<compile_context>
chip_gen: v5e
topology: v5e:2x2
jax: 0.10.0
libtpu: 0.0.40
codegen_flags: <defaults>
</compile_context>

<pallas_src>
import jax
import jax.numpy as jnp
from jax.experimental import pallas as pl
from jax.experimental.pallas import tpu as pltpu

H1 = 512
H2 = 2048
OUT = 28 * 28          # 784


def _prelu(x, alpha):
    # PReLU(x) = max(0, x) + alpha * min(0, x)
    return jnp.where(x > 0, x, alpha * x)


def _mlp_kernel(alpha_ref,            # SMEM (2,)   -- PReLU alphas (scalar prefetch)
                x_ref,                # VMEM (TM, F)          f32
                w1_ref, b1_ref,       # VMEM (F, 512)  bf16, (1, 512)  f32
                w2_ref, b2_ref,       # VMEM (512, 2048) bf16, (1, 2048) f32
                w3_ref, b3_ref,       # VMEM (2048, 784) bf16, (1, 784)  f32
                o_ref):               # VMEM (TM, 784)        f32
    a1 = alpha_ref[0]
    a2 = alpha_ref[1]

    x = x_ref[...].astype(jnp.bfloat16)

    h1 = jnp.dot(x, w1_ref[...], preferred_element_type=jnp.float32) + b1_ref[...]
    h1 = _prelu(h1, a1)

    h2 = jnp.dot(h1.astype(jnp.bfloat16), w2_ref[...],
                 preferred_element_type=jnp.float32) + b2_ref[...]
    h2 = _prelu(h2, a2)

    h3 = jnp.dot(h2.astype(jnp.bfloat16), w3_ref[...],
                 preferred_element_type=jnp.float32) + b3_ref[...]
    o_ref[...] = jax.nn.sigmoid(h3)


def prepare_params(params):
    """Cast weights to bf16 for the kernel (biases/alphas stay f32)."""
    return dict(
        w1=params["w1"].astype(jnp.bfloat16),
        b1=params["b1"],
        w2=params["w2"].astype(jnp.bfloat16),
        b2=params["b2"],
        w3=params["w3"].astype(jnp.bfloat16),
        b3=params["b3"],
        alphas=params["alphas"],
    )


def _pick_tm(B):
    """Batch-tile rows: multiple of 16 (bf16 LHS vreg fill)."""
    rb = max(16, ((B + 15) // 16) * 16)
    if rb <= 512:
        # Single tile: grid=1 -> weights DMA'd exactly once (no duplicate fetch
        # per TensorCore on v7x at small/medium batch).
        return rb
    # Large batch: 256 fills the 256-wide MXU on v6e/v7x; grid is sharded
    # across TensorCores via dimension_semantics=("parallel",).
    return 256


def _vmem_limit_bytes():
    """~75% of physical VMEM, capped at 100 MiB (v5e/v6e: ~96 MiB, v7x: ~48 MiB)."""
    cap = 128 * 1024 * 1024
    try:
        info = pltpu.get_tpu_info()
        cap = int(getattr(info, "vmem_capacity_bytes", cap))
    except Exception:
        # Fall back to a value that is safe on every generation (v7x = 64 MiB).
        return 48 * 1024 * 1024
    return int(min(100 * 1024 * 1024, cap * 3 // 4))


@jax.jit
def img_reconstruct_forward(x, kparams):
    """x: (B, num_features) f32, kparams from prepare_params -> (B, 1, 28, 28) f32."""
    w1, b1, w2, b2, w3, b3, alphas = (
        kparams["w1"], kparams["b1"], kparams["w2"], kparams["b2"],
        kparams["w3"], kparams["b3"], kparams["alphas"],
    )
    B, F = x.shape

    TM = _pick_tm(B)
    grid = (pl.cdiv(B, TM),)

    # Weights/biases: constant block index -> VMEM-resident, streamed from HBM
    # exactly once; Buffered(1) drops the useless second pipeline buffer.
    const = lambda i, alphas_ref: (0, 0)
    single = pl.Buffered(1)

    out_flat = pl.pallas_call(
        _mlp_kernel,
        out_shape=jax.ShapeDtypeStruct((B, OUT), jnp.float32),
        grid_spec=pltpu.PrefetchScalarGridSpec(
            num_scalar_prefetch=1,                       # alphas -> SMEM
            grid=grid,
            in_specs=[
                pl.BlockSpec((TM, F), lambda i, alphas_ref: (i, 0)),        # x
                pl.BlockSpec((F, H1), const, pipeline_mode=single),         # w1
                pl.BlockSpec((1, H1), const, pipeline_mode=single),         # b1
                pl.BlockSpec((H1, H2), const, pipeline_mode=single),        # w2
                pl.BlockSpec((1, H2), const, pipeline_mode=single),         # b2
                pl.BlockSpec((H2, OUT), const, pipeline_mode=single),       # w3
                pl.BlockSpec((1, OUT), const, pipeline_mode=single),        # b3
            ],
            out_specs=pl.BlockSpec((TM, OUT), lambda i, alphas_ref: (i, 0)),
        ),
        compiler_params=pltpu.CompilerParams(
            dimension_semantics=("parallel",),           # shard batch tiles across TCs
            vmem_limit_bytes=_vmem_limit_bytes(),
        ),
    )(alphas, x, w1, b1, w2, b2, w3, b3)

    # nn.Unflatten(1, (1, 28, 28)) -> NCHW (B, 1, 28, 28); free bitcast.
    return out_flat.reshape(B, 1, 28, 28)


def init_params(key, num_features):
    """f32 parameters matching PyTorch nn.Linear / nn.PReLU defaults."""
    ks = jax.random.split(key, 6)

    def lin(kw, kb, fan_in, fan_out):
        bound = 1.0 / jnp.sqrt(jnp.float32(fan_in))
        w = jax.random.uniform(kw, (fan_in, fan_out), jnp.float32, -bound, bound)
        b = jax.random.uniform(kb, (1, fan_out), jnp.float32, -bound, bound)
        return w, b

    w1, b1 = lin(ks[0], ks[1], num_features, H1)
    w2, b2 = lin(ks[2], ks[3], H1, H2)
    w3, b3 = lin(ks[4], ks[5], H2, OUT)
    # nn.PReLU() default: single learnable alpha = 0.25 per PReLU instance.
    alphas = jnp.array([0.25, 0.25], dtype=jnp.float32)
    return dict(w1=w1, b1=b1, w2=w2, b2=b2, w3=w3, b3=b3, alphas=alphas)


def _reference(x, params):
    """Pure-JAX f32 reference of the PyTorch forward."""
    a1, a2 = params["alphas"][0], params["alphas"][1]
    h1 = x @ params["w1"] + params["b1"]
    h1 = jnp.where(h1 > 0, h1, a1 * h1)
    h2 = h1 @ params["w2"] + params["b2"]
    h2 = jnp.where(h2 > 0, h2, a2 * h2)
    h3 = h2 @ params["w3"] + params["b3"]
    return jax.nn.sigmoid(h3).reshape(x.shape[0], 1, 28, 28)


if __name__ == "__main__":
    key = jax.random.PRNGKey(0)
    k_params, k_x = jax.random.split(key)

    batch, num_features = 2, 32
    params = init_params(k_params, num_features)
    kparams = prepare_params(params)
    x = jax.random.normal(k_x, (batch, num_features), jnp.float32)

    out = img_reconstruct_forward(x, kparams)
    out = jax.block_until_ready(out)

    ref = _reference(x, params)
    assert out.shape == (batch, 1, 28, 28), out.shape
    # bf16 weights/activations with f32 accumulation: relaxed tolerance vs f32 ref.
    max_err = float(jnp.max(jnp.abs(out - ref)))
    assert jnp.allclose(out, ref, atol=2e-2, rtol=2e-2), max_err

    print("KERNEL_OK")
</pallas_src>

<mosaic_0001>
module attributes {stable_mosaic.version = 11 : i64} {
  func.func @_mlp_kernel(%arg0: i32, %arg1: memref<2xf32, #tpu.memory_space<smem>>, %arg2: memref<16x32xf32, #tpu.memory_space<vmem>>, %arg3: memref<32x512xbf16, #tpu.memory_space<vmem>>, %arg4: memref<1x512xf32, #tpu.memory_space<vmem>>, %arg5: memref<512x2048xbf16, #tpu.memory_space<vmem>>, %arg6: memref<1x2048xf32, #tpu.memory_space<vmem>>, %arg7: memref<2048x784xbf16, #tpu.memory_space<vmem>>, %arg8: memref<1x784xf32, #tpu.memory_space<vmem>>, %arg9: memref<16x784xf32, #tpu.memory_space<vmem>>) attributes {dimension_semantics = [#tpu.dimension_semantics<parallel>], iteration_bounds = array<i64: 1>, scalar_prefetch = 1 : i64, scratch_operands = 0 : i64, tpu.core_type = #tpu.core_type<tc>, window_params = [{transform_indices = @transform_0, window_bounds = array<i64: 16, 32>}, {pipeline_mode = #tpu.pipeline_mode<synchronous>, transform_indices = @transform_1, window_bounds = array<i64: 32, 512>}, {pipeline_mode = #tpu.pipeline_mode<synchronous>, transform_indices = @transform_2, window_bounds = array<i64: 1, 512>}, {pipeline_mode = #tpu.pipeline_mode<synchronous>, transform_indices = @transform_3, window_bounds = array<i64: 512, 2048>}, {pipeline_mode = #tpu.pipeline_mode<synchronous>, transform_indices = @transform_4, window_bounds = array<i64: 1, 2048>}, {pipeline_mode = #tpu.pipeline_mode<synchronous>, transform_indices = @transform_5, window_bounds = array<i64: 2048, 784>}, {pipeline_mode = #tpu.pipeline_mode<synchronous>, transform_indices = @transform_6, window_bounds = array<i64: 1, 784>}, {transform_indices = @transform_7, window_bounds = array<i64: 16, 784>}]} {
    %c0 = arith.constant 0 : index
    %0 = memref.load %arg1[%c0] : memref<2xf32, #tpu.memory_space<smem>>
    %c1 = arith.constant 1 : index
    %1 = memref.load %arg1[%c1] : memref<2xf32, #tpu.memory_space<smem>>
    %c0_0 = arith.constant 0 : index
    %c0_1 = arith.constant 0 : index
    %2 = vector.load %arg2[%c0_0, %c0_1] : memref<16x32xf32, #tpu.memory_space<vmem>>, vector<16x32xf32>
    %3 = arith.truncf %2 : vector<16x32xf32> to vector<16x32xbf16>
    %c0_2 = arith.constant 0 : index
    %c0_3 = arith.constant 0 : index
    %4 = vector.load %arg3[%c0_2, %c0_3] : memref<32x512xbf16, #tpu.memory_space<vmem>>, vector<32x512xbf16>
    %cst = arith.constant dense<0.000000e+00> : vector<16x512xf32>
    %5 = tpu.matmul %3, %4, %cst {dimension_numbers = #tpu.dot_dimension_numbers<[1], [0], [0], [1], [0, 0, 1, 1], [], []>} : vector<16x32xbf16>, vector<32x512xbf16>, vector<16x512xf32> -> vector<16x512xf32>
    %c0_4 = arith.constant 0 : index
    %c0_5 = arith.constant 0 : index
    %6 = vector.load %arg4[%c0_4, %c0_5] : memref<1x512xf32, #tpu.memory_space<vmem>>, vector<1x512xf32>
    %7 = vector.broadcast %6 : vector<1x512xf32> to vector<16x512xf32>
    %8 = arith.addf %5, %7 : vector<16x512xf32>
    %cst_6 = arith.constant 0.000000e+00 : f32
    %9 = vector.broadcast %cst_6 : f32 to vector<16x512xf32>
    %10 = arith.cmpf ogt, %8, %9 : vector<16x512xf32>
    %11 = vector.broadcast %0 : f32 to vector<16x512xf32>
    %12 = arith.mulf %11, %8 : vector<16x512xf32>
    %13 = arith.select %10, %8, %12 : vector<16x512xi1>, vector<16x512xf32>
    %14 = arith.truncf %13 : vector<16x512xf32> to vector<16x512xbf16>
    %c0_7 = arith.constant 0 : index
    %c0_8 = arith.constant 0 : index
    %15 = vector.load %arg5[%c0_7, %c0_8] : memref<512x2048xbf16, #tpu.memory_space<vmem>>, vector<512x2048xbf16>
    %cst_9 = arith.constant dense<0.000000e+00> : vector<16x2048xf32>
    %16 = tpu.matmul %14, %15, %cst_9 {dimension_numbers = #tpu.dot_dimension_numbers<[1], [0], [0], [1], [0, 0, 1, 1], [], []>} : vector<16x512xbf16>, vector<512x2048xbf16>, vector<16x2048xf32> -> vector<16x2048xf32>
    %c0_10 = arith.constant 0 : index
    %c0_11 = arith.constant 0 : index
    %17 = vector.load %arg6[%c0_10, %c0_11] : memref<1x2048xf32, #tpu.memory_space<vmem>>, vector<1x2048xf32>
    %18 = vector.broadcast %17 : vector<1x2048xf32> to vector<16x2048xf32>
    %19 = arith.addf %16, %18 : vector<16x2048xf32>
    %cst_12 = arith.constant 0.000000e+00 : f32
    %20 = vector.broadcast %cst_12 : f32 to vector<16x2048xf32>
    %21 = arith.cmpf ogt, %19, %20 : vector<16x2048xf32>
    %22 = vector.broadcast %1 : f32 to vector<16x2048xf32>
    %23 = arith.mulf %22, %19 : vector<16x2048xf32>
    %24 = arith.select %21, %19, %23 : vector<16x2048xi1>, vector<16x2048xf32>
    %25 = arith.truncf %24 : vector<16x2048xf32> to vector<16x2048xbf16>
    %c0_13 = arith.constant 0 : index
    %c0_14 = arith.constant 0 : index
    %26 = vector.load %arg7[%c0_13, %c0_14] : memref<2048x784xbf16, #tpu.memory_space<vmem>>, vector<2048x784xbf16>
    %cst_15 = arith.constant dense<0.000000e+00> : vector<16x784xf32>
    %27 = tpu.matmul %25, %26, %cst_15 {dimension_numbers = #tpu.dot_dimension_numbers<[1], [0], [0], [1], [0, 0, 1, 1], [], []>} : vector<16x2048xbf16>, vector<2048x784xbf16>, vector<16x784xf32> -> vector<16x784xf32>
    %c0_16 = arith.constant 0 : index
    %c0_17 = arith.constant 0 : index
    %28 = vector.load %arg8[%c0_16, %c0_17] : memref<1x784xf32, #tpu.memory_space<vmem>>, vector<1x784xf32>
    %29 = vector.broadcast %28 : vector<1x784xf32> to vector<16x784xf32>
    %30 = arith.addf %27, %29 : vector<16x784xf32>
    %31 = arith.negf %30 : vector<16x784xf32>
    %32 = math.exp %31 : vector<16x784xf32>
    %cst_18 = arith.constant 1.000000e+00 : f32
    %33 = vector.broadcast %cst_18 : f32 to vector<16x784xf32>
    %34 = arith.addf %33, %32 : vector<16x784xf32>
    %35 = arith.divf %33, %34 : vector<16x784xf32>
    %c0_19 = arith.constant 0 : index
    %c0_20 = arith.constant 0 : index
    %36 = vector.load %arg9[%c0_19, %c0_20] : memref<16x784xf32, #tpu.memory_space<vmem>>, vector<16x784xf32>
    tpu.vector_store %arg9[%c0_19, %c0_20], %35 {strides = array<i32>} : memref<16x784xf32, #tpu.memory_space<vmem>>, vector<16x784xf32>,
    return
  }
  func.func @transform_0(%arg0: i32, %arg1: memref<2xf32, #tpu.memory_space<smem>>) -> (i32, i32) {
    %c0_i32 = arith.constant 0 : i32
    %c0_i32_0 = arith.constant 0 : i32
    return %arg0, %c0_i32 : i32, i32
  }
  func.func @transform_1(%arg0: i32, %arg1: memref<2xf32, #tpu.memory_space<smem>>) -> (i32, i32) {
    %c0_i32 = arith.constant 0 : i32
    %c0_i32_0 = arith.constant 0 : i32
    %c0_i32_1 = arith.constant 0 : i32
    return %c0_i32, %c0_i32_0 : i32, i32
  }
  func.func @transform_2(%arg0: i32, %arg1: memref<2xf32, #tpu.memory_space<smem>>) -> (i32, i32) {
    %c0_i32 = arith.constant 0 : i32
    %c0_i32_0 = arith.constant 0 : i32
    %c0_i32_1 = arith.constant 0 : i32
    return %c0_i32, %c0_i32_0 : i32, i32
  }
  func.func @transform_3(%arg0: i32, %arg1: memref<2xf32, #tpu.memory_space<smem>>) -> (i32, i32) {
    %c0_i32 = arith.constant 0 : i32
    %c0_i32_0 = arith.constant 0 : i32
    %c0_i32_1 = arith.constant 0 : i32
    return %c0_i32, %c0_i32_0 : i32, i32
  }
  func.func @transform_4(%arg0: i32, %arg1: memref<2xf32, #tpu.memory_space<smem>>) -> (i32, i32) {
    %c0_i32 = arith.constant 0 : i32
    %c0_i32_0 = arith.constant 0 : i32
    %c0_i32_1 = arith.constant 0 : i32
    return %c0_i32, %c0_i32_0 : i32, i32
  }
  func.func @transform_5(%arg0: i32, %arg1: memref<2xf32, #tpu.memory_space<smem>>) -> (i32, i32) {
    %c0_i32 = arith.constant 0 : i32
    %c0_i32_0 = arith.constant 0 : i32
    %c0_i32_1 = arith.constant 0 : i32
    return %c0_i32, %c0_i32_0 : i32, i32
  }
  func.func @transform_6(%arg0: i32, %arg1: memref<2xf32, #tpu.memory_space<smem>>) -> (i32, i32) {
    %c0_i32 = arith.constant 0 : i32
    %c0_i32_0 = arith.constant 0 : i32
    %c0_i32_1 = arith.constant 0 : i32
    return %c0_i32, %c0_i32_0 : i32, i32
  }
  func.func @transform_7(%arg0: i32, %arg1: memref<2xf32, #tpu.memory_space<smem>>) -> (i32, i32) {
    %c0_i32 = arith.constant 0 : i32
    %c0_i32_0 = arith.constant 0 : i32
    return %arg0, %c0_i32 : i32, i32
  }
}

</mosaic_0001>

<llo_original>
// kernel: img_reconstruct_forward.1
$region0: #{img_reconstruct_forward.1}
  #allocation0 [shape = 'u32[]', space=smem, size = 0x4, offset = 0x4, fixed_abs, tag = 'smem constant byte address 0x4 - core index']
  #allocation1 [shape = 'u32[72,128]{1,0:T(1,128)}', space=vmem, size = 0x9000, scoped, tag = 'internal scratch']
  #allocation2 [shape = 's32[1]{0}', space=sflag, size = 0x4, scoped, tag = 'scoped memory for img_reconstruct_forward.1']
  #allocation3 [shape = 'u8[512]{0}', space=smem, size = 0x200, scoped, tag = 'prefetched SMEM operand 0']
  %s0 = inlined_call_operand.vmem [shape: f32[2], index: 0, kind: input, shape index: {}]
  %s1 = inlined_call_operand.vmem [shape: f32[2,32], index: 1, kind: input, shape index: {}]
  %s2 = inlined_call_operand.vmem [shape: bf16[32,512], index: 2, kind: input, shape index: {}]
  %s3 = inlined_call_operand.vmem [shape: f32[1,512], index: 3, kind: input, shape index: {}]
  %s4 = inlined_call_operand.vmem [shape: bf16[512,2048], index: 4, kind: input, shape index: {}]
  %s5 = inlined_call_operand.vmem [shape: f32[1,2048], index: 5, kind: input, shape index: {}]
  %s6 = inlined_call_operand.vmem [shape: bf16[2048,784], index: 6, kind: input, shape index: {}]
  %s7 = inlined_call_operand.vmem [shape: f32[1,784], index: 7, kind: input, shape index: {}]
  %s8 = inlined_call_operand.vmem [shape: f32[2,784], index: 8, kind: output, shape index: {}]
  %s9 = sld [smem:[#allocation0]]
  $region60: #{img_reconstruct_forward.1} parent=0
    _
  %s11 = ssub.s32 1, %s9
  %s12 = scalar_select 0, %s11, %s9
  %s14 = sshll.u32 %s0, 4
  %s15 = int_to_ptr.vmem [resolvable:$true] %s14
  %17 = dma.vmem_to_smem %s15, 16, [#allocation3], [#allocation2]
  %19 = dma.done [#allocation2], 16
  %20 = sfence
  $region1: #{img_reconstruct_forward.1} parent=0
    #allocation4 [shape = 'u8[57344]{0}', space=vmem, size = 0xe000, scoped, tag = 'output window, operand 0, single buffered']
    // Predicated region
    $region2: #{img_reconstruct_forward.1} parent=1 // pred_check
      _
    $region3: #{img_reconstruct_forward.1} parent=1 // pred_check_branch
      %22 = sbr.rel (0) target = $region5
    $region4: #{img_reconstruct_forward.1} parent=1 // pred_region
      _
    $region5: #{img_reconstruct_forward.1} parent=1 // pred_fallthru
      _
    // Predicated region
    $region6: #{img_reconstruct_forward.1} parent=1 // pred_check
      _
    $region7: #{img_reconstruct_forward.1} parent=1 // pred_check_branch
      %24 = sbr.rel (0) target = $region9
    $region8: #{img_reconstruct_forward.1} parent=1 // pred_region
      _
    $region9: #{img_reconstruct_forward.1} parent=1 // pred_fallthru
      _
    // Predicated region
    $region10: #{img_reconstruct_forward.1} parent=1 // pred_check
      _
    $region11: #{img_reconstruct_forward.1} parent=1 // pred_check_branch
      %26 = sbr.rel (0) target = $region13
    $region12: #{img_reconstruct_forward.1} parent=1 // pred_region
      _
    $region13: #{img_reconstruct_forward.1} parent=1 // pred_fallthru
      _
    // Predicated region
    $region14: #{img_reconstruct_forward.1} parent=1 // pred_check
      _
    $region15: #{img_reconstruct_forward.1} parent=1 // pred_check_branch
      %28 = sbr.rel (0) target = $region17
    $region16: #{img_reconstruct_forward.1} parent=1 // pred_region
      _
    $region17: #{img_reconstruct_forward.1} parent=1 // pred_fallthru
      _
    // Predicated region
    $region18: #{img_reconstruct_forward.1} parent=1 // pred_check
      _
    $region19: #{img_reconstruct_forward.1} parent=1 // pred_check_branch
      %30 = sbr.rel (0) target = $region21
    $region20: #{img_reconstruct_forward.1} parent=1 // pred_region
      _
    $region21: #{img_reconstruct_forward.1} parent=1 // pred_fallthru
      _
    // Predicated region
    $region22: #{img_reconstruct_forward.1} parent=1 // pred_check
      _
    $region23: #{img_reconstruct_forward.1} parent=1 // pred_check_branch
      %32 = sbr.rel (0) target = $region25
    $region24: #{img_reconstruct_forward.1} parent=1 // pred_region
      _
    $region25: #{img_reconstruct_forward.1} parent=1 // pred_fallthru
      _
    // Predicated region
    $region26: #{img_reconstruct_forward.1} parent=1 // pred_check
      _
    $region27: #{img_reconstruct_forward.1} parent=1 // pred_check_branch
      %34 = sbr.rel (0) target = $region29
    $region28: #{img_reconstruct_forward.1} parent=1 // pred_region
      _
    $region29: #{img_reconstruct_forward.1} parent=1 // pred_fallthru
      _
    %s36 = sld [smem:[#allocation3]]
    %s37 = sld [smem:[#allocation3 + $0x1]]
    %v38 = vld [vmem:[%s1] sm:$0xff]
    %v39 = vld [vmem:[%s1 + $0x8] sm:$0xff]
    %v40 = vpack.c.bf16 %v39, %v38
    %v41 = vld [vmem:[%s2] sm:$0xff]
    %v42 = vld [vmem:[%s2 + $0x8] sm:$0xff]
    %v43 = vld [vmem:[%s2 + $0x10] sm:$0xff]
    %v44 = vld [vmem:[%s2 + $0x18] sm:$0xff]
    %v45 = vld [vmem:[%s2 + $0x20] sm:$0xff]
    %v46 = vld [vmem:[%s2 + $0x28] sm:$0xff]
    %v47 = vld [vmem:[%s2 + $0x30] sm:$0xff]
    %v48 = vld [vmem:[%s2 + $0x38] sm:$0xff]
    %v49 = vld [vmem:[%s3] sm:$0xf]
    %v51 = vperm.slane %v49, 0
    %v52 = vperm.slane %v49, 1
    %v53 = vperm.slane %v49, 2
    %v54 = vperm.slane %v49, 3
    %v67 = vunpack.c.l.b16 %v41
    %v68 = vunpack.c.h.b16 %v41
    %v69 = vunpack.c.l.b16 %v42
    %v70 = vunpack.c.h.b16 %v42
    %v71 = vunpack.c.l.b16 %v43
    %v72 = vunpack.c.h.b16 %v43
    %v73 = vunpack.c.l.b16 %v44
    %v74 = vunpack.c.h.b16 %v44
    %v75 = vunpack.c.l.b16 %v45
    %v76 = vunpack.c.h.b16 %v45
    %v77 = vunpack.c.l.b16 %v46
    %v78 = vunpack.c.h.b16 %v46
    %v79 = vunpack.c.l.b16 %v47
    %v80 = vunpack.c.h.b16 %v47
    %v81 = vunpack.c.l.b16 %v48
    %v82 = vunpack.c.h.b16 %v48
    %v83 = vpack.c.b16 %v71, %v67
    %v84 = vpack.c.b16 %v72, %v68
    %v85 = vpack.c.b16 %v73, %v69
    %v86 = vpack.c.b16 %v74, %v70
    %v87 = vpack.c.b16 %v79, %v75
    %v88 = vpack.c.b16 %v80, %v76
    %v89 = vpack.c.b16 %v81, %v77
    %v90 = vpack.c.b16 %v82, %v78
    %vm99 = vcmask 261120
    %v101 = vsel %vm99, %v40, 0
    %103 = vmatpush.bf16.msra.mxu0 0
    %104 = vmatpush.bf16.msra.mxu0 0
    %105 = vmatpush.bf16.msra.mxu0 0
    %106 = vmatpush.bf16.msra.mxu0 0
    %107 = vmatpush.bf16.msra.mxu0 0
    %108 = vmatpush.bf16.msra.mxu0 0
    %109 = vmatpush.bf16.msra.mxu0 %v87
    %110 = vmatpush.bf16.msra.mxu0 %v83
    %111 = vmatmul.bf16.gmra.mxu0 %v101
    %v112 = vpop.f32.mrf.mxu0
    %v113 = vadd.f32 %v51, %v112
    %v114 = vpop.f32.mrf.mxu0
    %v115 = vadd.f32 %v51, %v114
    %116 = vdwg.mxu0
    %117 = vmatpush.bf16.msra.mxu0 0
    %118 = vmatpush.bf16.msra.mxu0 0
    %119 = vmatpush.bf16.msra.mxu0 0
    %120 = vmatpush.bf16.msra.mxu0 0
    %121 = vmatpush.bf16.msra.mxu0 0
    %122 = vmatpush.bf16.msra.mxu0 0
    %123 = vmatpush.bf16.msra.mxu0 %v88
    %124 = vmatpush.bf16.msra.mxu0 %v84
    %125 = vmatmul.bf16.gmra.mxu0 %v101
    %v126 = vpop.f32.mrf.mxu0
    %v127 = vadd.f32 %v52, %v126
    %v128 = vpop.f32.mrf.mxu0
    %v129 = vadd.f32 %v52, %v128
    %130 = vdwg.mxu0
    %131 = vmatpush.bf16.msra.mxu0 0
    %132 = vmatpush.bf16.msra.mxu0 0
    %133 = vmatpush.bf16.msra.mxu0 0
    %134 = vmatpush.bf16.msra.mxu0 0
    %135 = vmatpush.bf16.msra.mxu0 0
    %136 = vmatpush.bf16.msra.mxu0 0
    %137 = vmatpush.bf16.msra.mxu0 %v89
    %138 = vmatpush.bf16.msra.mxu0 %v85
    %139 = vmatmul.bf16.gmra.mxu0 %v101
    %v140 = vpop.f32.mrf.mxu0
    %v141 = vadd.f32 %v53, %v140
    %v142 = vpop.f32.mrf.mxu0
    %v143 = vadd.f32 %v53, %v142
    %144 = vdwg.mxu0
    %145 = vmatpush.bf16.msra.mxu0 0
    %146 = vmatpush.bf16.msra.mxu0 0
    %147 = vmatpush.bf16.msra.mxu0 0
    %148 = vmatpush.bf16.msra.mxu0 0
    %149 = vmatpush.bf16.msra.mxu0 0
    %150 = vmatpush.bf16.msra.mxu0 0
    %151 = vmatpush.bf16.msra.mxu0 %v90
    %152 = vmatpush.bf16.msra.mxu0 %v86
    %153 = vmatmul.bf16.gmra.mxu0 %v101
    %v154 = vpop.f32.mrf.mxu0
    %v155 = vadd.f32 %v54, %v154
    %v156 = vpop.f32.mrf.mxu0
    %v157 = vadd.f32 %v54, %v156
    %158 = vdwg.mxu0
    %vm159 = vcmp.gt.f32.partialorder %v113, 0.0
    %vm160 = vcmp.gt.f32.partialorder %v127, 0.0
    %vm161 = vcmp.gt.f32.partialorder %v141, 0.0
    %vm162 = vcmp.gt.f32.partialorder %v155, 0.0
    %vm163 = vcmp.gt.f32.partialorder %v115, 0.0
    %vm164 = vcmp.gt.f32.partialorder %v129, 0.0
    %vm165 = vcmp.gt.f32.partialorder %v143, 0.0
    %vm166 = vcmp.gt.f32.partialorder %v157, 0.0
    %v167 = vstv %s36
    %v168 = vmul.f32 %v167, %v113
    %v169 = vmul.f32 %v167, %v127
    %v170 = vmul.f32 %v167, %v141
    %v171 = vmul.f32 %v167, %v155
    %v172 = vmul.f32 %v167, %v115
    %v173 = vmul.f32 %v167, %v129
    %v174 = vmul.f32 %v167, %v143
    %v175 = vmul.f32 %v167, %v157
    %v176 = vsel %vm159, %v113, %v168
    %v177 = vsel %vm160, %v127, %v169
    %v178 = vsel %vm161, %v141, %v170
    %v179 = vsel %vm162, %v155, %v171
    %v180 = vsel %vm163, %v115, %v172
    %v181 = vsel %vm164, %v129, %v173
    %v182 = vsel %vm165, %v143, %v174
    %v183 = vsel %vm166, %v157, %v175
    %v184 = vpack.c.bf16 %v180, %v176
    %v185 = vpack.c.bf16 %v181, %v177
    %v186 = vpack.c.bf16 %v182, %v178
    %v187 = vpack.c.bf16 %v183, %v179
    %v188 = vld [vmem:[%s4] sm:$0xff]
    %v189 = vld [vmem:[%s4 + $0x8] sm:$0xff]
    %v190 = vld [vmem:[%s4 + $0x10] sm:$0xff]
    %v191 = vld [vmem:[%s4 + $0x18] sm:$0xff]
    %v192 = vld [vmem:[%s4 + $0x20] sm:$0xff]
    %v193 = vld [vmem:[%s4 + $0x28] sm:$0xff]
    %v194 = vld [vmem:[%s4 + $0x30] sm:$0xff]
    %v195 = vld [vmem:[%s4 + $0x38] sm:$0xff]
    %v196 = vld [vmem:[%s4 + $0x40] sm:$0xff]
    %v197 = vld [vmem:[%s4 + $0x48] sm:$0xff]
    %v198 = vld [vmem:[%s4 + $0x50] sm:$0xff]
    %v199 = vld [vmem:[%s4 + $0x58] sm:$0xff]
    %v200 = vld [vmem:[%s4 + $0x60] sm:$0xff]
    %v201 = vld [vmem:[%s4 + $0x68] sm:$0xff]
    %v202 = vld [vmem:[%s4 + $0x70] sm:$0xff]
    %v203 = vld [vmem:[%s4 + $0x78] sm:$0xff]
    %v204 = vld [vmem:[%s4 + $0x80] sm:$0xff]
    %v205 = vld [vmem:[%s4 + $0x88] sm:$0xff]
    %v206 = vld [vmem:[%s4 + $0x90] sm:$0xff]
    %v207 = vld [vmem:[%s4 + $0x98] sm:$0xff]
    %v208 = vld [vmem:[%s4 + $0xa0] sm:$0xff]
    %v209 = vld [vmem:[%s4 + $0xa8] sm:$0xff]
    %v210 = vld [vmem:[%s4 + $0xb0] sm:$0xff]
    %v211 = vld [vmem:[%s4 + $0xb8] sm:$0xff]
    %v212 = vld [vmem:[%s4 + $0xc0] sm:$0xff]
    %v213 = vld [vmem:[%s4 + $0xc8] sm:$0xff]
    %v214 = vld [vmem:[%s4 + $0xd0] sm:$0xff]
    %v215 = vld [vmem:[%s4 + $0xd8] sm:$0xff]
    %v216 = vld [vmem:[%s4 + $0xe0] sm:$0xff]
    %v217 = vld [vmem:[%s4 + $0xe8] sm:$0xff]
    %v218 = vld [vmem:[%s4 + $0xf0] sm:$0xff]
    %v219 = vld [vmem:[%s4 + $0xf8] sm:$0xff]
    %v220 = vld [vmem:[%s4 + $0x100] sm:$0xff]
    %v221 = vld [vmem:[%s4 + $0x108] sm:$0xff]
    %v222 = vld [vmem:[%s4 + $0x110] sm:$0xff]
    %v223 = vld [vmem:[%s4 + $0x118] sm:$0xff]
    %v224 = vld [vmem:[%s4 + $0x120] sm:$0xff]
    %v225 = vld [vmem:[%s4 + $0x128] sm:$0xff]
    %v226 = vld [vmem:[%s4 + $0x130] sm:$0xff]
    %v227 = vld [vmem:[%s4 + $0x138] sm:$0xff]
    %v228 = vld [vmem:[%s4 + $0x140] sm:$0xff]
    %v229 = vld [vmem:[%s4 + $0x148] sm:$0xff]
    %v230 = vld [vmem:[%s4 + $0x150] sm:$0xff]
    %v231 = vld [vmem:[%s4 + $0x158] sm:$0xff]
    %v232 = vld [vmem:[%s4 + $0x160] sm:$0xff]
    %v233 = vld [vmem:[%s4 + $0x168] sm:$0xff]
    %v234 = vld [vmem:[%s4 + $0x170] sm:$0xff]
    %v235 = vld [vmem:[%s4 + $0x178] sm:$0xff]
    %v236 = vld [vmem:[%s4 + $0x180] sm:$0xff]
    %v237 = vld [vmem:[%s4 + $0x188] sm:$0xff]
    %v238 = vld [vmem:[%s4 + $0x190] sm:$0xff]
    %v239 = vld [vmem:[%s4 + $0x198] sm:$0xff]
    %v240 = vld [vmem:[%s4 + $0x1a0] sm:$0xff]
    %v241 = vld [vmem:[%s4 + $0x1a8] sm:$0xff]
    %v242 = vld [vmem:[%s4 + $0x1b0] sm:$0xff]
    %v243 = vld [vmem:[%s4 + $0x1b8] sm:$0xff]
    %v244 = vld [vmem:[%s4 + $0x1c0] sm:$0xff]
    %v245 = vld [vmem:[%s4 + $0x1c8] sm:$0xff]
    %v246 = vld [vmem:[%s4 + $0x1d0] sm:$0xff]
    %v247 = vld [vmem:[%s4 + $0x1d8] sm:$0xff]
    %v248 = vld [vmem:[%s4 + $0x1e0] sm:$0xff]
    %v249 = vld [vmem:[%s4 + $0x1e8] sm:$0xff]
    %v250 = vld [vmem:[%s4 + $0x1f0] sm:$0xff]
    %v251 = vld [vmem:[%s4 + $0x1f8] sm:$0xff]
    %v252 = vld [vmem:[%s4 + $0x200] sm:$0xff]
    %v253 = vld [vmem:[%s4 + $0x208] sm:$0xff]
    %v254 = vld [vmem:[%s4 + $0x210] sm:$0xff]
    %v255 = vld [vmem:[%s4 + $0x218] sm:$0xff]
    %v256 = vld [vmem:[%s4 + $0x220] sm:$0xff]
    %v257 = vld [vmem:[%s4 + $0x228] sm:$0xff]
    %v258 = vld [vmem:[%s4 + $0x230] sm:$0xff]
    %v259 = vld [vmem:[%s4 + $0x238] sm:$0xff]
    %v260 = vld [vmem:[%s4 + $0x240] sm:$0xff]
    %v261 = vld [vmem:[%s4 + $0x248] sm:$0xff]
    %v262 = vld [vmem:[%s4 + $0x250] sm:$0xff]
    %v263 = vld [vmem:[%s4 + $0x258] sm:$0xff]
    %v264 = vld [vmem:[%s4 + $0x260] sm:$0xff]
    %v265 = vld [vmem:[%s4 + $0x268] sm:$0xff]
    %v266 = vld [vmem:[%s4 + $0x270] sm:$0xff]
    %v267 = vld [vmem:[%s4 + $0x278] sm:$0xff]
    %v268 = vld [vmem:[%s4 + $0x280] sm:$0xff]
    %v269 = vld [vmem:[%s4 + $0x288] sm:$0xff]
    %v270 = vld [vmem:[%s4 + $0x290] sm:$0xff]
    %v271 = vld [vmem:[%s4 + $0x298] sm:$0xff]
    %v272 = vld [vmem:[%s4 + $0x2a0] sm:$0xff]
    %v273 = vld [vmem:[%s4 + $0x2a8] sm:$0xff]
    %v274 = vld [vmem:[%s4 + $0x2b0] sm:$0xff]
    %v275 = vld [vmem:[%s4 + $0x2b8] sm:$0xff]
    %v276 = vld [vmem:[%s4 + $0x2c0] sm:$0xff]
    %v277 = vld [vmem:[%s4 + $0x2c8] sm:$0xff]
    %v278 = vld [vmem:[%s4 + $0x2d0] sm:$0xff]
    %v279 = vld [vmem:[%s4 + $0x2d8] sm:$0xff]
    %v280 = vld [vmem:[%s4 + $0x2e0] sm:$0xff]
    %v281 = vld [vmem:[%s4 + $0x2e8] sm:$0xff]
    %v282 = vld [vmem:[%s4 + $0x2f0] sm:$0xff]
    %v283 = vld [vmem:[%s4 + $0x2f8] sm:$0xff]
    %v284 = vld [vmem:[%s4 + $0x300] sm:$0xff]
    %v285 = vld [vmem:[%s4 + $0x308] sm:$0xff]
    %v286 = vld [vmem:[%s4 + $0x310] sm:$0xff]
    %v287 = vld [vmem:[%s4 + $0x318] sm:$0xff]
    %v288 = vld [vmem:[%s4 + $0x320] sm:$0xff]
    %v289 = vld [vmem:[%s4 + $0x328] sm:$0xff]
    %v290 = vld [vmem:[%s4 + $0x330] sm:$0xff]
    %v291 = vld [vmem:[%s4 + $0x338] sm:$0xff]
    %v292 = vld [vmem:[%s4 + $0x340] sm:$0xff]
    %v293 = vld [vmem:[%s4 + $0x348] sm:$0xff]
    %v294 = vld [vmem:[%s4 + $0x350] sm:$0xff]
    %v295 = vld [vmem:[%s4 + $0x358] sm:$0xff]
    %v296 = vld [vmem:[%s4 + $0x360] sm:$0xff]
    %v297 = vld [vmem:[%s4 + $0x368] sm:$0xff]
    %v298 = vld [vmem:[%s4 + $0x370] sm:$0xff]
    %v299 = vld [vmem:[%s4 + $0x378] sm:$0xff]
    %v300 = vld [vmem:[%s4 + $0x380] sm:$0xff]
    %v301 = vld [vmem:[%s4 + $0x388] sm:$0xff]
    %v302 = vld [vmem:[%s4 + $0x390] sm:$0xff]
    %v303 = vld [vmem:[%s4 + $0x398] sm:$0xff]
    %v304 = vld [vmem:[%s4 + $0x3a0] sm:$0xff]
    %v305 = vld [vmem:[%s4 + $0x3a8] sm:$0xff]
    %v306 = vld [vmem:[%s4 + $0x3b0] sm:$0xff]
    %v307 = vld [vmem:[%s4 + $0x3b8] sm:$0xff]
    %v308 = vld [vmem:[%s4 + $0x3c0] sm:$0xff]
    %v309 = vld [vmem:[%s4 + $0x3c8] sm:$0xff]
    %v310 = vld [vmem:[%s4 + $0x3d0] sm:$0xff]
    %v311 = vld [vmem:[%s4 + $0x3d8] sm:$0xff]
    %v312 = vld [vmem:[%s4 + $0x3e0] sm:$0xff]
    %v313 = vld [vmem:[%s4 + $0x3e8] sm:$0xff]
    %v314 = vld [vmem:[%s4 + $0x3f0] sm:$0xff]
    %v315 = vld [vmem:[%s4 + $0x3f8] sm:$0xff]
    %v316 = vld [vmem:[%s4 + $0x400] sm:$0xff]
    %v317 = vld [vmem:[%s4 + $0x408] sm:$0xff]
    %v318 = vld [vmem:[%s4 + $0x410] sm:$0xff]
    %v319 = vld [vmem:[%s4 + $0x418] sm:$0xff]
    %v320 = vld [vmem:[%s4 + $0x420] sm:$0xff]
    %v321 = vld [vmem:[%s4 + $0x428] sm:$0xff]
    %v322 = vld [vmem:[%s4 + $0x430] sm:$0xff]
    %v323 = vld [vmem:[%s4 + $0x438] sm:$0xff]
    %v324 = vld [vmem:[%s4 + $0x440] sm:$0xff]
    %v325 = vld [vmem:[%s4 + $0x448] sm:$0xff]
    %v326 = vld [vmem:[%s4 + $0x450] sm:$0xff]
    %v327 = vld [vmem:[%s4 + $0x458] sm:$0xff]
    %v328 = vld [vmem:[%s4 + $0x460] sm:$0xff]
    %v329 = vld [vmem:[%s4 + $0x468] sm:$0xff]
    %v330 = vld [vmem:[%s4 + $0x470] sm:$0xff]
    %v331 = vld [vmem:[%s4 + $0x478] sm:$0xff]
    %v332 = vld [vmem:[%s4 + $0x480] sm:$0xff]
    %v333 = vld [vmem:[%s4 + $0x488] sm:$0xff]
    %v334 = vld [vmem:[%s4 + $0x490] sm:$0xff]
    %v335 = vld [vmem:[%s4 + $0x498] sm:$0xff]
    %v336 = vld [vmem:[%s4 + $0x4a0] sm:$0xff]
    %v337 = vld [vmem:[%s4 + $0x4a8] sm:$0xff]
    %v338 = vld [vmem:[%s4 + $0x4b0] sm:$0xff]
    %v339 = vld [vmem:[%s4 + $0x4b8] sm:$0xff]
    %v340 = vld [vmem:[%s4 + $0x4c0] sm:$0xff]
    %v341 = vld [vmem:[%s4 + $0x4c8] sm:$0xff]
    %v342 = vld [vmem:[%s4 + $0x4d0] sm:$0xff]
    %v343 = vld [vmem:[%s4 + $0x4d8] sm:$0xff]
    %v344 = vld [vmem:[%s4 + $0x4e0] sm:$0xff]
    %v345 = vld [vmem:[%s4 + $0x4e8] sm:$0xff]
    %v346 = vld [vmem:[%s4 + $0x4f0] sm:$0xff]
    %v347 = vld [vmem:[%s4 + $0x4f8] sm:$0xff]
    %v348 = vld [vmem:[%s4 + $0x500] sm:$0xff]
    %v349 = vld [vmem:[%s4 + $0x508] sm:$0xff]
    %v350 = vld [vmem:[%s4 + $0x510] sm:$0xff]
    %v351 = vld [vmem:[%s4 + $0x518] sm:$0xff]
    %v352 = vld [vmem:[%s4 + $0x520] sm:$0xff]
    %v353 = vld [vmem:[%s4 + $0x528] sm:$0xff]
    %v354 = vld [vmem:[%s4 + $0x530] sm:$0xff]
    %v355 = vld [vmem:[%s4 + $0x538] sm:$0xff]
    %v356 = vld [vmem:[%s4 + $0x540] sm:$0xff]
    %v357 = vld [vmem:[%s4 + $0x548] sm:$0xff]
    %v358 = vld [vmem:[%s4 + $0x550] sm:$0xff]
    %v359 = vld [vmem:[%s4 + $0x558] sm:$0xff]
    %v360 = vld [vmem:[%s4 + $0x560] sm:$0xff]
    %v361 = vld [vmem:[%s4 + $0x568] sm:$0xff]
    %v362 = vld [vmem:[%s4 + $0x570] sm:$0xff]
    %v363 = vld [vmem:[%s4 + $0x578] sm:$0xff]
    %v364 = vld [vmem:[%s4 + $0x580] sm:$0xff]
    %v365 = vld [vmem:[%s4 + $0x588] sm:$0xff]
    %v366 = vld [vmem:[%s4 + $0x590] sm:$0xff]
    %v367 = vld [vmem:[%s4 + $0x598] sm:$0xff]
    %v368 = vld [vmem:[%s4 + $0x5a0] sm:$0xff]
    %v369 = vld [vmem:[%s4 + $0x5a8] sm:$0xff]
    %v370 = vld [vmem:[%s4 + $0x5b0] sm:$0xff]
    %v371 = vld [vmem:[%s4 + $0x5b8] sm:$0xff]
    %v372 = vld [vmem:[%s4 + $0x5c0] sm:$0xff]
    %v373 = vld [vmem:[%s4 + $0x5c8] sm:$0xff]
    %v374 = vld [vmem:[%s4 + $0x5d0] sm:$0xff]
    %v375 = vld [vmem:[%s4 + $0x5d8] sm:$0xff]
    %v376 = vld [vmem:[%s4 + $0x5e0] sm:$0xff]
    %v377 = vld [vmem:[%s4 + $0x5e8] sm:$0xff]
    %v378 = vld [vmem:[%s4 + $0x5f0] sm:$0xff]
    %v379 = vld [vmem:[%s4 + $0x5f8] sm:$0xff]
    %v380 = vld [vmem:[%s4 + $0x600] sm:$0xff]
    %v381 = vld [vmem:[%s4 + $0x608] sm:$0xff]
    %v382 = vld [vmem:[%s4 + $0x610] sm:$0xff]
    %v383 = vld [vmem:[%s4 + $0x618] sm:$0xff]
    %v384 = vld [vmem:[%s4 + $0x620] sm:$0xff]
    %v385 = vld [vmem:[%s4 + $0x628] sm:$0xff]
    %v386 = vld [vmem:[%s4 + $0x630] sm:$0xff]
    %v387 = vld [vmem:[%s4 + $0x638] sm:$0xff]
    %v388 = vld [vmem:[%s4 + $0x640] sm:$0xff]
    %v389 = vld [vmem:[%s4 + $0x648] sm:$0xff]
    %v390 = vld [vmem:[%s4 + $0x650] sm:$0xff]
    %v391 = vld [vmem:[%s4 + $0x658] sm:$0xff]
    %v392 = vld [vmem:[%s4 + $0x660] sm:$0xff]
    %v393 = vld [vmem:[%s4 + $0x668] sm:$0xff]
    %v394 = vld [vmem:[%s4 + $0x670] sm:$0xff]
    %v395 = vld [vmem:[%s4 + $0x678] sm:$0xff]
    %v396 = vld [vmem:[%s4 + $0x680] sm:$0xff]
    %v397 = vld [vmem:[%s4 + $0x688] sm:$0xff]
    %v398 = vld [vmem:[%s4 + $0x690] sm:$0xff]
    %v399 = vld [vmem:[%s4 + $0x698] sm:$0xff]
    %v400 = vld [vmem:[%s4 + $0x6a0] sm:$0xff]
    %v401 = vld [vmem:[%s4 + $0x6a8] sm:$0xff]
    %v402 = vld [vmem:[%s4 + $0x6b0] sm:$0xff]
    %v403 = vld [vmem:[%s4 + $0x6b8] sm:$0xff]
    %v404 = vld [vmem:[%s4 + $0x6c0] sm:$0xff]
    %v405 = vld [vmem:[%s4 + $0x6c8] sm:$0xff]
    %v406 = vld [vmem:[%s4 + $0x6d0] sm:$0xff]
    %v407 = vld [vmem:[%s4 + $0x6d8] sm:$0xff]
    %v408 = vld [vmem:[%s4 + $0x6e0] sm:$0xff]
    %v409 = vld [vmem:[%s4 + $0x6e8] sm:$0xff]
    %v410 = vld [vmem:[%s4 + $0x6f0] sm:$0xff]
    %v411 = vld [vmem:[%s4 + $0x6f8] sm:$0xff]
    %v412 = vld [vmem:[%s4 + $0x700] sm:$0xff]
    %v413 = vld [vmem:[%s4 + $0x708] sm:$0xff]
    %v414 = vld [vmem:[%s4 + $0x710] sm:$0xff]
    %v415 = vld [vmem:[%s4 + $0x718] sm:$0xff]
    %v416 = vld [vmem:[%s4 + $0x720] sm:$0xff]
    %v417 = vld [vmem:[%s4 + $0x728] sm:$0xff]
    %v418 = vld [vmem:[%s4 + $0x730] sm:$0xff]
    %v419 = vld [vmem:[%s4 + $0x738] sm:$0xff]
    %v420 = vld [vmem:[%s4 + $0x740] sm:$0xff]
    %v421 = vld [vmem:[%s4 + $0x748] sm:$0xff]
    %v422 = vld [vmem:[%s4 + $0x750] sm:$0xff]
    %v423 = vld [vmem:[%s4 + $0x758] sm:$0xff]
    %v424 = vld [vmem:[%s4 + $0x760] sm:$0xff]
    %v425 = vld [vmem:[%s4 + $0x768] sm:$0xff]
    %v426 = vld [vmem:[%s4 + $0x770] sm:$0xff]
    %v427 = vld [vmem:[%s4 + $0x778] sm:$0xff]
    %v428 = vld [vmem:[%s4 + $0x780] sm:$0xff]
    %v429 = vld [vmem:[%s4 + $0x788] sm:$0xff]
    %v430 = vld [vmem:[%s4 + $0x790] sm:$0xff]
    %v431 = vld [vmem:[%s4 + $0x798] sm:$0xff]
    %v432 = vld [vmem:[%s4 + $0x7a0] sm:$0xff]
    %v433 = vld [vmem:[%s4 + $0x7a8] sm:$0xff]
    %v434 = vld [vmem:[%s4 + $0x7b0] sm:$0xff]
    %v435 = vld [vmem:[%s4 + $0x7b8] sm:$0xff]
    %v436 = vld [vmem:[%s4 + $0x7c0] sm:$0xff]
    %v437 = vld [vmem:[%s4 + $0x7c8] sm:$0xff]
    %v438 = vld [vmem:[%s4 + $0x7d0] sm:$0xff]
    %v439 = vld [vmem:[%s4 + $0x7d8] sm:$0xff]
    %v440 = vld [vmem:[%s4 + $0x7e0] sm:$0xff]
    %v441 = vld [vmem:[%s4 + $0x7e8] sm:$0xff]
    %v442 = vld [vmem:[%s4 + $0x7f0] sm:$0xff]
    %v443 = vld [vmem:[%s4 + $0x7f8] sm:$0xff]
    %v444 = vld [vmem:[%s4 + $0x800] sm:$0xff]
    %v445 = vld [vmem:[%s4 + $0x808] sm:$0xff]
    %v446 = vld [vmem:[%s4 + $0x810] sm:$0xff]
    %v447 = vld [vmem:[%s4 + $0x818] sm:$0xff]
    %v448 = vld [vmem:[%s4 + $0x820] sm:$0xff]
    %v449 = vld [vmem:[%s4 + $0x828] sm:$0xff]
    %v450 = vld [vmem:[%s4 + $0x830] sm:$0xff]
    %v451 = vld [vmem:[%s4 + $0x838] sm:$0xff]
    %v452 = vld [vmem:[%s4 + $0x840] sm:$0xff]
    %v453 = vld [vmem:[%s4 + $0x848] sm:$0xff]
    %v454 = vld [vmem:[%s4 + $0x850] sm:$0xff]
    %v455 = vld [vmem:[%s4 + $0x858] sm:$0xff]
    %v456 = vld [vmem:[%s4 + $0x860] sm:$0xff]
    %v457 = vld [vmem:[%s4 + $0x868] sm:$0xff]
    %v458 = vld [vmem:[%s4 + $0x870] sm:$0xff]
    %v459 = vld [vmem:[%s4 + $0x878] sm:$0xff]
    %v460 = vld [vmem:[%s4 + $0x880] sm:$0xff]
    %v461 = vld [vmem:[%s4 + $0x888] sm:$0xff]
    %v462 = vld [vmem:[%s4 + $0x890] sm:$0xff]
    %v463 = vld [vmem:[%s4 + $0x898] sm:$0xff]
    %v464 = vld [vmem:[%s4 + $0x8a0] sm:$0xff]
    %v465 = vld [vmem:[%s4 + $0x8a8] sm:$0xff]
    %v466 = vld [vmem:[%s4 + $0x8b0] sm:$0xff]
    %v467 = vld [vmem:[%s4 + $0x8b8] sm:$0xff]
    %v468 = vld [vmem:[%s4 + $0x8c0] sm:$0xff]
    %v469 = vld [vmem:[%s4 + $0x8c8] sm:$0xff]
    %v470 = vld [vmem:[%s4 + $0x8d0] sm:$0xff]
    %v471 = vld [vmem:[%s4 + $0x8d8] sm:$0xff]
    %v472 = vld [vmem:[%s4 + $0x8e0] sm:$0xff]
    %v473 = vld [vmem:[%s4 + $0x8e8] sm:$0xff]
    %v474 = vld [vmem:[%s4 + $0x8f0] sm:$0xff]
    %v475 = vld [vmem:[%s4 + $0x8f8] sm:$0xff]
    %v476 = vld [vmem:[%s4 + $0x900] sm:$0xff]
    %v477 = vld [vmem:[%s4 + $0x908] sm:$0xff]
    %v478 = vld [vmem:[%s4 + $0x910] sm:$0xff]
    %v479 = vld [vmem:[%s4 + $0x918] sm:$0xff]
    %v480 = vld [vmem:[%s4 + $0x920] sm:$0xff]
    %v481 = vld [vmem:[%s4 + $0x928] sm:$0xff]
    %v482 = vld [vmem:[%s4 + $0x930] sm:$0xff]
    %v483 = vld [vmem:[%s4 + $0x938] sm:$0xff]
    %v484 = vld [vmem:[%s4 + $0x940] sm:$0xff]
    %v485 = vld [vmem:[%s4 + $0x948] sm:$0xff]
    %v486 = vld [vmem:[%s4 + $0x950] sm:$0xff]
    %v487 = vld [vmem:[%s4 + $0x958] sm:$0xff]
    %v488 = vld [vmem:[%s4 + $0x960] sm:$0xff]
    %v489 = vld [vmem:[%s4 + $0x968] sm:$0xff]
    %v490 = vld [vmem:[%s4 + $0x970] sm:$0xff]
    %v491 = vld [vmem:[%s4 + $0x978] sm:$0xff]
    %v492 = vld [vmem:[%s4 + $0x980] sm:$0xff]
    %v493 = vld [vmem:[%s4 + $0x988] sm:$0xff]
    %v494 = vld [vmem:[%s4 + $0x990] sm:$0xff]
    %v495 = vld [vmem:[%s4 + $0x998] sm:$0xff]
    %v496 = vld [vmem:[%s4 + $0x9a0] sm:$0xff]
    %v497 = vld [vmem:[%s4 + $0x9a8] sm:$0xff]
    %v498 = vld [vmem:[%s4 + $0x9b0] sm:$0xff]
    %v499 = vld [vmem:[%s4 + $0x9b8] sm:$0xff]
    %v500 = vld [vmem:[%s4 + $0x9c0] sm:$0xff]
    %v501 = vld [vmem:[%s4 + $0x9c8] sm:$0xff]
    %v502 = vld [vmem:[%s4 + $0x9d0] sm:$0xff]
    %v503 = vld [vmem:[%s4 + $0x9d8] sm:$0xff]
    %v504 = vld [vmem:[%s4 + $0x9e0] sm:$0xff]
    %v505 = vld [vmem:[%s4 + $0x9e8] sm:$0xff]
    %v506 = vld [vmem:[%s4 + $0x9f0] sm:$0xff]
    %v507 = vld [vmem:[%s4 + $0x9f8] sm:$0xff]
    %v508 = vld [vmem:[%s4 + $0xa00] sm:$0xff]
    %v509 = vld [vmem:[%s4 + $0xa08] sm:$0xff]
    %v510 = vld [vmem:[%s4 + $0xa10] sm:$0xff]
    %v511 = vld [vmem:[%s4 + $0xa18] sm:$0xff]
    %v512 = vld [vmem:[%s4 + $0xa20] sm:$0xff]
    %v513 = vld [vmem:[%s4 + $0xa28] sm:$0xff]
    %v514 = vld [vmem:[%s4 + $0xa30] sm:$0xff]
    %v515 = vld [vmem:[%s4 + $0xa38] sm:$0xff]
    %v516 = vld [vmem:[%s4 + $0xa40] sm:$0xff]
    %v517 = vld [vmem:[%s4 + $0xa48] sm:$0xff]
    %v518 = vld [vmem:[%s4 + $0xa50] sm:$0xff]
    %v519 = vld [vmem:[%s4 + $0xa58] sm:$0xff]
    %v520 = vld [vmem:[%s4 + $0xa60] sm:$0xff]
    %v521 = vld [vmem:[%s4 + $0xa68] sm:$0xff]
    %v522 = vld [vmem:[%s4 + $0xa70] sm:$0xff]
    %v523 = vld [vmem:[%s4 + $0xa78] sm:$0xff]
    %v524 = vld [vmem:[%s4 + $0xa80] sm:$0xff]
    %v525 = vld [vmem:[%s4 + $0xa88] sm:$0xff]
    %v526 = vld [vmem:[%s4 + $0xa90] sm:$0xff]
    %v527 = vld [vmem:[%s4 + $0xa98] sm:$0xff]
    %v528 = vld [vmem:[%s4 + $0xaa0] sm:$0xff]
    %v529 = vld [vmem:[%s4 + $0xaa8] sm:$0xff]
    %v530 = vld [vmem:[%s4 + $0xab0] sm:$0xff]
    %v531 = vld [vmem:[%s4 + $0xab8] sm:$0xff]
    %v532 = vld [vmem:[%s4 + $0xac0] sm:$0xff]
    %v533 = vld [vmem:[%s4 + $0xac8] sm:$0xff]
    %v534 = vld [vmem:[%s4 + $0xad0] sm:$0xff]
    %v535 = vld [vmem:[%s4 + $0xad8] sm:$0xff]
    %v536 = vld [vmem:[%s4 + $0xae0] sm:$0xff]
    %v537 = vld [vmem:[%s4 + $0xae8] sm:$0xff]
    %v538 = vld [vmem:[%s4 + $0xaf0] sm:$0xff]
    %v539 = vld [vmem:[%s4 + $0xaf8] sm:$0xff]
    %v540 = vld [vmem:[%s4 + $0xb00] sm:$0xff]
    %v541 = vld [vmem:[%s4 + $0xb08] sm:$0xff]
    %v542 = vld [vmem:[%s4 + $0xb10] sm:$0xff]
    %v543 = vld [vmem:[%s4 + $0xb18] sm:$0xff]
    %v544 = vld [vmem:[%s4 + $0xb20] sm:$0xff]
    %v545 = vld [vmem:[%s4 + $0xb28] sm:$0xff]
    %v546 = vld [vmem:[%s4 + $0xb30] sm:$0xff]
    %v547 = vld [vmem:[%s4 + $0xb38] sm:$0xff]
    %v548 = vld [vmem:[%s4 + $0xb40] sm:$0xff]
    %v549 = vld [vmem:[%s4 + $0xb48] sm:$0xff]
    %v550 = vld [vmem:[%s4 + $0xb50] sm:$0xff]
    %v551 = vld [vmem:[%s4 + $0xb58] sm:$0xff]
    %v552 = vld [vmem:[%s4 + $0xb60] sm:$0xff]
    %v553 = vld [vmem:[%s4 + $0xb68] sm:$0xff]
    %v554 = vld [vmem:[%s4 + $0xb70] sm:$0xff]
    %v555 = vld [vmem:[%s4 + $0xb78] sm:$0xff]
    %v556 = vld [vmem:[%s4 + $0xb80] sm:$0xff]
    %v557 = vld [vmem:[%s4 + $0xb88] sm:$0xff]
    %v558 = vld [vmem:[%s4 + $0xb90] sm:$0xff]
    %v559 = vld [vmem:[%s4 + $0xb98] sm:$0xff]
    %v560 = vld [vmem:[%s4 + $0xba0] sm:$0xff]
    %v561 = vld [vmem:[%s4 + $0xba8] sm:$0xff]
    %v562 = vld [vmem:[%s4 + $0xbb0] sm:$0xff]
    %v563 = vld [vmem:[%s4 + $0xbb8] sm:$0xff]
    %v564 = vld [vmem:[%s4 + $0xbc0] sm:$0xff]
    %v565 = vld [vmem:[%s4 + $0xbc8] sm:$0xff]
    %v566 = vld [vmem:[%s4 + $0xbd0] sm:$0xff]
    %v567 = vld [vmem:[%s4 + $0xbd8] sm:$0xff]
    %v568 = vld [vmem:[%s4 + $0xbe0] sm:$0xff]
    %v569 = vld [vmem:[%s4 + $0xbe8] sm:$0xff]
    %v570 = vld [vmem:[%s4 + $0xbf0] sm:$0xff]
    %v571 = vld [vmem:[%s4 + $0xbf8] sm:$0xff]
    %v572 = vld [vmem:[%s4 + $0xc00] sm:$0xff]
    %v573 = vld [vmem:[%s4 + $0xc08] sm:$0xff]
    %v574 = vld [vmem:[%s4 + $0xc10] sm:$0xff]
    %v575 = vld [vmem:[%s4 + $0xc18] sm:$0xff]
    %v576 = vld [vmem:[%s4 + $0xc20] sm:$0xff]
    %v577 = vld [vmem:[%s4 + $0xc28] sm:$0xff]
    %v578 = vld [vmem:[%s4 + $0xc30] sm:$0xff]
    %v579 = vld [vmem:[%s4 + $0xc38] sm:$0xff]
    %v580 = vld [vmem:[%s4 + $0xc40] sm:$0xff]
    %v581 = vld [vmem:[%s4 + $0xc48] sm:$0xff]
    %v582 = vld [vmem:[%s4 + $0xc50] sm:$0xff]
    %v583 = vld [vmem:[%s4 + $0xc58] sm:$0xff]
    %v584 = vld [vmem:[%s4 + $0xc60] sm:$0xff]
    %v585 = vld [vmem:[%s4 + $0xc68] sm:$0xff]
    %v586 = vld [vmem:[%s4 + $0xc70] sm:$0xff]
    %v587 = vld [vmem:[%s4 + $0xc78] sm:$0xff]
    %v588 = vld [vmem:[%s4 + $0xc80] sm:$0xff]
    %v589 = vld [vmem:[%s4 + $0xc88] sm:$0xff]
    %v590 = vld [vmem:[%s4 + $0xc90] sm:$0xff]
    %v591 = vld [vmem:[%s4 + $0xc98] sm:$0xff]
    %v592 = vld [vmem:[%s4 + $0xca0] sm:$0xff]
    %v593 = vld [vmem:[%s4 + $0xca8] sm:$0xff]
    %v594 = vld [vmem:[%s4 + $0xcb0] sm:$0xff]
    %v595 = vld [vmem:[%s4 + $0xcb8] sm:$0xff]
    %v596 = vld [vmem:[%s4 + $0xcc0] sm:$0xff]
    %v597 = vld [vmem:[%s4 + $0xcc8] sm:$0xff]
    %v598 = vld [vmem:[%s4 + $0xcd0] sm:$0xff]
    %v599 = vld [vmem:[%s4 + $0xcd8] sm:$0xff]
    %v600 = vld [vmem:[%s4 + $0xce0] sm:$0xff]
    %v601 = vld [vmem:[%s4 + $0xce8] sm:$0xff]
    %v602 = vld [vmem:[%s4 + $0xcf0] sm:$0xff]
    %v603 = vld [vmem:[%s4 + $0xcf8] sm:$0xff]
    %v604 = vld [vmem:[%s4 + $0xd00] sm:$0xff]
    %v605 = vld [vmem:[%s4 + $0xd08] sm:$0xff]
    %v606 = vld [vmem:[%s4 + $0xd10] sm:$0xff]
    %v607 = vld [vmem:[%s4 + $0xd18] sm:$0xff]
    %v608 = vld [vmem:[%s4 + $0xd20] sm:$0xff]
    %v609 = vld [vmem:[%s4 + $0xd28] sm:$0xff]
    %v610 = vld [vmem:[%s4 + $0xd30] sm:$0xff]
    %v611 = vld [vmem:[%s4 + $0xd38] sm:$0xff]
    %v612 = vld [vmem:[%s4 + $0xd40] sm:$0xff]
    %v613 = vld [vmem:[%s4 + $0xd48] sm:$0xff]
    %v614 = vld [vmem:[%s4 + $0xd50] sm:$0xff]
    %v615 = vld [vmem:[%s4 + $0xd58] sm:$0xff]
    %v616 = vld [vmem:[%s4 + $0xd60] sm:$0xff]
    %v617 = vld [vmem:[%s4 + $0xd68] sm:$0xff]
    %v618 = vld [vmem:[%s4 + $0xd70] sm:$0xff]
    %v619 = vld [vmem:[%s4 + $0xd78] sm:$0xff]
    %v620 = vld [vmem:[%s4 + $0xd80] sm:$0xff]
    %v621 = vld [vmem:[%s4 + $0xd88] sm:$0xff]
    %v622 = vld [vmem:[%s4 + $0xd90] sm:$0xff]
    %v623 = vld [vmem:[%s4 + $0xd98] sm:$0xff]
    %v624 = vld [vmem:[%s4 + $0xda0] sm:$0xff]
    %v625 = vld [vmem:[%s4 + $0xda8] sm:$0xff]
    %v626 = vld [vmem:[%s4 + $0xdb0] sm:$0xff]
    %v627 = vld [vmem:[%s4 + $0xdb8] sm:$0xff]
    %v628 = vld [vmem:[%s4 + $0xdc0] sm:$0xff]
    %v629 = vld [vmem:[%s4 + $0xdc8] sm:$0xff]
    %v630 = vld [vmem:[%s4 + $0xdd0] sm:$0xff]
    %v631 = vld [vmem:[%s4 + $0xdd8] sm:$0xff]
    %v632 = vld [vmem:[%s4 + $0xde0] sm:$0xff]
    %v633 = vld [vmem:[%s4 + $0xde8] sm:$0xff]
    %v634 = vld [vmem:[%s4 + $0xdf0] sm:$0xff]
    %v635 = vld [vmem:[%s4 + $0xdf8] sm:$0xff]
    %v636 = vld [vmem:[%s4 + $0xe00] sm:$0xff]
    %v637 = vld [vmem:[%s4 + $0xe08] sm:$0xff]
    %v638 = vld [vmem:[%s4 + $0xe10] sm:$0xff]
    %v639 = vld [vmem:[%s4 + $0xe18] sm:$0xff]
    %v640 = vld [vmem:[%s4 + $0xe20] sm:$0xff]
    %v641 = vld [vmem:[%s4 + $0xe28] sm:$0xff]
    %v642 = vld [vmem:[%s4 + $0xe30] sm:$0xff]
    %v643 = vld [vmem:[%s4 + $0xe38] sm:$0xff]
    %v644 = vld [vmem:[%s4 + $0xe40] sm:$0xff]
    %v645 = vld [vmem:[%s4 + $0xe48] sm:$0xff]
    %v646 = vld [vmem:[%s4 + $0xe50] sm:$0xff]
    %v647 = vld [vmem:[%s4 + $0xe58] sm:$0xff]
    %v648 = vld [vmem:[%s4 + $0xe60] sm:$0xff]
    %v649 = vld [vmem:[%s4 + $0xe68] sm:$0xff]
    %v650 = vld [vmem:[%s4 + $0xe70] sm:$0xff]
    %v651 = vld [vmem:[%s4 + $0xe78] sm:$0xff]
    %v652 = vld [vmem:[%s4 + $0xe80] sm:$0xff]
    %v653 = vld [vmem:[%s4 + $0xe88] sm:$0xff]
    %v654 = vld [vmem:[%s4 + $0xe90] sm:$0xff]
    %v655 = vld [vmem:[%s4 + $0xe98] sm:$0xff]
    %v656 = vld [vmem:[%s4 + $0xea0] sm:$0xff]
    %v657 = vld [vmem:[%s4 + $0xea8] sm:$0xff]
    %v658 = vld [vmem:[%s4 + $0xeb0] sm:$0xff]
    %v659 = vld [vmem:[%s4 + $0xeb8] sm:$0xff]
    %v660 = vld [vmem:[%s4 + $0xec0] sm:$0xff]
    %v661 = vld [vmem:[%s4 + $0xec8] sm:$0xff]
    %v662 = vld [vmem:[%s4 + $0xed0] sm:$0xff]
    %v663 = vld [vmem:[%s4 + $0xed8] sm:$0xff]
    %v664 = vld [vmem:[%s4 + $0xee0] sm:$0xff]
    %v665 = vld [vmem:[%s4 + $0xee8] sm:$0xff]
    %v666 = vld [vmem:[%s4 + $0xef0] sm:$0xff]
    %v667 = vld [vmem:[%s4 + $0xef8] sm:$0xff]
    %v668 = vld [vmem:[%s4 + $0xf00] sm:$0xff]
    %v669 = vld [vmem:[%s4 + $0xf08] sm:$0xff]
    %v670 = vld [vmem:[%s4 + $0xf10] sm:$0xff]
    %v671 = vld [vmem:[%s4 + $0xf18] sm:$0xff]
    %v672 = vld [vmem:[%s4 + $0xf20] sm:$0xff]
    %v673 = vld [vmem:[%s4 + $0xf28] sm:$0xff]
    %v674 = vld [vmem:[%s4 + $0xf30] sm:$0xff]
    %v675 = vld [vmem:[%s4 + $0xf38] sm:$0xff]
    %v676 = vld [vmem:[%s4 + $0xf40] sm:$0xff]
    %v677 = vld [vmem:[%s4 + $0xf48] sm:$0xff]
    %v678 = vld [vmem:[%s4 + $0xf50] sm:$0xff]
    %v679 = vld [vmem:[%s4 + $0xf58] sm:$0xff]
    %v680 = vld [vmem:[%s4 + $0xf60] sm:$0xff]
    %v681 = vld [vmem:[%s4 + $0xf68] sm:$0xff]
    %v682 = vld [vmem:[%s4 + $0xf70] sm:$0xff]
    %v683 = vld [vmem:[%s4 + $0xf78] sm:$0xff]
    %v684 = vld [vmem:[%s4 + $0xf80] sm:$0xff]
    %v685 = vld [vmem:[%s4 + $0xf88] sm:$0xff]
    %v686 = vld [vmem:[%s4 + $0xf90] sm:$0xff]
    %v687 = vld [vmem:[%s4 + $0xf98] sm:$0xff]
    %v688 = vld [vmem:[%s4 + $0xfa0] sm:$0xff]
    %v689 = vld [vmem:[%s4 + $0xfa8] sm:$0xff]
    %v690 = vld [vmem:[%s4 + $0xfb0] sm:$0xff]
    %v691 = vld [vmem:[%s4 + $0xfb8] sm:$0xff]
    %v692 = vld [vmem:[%s4 + $0xfc0] sm:$0xff]
    %v693 = vld [vmem:[%s4 + $0xfc8] sm:$0xff]
    %v694 = vld [vmem:[%s4 + $0xfd0] sm:$0xff]
    %v695 = vld [vmem:[%s4 + $0xfd8] sm:$0xff]
    %v696 = vld [vmem:[%s4 + $0xfe0] sm:$0xff]
    %v697 = vld [vmem:[%s4 + $0xfe8] sm:$0xff]
    %v698 = vld [vmem:[%s4 + $0xff0] sm:$0xff]
    %v699 = vld [vmem:[%s4 + $0xff8] sm:$0xff]
    %v700 = vld [vmem:[%s5] sm:$0xff]
    %v701 = vld [vmem:[%s5 + $0x8] sm:$0xff]
    %v704 = vperm.slane %v700, 0
    %v705 = vperm.slane %v700, 1
    %v706 = vperm.slane %v700, 2
    %v707 = vperm.slane %v700, 3
    %v708 = vperm.slane %v700, 4
    %v709 = vperm.slane %v700, 5
    %v710 = vperm.slane %v700, 6
    %v711 = vperm.slane %v700, 7
    %v712 = vperm.slane %v701, 0
    %v713 = vperm.slane %v701, 1
    %v714 = vperm.slane %v701, 2
    %v715 = vperm.slane %v701, 3
    %v716 = vperm.slane %v701, 4
    %v717 = vperm.slane %v701, 5
    %v718 = vperm.slane %v701, 6
    %v719 = vperm.slane %v701, 7
    %v1248 = vunpack.c.l.b16 %v188
    %v1249 = vunpack.c.h.b16 %v188
    %v1250 = vunpack.c.l.b16 %v189
    %v1251 = vunpack.c.h.b16 %v189
    %v1252 = vunpack.c.l.b16 %v190
    %v1253 = vunpack.c.h.b16 %v190
    %v1254 = vunpack.c.l.b16 %v191
    %v1255 = vunpack.c.h.b16 %v191
    %v1256 = vunpack.c.l.b16 %v192
    %v1257 = vunpack.c.h.b16 %v192
    %v1258 = vunpack.c.l.b16 %v193
    %v1259 = vunpack.c.h.b16 %v193
    %v1260 = vunpack.c.l.b16 %v194
    %v1261 = vunpack.c.h.b16 %v194
    %v1262 = vunpack.c.l.b16 %v195
    %v1263 = vunpack.c.h.b16 %v195
    %v1264 = vunpack.c.l.b16 %v196
    %v1265 = vunpack.c.h.b16 %v196
    %v1266 = vunpack.c.l.b16 %v197
    %v1267 = vunpack.c.h.b16 %v197
    %v1268 = vunpack.c.l.b16 %v198
    %v1269 = vunpack.c.h.b16 %v198
    %v1270 = vunpack.c.l.b16 %v199
    %v1271 = vunpack.c.h.b16 %v199
    %v1272 = vunpack.c.l.b16 %v200
    %v1273 = vunpack.c.h.b16 %v200
    %v1274 = vunpack.c.l.b16 %v201
    %v1275 = vunpack.c.h.b16 %v201
    %v1276 = vunpack.c.l.b16 %v202
    %v1277 = vunpack.c.h.b16 %v202
    %v1278 = vunpack.c.l.b16 %v203
    %v1279 = vunpack.c.h.b16 %v203
    %v1280 = vunpack.c.l.b16 %v204
    %v1281 = vunpack.c.h.b16 %v204
    %v1282 = vunpack.c.l.b16 %v205
    %v1283 = vunpack.c.h.b16 %v205
    %v1284 = vunpack.c.l.b16 %v206
    %v1285 = vunpack.c.h.b16 %v206
    %v1286 = vunpack.c.l.b16 %v207
    %v1287 = vunpack.c.h.b16 %v207
    %v1288 = vunpack.c.l.b16 %v208
    %v1289 = vunpack.c.h.b16 %v208
    %v1290 = vunpack.c.l.b16 %v209
    %v1291 = vunpack.c.h.b16 %v209
    %v1292 = vunpack.c.l.b16 %v210
    %v1293 = vunpack.c.h.b16 %v210
    %v1294 = vunpack.c.l.b16 %v211
    %v1295 = vunpack.c.h.b16 %v211
    %v1296 = vunpack.c.l.b16 %v212
    %v1297 = vunpack.c.h.b16 %v212
    %v1298 = vunpack.c.l.b16 %v213
    %v1299 = vunpack.c.h.b16 %v213
    %v1300 = vunpack.c.l.b16 %v214
    %v1301 = vunpack.c.h.b16 %v214
    %v1302 = vunpack.c.l.b16 %v215
    %v1303 = vunpack.c.h.b16 %v215
    %v1304 = vunpack.c.l.b16 %v216
    %v1305 = vunpack.c.h.b16 %v216
    %v1306 = vunpack.c.l.b16 %v217
    %v1307 = vunpack.c.h.b16 %v217
    %v1308 = vunpack.c.l.b16 %v218
    %v1309 = vunpack.c.h.b16 %v218
    %v1310 = vunpack.c.l.b16 %v219
    %v1311 = vunpack.c.h.b16 %v219
    %v1312 = vunpack.c.l.b16 %v220
    %v1313 = vunpack.c.h.b16 %v220
    %v1314 = vunpack.c.l.b16 %v221
    %v1315 = vunpack.c.h.b16 %v221
    %v1316 = vunpack.c.l.b16 %v222
    %v1317 = vunpack.c.h.b16 %v222
    %v1318 = vunpack.c.l.b16 %v223
    %v1319 = vunpack.c.h.b16 %v223
    %v1320 = vunpack.c.l.b16 %v224
    %v1321 = vunpack.c.h.b16 %v224
    %v1322 = vunpack.c.l.b16 %v225
    %v1323 = vunpack.c.h.b16 %v225
    %v1324 = vunpack.c.l.b16 %v226
    %v1325 = vunpack.c.h.b16 %v226
    %v1326 = vunpack.c.l.b16 %v227
    %v1327 = vunpack.c.h.b16 %v227
    %v1328 = vunpack.c.l.b16 %v228
    %v1329 = vunpack.c.h.b16 %v228
    %v1330 = vunpack.c.l.b16 %v229
    %v1331 = vunpack.c.h.b16 %v229
    %v1332 = vunpack.c.l.b16 %v230
    %v1333 = vunpack.c.h.b16 %v230
    %v1334 = vunpack.c.l.b16 %v231
    %v1335 = vunpack.c.h.b16 %v231
    %v1336 = vunpack.c.l.b16 %v232
    %v1337 = vunpack.c.h.b16 %v232
    %v1338 = vunpack.c.l.b16 %v233
    %v1339 = vunpack.c.h.b16 %v233
    %v1340 = vunpack.c.l.b16 %v234
    %v1341 = vunpack.c.h.b16 %v234
    %v1342 = vunpack.c.l.b16 %v235
    %v1343 = vunpack.c.h.b16 %v235
    %v1344 = vunpack.c.l.b16 %v236
    %v1345 = vunpack.c.h.b16 %v236
    %v1346 = vunpack.c.l.b16 %v237
    %v1347 = vunpack.c.h.b16 %v237
    %v1348 = vunpack.c.l.b16 %v238
    %v1349 = vunpack.c.h.b16 %v238
    %v1350 = vunpack.c.l.b16 %v239
    %v1351 = vunpack.c.h.b16 %v239
    %v1352 = vunpack.c.l.b16 %v240
    %v1353 = vunpack.c.h.b16 %v240
    %v1354 = vunpack.c.l.b16 %v241
    %v1355 = vunpack.c.h.b16 %v241
    %v1356 = vunpack.c.l.b16 %v242
    %v1357 = vunpack.c.h.b16 %v242
    %v1358 = vunpack.c.l.b16 %v243
    %v1359 = vunpack.c.h.b16 %v243
    %v1360 = vunpack.c.l.b16 %v244
    %v1361 = vunpack.c.h.b16 %v244
    %v1362 = vunpack.c.l.b16 %v245
    %v1363 = vunpack.c.h.b16 %v245
    %v1364 = vunpack.c.l.b16 %v246
    %v1365 = vunpack.c.h.b16 %v246
    %v1366 = vunpack.c.l.b16 %v247
    %v1367 = vunpack.c.h.b16 %v247
    %v1368 = vunpack.c.l.b16 %v248
    %v1369 = vunpack.c.h.b16 %v248
    %v1370 = vunpack.c.l.b16 %v249
    %v1371 = vunpack.c.h.b16 %v249
    %v1372 = vunpack.c.l.b16 %v250
    %v1373 = vunpack.c.h.b16 %v250
    %v1374 = vunpack.c.l.b16 %v251
    %v1375 = vunpack.c.h.b16 %v251
    %v1376 = vunpack.c.l.b16 %v252
    %v1377 = vunpack.c.h.b16 %v252
    %v1378 = vunpack.c.l.b16 %v253
    %v1379 = vunpack.c.h.b16 %v253
    %v1380 = vunpack.c.l.b16 %v254
    %v1381 = vunpack.c.h.b16 %v254
    %v1382 = vunpack.c.l.b16 %v255
    %v1383 = vunpack.c.h.b16 %v255
    %v1384 = vunpack.c.l.b16 %v256
    %v1385 = vunpack.c.h.b16 %v256
    %v1386 = vunpack.c.l.b16 %v257
    %v1387 = vunpack.c.h.b16 %v257
    %v1388 = vunpack.c.l.b16 %v258
    %v1389 = vunpack.c.h.b16 %v258
    %v1390 = vunpack.c.l.b16 %v259
    %v1391 = vunpack.c.h.b16 %v259
    %v1392 = vunpack.c.l.b16 %v260
    %v1393 = vunpack.c.h.b16 %v260
    %v1394 = vunpack.c.l.b16 %v261
    %v1395 = vunpack.c.h.b16 %v261
    %v1396 = vunpack.c.l.b16 %v262
    %v1397 = vunpack.c.h.b16 %v262
    %v1398 = vunpack.c.l.b16 %v263
    %v1399 = vunpack.c.h.b16 %v263
    %v1400 = vunpack.c.l.b16 %v264
    %v1401 = vunpack.c.h.b16 %v264
    %v1402 = vunpack.c.l.b16 %v265
    %v1403 = vunpack.c.h.b16 %v265
    %v1404 = vunpack.c.l.b16 %v266
    %v1405 = vunpack.c.h.b16 %v266
    %v1406 = vunpack.c.l.b16 %v267
    %v1407 = vunpack.c.h.b16 %v267
    %v1408 = vunpack.c.l.b16 %v268
    %v1409 = vunpack.c.h.b16 %v268
    %v1410 = vunpack.c.l.b16 %v269
    %v1411 = vunpack.c.h.b16 %v269
    %v1412 = vunpack.c.l.b16 %v270
    %v1413 = vunpack.c.h.b16 %v270
    %v1414 = vunpack.c.l.b16 %v271
    %v1415 = vunpack.c.h.b16 %v271
    %v1416 = vunpack.c.l.b16 %v272
    %v1417 = vunpack.c.h.b16 %v272
    %v1418 = vunpack.c.l.b16 %v273
    %v1419 = vunpack.c.h.b16 %v273
    %v1420 = vunpack.c.l.b16 %v274
    %v1421 = vunpack.c.h.b16 %v274
    %v1422 = vunpack.c.l.b16 %v275
    %v1423 = vunpack.c.h.b16 %v275
    %v1424 = vunpack.c.l.b16 %v276
    %v1425 = vunpack.c.h.b16 %v276
    %v1426 = vunpack.c.l.b16 %v277
    %v1427 = vunpack.c.h.b16 %v277
    %v1428 = vunpack.c.l.b16 %v278
    %v1429 = vunpack.c.h.b16 %v278
    %v1430 = vunpack.c.l.b16 %v279
    %v1431 = vunpack.c.h.b16 %v279
    %v1432 = vunpack.c.l.b16 %v280
    %v1433 = vunpack.c.h.b16 %v280
    %v1434 = vunpack.c.l.b16 %v281
    %v1435 = vunpack.c.h.b16 %v281
    %v1436 = vunpack.c.l.b16 %v282
    %v1437 = vunpack.c.h.b16 %v282
    %v1438 = vunpack.c.l.b16 %v283
    %v1439 = vunpack.c.h.b16 %v283
    %v1440 = vunpack.c.l.b16 %v284
    %v1441 = vunpack.c.h.b16 %v284
    %v1442 = vunpack.c.l.b16 %v285
    %v1443 = vunpack.c.h.b16 %v285
    %v1444 = vunpack.c.l.b16 %v286
    %v1445 = vunpack.c.h.b16 %v286
    %v1446 = vunpack.c.l.b16 %v287
    %v1447 = vunpack.c.h.b16 %v287
    %v1448 = vunpack.c.l.b16 %v288
    %v1449 = vunpack.c.h.b16 %v288
    %v1450 = vunpack.c.l.b16 %v289
    %v1451 = vunpack.c.h.b16 %v289
    %v1452 = vunpack.c.l.b16 %v290
    %v1453 = vunpack.c.h.b16 %v290
    %v1454 = vunpack.c.l.b16 %v291
    %v1455 = vunpack.c.h.b16 %v291
    %v1456 = vunpack.c.l.b16 %v292
    %v1457 = vunpack.c.h.b16 %v292
    %v1458 = vunpack.c.l.b16 %v293
    %v1459 = vunpack.c.h.b16 %v293
    %v1460 = vunpack.c.l.b16 %v294
    %v1461 = vunpack.c.h.b16 %v294
    %v1462 = vunpack.c.l.b16 %v295
    %v1463 = vunpack.c.h.b16 %v295
    %v1464 = vunpack.c.l.b16 %v296
    %v1465 = vunpack.c.h.b16 %v296
    %v1466 = vunpack.c.l.b16 %v297
    %v1467 = vunpack.c.h.b16 %v297
    %v1468 = vunpack.c.l.b16 %v298
    %v1469 = vunpack.c.h.b16 %v298
    %v1470 = vunpack.c.l.b16 %v299
    %v1471 = vunpack.c.h.b16 %v299
    %v1472 = vunpack.c.l.b16 %v300
    %v1473 = vunpack.c.h.b16 %v300
    %v1474 = vunpack.c.l.b16 %v301
    %v1475 = vunpack.c.h.b16 %v301
    %v1476 = vunpack.c.l.b16 %v302
    %v1477 = vunpack.c.h.b16 %v302
    %v1478 = vunpack.c.l.b16 %v303
    %v1479 = vunpack.c.h.b16 %v303
    %v1480 = vunpack.c.l.b16 %v304
    %v1481 = vunpack.c.h.b16 %v304
    %v1482 = vunpack.c.l.b16 %v305
    %v1483 = vunpack.c.h.b16 %v305
    %v1484 = vunpack.c.l.b16 %v306
    %v1485 = vunpack.c.h.b16 %v306
    %v1486 = vunpack.c.l.b16 %v307
    %v1487 = vunpack.c.h.b16 %v307
    %v1488 = vunpack.c.l.b16 %v308
    %v1489 = vunpack.c.h.b16 %v308
    %v1490 = vunpack.c.l.b16 %v309
    %v1491 = vunpack.c.h.b16 %v309
    %v1492 = vunpack.c.l.b16 %v310
    %v1493 = vunpack.c.h.b16 %v310
    %v1494 = vunpack.c.l.b16 %v311
    %v1495 = vunpack.c.h.b16 %v311
    %v1496 = vunpack.c.l.b16 %v312
    %v1497 = vunpack.c.h.b16 %v312
    %v1498 = vunpack.c.l.b16 %v313
    %v1499 = vunpack.c.h.b16 %v313
    %v1500 = vunpack.c.l.b16 %v314
    %v1501 = vunpack.c.h.b16 %v314
    %v1502 = vunpack.c.l.b16 %v315
    %v1503 = vunpack.c.h.b16 %v315
    %v1504 = vunpack.c.l.b16 %v316
    %v1505 = vunpack.c.h.b16 %v316
    %v1506 = vunpack.c.l.b16 %v317
    %v1507 = vunpack.c.h.b16 %v317
    %v1508 = vunpack.c.l.b16 %v318
    %v1509 = vunpack.c.h.b16 %v318
    %v1510 = vunpack.c.l.b16 %v319
    %v1511 = vunpack.c.h.b16 %v319
    %v1512 = vunpack.c.l.b16 %v320
    %v1513 = vunpack.c.h.b16 %v320
    %v1514 = vunpack.c.l.b16 %v321
    %v1515 = vunpack.c.h.b16 %v321
    %v1516 = vunpack.c.l.b16 %v322
    %v1517 = vunpack.c.h.b16 %v322
    %v1518 = vunpack.c.l.b16 %v323
    %v1519 = vunpack.c.h.b16 %v323
    %v1520 = vunpack.c.l.b16 %v324
    %v1521 = vunpack.c.h.b16 %v324
    %v1522 = vunpack.c.l.b16 %v325
    %v1523 = vunpack.c.h.b16 %v325
    %v1524 = vunpack.c.l.b16 %v326
    %v1525 = vunpack.c.h.b16 %v326
    %v1526 = vunpack.c.l.b16 %v327
    %v1527 = vunpack.c.h.b16 %v327
    %v1528 = vunpack.c.l.b16 %v328
    %v1529 = vunpack.c.h.b16 %v328
    %v1530 = vunpack.c.l.b16 %v329
    %v1531 = vunpack.c.h.b16 %v329
    %v1532 = vunpack.c.l.b16 %v330
    %v1533 = vunpack.c.h.b16 %v330
    %v1534 = vunpack.c.l.b16 %v331
    %v1535 = vunpack.c.h.b16 %v331
    %v1536 = vunpack.c.l.b16 %v332
    %v1537 = vunpack.c.h.b16 %v332
    %v1538 = vunpack.c.l.b16 %v333
    %v1539 = vunpack.c.h.b16 %v333
    %v1540 = vunpack.c.l.b16 %v334
    %v1541 = vunpack.c.h.b16 %v334
    %v1542 = vunpack.c.l.b16 %v335
    %v1543 = vunpack.c.h.b16 %v335
    %v1544 = vunpack.c.l.b16 %v336
    %v1545 = vunpack.c.h.b16 %v336
    %v1546 = vunpack.c.l.b16 %v337
    %v1547 = vunpack.c.h.b16 %v337
    %v1548 = vunpack.c.l.b16 %v338
    %v1549 = vunpack.c.h.b16 %v338
    %v1550 = vunpack.c.l.b16 %v339
    %v1551 = vunpack.c.h.b16 %v339
    %v1552 = vunpack.c.l.b16 %v340
    %v1553 = vunpack.c.h.b16 %v340
    %v1554 = vunpack.c.l.b16 %v341
    %v1555 = vunpack.c.h.b16 %v341
    %v1556 = vunpack.c.l.b16 %v342
    %v1557 = vunpack.c.h.b16 %v342
    %v1558 = vunpack.c.l.b16 %v343
    %v1559 = vunpack.c.h.b16 %v343
    %v1560 = vunpack.c.l.b16 %v344
    %v1561 = vunpack.c.h.b16 %v344
    %v1562 = vunpack.c.l.b16 %v345
    %v1563 = vunpack.c.h.b16 %v345
    %v1564 = vunpack.c.l.b16 %v346
    %v1565 = vunpack.c.h.b16 %v346
    %v1566 = vunpack.c.l.b16 %v347
    %v1567 = vunpack.c.h.b16 %v347
    %v1568 = vunpack.c.l.b16 %v348
    %v1569 = vunpack.c.h.b16 %v348
    %v1570 = vunpack.c.l.b16 %v349
    %v1571 = vunpack.c.h.b16 %v349
    %v1572 = vunpack.c.l.b16 %v350
    %v1573 = vunpack.c.h.b16 %v350
    %v1574 = vunpack.c.l.b16 %v351
    %v1575 = vunpack.c.h.b16 %v351
    %v1576 = vunpack.c.l.b16 %v352
    %v1577 = vunpack.c.h.b16 %v352
    %v1578 = vunpack.c.l.b16 %v353
    %v1579 = vunpack.c.h.b16 %v353
    %v1580 = vunpack.c.l.b16 %v354
    %v1581 = vunpack.c.h.b16 %v354
    %v1582 = vunpack.c.l.b16 %v355
    %v1583 = vunpack.c.h.b16 %v355
    %v1584 = vunpack.c.l.b16 %v356
    %v1585 = vunpack.c.h.b16 %v356
    %v1586 = vunpack.c.l.b16 %v357
    %v1587 = vunpack.c.h.b16 %v357
    %v1588 = vunpack.c.l.b16 %v358
    %v1589 = vunpack.c.h.b16 %v358
    %v1590 = vunpack.c.l.b16 %v359
    %v1591 = vunpack.c.h.b16 %v359
    %v1592 = vunpack.c.l.b16 %v360
    %v1593 = vunpack.c.h.b16 %v360
    %v1594 = vunpack.c.l.b16 %v361
    %v1595 = vunpack.c.h.b16 %v361
    %v1596 = vunpack.c.l.b16 %v362
    %v1597 = vunpack.c.h.b16 %v362
    %v1598 = vunpack.c.l.b16 %v363
    %v1599 = vunpack.c.h.b16 %v363
    %v1600 = vunpack.c.l.b16 %v364
    %v1601 = vunpack.c.h.b16 %v364
    %v1602 = vunpack.c.l.b16 %v365
    %v1603 = vunpack.c.h.b16 %v365
    %v1604 = vunpack.c.l.b16 %v366
    %v1605 = vunpack.c.h.b16 %v366
    %v1606 = vunpack.c.l.b16 %v367
    %v1607 = vunpack.c.h.b16 %v367
    %v1608 = vunpack.c.l.b16 %v368
    %v1609 = vunpack.c.h.b16 %v368
    %v1610 = vunpack.c.l.b16 %v369
    %v1611 = vunpack.c.h.b16 %v369
    %v1612 = vunpack.c.l.b16 %v370
    %v1613 = vunpack.c.h.b16 %v370
    %v1614 = vunpack.c.l.b16 %v371
    %v1615 = vunpack.c.h.b16 %v371
    %v1616 = vunpack.c.l.b16 %v372
    %v1617 = vunpack.c.h.b16 %v372
    %v1618 = vunpack.c.l.b16 %v373
    %v1619 = vunpack.c.h.b16 %v373
    %v1620 = vunpack.c.l.b16 %v374
    %v1621 = vunpack.c.h.b16 %v374
    %v1622 = vunpack.c.l.b16 %v375
    %v1623 = vunpack.c.h.b16 %v375
    %v1624 = vunpack.c.l.b16 %v376
    %v1625 = vunpack.c.h.b16 %v376
    %v1626 = vunpack.c.l.b16 %v377
    %v1627 = vunpack.c.h.b16 %v377
    %v1628 = vunpack.c.l.b16 %v378
    %v1629 = vunpack.c.h.b16 %v378
    %v1630 = vunpack.c.l.b16 %v379
    %v1631 = vunpack.c.h.b16 %v379
    %v1632 = vunpack.c.l.b16 %v380
    %v1633 = vunpack.c.h.b16 %v380
    %v1634 = vunpack.c.l.b16 %v381
    %v1635 = vunpack.c.h.b16 %v381
    %v1636 = vunpack.c.l.b16 %v382
    %v1637 = vunpack.c.h.b16 %v382
    %v1638 = vunpack.c.l.b16 %v383
    %v1639 = vunpack.c.h.b16 %v383
    %v1640 = vunpack.c.l.b16 %v384
    %v1641 = vunpack.c.h.b16 %v384
    %v1642 = vunpack.c.l.b16 %v385
    %v1643 = vunpack.c.h.b16 %v385
    %v1644 = vunpack.c.l.b16 %v386
    %v1645 = vunpack.c.h.b16 %v386
    %v1646 = vunpack.c.l.b16 %v387
    %v1647 = vunpack.c.h.b16 %v387
    %v1648 = vunpack.c.l.b16 %v388
    %v1649 = vunpack.c.h.b16 %v388
    %v1650 = vunpack.c.l.b16 %v389
    %v1651 = vunpack.c.h.b16 %v389
    %v1652 = vunpack.c.l.b16 %v390
    %v1653 = vunpack.c.h.b16 %v390
    %v1654 = vunpack.c.l.b16 %v391
    %v1655 = vunpack.c.h.b16 %v391
    %v1656 = vunpack.c.l.b16 %v392
    %v1657 = vunpack.c.h.b16 %v392
    %v1658 = vunpack.c.l.b16 %v393
    %v1659 = vunpack.c.h.b16 %v393
    %v1660 = vunpack.c.l.b16 %v394
    %v1661 = vunpack.c.h.b16 %v394
    %v1662 = vunpack.c.l.b16 %v395
    %v1663 = vunpack.c.h.b16 %v395
    %v1664 = vunpack.c.l.b16 %v396
    %v1665 = vunpack.c.h.b16 %v396
    %v1666 = vunpack.c.l.b16 %v397
    %v1667 = vunpack.c.h.b16 %v397
    %v1668 = vunpack.c.l.b16 %v398
    %v1669 = vunpack.c.h.b16 %v398
    %v1670 = vunpack.c.l.b16 %v399
    %v1671 = vunpack.c.h.b16 %v399
    %v1672 = vunpack.c.l.b16 %v400
    %v1673 = vunpack.c.h.b16 %v400
    %v1674 = vunpack.c.l.b16 %v401
    %v1675 = vunpack.c.h.b16 %v401
    %v1676 = vunpack.c.l.b16 %v402
    %v1677 = vunpack.c.h.b16 %v402
    %v1678 = vunpack.c.l.b16 %v403
    %v1679 = vunpack.c.h.b16 %v403
    %v1680 = vunpack.c.l.b16 %v404
    %v1681 = vunpack.c.h.b16 %v404
    %v1682 = vunpack.c.l.b16 %v405
    %v1683 = vunpack.c.h.b16 %v405
    %v1684 = vunpack.c.l.b16 %v406
    %v1685 = vunpack.c.h.b16 %v406
    %v1686 = vunpack.c.l.b16 %v407
    %v1687 = vunpack.c.h.b16 %v407
    %v1688 = vunpack.c.l.b16 %v408
    %v1689 = vunpack.c.h.b16 %v408
    %v1690 = vunpack.c.l.b16 %v409
    %v1691 = vunpack.c.h.b16 %v409
    %v1692 = vunpack.c.l.b16 %v410
    %v1693 = vunpack.c.h.b16 %v410
    %v1694 = vunpack.c.l.b16 %v411
    %v1695 = vunpack.c.h.b16 %v411
    %v1696 = vunpack.c.l.b16 %v412
    %v1697 = vunpack.c.h.b16 %v412
    %v1698 = vunpack.c.l.b16 %v413
    %v1699 = vunpack.c.h.b16 %v413
    %v1700 = vunpack.c.l.b16 %v414
    %v1701 = vunpack.c.h.b16 %v414
    %v1702 = vunpack.c.l.b16 %v415
    %v1703 = vunpack.c.h.b16 %v415
    %v1704 = vunpack.c.l.b16 %v416
    %v1705 = vunpack.c.h.b16 %v416
    %v1706 = vunpack.c.l.b16 %v417
    %v1707 = vunpack.c.h.b16 %v417
    %v1708 = vunpack.c.l.b16 %v418
    %v1709 = vunpack.c.h.b16 %v418
    %v1710 = vunpack.c.l.b16 %v419
    %v1711 = vunpack.c.h.b16 %v419
    %v1712 = vunpack.c.l.b16 %v420
    %v1713 = vunpack.c.h.b16 %v420
    %v1714 = vunpack.c.l.b16 %v421
    %v1715 = vunpack.c.h.b16 %v421
    %v1716 = vunpack.c.l.b16 %v422
    %v1717 = vunpack.c.h.b16 %v422
    %v1718 = vunpack.c.l.b16 %v423
    %v1719 = vunpack.c.h.b16 %v423
    %v1720 = vunpack.c.l.b16 %v424
    %v1721 = vunpack.c.h.b16 %v424
    %v1722 = vunpack.c.l.b16 %v425
    %v1723 = vunpack.c.h.b16 %v425
    %v1724 = vunpack.c.l.b16 %v426
    %v1725 = vunpack.c.h.b16 %v426
    %v1726 = vunpack.c.l.b16 %v427
    %v1727 = vunpack.c.h.b16 %v427
    %v1728 = vunpack.c.l.b16 %v428
    %v1729 = vunpack.c.h.b16 %v428
    %v1730 = vunpack.c.l.b16 %v429
    %v1731 = vunpack.c.h.b16 %v429
    %v1732 = vunpack.c.l.b16 %v430
    %v1733 = vunpack.c.h.b16 %v430
    %v1734 = vunpack.c.l.b16 %v431
    %v1735 = vunpack.c.h.b16 %v431
    %v1736 = vunpack.c.l.b16 %v432
    %v1737 = vunpack.c.h.b16 %v432
    %v1738 = vunpack.c.l.b16 %v433
    %v1739 = vunpack.c.h.b16 %v433
    %v1740 = vunpack.c.l.b16 %v434
    %v1741 = vunpack.c.h.b16 %v434
    %v1742 = vunpack.c.l.b16 %v435
    %v1743 = vunpack.c.h.b16 %v435
    %v1744 = vunpack.c.l.b16 %v436
    %v1745 = vunpack.c.h.b16 %v436
    %v1746 = vunpack.c.l.b16 %v437
    %v1747 = vunpack.c.h.b16 %v437
    %v1748 = vunpack.c.l.b16 %v438
    %v1749 = vunpack.c.h.b16 %v438
    %v1750 = vunpack.c.l.b16 %v439
    %v1751 = vunpack.c.h.b16 %v439
    %v1752 = vunpack.c.l.b16 %v440
    %v1753 = vunpack.c.h.b16 %v440
    %v1754 = vunpack.c.l.b16 %v441
    %v1755 = vunpack.c.h.b16 %v441
    %v1756 = vunpack.c.l.b16 %v442
    %v1757 = vunpack.c.h.b16 %v442
    %v1758 = vunpack.c.l.b16 %v443
    %v1759 = vunpack.c.h.b16 %v443
    %v1760 = vunpack.c.l.b16 %v444
    %v1761 = vunpack.c.h.b16 %v444
    %v1762 = vunpack.c.l.b16 %v445
    %v1763 = vunpack.c.h.b16 %v445
    %v1764 = vunpack.c.l.b16 %v446
    %v1765 = vunpack.c.h.b16 %v446
    %v1766 = vunpack.c.l.b16 %v447
    %v1767 = vunpack.c.h.b16 %v447
    %v1768 = vunpack.c.l.b16 %v448
    %v1769 = vunpack.c.h.b16 %v448
    %v1770 = vunpack.c.l.b16 %v449
    %v1771 = vunpack.c.h.b16 %v449
    %v1772 = vunpack.c.l.b16 %v450
    %v1773 = vunpack.c.h.b16 %v450
    %v1774 = vunpack.c.l.b16 %v451
    %v1775 = vunpack.c.h.b16 %v451
    %v1776 = vunpack.c.l.b16 %v452
    %v1777 = vunpack.c.h.b16 %v452
    %v1778 = vunpack.c.l.b16 %v453
    %v1779 = vunpack.c.h.b16 %v453
    %v1780 = vunpack.c.l.b16 %v454
    %v1781 = vunpack.c.h.b16 %v454
    %v1782 = vunpack.c.l.b16 %v455
    %v1783 = vunpack.c.h.b16 %v455
    %v1784 = vunpack.c.l.b16 %v456
    %v1785 = vunpack.c.h.b16 %v456
    %v1786 = vunpack.c.l.b16 %v457
    %v1787 = vunpack.c.h.b16 %v457
    %v1788 = vunpack.c.l.b16 %v458
    %v1789 = vunpack.c.h.b16 %v458
    %v1790 = vunpack.c.l.b16 %v459
    %v1791 = vunpack.c.h.b16 %v459
    %v1792 = vunpack.c.l.b16 %v460
    %v1793 = vunpack.c.h.b16 %v460
    %v1794 = vunpack.c.l.b16 %v461
    %v1795 = vunpack.c.h.b16 %v461
    %v1796 = vunpack.c.l.b16 %v462
    %v1797 = vunpack.c.h.b16 %v462
    %v1798 = vunpack.c.l.b16 %v463
    %v1799 = vunpack.c.h.b16 %v463
    %v1800 = vunpack.c.l.b16 %v464
    %v1801 = vunpack.c.h.b16 %v464
    %v1802 = vunpack.c.l.b16 %v465
    %v1803 = vunpack.c.h.b16 %v465
    %v1804 = vunpack.c.l.b16 %v466
    %v1805 = vunpack.c.h.b16 %v466
    %v1806 = vunpack.c.l.b16 %v467
    %v1807 = vunpack.c.h.b16 %v467
    %v1808 = vunpack.c.l.b16 %v468
    %v1809 = vunpack.c.h.b16 %v468
    %v1810 = vunpack.c.l.b16 %v469
    %v1811 = vunpack.c.h.b16 %v469
    %v1812 = vunpack.c.l.b16 %v470
    %v1813 = vunpack.c.h.b16 %v470
    %v1814 = vunpack.c.l.b16 %v471
    %v1815 = vunpack.c.h.b16 %v471
    %v1816 = vunpack.c.l.b16 %v472
    %v1817 = vunpack.c.h.b16 %v472
    %v1818 = vunpack.c.l.b16 %v473
    %v1819 = vunpack.c.h.b16 %v473
    %v1820 = vunpack.c.l.b16 %v474
    %v1821 = vunpack.c.h.b16 %v474
    %v1822 = vunpack.c.l.b16 %v475
    %v1823 = vunpack.c.h.b16 %v475
    %v1824 = vunpack.c.l.b16 %v476
    %v1825 = vunpack.c.h.b16 %v476
    %v1826 = vunpack.c.l.b16 %v477
    %v1827 = vunpack.c.h.b16 %v477
    %v1828 = vunpack.c.l.b16 %v478
    %v1829 = vunpack.c.h.b16 %v478
    %v1830 = vunpack.c.l.b16 %v479
    %v1831 = vunpack.c.h.b16 %v479
    %v1832 = vunpack.c.l.b16 %v480
    %v1833 = vunpack.c.h.b16 %v480
    %v1834 = vunpack.c.l.b16 %v481
    %v1835 = vunpack.c.h.b16 %v481
    %v1836 = vunpack.c.l.b16 %v482
    %v1837 = vunpack.c.h.b16 %v482
    %v1838 = vunpack.c.l.b16 %v483
    %v1839 = vunpack.c.h.b16 %v483
    %v1840 = vunpack.c.l.b16 %v484
    %v1841 = vunpack.c.h.b16 %v484
    %v1842 = vunpack.c.l.b16 %v485
    %v1843 = vunpack.c.h.b16 %v485
    %v1844 = vunpack.c.l.b16 %v486
    %v1845 = vunpack.c.h.b16 %v486
    %v1846 = vunpack.c.l.b16 %v487
    %v1847 = vunpack.c.h.b16 %v487
    %v1848 = vunpack.c.l.b16 %v488
    %v1849 = vunpack.c.h.b16 %v488
    %v1850 = vunpack.c.l.b16 %v489
    %v1851 = vunpack.c.h.b16 %v489
    %v1852 = vunpack.c.l.b16 %v490
    %v1853 = vunpack.c.h.b16 %v490
    %v1854 = vunpack.c.l.b16 %v491
    %v1855 = vunpack.c.h.b16 %v491
    %v1856 = vunpack.c.l.b16 %v492
    %v1857 = vunpack.c.h.b16 %v492
    %v1858 = vunpack.c.l.b16 %v493
    %v1859 = vunpack.c.h.b16 %v493
    %v1860 = vunpack.c.l.b16 %v494
    %v1861 = vunpack.c.h.b16 %v494
    %v1862 = vunpack.c.l.b16 %v495
    %v1863 = vunpack.c.h.b16 %v495
    %v1864 = vunpack.c.l.b16 %v496
    %v1865 = vunpack.c.h.b16 %v496
    %v1866 = vunpack.c.l.b16 %v497
    %v1867 = vunpack.c.h.b16 %v497
    %v1868 = vunpack.c.l.b16 %v498
    %v1869 = vunpack.c.h.b16 %v498
    %v1870 = vunpack.c.l.b16 %v499
    %v1871 = vunpack.c.h.b16 %v499
    %v1872 = vunpack.c.l.b16 %v500
    %v1873 = vunpack.c.h.b16 %v500
    %v1874 = vunpack.c.l.b16 %v501
    %v1875 = vunpack.c.h.b16 %v501
    %v1876 = vunpack.c.l.b16 %v502
    %v1877 = vunpack.c.h.b16 %v502
    %v1878 = vunpack.c.l.b16 %v503
    %v1879 = vunpack.c.h.b16 %v503
    %v1880 = vunpack.c.l.b16 %v504
    %v1881 = vunpack.c.h.b16 %v504
    %v1882 = vunpack.c.l.b16 %v505
    %v1883 = vunpack.c.h.b16 %v505
    %v1884 = vunpack.c.l.b16 %v506
    %v1885 = vunpack.c.h.b16 %v506
    %v1886 = vunpack.c.l.b16 %v507
    %v1887 = vunpack.c.h.b16 %v507
    %v1888 = vunpack.c.l.b16 %v508
    %v1889 = vunpack.c.h.b16 %v508
    %v1890 = vunpack.c.l.b16 %v509
    %v1891 = vunpack.c.h.b16 %v509
    %v1892 = vunpack.c.l.b16 %v510
    %v1893 = vunpack.c.h.b16 %v510
    %v1894 = vunpack.c.l.b16 %v511
    %v1895 = vunpack.c.h.b16 %v511
    %v1896 = vunpack.c.l.b16 %v512
    %v1897 = vunpack.c.h.b16 %v512
    %v1898 = vunpack.c.l.b16 %v513
    %v1899 = vunpack.c.h.b16 %v513
    %v1900 = vunpack.c.l.b16 %v514
    %v1901 = vunpack.c.h.b16 %v514
    %v1902 = vunpack.c.l.b16 %v515
    %v1903 = vunpack.c.h.b16 %v515
    %v1904 = vunpack.c.l.b16 %v516
    %v1905 = vunpack.c.h.b16 %v516
    %v1906 = vunpack.c.l.b16 %v517
    %v1907 = vunpack.c.h.b16 %v517
    %v1908 = vunpack.c.l.b16 %v518
    %v1909 = vunpack.c.h.b16 %v518
    %v1910 = vunpack.c.l.b16 %v519
    %v1911 = vunpack.c.h.b16 %v519
    %v1912 = vunpack.c.l.b16 %v520
    %v1913 = vunpack.c.h.b16 %v520
    %v1914 = vunpack.c.l.b16 %v521
    %v1915 = vunpack.c.h.b16 %v521
    %v1916 = vunpack.c.l.b16 %v522
    %v1917 = vunpack.c.h.b16 %v522
    %v1918 = vunpack.c.l.b16 %v523
    %v1919 = vunpack.c.h.b16 %v523
    %v1920 = vunpack.c.l.b16 %v524
    %v1921 = vunpack.c.h.b16 %v524
    %v1922 = vunpack.c.l.b16 %v525
    %v1923 = vunpack.c.h.b16 %v525
    %v1924 = vunpack.c.l.b16 %v526
    %v1925 = vunpack.c.h.b16 %v526
    %v1926 = vunpack.c.l.b16 %v527
    %v1927 = vunpack.c.h.b16 %v527
    %v1928 = vunpack.c.l.b16 %v528
    %v1929 = vunpack.c.h.b16 %v528
    %v1930 = vunpack.c.l.b16 %v529
    %v1931 = vunpack.c.h.b16 %v529
    %v1932 = vunpack.c.l.b16 %v530
    %v1933 = vunpack.c.h.b16 %v530
    %v1934 = vunpack.c.l.b16 %v531
    %v1935 = vunpack.c.h.b16 %v531
    %v1936 = vunpack.c.l.b16 %v532
    %v1937 = vunpack.c.h.b16 %v532
    %v1938 = vunpack.c.l.b16 %v533
    %v1939 = vunpack.c.h.b16 %v533
    %v1940 = vunpack.c.l.b16 %v534
    %v1941 = vunpack.c.h.b16 %v534
    %v1942 = vunpack.c.l.b16 %v535
    %v1943 = vunpack.c.h.b16 %v535
    %v1944 = vunpack.c.l.b16 %v536
    %v1945 = vunpack.c.h.b16 %v536
    %v1946 = vunpack.c.l.b16 %v537
    %v1947 = vunpack.c.h.b16 %v537
    %v1948 = vunpack.c.l.b16 %v538
    %v1949 = vunpack.c.h.b16 %v538
    %v1950 = vunpack.c.l.b16 %v539
    %v1951 = vunpack.c.h.b16 %v539
    %v1952 = vunpack.c.l.b16 %v540
    %v1953 = vunpack.c.h.b16 %v540
    %v1954 = vunpack.c.l.b16 %v541
    %v1955 = vunpack.c.h.b16 %v541
    %v1956 = vunpack.c.l.b16 %v542
    %v1957 = vunpack.c.h.b16 %v542
    %v1958 = vunpack.c.l.b16 %v543
    %v1959 = vunpack.c.h.b16 %v543
    %v1960 = vunpack.c.l.b16 %v544
    %v1961 = vunpack.c.h.b16 %v544
    %v1962 = vunpack.c.l.b16 %v545
    %v1963 = vunpack.c.h.b16 %v545
    %v1964 = vunpack.c.l.b16 %v546
    %v1965 = vunpack.c.h.b16 %v546
    %v1966 = vunpack.c.l.b16 %v547
    %v1967 = vunpack.c.h.b16 %v547
    %v1968 = vunpack.c.l.b16 %v548
    %v1969 = vunpack.c.h.b16 %v548
    %v1970 = vunpack.c.l.b16 %v549
    %v1971 = vunpack.c.h.b16 %v549
    %v1972 = vunpack.c.l.b16 %v550
    %v1973 = vunpack.c.h.b16 %v550
    %v1974 = vunpack.c.l.b16 %v551
    %v1975 = vunpack.c.h.b16 %v551
    %v1976 = vunpack.c.l.b16 %v552
    %v1977 = vunpack.c.h.b16 %v552
    %v1978 = vunpack.c.l.b16 %v553
    %v1979 = vunpack.c.h.b16 %v553
    %v1980 = vunpack.c.l.b16 %v554
    %v1981 = vunpack.c.h.b16 %v554
    %v1982 = vunpack.c.l.b16 %v555
    %v1983 = vunpack.c.h.b16 %v555
    %v1984 = vunpack.c.l.b16 %v556
    %v1985 = vunpack.c.h.b16 %v556
    %v1986 = vunpack.c.l.b16 %v557
    %v1987 = vunpack.c.h.b16 %v557
    %v1988 = vunpack.c.l.b16 %v558
    %v1989 = vunpack.c.h.b16 %v558
    %v1990 = vunpack.c.l.b16 %v559
    %v1991 = vunpack.c.h.b16 %v559
    %v1992 = vunpack.c.l.b16 %v560
    %v1993 = vunpack.c.h.b16 %v560
    %v1994 = vunpack.c.l.b16 %v561
    %v1995 = vunpack.c.h.b16 %v561
    %v1996 = vunpack.c.l.b16 %v562
    %v1997 = vunpack.c.h.b16 %v562
    %v1998 = vunpack.c.l.b16 %v563
    %v1999 = vunpack.c.h.b16 %v563
    %v2000 = vunpack.c.l.b16 %v564
    %v2001 = vunpack.c.h.b16 %v564
    %v2002 = vunpack.c.l.b16 %v565
    %v2003 = vunpack.c.h.b16 %v565
    %v2004 = vunpack.c.l.b16 %v566
    %v2005 = vunpack.c.h.b16 %v566
    %v2006 = vunpack.c.l.b16 %v567
    %v2007 = vunpack.c.h.b16 %v567
    %v2008 = vunpack.c.l.b16 %v568
    %v2009 = vunpack.c.h.b16 %v568
    %v2010 = vunpack.c.l.b16 %v569
    %v2011 = vunpack.c.h.b16 %v569
    %v2012 = vunpack.c.l.b16 %v570
    %v2013 = vunpack.c.h.b16 %v570
    %v2014 = vunpack.c.l.b16 %v571
    %v2015 = vunpack.c.h.b16 %v571
    %v2016 = vunpack.c.l.b16 %v572
    %v2017 = vunpack.c.h.b16 %v572
    %v2018 = vunpack.c.l.b16 %v573
    %v2019 = vunpack.c.h.b16 %v573
    %v2020 = vunpack.c.l.b16 %v574
    %v2021 = vunpack.c.h.b16 %v574
    %v2022 = vunpack.c.l.b16 %v575
    %v2023 = vunpack.c.h.b16 %v575
    %v2024 = vunpack.c.l.b16 %v576
    %v2025 = vunpack.c.h.b16 %v576
    %v2026 = vunpack.c.l.b16 %v577
    %v2027 = vunpack.c.h.b16 %v577
    %v2028 = vunpack.c.l.b16 %v578
    %v2029 = vunpack.c.h.b16 %v578
    %v2030 = vunpack.c.l.b16 %v579
    %v2031 = vunpack.c.h.b16 %v579
    %v2032 = vunpack.c.l.b16 %v580
    %v2033 = vunpack.c.h.b16 %v580
    %v2034 = vunpack.c.l.b16 %v581
    %v2035 = vunpack.c.h.b16 %v581
    %v2036 = vunpack.c.l.b16 %v582
    %v2037 = vunpack.c.h.b16 %v582
    %v2038 = vunpack.c.l.b16 %v583
    %v2039 = vunpack.c.h.b16 %v583
    %v2040 = vunpack.c.l.b16 %v584
    %v2041 = vunpack.c.h.b16 %v584
    %v2042 = vunpack.c.l.b16 %v585
    %v2043 = vunpack.c.h.b16 %v585
    %v2044 = vunpack.c.l.b16 %v586
    %v2045 = vunpack.c.h.b16 %v586
    %v2046 = vunpack.c.l.b16 %v587
    %v2047 = vunpack.c.h.b16 %v587
    %v2048 = vunpack.c.l.b16 %v588
    %v2049 = vunpack.c.h.b16 %v588
    %v2050 = vunpack.c.l.b16 %v589
    %v2051 = vunpack.c.h.b16 %v589
    %v2052 = vunpack.c.l.b16 %v590
    %v2053 = vunpack.c.h.b16 %v590
    %v2054 = vunpack.c.l.b16 %v591
    %v2055 = vunpack.c.h.b16 %v591
    %v2056 = vunpack.c.l.b16 %v592
    %v2057 = vunpack.c.h.b16 %v592
    %v2058 = vunpack.c.l.b16 %v593
    %v2059 = vunpack.c.h.b16 %v593
    %v2060 = vunpack.c.l.b16 %v594
    %v2061 = vunpack.c.h.b16 %v594
    %v2062 = vunpack.c.l.b16 %v595
    %v2063 = vunpack.c.h.b16 %v595
    %v2064 = vunpack.c.l.b16 %v596
    %v2065 = vunpack.c.h.b16 %v596
    %v2066 = vunpack.c.l.b16 %v597
    %v2067 = vunpack.c.h.b16 %v597
    %v2068 = vunpack.c.l.b16 %v598
    %v2069 = vunpack.c.h.b16 %v598
    %v2070 = vunpack.c.l.b16 %v599
    %v2071 = vunpack.c.h.b16 %v599
    %v2072 = vunpack.c.l.b16 %v600
    %v2073 = vunpack.c.h.b16 %v600
    %v2074 = vunpack.c.l.b16 %v601
    %v2075 = vunpack.c.h.b16 %v601
    %v2076 = vunpack.c.l.b16 %v602
    %v2077 = vunpack.c.h.b16 %v602
    %v2078 = vunpack.c.l.b16 %v603
    %v2079 = vunpack.c.h.b16 %v603
    %v2080 = vunpack.c.l.b16 %v604
    %v2081 = vunpack.c.h.b16 %v604
    %v2082 = vunpack.c.l.b16 %v605
    %v2083 = vunpack.c.h.b16 %v605
    %v2084 = vunpack.c.l.b16 %v606
    %v2085 = vunpack.c.h.b16 %v606
    %v2086 = vunpack.c.l.b16 %v607
    %v2087 = vunpack.c.h.b16 %v607
    %v2088 = vunpack.c.l.b16 %v608
    %v2089 = vunpack.c.h.b16 %v608
    %v2090 = vunpack.c.l.b16 %v609
    %v2091 = vunpack.c.h.b16 %v609
    %v2092 = vunpack.c.l.b16 %v610
    %v2093 = vunpack.c.h.b16 %v610
    %v2094 = vunpack.c.l.b16 %v611
    %v2095 = vunpack.c.h.b16 %v611
    %v2096 = vunpack.c.l.b16 %v612
    %v2097 = vunpack.c.h.b16 %v612
    %v2098 = vunpack.c.l.b16 %v613
    %v2099 = vunpack.c.h.b16 %v613
    %v2100 = vunpack.c.l.b16 %v614
    %v2101 = vunpack.c.h.b16 %v614
    %v2102 = vunpack.c.l.b16 %v615
    %v2103 = vunpack.c.h.b16 %v615
    %v2104 = vunpack.c.l.b16 %v616
    %v2105 = vunpack.c.h.b16 %v616
    %v2106 = vunpack.c.l.b16 %v617
    %v2107 = vunpack.c.h.b16 %v617
    %v2108 = vunpack.c.l.b16 %v618
    %v2109 = vunpack.c.h.b16 %v618
    %v2110 = vunpack.c.l.b16 %v619
    %v2111 = vunpack.c.h.b16 %v619
    %v2112 = vunpack.c.l.b16 %v620
    %v2113 = vunpack.c.h.b16 %v620
    %v2114 = vunpack.c.l.b16 %v621
    %v2115 = vunpack.c.h.b16 %v621
    %v2116 = vunpack.c.l.b16 %v622
    %v2117 = vunpack.c.h.b16 %v622
    %v2118 = vunpack.c.l.b16 %v623
    %v2119 = vunpack.c.h.b16 %v623
    %v2120 = vunpack.c.l.b16 %v624
    %v2121 = vunpack.c.h.b16 %v624
    %v2122 = vunpack.c.l.b16 %v625
    %v2123 = vunpack.c.h.b16 %v625
    %v2124 = vunpack.c.l.b16 %v626
    %v2125 = vunpack.c.h.b16 %v626
    %v2126 = vunpack.c.l.b16 %v627
    %v2127 = vunpack.c.h.b16 %v627
    %v2128 = vunpack.c.l.b16 %v628
    %v2129 = vunpack.c.h.b16 %v628
    %v2130 = vunpack.c.l.b16 %v629
    %v2131 = vunpack.c.h.b16 %v629
    %v2132 = vunpack.c.l.b16 %v630
    %v2133 = vunpack.c.h.b16 %v630
    %v2134 = vunpack.c.l.b16 %v631
    %v2135 = vunpack.c.h.b16 %v631
    %v2136 = vunpack.c.l.b16 %v632
    %v2137 = vunpack.c.h.b16 %v632
    %v2138 = vunpack.c.l.b16 %v633
    %v2139 = vunpack.c.h.b16 %v633
    %v2140 = vunpack.c.l.b16 %v634
    %v2141 = vunpack.c.h.b16 %v634
    %v2142 = vunpack.c.l.b16 %v635
    %v2143 = vunpack.c.h.b16 %v635
    %v2144 = vunpack.c.l.b16 %v636
    %v2145 = vunpack.c.h.b16 %v636
    %v2146 = vunpack.c.l.b16 %v637
    %v2147 = vunpack.c.h.b16 %v637
    %v2148 = vunpack.c.l.b16 %v638
    %v2149 = vunpack.c.h.b16 %v638
    %v2150 = vunpack.c.l.b16 %v639
    %v2151 = vunpack.c.h.b16 %v639
    %v2152 = vunpack.c.l.b16 %v640
    %v2153 = vunpack.c.h.b16 %v640
    %v2154 = vunpack.c.l.b16 %v641
    %v2155 = vunpack.c.h.b16 %v641
    %v2156 = vunpack.c.l.b16 %v642
    %v2157 = vunpack.c.h.b16 %v642
    %v2158 = vunpack.c.l.b16 %v643
    %v2159 = vunpack.c.h.b16 %v643
    %v2160 = vunpack.c.l.b16 %v644
    %v2161 = vunpack.c.h.b16 %v644
    %v2162 = vunpack.c.l.b16 %v645
    %v2163 = vunpack.c.h.b16 %v645
    %v2164 = vunpack.c.l.b16 %v646
    %v2165 = vunpack.c.h.b16 %v646
    %v2166 = vunpack.c.l.b16 %v647
    %v2167 = vunpack.c.h.b16 %v647
    %v2168 = vunpack.c.l.b16 %v648
    %v2169 = vunpack.c.h.b16 %v648
    %v2170 = vunpack.c.l.b16 %v649
    %v2171 = vunpack.c.h.b16 %v649
    %v2172 = vunpack.c.l.b16 %v650
    %v2173 = vunpack.c.h.b16 %v650
    %v2174 = vunpack.c.l.b16 %v651
    %v2175 = vunpack.c.h.b16 %v651
    %v2176 = vunpack.c.l.b16 %v652
    %v2177 = vunpack.c.h.b16 %v652
    %v2178 = vunpack.c.l.b16 %v653
    %v2179 = vunpack.c.h.b16 %v653
    %v2180 = vunpack.c.l.b16 %v654
    %v2181 = vunpack.c.h.b16 %v654
    %v2182 = vunpack.c.l.b16 %v655
    %v2183 = vunpack.c.h.b16 %v655
    %v2184 = vunpack.c.l.b16 %v656
    %v2185 = vunpack.c.h.b16 %v656
    %v2186 = vunpack.c.l.b16 %v657
    %v2187 = vunpack.c.h.b16 %v657
    %v2188 = vunpack.c.l.b16 %v658
    %v2189 = vunpack.c.h.b16 %v658
    %v2190 = vunpack.c.l.b16 %v659
    %v2191 = vunpack.c.h.b16 %v659
    %v2192 = vunpack.c.l.b16 %v660
    %v2193 = vunpack.c.h.b16 %v660
    %v2194 = vunpack.c.l.b16 %v661
    %v2195 = vunpack.c.h.b16 %v661
    %v2196 = vunpack.c.l.b16 %v662
    %v2197 = vunpack.c.h.b16 %v662
    %v2198 = vunpack.c.l.b16 %v663
    %v2199 = vunpack.c.h.b16 %v663
    %v2200 = vunpack.c.l.b16 %v664
    %v2201 = vunpack.c.h.b16 %v664
    %v2202 = vunpack.c.l.b16 %v665
    %v2203 = vunpack.c.h.b16 %v665
    %v2204 = vunpack.c.l.b16 %v666
    %v2205 = vunpack.c.h.b16 %v666
    %v2206 = vunpack.c.l.b16 %v667
    %v2207 = vunpack.c.h.b16 %v667
    %v2208 = vunpack.c.l.b16 %v668
    %v2209 = vunpack.c.h.b16 %v668
    %v2210 = vunpack.c.l.b16 %v669
    %v2211 = vunpack.c.h.b16 %v669
    %v2212 = vunpack.c.l.b16 %v670
    %v2213 = vunpack.c.h.b16 %v670
    %v2214 = vunpack.c.l.b16 %v671
    %v2215 = vunpack.c.h.b16 %v671
    %v2216 = vunpack.c.l.b16 %v672
    %v2217 = vunpack.c.h.b16 %v672
    %v2218 = vunpack.c.l.b16 %v673
    %v2219 = vunpack.c.h.b16 %v673
    %v2220 = vunpack.c.l.b16 %v674
    %v2221 = vunpack.c.h.b16 %v674
    %v2222 = vunpack.c.l.b16 %v675
    %v2223 = vunpack.c.h.b16 %v675
    %v2224 = vunpack.c.l.b16 %v676
    %v2225 = vunpack.c.h.b16 %v676
    %v2226 = vunpack.c.l.b16 %v677
    %v2227 = vunpack.c.h.b16 %v677
    %v2228 = vunpack.c.l.b16 %v678
    %v2229 = vunpack.c.h.b16 %v678
    %v2230 = vunpack.c.l.b16 %v679
    %v2231 = vunpack.c.h.b16 %v679
    %v2232 = vunpack.c.l.b16 %v680
    %v2233 = vunpack.c.h.b16 %v680
    %v2234 = vunpack.c.l.b16 %v681
    %v2235 = vunpack.c.h.b16 %v681
    %v2236 = vunpack.c.l.b16 %v682
    %v2237 = vunpack.c.h.b16 %v682
    %v2238 = vunpack.c.l.b16 %v683
    %v2239 = vunpack.c.h.b16 %v683
    %v2240 = vunpack.c.l.b16 %v684
    %v2241 = vunpack.c.h.b16 %v684
    %v2242 = vunpack.c.l.b16 %v685
    %v2243 = vunpack.c.h.b16 %v685
    %v2244 = vunpack.c.l.b16 %v686
    %v2245 = vunpack.c.h.b16 %v686
    %v2246 = vunpack.c.l.b16 %v687
    %v2247 = vunpack.c.h.b16 %v687
    %v2248 = vunpack.c.l.b16 %v688
    %v2249 = vunpack.c.h.b16 %v688
    %v2250 = vunpack.c.l.b16 %v689
    %v2251 = vunpack.c.h.b16 %v689
    %v2252 = vunpack.c.l.b16 %v690
    %v2253 = vunpack.c.h.b16 %v690
    %v2254 = vunpack.c.l.b16 %v691
    %v2255 = vunpack.c.h.b16 %v691
    %v2256 = vunpack.c.l.b16 %v692
    %v2257 = vunpack.c.h.b16 %v692
    %v2258 = vunpack.c.l.b16 %v693
    %v2259 = vunpack.c.h.b16 %v693
    %v2260 = vunpack.c.l.b16 %v694
    %v2261 = vunpack.c.h.b16 %v694
    %v2262 = vunpack.c.l.b16 %v695
    %v2263 = vunpack.c.h.b16 %v695
    %v2264 = vunpack.c.l.b16 %v696
    %v2265 = vunpack.c.h.b16 %v696
    %v2266 = vunpack.c.l.b16 %v697
    %v2267 = vunpack.c.h.b16 %v697
    %v2268 = vunpack.c.l.b16 %v698
    %v2269 = vunpack.c.h.b16 %v698
    %v2270 = vunpack.c.l.b16 %v699
    %v2271 = vunpack.c.h.b16 %v699
    %v2272 = vpack.c.b16 %v1264, %v1248
    %v2273 = vpack.c.b16 %v1265, %v1249
    %v2274 = vpack.c.b16 %v1266, %v1250
    %v2275 = vpack.c.b16 %v1267, %v1251
    %v2276 = vpack.c.b16 %v1268, %v1252
    %v2277 = vpack.c.b16 %v1269, %v1253
    %v2278 = vpack.c.b16 %v1270, %v1254
    %v2279 = vpack.c.b16 %v1271, %v1255
    %v2280 = vpack.c.b16 %v1272, %v1256
    %v2281 = vpack.c.b16 %v1273, %v1257
    %v2282 = vpack.c.b16 %v1274, %v1258
    %v2283 = vpack.c.b16 %v1275, %v1259
    %v2284 = vpack.c.b16 %v1276, %v1260
    %v2285 = vpack.c.b16 %v1277, %v1261
    %v2286 = vpack.c.b16 %v1278, %v1262
    %v2287 = vpack.c.b16 %v1279, %v1263
    %v2288 = vpack.c.b16 %v1296, %v1280
    %v2289 = vpack.c.b16 %v1297, %v1281
    %v2290 = vpack.c.b16 %v1298, %v1282
    %v2291 = vpack.c.b16 %v1299, %v1283
    %v2292 = vpack.c.b16 %v1300, %v1284
    %v2293 = vpack.c.b16 %v1301, %v1285
    %v2294 = vpack.c.b16 %v1302, %v1286
    %v2295 = vpack.c.b16 %v1303, %v1287
    %v2296 = vpack.c.b16 %v1304, %v1288
    %v2297 = vpack.c.b16 %v1305, %v1289
    %v2298 = vpack.c.b16 %v1306, %v1290
    %v2299 = vpack.c.b16 %v1307, %v1291
    %v2300 = vpack.c.b16 %v1308, %v1292
    %v2301 = vpack.c.b16 %v1309, %v1293
    %v2302 = vpack.c.b16 %v1310, %v1294
    %v2303 = vpack.c.b16 %v1311, %v1295
    %v2304 = vpack.c.b16 %v1328, %v1312
    %v2305 = vpack.c.b16 %v1329, %v1313
    %v2306 = vpack.c.b16 %v1330, %v1314
    %v2307 = vpack.c.b16 %v1331, %v1315
    %v2308 = vpack.c.b16 %v1332, %v1316
    %v2309 = vpack.c.b16 %v1333, %v1317
    %v2310 = vpack.c.b16 %v1334, %v1318
    %v2311 = vpack.c.b16 %v1335, %v1319
    %v2312 = vpack.c.b16 %v1336, %v1320
    %v2313 = vpack.c.b16 %v1337, %v1321
    %v2314 = vpack.c.b16 %v1338, %v1322
    %v2315 = vpack.c.b16 %v1339, %v1323
    %v2316 = vpack.c.b16 %v1340, %v1324
    %v2317 = vpack.c.b16 %v1341, %v1325
    %v2318 = vpack.c.b16 %v1342, %v1326
    %v2319 = vpack.c.b16 %v1343, %v1327
    %v2320 = vpack.c.b16 %v1360, %v1344
    %v2321 = vpack.c.b16 %v1361, %v1345
    %v2322 = vpack.c.b16 %v1362, %v1346
    %v2323 = vpack.c.b16 %v1363, %v1347
    %v2324 = vpack.c.b16 %v1364, %v1348
    %v2325 = vpack.c.b16 %v1365, %v1349
    %v2326 = vpack.c.b16 %v1366, %v1350
    %v2327 = vpack.c.b16 %v1367, %v1351
    %v2328 = vpack.c.b16 %v1368, %v1352
    %v2329 = vpack.c.b16 %v1369, %v1353
    %v2330 = vpack.c.b16 %v1370, %v1354
    %v2331 = vpack.c.b16 %v1371, %v1355
    %v2332 = vpack.c.b16 %v1372, %v1356
    %v2333 = vpack.c.b16 %v1373, %v1357
    %v2334 = vpack.c.b16 %v1374, %v1358
    %v2335 = vpack.c.b16 %v1375, %v1359
    %v2336 = vpack.c.b16 %v1392, %v1376
    %v2337 = vpack.c.b16 %v1393, %v1377
    %v2338 = vpack.c.b16 %v1394, %v1378
    %v2339 = vpack.c.b16 %v1395, %v1379
    %v2340 = vpack.c.b16 %v1396, %v1380
    %v2341 = vpack.c.b16 %v1397, %v1381
    %v2342 = vpack.c.b16 %v1398, %v1382
    %v2343 = vpack.c.b16 %v1399, %v1383
    %v2344 = vpack.c.b16 %v1400, %v1384
    %v2345 = vpack.c.b16 %v1401, %v1385
    %v2346 = vpack.c.b16 %v1402, %v1386
    %v2347 = vpack.c.b16 %v1403, %v1387
    %v2348 = vpack.c.b16 %v1404, %v1388
    %v2349 = vpack.c.b16 %v1405, %v1389
    %v2350 = vpack.c.b16 %v1406, %v1390
    %v2351 = vpack.c.b16 %v1407, %v1391
    %v2352 = vpack.c.b16 %v1424, %v1408
    %v2353 = vpack.c.b16 %v1425, %v1409
    %v2354 = vpack.c.b16 %v1426, %v1410
    %v2355 = vpack.c.b16 %v1427, %v1411
    %v2356 = vpack.c.b16 %v1428, %v1412
    %v2357 = vpack.c.b16 %v1429, %v1413
    %v2358 = vpack.c.b16 %v1430, %v1414
    %v2359 = vpack.c.b16 %v1431, %v1415
    %v2360 = vpack.c.b16 %v1432, %v1416
    %v2361 = vpack.c.b16 %v1433, %v1417
    %v2362 = vpack.c.b16 %v1434, %v1418
    %v2363 = vpack.c.b16 %v1435, %v1419
    %v2364 = vpack.c.b16 %v1436, %v1420
    %v2365 = vpack.c.b16 %v1437, %v1421
    %v2366 = vpack.c.b16 %v1438, %v1422
    %v2367 = vpack.c.b16 %v1439, %v1423
    %v2368 = vpack.c.b16 %v1456, %v1440
    %v2369 = vpack.c.b16 %v1457, %v1441
    %v2370 = vpack.c.b16 %v1458, %v1442
    %v2371 = vpack.c.b16 %v1459, %v1443
    %v2372 = vpack.c.b16 %v1460, %v1444
    %v2373 = vpack.c.b16 %v1461, %v1445
    %v2374 = vpack.c.b16 %v1462, %v1446
    %v2375 = vpack.c.b16 %v1463, %v1447
    %v2376 = vpack.c.b16 %v1464, %v1448
    %v2377 = vpack.c.b16 %v1465, %v1449
    %v2378 = vpack.c.b16 %v1466, %v1450
    %v2379 = vpack.c.b16 %v1467, %v1451
    %v2380 = vpack.c.b16 %v1468, %v1452
    %v2381 = vpack.c.b16 %v1469, %v1453
    %v2382 = vpack.c.b16 %v1470, %v1454
    %v2383 = vpack.c.b16 %v1471, %v1455
    %v2384 = vpack.c.b16 %v1488, %v1472
    %v2385 = vpack.c.b16 %v1489, %v1473
    %v2386 = vpack.c.b16 %v1490, %v1474
    %v2387 = vpack.c.b16 %v1491, %v1475
    %v2388 = vpack.c.b16 %v1492, %v1476
    %v2389 = vpack.c.b16 %v1493, %v1477
    %v2390 = vpack.c.b16 %v1494, %v1478
    %v2391 = vpack.c.b16 %v1495, %v1479
    %v2392 = vpack.c.b16 %v1496, %v1480
    %v2393 = vpack.c.b16 %v1497, %v1481
    %v2394 = vpack.c.b16 %v1498, %v1482
    %v2395 = vpack.c.b16 %v1499, %v1483
    %v2396 = vpack.c.b16 %v1500, %v1484
    %v2397 = vpack.c.b16 %v1501, %v1485
    %v2398 = vpack.c.b16 %v1502, %v1486
    %v2399 = vpack.c.b16 %v1503, %v1487
    %v2400 = vpack.c.b16 %v1520, %v1504
    %v2401 = vpack.c.b16 %v1521, %v1505
    %v2402 = vpack.c.b16 %v1522, %v1506
    %v2403 = vpack.c.b16 %v1523, %v1507
    %v2404 = vpack.c.b16 %v1524, %v1508
    %v2405 = vpack.c.b16 %v1525, %v1509
    %v2406 = vpack.c.b16 %v1526, %v1510
    %v2407 = vpack.c.b16 %v1527, %v1511
    %v2408 = vpack.c.b16 %v1528, %v1512
    %v2409 = vpack.c.b16 %v1529, %v1513
    %v2410 = vpack.c.b16 %v1530, %v1514
    %v2411 = vpack.c.b16 %v1531, %v1515
    %v2412 = vpack.c.b16 %v1532, %v1516
    %v2413 = vpack.c.b16 %v1533, %v1517
    %v2414 = vpack.c.b16 %v1534, %v1518
    %v2415 = vpack.c.b16 %v1535, %v1519
    %v2416 = vpack.c.b16 %v1552, %v1536
    %v2417 = vpack.c.b16 %v1553, %v1537
    %v2418 = vpack.c.b16 %v1554, %v1538
    %v2419 = vpack.c.b16 %v1555, %v1539
    %v2420 = vpack.c.b16 %v1556, %v1540
    %v2421 = vpack.c.b16 %v1557, %v1541
    %v2422 = vpack.c.b16 %v1558, %v1542
    %v2423 = vpack.c.b16 %v1559, %v1543
    %v2424 = vpack.c.b16 %v1560, %v1544
    %v2425 = vpack.c.b16 %v1561, %v1545
    %v2426 = vpack.c.b16 %v1562, %v1546
    %v2427 = vpack.c.b16 %v1563, %v1547
    %v2428 = vpack.c.b16 %v1564, %v1548
    %v2429 = vpack.c.b16 %v1565, %v1549
    %v2430 = vpack.c.b16 %v1566, %v1550
    %v2431 = vpack.c.b16 %v1567, %v1551
    %v2432 = vpack.c.b16 %v1584, %v1568
    %v2433 = vpack.c.b16 %v1585, %v1569
    %v2434 = vpack.c.b16 %v1586, %v1570
    %v2435 = vpack.c.b16 %v1587, %v1571
    %v2436 = vpack.c.b16 %v1588, %v1572
    %v2437 = vpack.c.b16 %v1589, %v1573
    %v2438 = vpack.c.b16 %v1590, %v1574
    %v2439 = vpack.c.b16 %v1591, %v1575
    %v2440 = vpack.c.b16 %v1592, %v1576
    %v2441 = vpack.c.b16 %v1593, %v1577
    %v2442 = vpack.c.b16 %v1594, %v1578
    %v2443 = vpack.c.b16 %v1595, %v1579
    %v2444 = vpack.c.b16 %v1596, %v1580
    %v2445 = vpack.c.b16 %v1597, %v1581
    %v2446 = vpack.c.b16 %v1598, %v1582
    %v2447 = vpack.c.b16 %v1599, %v1583
    %v2448 = vpack.c.b16 %v1616, %v1600
    %v2449 = vpack.c.b16 %v1617, %v1601
    %v2450 = vpack.c.b16 %v1618, %v1602
    %v2451 = vpack.c.b16 %v1619, %v1603
    %v2452 = vpack.c.b16 %v1620, %v1604
    %v2453 = vpack.c.b16 %v1621, %v1605
    %v2454 = vpack.c.b16 %v1622, %v1606
    %v2455 = vpack.c.b16 %v1623, %v1607
    %v2456 = vpack.c.b16 %v1624, %v1608
    %v2457 = vpack.c.b16 %v1625, %v1609
    %v2458 = vpack.c.b16 %v1626, %v1610
    %v2459 = vpack.c.b16 %v1627, %v1611
    %v2460 = vpack.c.b16 %v1628, %v1612
    %v2461 = vpack.c.b16 %v1629, %v1613
    %v2462 = vpack.c.b16 %v1630, %v1614
    %v2463 = vpack.c.b16 %v1631, %v1615
    %v2464 = vpack.c.b16 %v1648, %v1632
    %v2465 = vpack.c.b16 %v1649, %v1633
    %v2466 = vpack.c.b16 %v1650, %v1634
    %v2467 = vpack.c.b16 %v1651, %v1635
    %v2468 = vpack.c.b16 %v1652, %v1636
    %v2469 = vpack.c.b16 %v1653, %v1637
    %v2470 = vpack.c.b16 %v1654, %v1638
    %v2471 = vpack.c.b16 %v1655, %v1639
    %v2472 = vpack.c.b16 %v1656, %v1640
    %v2473 = vpack.c.b16 %v1657, %v1641
    %v2474 = vpack.c.b16 %v1658, %v1642
    %v2475 = vpack.c.b16 %v1659, %v1643
    %v2476 = vpack.c.b16 %v1660, %v1644
    %v2477 = vpack.c.b16 %v1661, %v1645
    %v2478 = vpack.c.b16 %v1662, %v1646
    %v2479 = vpack.c.b16 %v1663, %v1647
    %v2480 = vpack.c.b16 %v1680, %v1664
    %v2481 = vpack.c.b16 %v1681, %v1665
    %v2482 = vpack.c.b16 %v1682, %v1666
    %v2483 = vpack.c.b16 %v1683, %v1667
    %v2484 = vpack.c.b16 %v1684, %v1668
    %v2485 = vpack.c.b16 %v1685, %v1669
    %v2486 = vpack.c.b16 %v1686, %v1670
    %v2487 = vpack.c.b16 %v1687, %v1671
    %v2488 = vpack.c.b16 %v1688, %v1672
    %v2489 = vpack.c.b16 %v1689, %v1673
    %v2490 = vpack.c.b16 %v1690, %v1674
    %v2491 = vpack.c.b16 %v1691, %v1675
    %v2492 = vpack.c.b16 %v1692, %v1676
    %v2493 = vpack.c.b16 %v1693, %v1677
    %v2494 = vpack.c.b16 %v1694, %v1678
    %v2495 = vpack.c.b16 %v1695, %v1679
    %v2496 = vpack.c.b16 %v1712, %v1696
    %v2497 = vpack.c.b16 %v1713, %v1697
    %v2498 = vpack.c.b16 %v1714, %v1698
    %v2499 = vpack.c.b16 %v1715, %v1699
    %v2500 = vpack.c.b16 %v1716, %v1700
    %v2501 = vpack.c.b16 %v1717, %v1701
    %v2502 = vpack.c.b16 %v1718, %v1702
    %v2503 = vpack.c.b16 %v1719, %v1703
    %v2504 = vpack.c.b16 %v1720, %v1704
    %v2505 = vpack.c.b16 %v1721, %v1705
    %v2506 = vpack.c.b16 %v1722, %v1706
    %v2507 = vpack.c.b16 %v1723, %v1707
    %v2508 = vpack.c.b16 %v1724, %v1708
    %v2509 = vpack.c.b16 %v1725, %v1709
    %v2510 = vpack.c.b16 %v1726, %v1710
    %v2511 = vpack.c.b16 %v1727, %v1711
    %v2512 = vpack.c.b16 %v1744, %v1728
    %v2513 = vpack.c.b16 %v1745, %v1729
    %v2514 = vpack.c.b16 %v1746, %v1730
    %v2515 = vpack.c.b16 %v1747, %v1731
    %v2516 = vpack.c.b16 %v1748, %v1732
    %v2517 = vpack.c.b16 %v1749, %v1733
    %v2518 = vpack.c.b16 %v1750, %v1734
    %v2519 = vpack.c.b16 %v1751, %v1735
    %v2520 = vpack.c.b16 %v1752, %v1736
    %v2521 = vpack.c.b16 %v1753, %v1737
    %v2522 = vpack.c.b16 %v1754, %v1738
    %v2523 = vpack.c.b16 %v1755, %v1739
    %v2524 = vpack.c.b16 %v1756, %v1740
    %v2525 = vpack.c.b16 %v1757, %v1741
    %v2526 = vpack.c.b16 %v1758, %v1742
    %v2527 = vpack.c.b16 %v1759, %v1743
    %v2528 = vpack.c.b16 %v1776, %v1760
    %v2529 = vpack.c.b16 %v1777, %v1761
    %v2530 = vpack.c.b16 %v1778, %v1762
    %v2531 = vpack.c.b16 %v1779, %v1763
    %v2532 = vpack.c.b16 %v1780, %v1764
    %v2533 = vpack.c.b16 %v1781, %v1765
    %v2534 = vpack.c.b16 %v1782, %v1766
    %v2535 = vpack.c.b16 %v1783, %v1767
    %v2536 = vpack.c.b16 %v1784, %v1768
    %v2537 = vpack.c.b16 %v1785, %v1769
    %v2538 = vpack.c.b16 %v1786, %v1770
    %v2539 = vpack.c.b16 %v1787, %v1771
    %v2540 = vpack.c.b16 %v1788, %v1772
    %v2541 = vpack.c.b16 %v1789, %v1773
    %v2542 = vpack.c.b16 %v1790, %v1774
    %v2543 = vpack.c.b16 %v1791, %v1775
    %v2544 = vpack.c.b16 %v1808, %v1792
    %v2545 = vpack.c.b16 %v1809, %v1793
    %v2546 = vpack.c.b16 %v1810, %v1794
    %v2547 = vpack.c.b16 %v1811, %v1795
    %v2548 = vpack.c.b16 %v1812, %v1796
    %v2549 = vpack.c.b16 %v1813, %v1797
    %v2550 = vpack.c.b16 %v1814, %v1798
    %v2551 = vpack.c.b16 %v1815, %v1799
    %v2552 = vpack.c.b16 %v1816, %v1800
    %v2553 = vpack.c.b16 %v1817, %v1801
    %v2554 = vpack.c.b16 %v1818, %v1802
    %v2555 = vpack.c.b16 %v1819, %v1803
    %v2556 = vpack.c.b16 %v1820, %v1804
    %v2557 = vpack.c.b16 %v1821, %v1805
    %v2558 = vpack.c.b16 %v1822, %v1806
    %v2559 = vpack.c.b16 %v1823, %v1807
    %v2560 = vpack.c.b16 %v1840, %v1824
    %v2561 = vpack.c.b16 %v1841, %v1825
    %v2562 = vpack.c.b16 %v1842, %v1826
    %v2563 = vpack.c.b16 %v1843, %v1827
    %v2564 = vpack.c.b16 %v1844, %v1828
    %v2565 = vpack.c.b16 %v1845, %v1829
    %v2566 = vpack.c.b16 %v1846, %v1830
    %v2567 = vpack.c.b16 %v1847, %v1831
    %v2568 = vpack.c.b16 %v1848, %v1832
    %v2569 = vpack.c.b16 %v1849, %v1833
    %v2570 = vpack.c.b16 %v1850, %v1834
    %v2571 = vpack.c.b16 %v1851, %v1835
    %v2572 = vpack.c.b16 %v1852, %v1836
    %v2573 = vpack.c.b16 %v1853, %v1837
    %v2574 = vpack.c.b16 %v1854, %v1838
    %v2575 = vpack.c.b16 %v1855, %v1839
    %v2576 = vpack.c.b16 %v1872, %v1856
    %v2577 = vpack.c.b16 %v1873, %v1857
    %v2578 = vpack.c.b16 %v1874, %v1858
    %v2579 = vpack.c.b16 %v1875, %v1859
    %v2580 = vpack.c.b16 %v1876, %v1860
    %v2581 = vpack.c.b16 %v1877, %v1861
    %v2582 = vpack.c.b16 %v1878, %v1862
    %v2583 = vpack.c.b16 %v1879, %v1863
    %v2584 = vpack.c.b16 %v1880, %v1864
    %v2585 = vpack.c.b16 %v1881, %v1865
    %v2586 = vpack.c.b16 %v1882, %v1866
    %v2587 = vpack.c.b16 %v1883, %v1867
    %v2588 = vpack.c.b16 %v1884, %v1868
    %v2589 = vpack.c.b16 %v1885, %v1869
    %v2590 = vpack.c.b16 %v1886, %v1870
    %v2591 = vpack.c.b16 %v1887, %v1871
    %v2592 = vpack.c.b16 %v1904, %v1888
    %v2593 = vpack.c.b16 %v1905, %v1889
    %v2594 = vpack.c.b16 %v1906, %v1890
    %v2595 = vpack.c.b16 %v1907, %v1891
    %v2596 = vpack.c.b16 %v1908, %v1892
    %v2597 = vpack.c.b16 %v1909, %v1893
    %v2598 = vpack.c.b16 %v1910, %v1894
    %v2599 = vpack.c.b16 %v1911, %v1895
    %v2600 = vpack.c.b16 %v1912, %v1896
    %v2601 = vpack.c.b16 %v1913, %v1897
    %v2602 = vpack.c.b16 %v1914, %v1898
    %v2603 = vpack.c.b16 %v1915, %v1899
    %v2604 = vpack.c.b16 %v1916, %v1900
    %v2605 = vpack.c.b16 %v1917, %v1901
    %v2606 = vpack.c.b16 %v1918, %v1902
    %v2607 = vpack.c.b16 %v1919, %v1903
    %v2608 = vpack.c.b16 %v1936, %v1920
    %v2609 = vpack.c.b16 %v1937, %v1921
    %v2610 = vpack.c.b16 %v1938, %v1922
    %v2611 = vpack.c.b16 %v1939, %v1923
    %v2612 = vpack.c.b16 %v1940, %v1924
    %v2613 = vpack.c.b16 %v1941, %v1925
    %v2614 = vpack.c.b16 %v1942, %v1926
    %v2615 = vpack.c.b16 %v1943, %v1927
    %v2616 = vpack.c.b16 %v1944, %v1928
    %v2617 = vpack.c.b16 %v1945, %v1929
    %v2618 = vpack.c.b16 %v1946, %v1930
    %v2619 = vpack.c.b16 %v1947, %v1931
    %v2620 = vpack.c.b16 %v1948, %v1932
    %v2621 = vpack.c.b16 %v1949, %v1933
    %v2622 = vpack.c.b16 %v1950, %v1934
    %v2623 = vpack.c.b16 %v1951, %v1935
    %v2624 = vpack.c.b16 %v1968, %v1952
    %v2625 = vpack.c.b16 %v1969, %v1953
    %v2626 = vpack.c.b16 %v1970, %v1954
    %v2627 = vpack.c.b16 %v1971, %v1955
    %v2628 = vpack.c.b16 %v1972, %v1956
    %v2629 = vpack.c.b16 %v1973, %v1957
    %v2630 = vpack.c.b16 %v1974, %v1958
    %v2631 = vpack.c.b16 %v1975, %v1959
    %v2632 = vpack.c.b16 %v1976, %v1960
    %v2633 = vpack.c.b16 %v1977, %v1961
    %v2634 = vpack.c.b16 %v1978, %v1962
    %v2635 = vpack.c.b16 %v1979, %v1963
    %v2636 = vpack.c.b16 %v1980, %v1964
    %v2637 = vpack.c.b16 %v1981, %v1965
    %v2638 = vpack.c.b16 %v1982, %v1966
    %v2639 = vpack.c.b16 %v1983, %v1967
    %v2640 = vpack.c.b16 %v2000, %v1984
    %v2641 = vpack.c.b16 %v2001, %v1985
    %v2642 = vpack.c.b16 %v2002, %v1986
    %v2643 = vpack.c.b16 %v2003, %v1987
    %v2644 = vpack.c.b16 %v2004, %v1988
    %v2645 = vpack.c.b16 %v2005, %v1989
    %v2646 = vpack.c.b16 %v2006, %v1990
    %v2647 = vpack.c.b16 %v2007, %v1991
    %v2648 = vpack.c.b16 %v2008, %v1992
    %v2649 = vpack.c.b16 %v2009, %v1993
    %v2650 = vpack.c.b16 %v2010, %v1994
    %v2651 = vpack.c.b16 %v2011, %v1995
    %v2652 = vpack.c.b16 %v2012, %v1996
    %v2653 = vpack.c.b16 %v2013, %v1997
    %v2654 = vpack.c.b16 %v2014, %v1998
    %v2655 = vpack.c.b16 %v2015, %v1999
    %v2656 = vpack.c.b16 %v2032, %v2016
    %v2657 = vpack.c.b16 %v2033, %v2017
    %v2658 = vpack.c.b16 %v2034, %v2018
    %v2659 = vpack.c.b16 %v2035, %v2019
    %v2660 = vpack.c.b16 %v2036, %v2020
    %v2661 = vpack.c.b16 %v2037, %v2021
    %v2662 = vpack.c.b16 %v2038, %v2022
    %v2663 = vpack.c.b16 %v2039, %v2023
    %v2664 = vpack.c.b16 %v2040, %v2024
    %v2665 = vpack.c.b16 %v2041, %v2025
    %v2666 = vpack.c.b16 %v2042, %v2026
    %v2667 = vpack.c.b16 %v2043, %v2027
    %v2668 = vpack.c.b16 %v2044, %v2028
    %v2669 = vpack.c.b16 %v2045, %v2029
    %v2670 = vpack.c.b16 %v2046, %v2030
    %v2671 = vpack.c.b16 %v2047, %v2031
    %v2672 = vpack.c.b16 %v2064, %v2048
    %v2673 = vpack.c.b16 %v2065, %v2049
    %v2674 = vpack.c.b16 %v2066, %v2050
    %v2675 = vpack.c.b16 %v2067, %v2051
    %v2676 = vpack.c.b16 %v2068, %v2052
    %v2677 = vpack.c.b16 %v2069, %v2053
    %v2678 = vpack.c.b16 %v2070, %v2054
    %v2679 = vpack.c.b16 %v2071, %v2055
    %v2680 = vpack.c.b16 %v2072, %v2056
    %v2681 = vpack.c.b16 %v2073, %v2057
    %v2682 = vpack.c.b16 %v2074, %v2058
    %v2683 = vpack.c.b16 %v2075, %v2059
    %v2684 = vpack.c.b16 %v2076, %v2060
    %v2685 = vpack.c.b16 %v2077, %v2061
    %v2686 = vpack.c.b16 %v2078, %v2062
    %v2687 = vpack.c.b16 %v2079, %v2063
    %v2688 = vpack.c.b16 %v2096, %v2080
    %v2689 = vpack.c.b16 %v2097, %v2081
    %v2690 = vpack.c.b16 %v2098, %v2082
    %v2691 = vpack.c.b16 %v2099, %v2083
    %v2692 = vpack.c.b16 %v2100, %v2084
    %v2693 = vpack.c.b16 %v2101, %v2085
    %v2694 = vpack.c.b16 %v2102, %v2086
    %v2695 = vpack.c.b16 %v2103, %v2087
    %v2696 = vpack.c.b16 %v2104, %v2088
    %v2697 = vpack.c.b16 %v2105, %v2089
    %v2698 = vpack.c.b16 %v2106, %v2090
    %v2699 = vpack.c.b16 %v2107, %v2091
    %v2700 = vpack.c.b16 %v2108, %v2092
    %v2701 = vpack.c.b16 %v2109, %v2093
    %v2702 = vpack.c.b16 %v2110, %v2094
    %v2703 = vpack.c.b16 %v2111, %v2095
    %v2704 = vpack.c.b16 %v2128, %v2112
    %v2705 = vpack.c.b16 %v2129, %v2113
    %v2706 = vpack.c.b16 %v2130, %v2114
    %v2707 = vpack.c.b16 %v2131, %v2115
    %v2708 = vpack.c.b16 %v2132, %v2116
    %v2709 = vpack.c.b16 %v2133, %v2117
    %v2710 = vpack.c.b16 %v2134, %v2118
    %v2711 = vpack.c.b16 %v2135, %v2119
    %v2712 = vpack.c.b16 %v2136, %v2120
    %v2713 = vpack.c.b16 %v2137, %v2121
    %v2714 = vpack.c.b16 %v2138, %v2122
    %v2715 = vpack.c.b16 %v2139, %v2123
    %v2716 = vpack.c.b16 %v2140, %v2124
    %v2717 = vpack.c.b16 %v2141, %v2125
    %v2718 = vpack.c.b16 %v2142, %v2126
    %v2719 = vpack.c.b16 %v2143, %v2127
    %v2720 = vpack.c.b16 %v2160, %v2144
    %v2721 = vpack.c.b16 %v2161, %v2145
    %v2722 = vpack.c.b16 %v2162, %v2146
    %v2723 = vpack.c.b16 %v2163, %v2147
    %v2724 = vpack.c.b16 %v2164, %v2148
    %v2725 = vpack.c.b16 %v2165, %v2149
    %v2726 = vpack.c.b16 %v2166, %v2150
    %v2727 = vpack.c.b16 %v2167, %v2151
    %v2728 = vpack.c.b16 %v2168, %v2152
    %v2729 = vpack.c.b16 %v2169, %v2153
    %v2730 = vpack.c.b16 %v2170, %v2154
    %v2731 = vpack.c.b16 %v2171, %v2155
    %v2732 = vpack.c.b16 %v2172, %v2156
    %v2733 = vpack.c.b16 %v2173, %v2157
    %v2734 = vpack.c.b16 %v2174, %v2158
    %v2735 = vpack.c.b16 %v2175, %v2159
    %v2736 = vpack.c.b16 %v2192, %v2176
    %v2737 = vpack.c.b16 %v2193, %v2177
    %v2738 = vpack.c.b16 %v2194, %v2178
    %v2739 = vpack.c.b16 %v2195, %v2179
    %v2740 = vpack.c.b16 %v2196, %v2180
    %v2741 = vpack.c.b16 %v2197, %v2181
    %v2742 = vpack.c.b16 %v2198, %v2182
    %v2743 = vpack.c.b16 %v2199, %v2183
    %v2744 = vpack.c.b16 %v2200, %v2184
    %v2745 = vpack.c.b16 %v2201, %v2185
    %v2746 = vpack.c.b16 %v2202, %v2186
    %v2747 = vpack.c.b16 %v2203, %v2187
    %v2748 = vpack.c.b16 %v2204, %v2188
    %v2749 = vpack.c.b16 %v2205, %v2189
    %v2750 = vpack.c.b16 %v2206, %v2190
    %v2751 = vpack.c.b16 %v2207, %v2191
    %v2752 = vpack.c.b16 %v2224, %v2208
    %v2753 = vpack.c.b16 %v2225, %v2209
    %v2754 = vpack.c.b16 %v2226, %v2210
    %v2755 = vpack.c.b16 %v2227, %v2211
    %v2756 = vpack.c.b16 %v2228, %v2212
    %v2757 = vpack.c.b16 %v2229, %v2213
    %v2758 = vpack.c.b16 %v2230, %v2214
    %v2759 = vpack.c.b16 %v2231, %v2215
    %v2760 = vpack.c.b16 %v2232, %v2216
    %v2761 = vpack.c.b16 %v2233, %v2217
    %v2762 = vpack.c.b16 %v2234, %v2218
    %v2763 = vpack.c.b16 %v2235, %v2219
    %v2764 = vpack.c.b16 %v2236, %v2220
    %v2765 = vpack.c.b16 %v2237, %v2221
    %v2766 = vpack.c.b16 %v2238, %v2222
    %v2767 = vpack.c.b16 %v2239, %v2223
    %v2768 = vpack.c.b16 %v2256, %v2240
    %v2769 = vpack.c.b16 %v2257, %v2241
    %v2770 = vpack.c.b16 %v2258, %v2242
    %v2771 = vpack.c.b16 %v2259, %v2243
    %v2772 = vpack.c.b16 %v2260, %v2244
    %v2773 = vpack.c.b16 %v2261, %v2245
    %v2774 = vpack.c.b16 %v2262, %v2246
    %v2775 = vpack.c.b16 %v2263, %v2247
    %v2776 = vpack.c.b16 %v2264, %v2248
    %v2777 = vpack.c.b16 %v2265, %v2249
    %v2778 = vpack.c.b16 %v2266, %v2250
    %v2779 = vpack.c.b16 %v2267, %v2251
    %v2780 = vpack.c.b16 %v2268, %v2252
    %v2781 = vpack.c.b16 %v2269, %v2253
    %v2782 = vpack.c.b16 %v2270, %v2254
    %v2783 = vpack.c.b16 %v2271, %v2255
    %3296 = vmatpush.bf16.msra.mxu0 %v2384
    %3297 = vmatpush.bf16.msra.mxu0 %v2368
    %3298 = vmatpush.bf16.msra.mxu0 %v2352
    %3299 = vmatpush.bf16.msra.mxu0 %v2336
    %3300 = vmatpush.bf16.msra.mxu0 %v2320
    %3301 = vmatpush.bf16.msra.mxu0 %v2304
    %3302 = vmatpush.bf16.msra.mxu0 %v2288
    %3303 = vmatpush.bf16.msra.mxu0 %v2272
    %3304 = vmatmul.bf16.gmra.mxu0 %v184
    %v3305 = vpop.f32.mrf.mxu0
    %v3306 = vadd.f32 %v704, %v3305
    %v3307 = vpop.f32.mrf.mxu0
    %v3308 = vadd.f32 %v704, %v3307
    %3309 = vdwg.mxu0
    %3310 = vmatpush.bf16.msra.mxu0 %v2512
    %3311 = vmatpush.bf16.msra.mxu0 %v2496
    %3312 = vmatpush.bf16.msra.mxu0 %v2480
    %3313 = vmatpush.bf16.msra.mxu0 %v2464
    %3314 = vmatpush.bf16.msra.mxu0 %v2448
    %3315 = vmatpush.bf16.msra.mxu0 %v2432
    %3316 = vmatpush.bf16.msra.mxu0 %v2416
    %3317 = vmatpush.bf16.msra.mxu0 %v2400
    %3318 = vmatmul.bf16.gmra.mxu0 %v185
    %v3319 = vpop.f32.mrf.mxu0
    %v3320 = vadd.f32 %v3306, %v3319
    %v3321 = vpop.f32.mrf.mxu0
    %v3322 = vadd.f32 %v3308, %v3321
    %3323 = vdwg.mxu0
    %3324 = vmatpush.bf16.msra.mxu0 %v2640
    %3325 = vmatpush.bf16.msra.mxu0 %v2624
    %3326 = vmatpush.bf16.msra.mxu0 %v2608
    %3327 = vmatpush.bf16.msra.mxu0 %v2592
    %3328 = vmatpush.bf16.msra.mxu0 %v2576
    %3329 = vmatpush.bf16.msra.mxu0 %v2560
    %3330 = vmatpush.bf16.msra.mxu0 %v2544
    %3331 = vmatpush.bf16.msra.mxu0 %v2528
    %3332 = vmatmul.bf16.gmra.mxu0 %v186
    %v3333 = vpop.f32.mrf.mxu0
    %v3334 = vadd.f32 %v3320, %v3333
    %v3335 = vpop.f32.mrf.mxu0
    %v3336 = vadd.f32 %v3322, %v3335
    %3337 = vdwg.mxu0
    %3338 = vmatpush.bf16.msra.mxu0 %v2768
    %3339 = vmatpush.bf16.msra.mxu0 %v2752
    %3340 = vmatpush.bf16.msra.mxu0 %v2736
    %3341 = vmatpush.bf16.msra.mxu0 %v2720
    %3342 = vmatpush.bf16.msra.mxu0 %v2704
    %3343 = vmatpush.bf16.msra.mxu0 %v2688
    %3344 = vmatpush.bf16.msra.mxu0 %v2672
    %3345 = vmatpush.bf16.msra.mxu0 %v2656
    %3346 = vmatmul.bf16.gmra.mxu0 %v187
    %v3347 = vpop.f32.mrf.mxu0
    %v3348 = vadd.f32 %v3334, %v3347
    %v3349 = vpop.f32.mrf.mxu0
    %v3350 = vadd.f32 %v3336, %v3349
    %3351 = vdwg.mxu0
    %3352 = vmatpush.bf16.msra.mxu0 %v2385
    %3353 = vmatpush.bf16.msra.mxu0 %v2369
    %3354 = vmatpush.bf16.msra.mxu0 %v2353
    %3355 = vmatpush.bf16.msra.mxu0 %v2337
    %3356 = vmatpush.bf16.msra.mxu0 %v2321
    %3357 = vmatpush.bf16.msra.mxu0 %v2305
    %3358 = vmatpush.bf16.msra.mxu0 %v2289
    %3359 = vmatpush.bf16.msra.mxu0 %v2273
    %3360 = vmatmul.bf16.gmra.mxu0 %v184
    %v3361 = vpop.f32.mrf.mxu0
    %v3362 = vadd.f32 %v705, %v3361
    %v3363 = vpop.f32.mrf.mxu0
    %v3364 = vadd.f32 %v705, %v3363
    %3365 = vdwg.mxu0
    %3366 = vmatpush.bf16.msra.mxu0 %v2513
    %3367 = vmatpush.bf16.msra.mxu0 %v2497
    %3368 = vmatpush.bf16.msra.mxu0 %v2481
    %3369 = vmatpush.bf16.msra.mxu0 %v2465
    %3370 = vmatpush.bf16.msra.mxu0 %v2449
    %3371 = vmatpush.bf16.msra.mxu0 %v2433
    %3372 = vmatpush.bf16.msra.mxu0 %v2417
    %3373 = vmatpush.bf16.msra.mxu0 %v2401
    %3374 = vmatmul.bf16.gmra.mxu0 %v185
    %v3375 = vpop.f32.mrf.mxu0
    %v3376 = vadd.f32 %v3362, %v3375
    %v3377 = vpop.f32.mrf.mxu0
    %v3378 = vadd.f32 %v3364, %v3377
    %3379 = vdwg.mxu0
    %3380 = vmatpush.bf16.msra.mxu0 %v2641
    %3381 = vmatpush.bf16.msra.mxu0 %v2625
    %3382 = vmatpush.bf16.msra.mxu0 %v2609
    %3383 = vmatpush.bf16.msra.mxu0 %v2593
    %3384 = vmatpush.bf16.msra.mxu0 %v2577
    %3385 = vmatpush.bf16.msra.mxu0 %v2561
    %3386 = vmatpush.bf16.msra.mxu0 %v2545
    %3387 = vmatpush.bf16.msra.mxu0 %v2529
    %3388 = vmatmul.bf16.gmra.mxu0 %v186
    %v3389 = vpop.f32.mrf.mxu0
    %v3390 = vadd.f32 %v3376, %v3389
    %v3391 = vpop.f32.mrf.mxu0
    %v3392 = vadd.f32 %v3378, %v3391
    %3393 = vdwg.mxu0
    %3394 = vmatpush.bf16.msra.mxu0 %v2769
    %3395 = vmatpush.bf16.msra.mxu0 %v2753
    %3396 = vmatpush.bf16.msra.mxu0 %v2737
    %3397 = vmatpush.bf16.msra.mxu0 %v2721
    %3398 = vmatpush.bf16.msra.mxu0 %v2705
    %3399 = vmatpush.bf16.msra.mxu0 %v2689
    %3400 = vmatpush.bf16.msra.mxu0 %v2673
    %3401 = vmatpush.bf16.msra.mxu0 %v2657
    %3402 = vmatmul.bf16.gmra.mxu0 %v187
    %v3403 = vpop.f32.mrf.mxu0
    %v3404 = vadd.f32 %v3390, %v3403
    %v3405 = vpop.f32.mrf.mxu0
    %v3406 = vadd.f32 %v3392, %v3405
    %3407 = vdwg.mxu0
    %3408 = vmatpush.bf16.msra.mxu0 %v2386
    %3409 = vmatpush.bf16.msra.mxu0 %v2370
    %3410 = vmatpush.bf16.msra.mxu0 %v2354
    %3411 = vmatpush.bf16.msra.mxu0 %v2338
    %3412 = vmatpush.bf16.msra.mxu0 %v2322
    %3413 = vmatpush.bf16.msra.mxu0 %v2306
    %3414 = vmatpush.bf16.msra.mxu0 %v2290
    %3415 = vmatpush.bf16.msra.mxu0 %v2274
    %3416 = vmatmul.bf16.gmra.mxu0 %v184
    %v3417 = vpop.f32.mrf.mxu0
    %v3418 = vadd.f32 %v706, %v3417
    %v3419 = vpop.f32.mrf.mxu0
    %v3420 = vadd.f32 %v706, %v3419
    %3421 = vdwg.mxu0
    %3422 = vmatpush.bf16.msra.mxu0 %v2514
    %3423 = vmatpush.bf16.msra.mxu0 %v2498
    %3424 = vmatpush.bf16.msra.mxu0 %v2482
    %3425 = vmatpush.bf16.msra.mxu0 %v2466
    %3426 = vmatpush.bf16.msra.mxu0 %v2450
    %3427 = vmatpush.bf16.msra.mxu0 %v2434
    %3428 = vmatpush.bf16.msra.mxu0 %v2418
    %3429 = vmatpush.bf16.msra.mxu0 %v2402
    %3430 = vmatmul.bf16.gmra.mxu0 %v185
    %v3431 = vpop.f32.mrf.mxu0
    %v3432 = vadd.f32 %v3418, %v3431
    %v3433 = vpop.f32.mrf.mxu0
    %v3434 = vadd.f32 %v3420, %v3433
    %3435 = vdwg.mxu0
    %3436 = vmatpush.bf16.msra.mxu0 %v2642
    %3437 = vmatpush.bf16.msra.mxu0 %v2626
    %3438 = vmatpush.bf16.msra.mxu0 %v2610
    %3439 = vmatpush.bf16.msra.mxu0 %v2594
    %3440 = vmatpush.bf16.msra.mxu0 %v2578
    %3441 = vmatpush.bf16.msra.mxu0 %v2562
    %3442 = vmatpush.bf16.msra.mxu0 %v2546
    %3443 = vmatpush.bf16.msra.mxu0 %v2530
    %3444 = vmatmul.bf16.gmra.mxu0 %v186
    %v3445 = vpop.f32.mrf.mxu0
    %v3446 = vadd.f32 %v3432, %v3445
    %v3447 = vpop.f32.mrf.mxu0
    %v3448 = vadd.f32 %v3434, %v3447
    %3449 = vdwg.mxu0
    %3450 = vmatpush.bf16.msra.mxu0 %v2770
    %3451 = vmatpush.bf16.msra.mxu0 %v2754
    %3452 = vmatpush.bf16.msra.mxu0 %v2738
    %3453 = vmatpush.bf16.msra.mxu0 %v2722
    %3454 = vmatpush.bf16.msra.mxu0 %v2706
    %3455 = vmatpush.bf16.msra.mxu0 %v2690
    %3456 = vmatpush.bf16.msra.mxu0 %v2674
    %3457 = vmatpush.bf16.msra.mxu0 %v2658
    %3458 = vmatmul.bf16.gmra.mxu0 %v187
    %v3459 = vpop.f32.mrf.mxu0
    %v3460 = vadd.f32 %v3446, %v3459
    %v3461 = vpop.f32.mrf.mxu0
    %v3462 = vadd.f32 %v3448, %v3461
    %3463 = vdwg.mxu0
    %3464 = vmatpush.bf16.msra.mxu0 %v2387
    %3465 = vmatpush.bf16.msra.mxu0 %v2371
    %3466 = vmatpush.bf16.msra.mxu0 %v2355
    %3467 = vmatpush.bf16.msra.mxu0 %v2339
    %3468 = vmatpush.bf16.msra.mxu0 %v2323
    %3469 = vmatpush.bf16.msra.mxu0 %v2307
    %3470 = vmatpush.bf16.msra.mxu0 %v2291
    %3471 = vmatpush.bf16.msra.mxu0 %v2275
    %3472 = vmatmul.bf16.gmra.mxu0 %v184
    %v3473 = vpop.f32.mrf.mxu0
    %v3474 = vadd.f32 %v707, %v3473
    %v3475 = vpop.f32.mrf.mxu0
    %v3476 = vadd.f32 %v707, %v3475
    %3477 = vdwg.mxu0
    %3478 = vmatpush.bf16.msra.mxu0 %v2515
    %3479 = vmatpush.bf16.msra.mxu0 %v2499
    %3480 = vmatpush.bf16.msra.mxu0 %v2483
    %3481 = vmatpush.bf16.msra.mxu0 %v2467
    %3482 = vmatpush.bf16.msra.mxu0 %v2451
    %3483 = vmatpush.bf16.msra.mxu0 %v2435
    %3484 = vmatpush.bf16.msra.mxu0 %v2419
    %3485 = vmatpush.bf16.msra.mxu0 %v2403
    %3486 = vmatmul.bf16.gmra.mxu0 %v185
    %v3487 = vpop.f32.mrf.mxu0
    %v3488 = vadd.f32 %v3474, %v3487
    %v3489 = vpop.f32.mrf.mxu0
    %v3490 = vadd.f32 %v3476, %v3489
    %3491 = vdwg.mxu0
    %3492 = vmatpush.bf16.msra.mxu0 %v2643
    %3493 = vmatpush.bf16.msra.mxu0 %v2627
    %3494 = vmatpush.bf16.msra.mxu0 %v2611
    %3495 = vmatpush.bf16.msra.mxu0 %v2595
    %3496 = vmatpush.bf16.msra.mxu0 %v2579
    %3497 = vmatpush.bf16.msra.mxu0 %v2563
    %3498 = vmatpush.bf16.msra.mxu0 %v2547
    %3499 = vmatpush.bf16.msra.mxu0 %v2531
    %3500 = vmatmul.bf16.gmra.mxu0 %v186
    %v3501 = vpop.f32.mrf.mxu0
    %v3502 = vadd.f32 %v3488, %v3501
    %v3503 = vpop.f32.mrf.mxu0
    %v3504 = vadd.f32 %v3490, %v3503
    %3505 = vdwg.mxu0
    %3506 = vmatpush.bf16.msra.mxu0 %v2771
    %3507 = vmatpush.bf16.msra.mxu0 %v2755
    %3508 = vmatpush.bf16.msra.mxu0 %v2739
    %3509 = vmatpush.bf16.msra.mxu0 %v2723
    %3510 = vmatpush.bf16.msra.mxu0 %v2707
    %3511 = vmatpush.bf16.msra.mxu0 %v2691
    %3512 = vmatpush.bf16.msra.mxu0 %v2675
    %3513 = vmatpush.bf16.msra.mxu0 %v2659
    %3514 = vmatmul.bf16.gmra.mxu0 %v187
    %v3515 = vpop.f32.mrf.mxu0
    %v3516 = vadd.f32 %v3502, %v3515
    %v3517 = vpop.f32.mrf.mxu0
    %v3518 = vadd.f32 %v3504, %v3517
    %3519 = vdwg.mxu0
    %3520 = vmatpush.bf16.msra.mxu0 %v2388
    %3521 = vmatpush.bf16.msra.mxu0 %v2372
    %3522 = vmatpush.bf16.msra.mxu0 %v2356
    %3523 = vmatpush.bf16.msra.mxu0 %v2340
    %3524 = vmatpush.bf16.msra.mxu0 %v2324
    %3525 = vmatpush.bf16.msra.mxu0 %v2308
    %3526 = vmatpush.bf16.msra.mxu0 %v2292
    %3527 = vmatpush.bf16.msra.mxu0 %v2276
    %3528 = vmatmul.bf16.gmra.mxu0 %v184
    %v3529 = vpop.f32.mrf.mxu0
    %v3530 = vadd.f32 %v708, %v3529
    %v3531 = vpop.f32.mrf.mxu0
    %v3532 = vadd.f32 %v708, %v3531
    %3533 = vdwg.mxu0
    %3534 = vmatpush.bf16.msra.mxu0 %v2516
    %3535 = vmatpush.bf16.msra.mxu0 %v2500
    %3536 = vmatpush.bf16.msra.mxu0 %v2484
    %3537 = vmatpush.bf16.msra.mxu0 %v2468
    %3538 = vmatpush.bf16.msra.mxu0 %v2452
    %3539 = vmatpush.bf16.msra.mxu0 %v2436
    %3540 = vmatpush.bf16.msra.mxu0 %v2420
    %3541 = vmatpush.bf16.msra.mxu0 %v2404
    %3542 = vmatmul.bf16.gmra.mxu0 %v185
    %v3543 = vpop.f32.mrf.mxu0
    %v3544 = vadd.f32 %v3530, %v3543
    %v3545 = vpop.f32.mrf.mxu0
    %v3546 = vadd.f32 %v3532, %v3545
    %3547 = vdwg.mxu0
    %3548 = vmatpush.bf16.msra.mxu0 %v2644
    %3549 = vmatpush.bf16.msra.mxu0 %v2628
    %3550 = vmatpush.bf16.msra.mxu0 %v2612
    %3551 = vmatpush.bf16.msra.mxu0 %v2596
    %3552 = vmatpush.bf16.msra.mxu0 %v2580
    %3553 = vmatpush.bf16.msra.mxu0 %v2564
    %3554 = vmatpush.bf16.msra.mxu0 %v2548
    %3555 = vmatpush.bf16.msra.mxu0 %v2532
    %3556 = vmatmul.bf16.gmra.mxu0 %v186
    %v3557 = vpop.f32.mrf.mxu0
    %v3558 = vadd.f32 %v3544, %v3557
    %v3559 = vpop.f32.mrf.mxu0
    %v3560 = vadd.f32 %v3546, %v3559
    %3561 = vdwg.mxu0
    %3562 = vmatpush.bf16.msra.mxu0 %v2772
    %3563 = vmatpush.bf16.msra.mxu0 %v2756
    %3564 = vmatpush.bf16.msra.mxu0 %v2740
    %3565 = vmatpush.bf16.msra.mxu0 %v2724
    %3566 = vmatpush.bf16.msra.mxu0 %v2708
    %3567 = vmatpush.bf16.msra.mxu0 %v2692
    %3568 = vmatpush.bf16.msra.mxu0 %v2676
    %3569 = vmatpush.bf16.msra.mxu0 %v2660
    %3570 = vmatmul.bf16.gmra.mxu0 %v187
    %v3571 = vpop.f32.mrf.mxu0
    %v3572 = vadd.f32 %v3558, %v3571
    %v3573 = vpop.f32.mrf.mxu0
    %v3574 = vadd.f32 %v3560, %v3573
    %3575 = vdwg.mxu0
    %3576 = vmatpush.bf16.msra.mxu0 %v2389
    %3577 = vmatpush.bf16.msra.mxu0 %v2373
    %3578 = vmatpush.bf16.msra.mxu0 %v2357
    %3579 = vmatpush.bf16.msra.mxu0 %v2341
    %3580 = vmatpush.bf16.msra.mxu0 %v2325
    %3581 = vmatpush.bf16.msra.mxu0 %v2309
    %3582 = vmatpush.bf16.msra.mxu0 %v2293
    %3583 = vmatpush.bf16.msra.mxu0 %v2277
    %3584 = vmatmul.bf16.gmra.mxu0 %v184
    %v3585 = vpop.f32.mrf.mxu0
    %v3586 = vadd.f32 %v709, %v3585
    %v3587 = vpop.f32.mrf.mxu0
    %v3588 = vadd.f32 %v709, %v3587
    %3589 = vdwg.mxu0
    %3590 = vmatpush.bf16.msra.mxu0 %v2517
    %3591 = vmatpush.bf16.msra.mxu0 %v2501
    %3592 = vmatpush.bf16.msra.mxu0 %v2485
    %3593 = vmatpush.bf16.msra.mxu0 %v2469
    %3594 = vmatpush.bf16.msra.mxu0 %v2453
    %3595 = vmatpush.bf16.msra.mxu0 %v2437
    %3596 = vmatpush.bf16.msra.mxu0 %v2421
    %3597 = vmatpush.bf16.msra.mxu0 %v2405
    %3598 = vmatmul.bf16.gmra.mxu0 %v185
    %v3599 = vpop.f32.mrf.mxu0
    %v3600 = vadd.f32 %v3586, %v3599
    %v3601 = vpop.f32.mrf.mxu0
    %v3602 = vadd.f32 %v3588, %v3601
    %3603 = vdwg.mxu0
    %3604 = vmatpush.bf16.msra.mxu0 %v2645
    %3605 = vmatpush.bf16.msra.mxu0 %v2629
    %3606 = vmatpush.bf16.msra.mxu0 %v2613
    %3607 = vmatpush.bf16.msra.mxu0 %v2597
    %3608 = vmatpush.bf16.msra.mxu0 %v2581
    %3609 = vmatpush.bf16.msra.mxu0 %v2565
    %3610 = vmatpush.bf16.msra.mxu0 %v2549
    %3611 = vmatpush.bf16.msra.mxu0 %v2533
    %3612 = vmatmul.bf16.gmra.mxu0 %v186
    %v3613 = vpop.f32.mrf.mxu0
    %v3614 = vadd.f32 %v3600, %v3613
    %v3615 = vpop.f32.mrf.mxu0
    %v3616 = vadd.f32 %v3602, %v3615
    %3617 = vdwg.mxu0
    %3618 = vmatpush.bf16.msra.mxu0 %v2773
    %3619 = vmatpush.bf16.msra.mxu0 %v2757
    %3620 = vmatpush.bf16.msra.mxu0 %v2741
    %3621 = vmatpush.bf16.msra.mxu0 %v2725
    %3622 = vmatpush.bf16.msra.mxu0 %v2709
    %3623 = vmatpush.bf16.msra.mxu0 %v2693
    %3624 = vmatpush.bf16.msra.mxu0 %v2677
    %3625 = vmatpush.bf16.msra.mxu0 %v2661
    %3626 = vmatmul.bf16.gmra.mxu0 %v187
    %v3627 = vpop.f32.mrf.mxu0
    %v3628 = vadd.f32 %v3614, %v3627
    %v3629 = vpop.f32.mrf.mxu0
    %v3630 = vadd.f32 %v3616, %v3629
    %3631 = vdwg.mxu0
    %3632 = vmatpush.bf16.msra.mxu0 %v2390
    %3633 = vmatpush.bf16.msra.mxu0 %v2374
    %3634 = vmatpush.bf16.msra.mxu0 %v2358
    %3635 = vmatpush.bf16.msra.mxu0 %v2342
    %3636 = vmatpush.bf16.msra.mxu0 %v2326
    %3637 = vmatpush.bf16.msra.mxu0 %v2310
    %3638 = vmatpush.bf16.msra.mxu0 %v2294
    %3639 = vmatpush.bf16.msra.mxu0 %v2278
    %3640 = vmatmul.bf16.gmra.mxu0 %v184
    %v3641 = vpop.f32.mrf.mxu0
    %v3642 = vadd.f32 %v710, %v3641
    %v3643 = vpop.f32.mrf.mxu0
    %v3644 = vadd.f32 %v710, %v3643
    %3645 = vdwg.mxu0
    %3646 = vmatpush.bf16.msra.mxu0 %v2518
    %3647 = vmatpush.bf16.msra.mxu0 %v2502
    %3648 = vmatpush.bf16.msra.mxu0 %v2486
    %3649 = vmatpush.bf16.msra.mxu0 %v2470
    %3650 = vmatpush.bf16.msra.mxu0 %v2454
    %3651 = vmatpush.bf16.msra.mxu0 %v2438
    %3652 = vmatpush.bf16.msra.mxu0 %v2422
    %3653 = vmatpush.bf16.msra.mxu0 %v2406
    %3654 = vmatmul.bf16.gmra.mxu0 %v185
    %v3655 = vpop.f32.mrf.mxu0
    %v3656 = vadd.f32 %v3642, %v3655
    %v3657 = vpop.f32.mrf.mxu0
    %v3658 = vadd.f32 %v3644, %v3657
    %3659 = vdwg.mxu0
    %3660 = vmatpush.bf16.msra.mxu0 %v2646
    %3661 = vmatpush.bf16.msra.mxu0 %v2630
    %3662 = vmatpush.bf16.msra.mxu0 %v2614
    %3663 = vmatpush.bf16.msra.mxu0 %v2598
    %3664 = vmatpush.bf16.msra.mxu0 %v2582
    %3665 = vmatpush.bf16.msra.mxu0 %v2566
    %3666 = vmatpush.bf16.msra.mxu0 %v2550
    %3667 = vmatpush.bf16.msra.mxu0 %v2534
    %3668 = vmatmul.bf16.gmra.mxu0 %v186
    %v3669 = vpop.f32.mrf.mxu0
    %v3670 = vadd.f32 %v3656, %v3669
    %v3671 = vpop.f32.mrf.mxu0
    %v3672 = vadd.f32 %v3658, %v3671
    %3673 = vdwg.mxu0
    %3674 = vmatpush.bf16.msra.mxu0 %v2774
    %3675 = vmatpush.bf16.msra.mxu0 %v2758
    %3676 = vmatpush.bf16.msra.mxu0 %v2742
    %3677 = vmatpush.bf16.msra.mxu0 %v2726
    %3678 = vmatpush.bf16.msra.mxu0 %v2710
    %3679 = vmatpush.bf16.msra.mxu0 %v2694
    %3680 = vmatpush.bf16.msra.mxu0 %v2678
    %3681 = vmatpush.bf16.msra.mxu0 %v2662
    %3682 = vmatmul.bf16.gmra.mxu0 %v187
    %v3683 = vpop.f32.mrf.mxu0
    %v3684 = vadd.f32 %v3670, %v3683
    %v3685 = vpop.f32.mrf.mxu0
    %v3686 = vadd.f32 %v3672, %v3685
    %3687 = vdwg.mxu0
    %3688 = vmatpush.bf16.msra.mxu0 %v2391
    %3689 = vmatpush.bf16.msra.mxu0 %v2375
    %3690 = vmatpush.bf16.msra.mxu0 %v2359
    %3691 = vmatpush.bf16.msra.mxu0 %v2343
    %3692 = vmatpush.bf16.msra.mxu0 %v2327
    %3693 = vmatpush.bf16.msra.mxu0 %v2311
    %3694 = vmatpush.bf16.msra.mxu0 %v2295
    %3695 = vmatpush.bf16.msra.mxu0 %v2279
    %3696 = vmatmul.bf16.gmra.mxu0 %v184
    %v3697 = vpop.f32.mrf.mxu0
    %v3698 = vadd.f32 %v711, %v3697
    %v3699 = vpop.f32.mrf.mxu0
    %v3700 = vadd.f32 %v711, %v3699
    %3701 = vdwg.mxu0
    %3702 = vmatpush.bf16.msra.mxu0 %v2519
    %3703 = vmatpush.bf16.msra.mxu0 %v2503
    %3704 = vmatpush.bf16.msra.mxu0 %v2487
    %3705 = vmatpush.bf16.msra.mxu0 %v2471
    %3706 = vmatpush.bf16.msra.mxu0 %v2455
    %3707 = vmatpush.bf16.msra.mxu0 %v2439
    %3708 = vmatpush.bf16.msra.mxu0 %v2423
    %3709 = vmatpush.bf16.msra.mxu0 %v2407
    %3710 = vmatmul.bf16.gmra.mxu0 %v185
    %v3711 = vpop.f32.mrf.mxu0
    %v3712 = vadd.f32 %v3698, %v3711
    %v3713 = vpop.f32.mrf.mxu0
    %v3714 = vadd.f32 %v3700, %v3713
    %3715 = vdwg.mxu0
    %3716 = vmatpush.bf16.msra.mxu0 %v2647
    %3717 = vmatpush.bf16.msra.mxu0 %v2631
    %3718 = vmatpush.bf16.msra.mxu0 %v2615
    %3719 = vmatpush.bf16.msra.mxu0 %v2599
    %3720 = vmatpush.bf16.msra.mxu0 %v2583
    %3721 = vmatpush.bf16.msra.mxu0 %v2567
    %3722 = vmatpush.bf16.msra.mxu0 %v2551
    %3723 = vmatpush.bf16.msra.mxu0 %v2535
    %3724 = vmatmul.bf16.gmra.mxu0 %v186
    %v3725 = vpop.f32.mrf.mxu0
    %v3726 = vadd.f32 %v3712, %v3725
    %v3727 = vpop.f32.mrf.mxu0
    %v3728 = vadd.f32 %v3714, %v3727
    %3729 = vdwg.mxu0
    %3730 = vmatpush.bf16.msra.mxu0 %v2775
    %3731 = vmatpush.bf16.msra.mxu0 %v2759
    %3732 = vmatpush.bf16.msra.mxu0 %v2743
    %3733 = vmatpush.bf16.msra.mxu0 %v2727
    %3734 = vmatpush.bf16.msra.mxu0 %v2711
    %3735 = vmatpush.bf16.msra.mxu0 %v2695
    %3736 = vmatpush.bf16.msra.mxu0 %v2679
    %3737 = vmatpush.bf16.msra.mxu0 %v2663
    %3738 = vmatmul.bf16.gmra.mxu0 %v187
    %v3739 = vpop.f32.mrf.mxu0
    %v3740 = vadd.f32 %v3726, %v3739
    %v3741 = vpop.f32.mrf.mxu0
    %v3742 = vadd.f32 %v3728, %v3741
    %3743 = vdwg.mxu0
    %3744 = vmatpush.bf16.msra.mxu0 %v2392
    %3745 = vmatpush.bf16.msra.mxu0 %v2376
    %3746 = vmatpush.bf16.msra.mxu0 %v2360
    %3747 = vmatpush.bf16.msra.mxu0 %v2344
    %3748 = vmatpush.bf16.msra.mxu0 %v2328
    %3749 = vmatpush.bf16.msra.mxu0 %v2312
    %3750 = vmatpush.bf16.msra.mxu0 %v2296
    %3751 = vmatpush.bf16.msra.mxu0 %v2280
    %3752 = vmatmul.bf16.gmra.mxu0 %v184
    %v3753 = vpop.f32.mrf.mxu0
    %v3754 = vadd.f32 %v712, %v3753
    %v3755 = vpop.f32.mrf.mxu0
    %v3756 = vadd.f32 %v712, %v3755
    %3757 = vdwg.mxu0
    %3758 = vmatpush.bf16.msra.mxu0 %v2520
    %3759 = vmatpush.bf16.msra.mxu0 %v2504
    %3760 = vmatpush.bf16.msra.mxu0 %v2488
    %3761 = vmatpush.bf16.msra.mxu0 %v2472
    %3762 = vmatpush.bf16.msra.mxu0 %v2456
    %3763 = vmatpush.bf16.msra.mxu0 %v2440
    %3764 = vmatpush.bf16.msra.mxu0 %v2424
    %3765 = vmatpush.bf16.msra.mxu0 %v2408
    %3766 = vmatmul.bf16.gmra.mxu0 %v185
    %v3767 = vpop.f32.mrf.mxu0
    %v3768 = vadd.f32 %v3754, %v3767
    %v3769 = vpop.f32.mrf.mxu0
    %v3770 = vadd.f32 %v3756, %v3769
    %3771 = vdwg.mxu0
    %3772 = vmatpush.bf16.msra.mxu0 %v2648
    %3773 = vmatpush.bf16.msra.mxu0 %v2632
    %3774 = vmatpush.bf16.msra.mxu0 %v2616
    %3775 = vmatpush.bf16.msra.mxu0 %v2600
    %3776 = vmatpush.bf16.msra.mxu0 %v2584
    %3777 = vmatpush.bf16.msra.mxu0 %v2568
    %3778 = vmatpush.bf16.msra.mxu0 %v2552
    %3779 = vmatpush.bf16.msra.mxu0 %v2536
    %3780 = vmatmul.bf16.gmra.mxu0 %v186
    %v3781 = vpop.f32.mrf.mxu0
    %v3782 = vadd.f32 %v3768, %v3781
    %v3783 = vpop.f32.mrf.mxu0
    %v3784 = vadd.f32 %v3770, %v3783
    %3785 = vdwg.mxu0
    %3786 = vmatpush.bf16.msra.mxu0 %v2776
    %3787 = vmatpush.bf16.msra.mxu0 %v2760
    %3788 = vmatpush.bf16.msra.mxu0 %v2744
    %3789 = vmatpush.bf16.msra.mxu0 %v2728
    %3790 = vmatpush.bf16.msra.mxu0 %v2712
    %3791 = vmatpush.bf16.msra.mxu0 %v2696
    %3792 = vmatpush.bf16.msra.mxu0 %v2680
    %3793 = vmatpush.bf16.msra.mxu0 %v2664
    %3794 = vmatmul.bf16.gmra.mxu0 %v187
    %v3795 = vpop.f32.mrf.mxu0
    %v3796 = vadd.f32 %v3782, %v3795
    %v3797 = vpop.f32.mrf.mxu0
    %v3798 = vadd.f32 %v3784, %v3797
    %3799 = vdwg.mxu0
    %3800 = vmatpush.bf16.msra.mxu0 %v2393
    %3801 = vmatpush.bf16.msra.mxu0 %v2377
    %3802 = vmatpush.bf16.msra.mxu0 %v2361
    %3803 = vmatpush.bf16.msra.mxu0 %v2345
    %3804 = vmatpush.bf16.msra.mxu0 %v2329
    %3805 = vmatpush.bf16.msra.mxu0 %v2313
    %3806 = vmatpush.bf16.msra.mxu0 %v2297
    %3807 = vmatpush.bf16.msra.mxu0 %v2281
    %3808 = vmatmul.bf16.gmra.mxu0 %v184
    %v3809 = vpop.f32.mrf.mxu0
    %v3810 = vadd.f32 %v713, %v3809
    %v3811 = vpop.f32.mrf.mxu0
    %v3812 = vadd.f32 %v713, %v3811
    %3813 = vdwg.mxu0
    %3814 = vmatpush.bf16.msra.mxu0 %v2521
    %3815 = vmatpush.bf16.msra.mxu0 %v2505
    %3816 = vmatpush.bf16.msra.mxu0 %v2489
    %3817 = vmatpush.bf16.msra.mxu0 %v2473
    %3818 = vmatpush.bf16.msra.mxu0 %v2457
    %3819 = vmatpush.bf16.msra.mxu0 %v2441
    %3820 = vmatpush.bf16.msra.mxu0 %v2425
    %3821 = vmatpush.bf16.msra.mxu0 %v2409
    %3822 = vmatmul.bf16.gmra.mxu0 %v185
    %v3823 = vpop.f32.mrf.mxu0
    %v3824 = vadd.f32 %v3810, %v3823
    %v3825 = vpop.f32.mrf.mxu0
    %v3826 = vadd.f32 %v3812, %v3825
    %3827 = vdwg.mxu0
    %3828 = vmatpush.bf16.msra.mxu0 %v2649
    %3829 = vmatpush.bf16.msra.mxu0 %v2633
    %3830 = vmatpush.bf16.msra.mxu0 %v2617
    %3831 = vmatpush.bf16.msra.mxu0 %v2601
    %3832 = vmatpush.bf16.msra.mxu0 %v2585
    %3833 = vmatpush.bf16.msra.mxu0 %v2569
    %3834 = vmatpush.bf16.msra.mxu0 %v2553
    %3835 = vmatpush.bf16.msra.mxu0 %v2537
    %3836 = vmatmul.bf16.gmra.mxu0 %v186
    %v3837 = vpop.f32.mrf.mxu0
    %v3838 = vadd.f32 %v3824, %v3837
    %v3839 = vpop.f32.mrf.mxu0
    %v3840 = vadd.f32 %v3826, %v3839
    %3841 = vdwg.mxu0
    %3842 = vmatpush.bf16.msra.mxu0 %v2777
    %3843 = vmatpush.bf16.msra.mxu0 %v2761
    %3844 = vmatpush.bf16.msra.mxu0 %v2745
    %3845 = vmatpush.bf16.msra.mxu0 %v2729
    %3846 = vmatpush.bf16.msra.mxu0 %v2713
    %3847 = vmatpush.bf16.msra.mxu0 %v2697
    %3848 = vmatpush.bf16.msra.mxu0 %v2681
    %3849 = vmatpush.bf16.msra.mxu0 %v2665
    %3850 = vmatmul.bf16.gmra.mxu0 %v187
    %v3851 = vpop.f32.mrf.mxu0
    %v3852 = vadd.f32 %v3838, %v3851
    %v3853 = vpop.f32.mrf.mxu0
    %v3854 = vadd.f32 %v3840, %v3853
    %3855 = vdwg.mxu0
    %3856 = vmatpush.bf16.msra.mxu0 %v2394
    %3857 = vmatpush.bf16.msra.mxu0 %v2378
    %3858 = vmatpush.bf16.msra.mxu0 %v2362
    %3859 = vmatpush.bf16.msra.mxu0 %v2346
    %3860 = vmatpush.bf16.msra.mxu0 %v2330
    %3861 = vmatpush.bf16.msra.mxu0 %v2314
    %3862 = vmatpush.bf16.msra.mxu0 %v2298
    %3863 = vmatpush.bf16.msra.mxu0 %v2282
    %3864 = vmatmul.bf16.gmra.mxu0 %v184
    %v3865 = vpop.f32.mrf.mxu0
    %v3866 = vadd.f32 %v714, %v3865
    %v3867 = vpop.f32.mrf.mxu0
    %v3868 = vadd.f32 %v714, %v3867
    %3869 = vdwg.mxu0
    %3870 = vmatpush.bf16.msra.mxu0 %v2522
    %3871 = vmatpush.bf16.msra.mxu0 %v2506
    %3872 = vmatpush.bf16.msra.mxu0 %v2490
    %3873 = vmatpush.bf16.msra.mxu0 %v2474
    %3874 = vmatpush.bf16.msra.mxu0 %v2458
    %3875 = vmatpush.bf16.msra.mxu0 %v2442
    %3876 = vmatpush.bf16.msra.mxu0 %v2426
    %3877 = vmatpush.bf16.msra.mxu0 %v2410
    %3878 = vmatmul.bf16.gmra.mxu0 %v185
    %v3879 = vpop.f32.mrf.mxu0
    %v3880 = vadd.f32 %v3866, %v3879
    %v3881 = vpop.f32.mrf.mxu0
    %v3882 = vadd.f32 %v3868, %v3881
    %3883 = vdwg.mxu0
    %3884 = vmatpush.bf16.msra.mxu0 %v2650
    %3885 = vmatpush.bf16.msra.mxu0 %v2634
    %3886 = vmatpush.bf16.msra.mxu0 %v2618
    %3887 = vmatpush.bf16.msra.mxu0 %v2602
    %3888 = vmatpush.bf16.msra.mxu0 %v2586
    %3889 = vmatpush.bf16.msra.mxu0 %v2570
    %3890 = vmatpush.bf16.msra.mxu0 %v2554
    %3891 = vmatpush.bf16.msra.mxu0 %v2538
    %3892 = vmatmul.bf16.gmra.mxu0 %v186
    %v3893 = vpop.f32.mrf.mxu0
    %v3894 = vadd.f32 %v3880, %v3893
    %v3895 = vpop.f32.mrf.mxu0
    %v3896 = vadd.f32 %v3882, %v3895
    %3897 = vdwg.mxu0
    %3898 = vmatpush.bf16.msra.mxu0 %v2778
    %3899 = vmatpush.bf16.msra.mxu0 %v2762
    %3900 = vmatpush.bf16.msra.mxu0 %v2746
    %3901 = vmatpush.bf16.msra.mxu0 %v2730
    %3902 = vmatpush.bf16.msra.mxu0 %v2714
    %3903 = vmatpush.bf16.msra.mxu0 %v2698
    %3904 = vmatpush.bf16.msra.mxu0 %v2682
    %3905 = vmatpush.bf16.msra.mxu0 %v2666
    %3906 = vmatmul.bf16.gmra.mxu0 %v187
    %v3907 = vpop.f32.mrf.mxu0
    %v3908 = vadd.f32 %v3894, %v3907
    %v3909 = vpop.f32.mrf.mxu0
    %v3910 = vadd.f32 %v3896, %v3909
    %3911 = vdwg.mxu0
    %3912 = vmatpush.bf16.msra.mxu0 %v2395
    %3913 = vmatpush.bf16.msra.mxu0 %v2379
    %3914 = vmatpush.bf16.msra.mxu0 %v2363
    %3915 = vmatpush.bf16.msra.mxu0 %v2347
    %3916 = vmatpush.bf16.msra.mxu0 %v2331
    %3917 = vmatpush.bf16.msra.mxu0 %v2315
    %3918 = vmatpush.bf16.msra.mxu0 %v2299
    %3919 = vmatpush.bf16.msra.mxu0 %v2283
    %3920 = vmatmul.bf16.gmra.mxu0 %v184
    %v3921 = vpop.f32.mrf.mxu0
    %v3922 = vadd.f32 %v715, %v3921
    %v3923 = vpop.f32.mrf.mxu0
    %v3924 = vadd.f32 %v715, %v3923
    %3925 = vdwg.mxu0
    %3926 = vmatpush.bf16.msra.mxu0 %v2523
    %3927 = vmatpush.bf16.msra.mxu0 %v2507
    %3928 = vmatpush.bf16.msra.mxu0 %v2491
    %3929 = vmatpush.bf16.msra.mxu0 %v2475
    %3930 = vmatpush.bf16.msra.mxu0 %v2459
    %3931 = vmatpush.bf16.msra.mxu0 %v2443
    %3932 = vmatpush.bf16.msra.mxu0 %v2427
    %3933 = vmatpush.bf16.msra.mxu0 %v2411
    %3934 = vmatmul.bf16.gmra.mxu0 %v185
    %v3935 = vpop.f32.mrf.mxu0
    %v3936 = vadd.f32 %v3922, %v3935
    %v3937 = vpop.f32.mrf.mxu0
    %v3938 = vadd.f32 %v3924, %v3937
    %3939 = vdwg.mxu0
    %3940 = vmatpush.bf16.msra.mxu0 %v2651
    %3941 = vmatpush.bf16.msra.mxu0 %v2635
    %3942 = vmatpush.bf16.msra.mxu0 %v2619
    %3943 = vmatpush.bf16.msra.mxu0 %v2603
    %3944 = vmatpush.bf16.msra.mxu0 %v2587
    %3945 = vmatpush.bf16.msra.mxu0 %v2571
    %3946 = vmatpush.bf16.msra.mxu0 %v2555
    %3947 = vmatpush.bf16.msra.mxu0 %v2539
    %3948 = vmatmul.bf16.gmra.mxu0 %v186
    %v3949 = vpop.f32.mrf.mxu0
    %v3950 = vadd.f32 %v3936, %v3949
    %v3951 = vpop.f32.mrf.mxu0
    %v3952 = vadd.f32 %v3938, %v3951
    %3953 = vdwg.mxu0
    %3954 = vmatpush.bf16.msra.mxu0 %v2779
    %3955 = vmatpush.bf16.msra.mxu0 %v2763
    %3956 = vmatpush.bf16.msra.mxu0 %v2747
    %3957 = vmatpush.bf16.msra.mxu0 %v2731
    %3958 = vmatpush.bf16.msra.mxu0 %v2715
    %3959 = vmatpush.bf16.msra.mxu0 %v2699
    %3960 = vmatpush.bf16.msra.mxu0 %v2683
    %3961 = vmatpush.bf16.msra.mxu0 %v2667
    %3962 = vmatmul.bf16.gmra.mxu0 %v187
    %v3963 = vpop.f32.mrf.mxu0
    %v3964 = vadd.f32 %v3950, %v3963
    %v3965 = vpop.f32.mrf.mxu0
    %v3966 = vadd.f32 %v3952, %v3965
    %3967 = vdwg.mxu0
    %3968 = vmatpush.bf16.msra.mxu0 %v2396
    %3969 = vmatpush.bf16.msra.mxu0 %v2380
    %3970 = vmatpush.bf16.msra.mxu0 %v2364
    %3971 = vmatpush.bf16.msra.mxu0 %v2348
    %3972 = vmatpush.bf16.msra.mxu0 %v2332
    %3973 = vmatpush.bf16.msra.mxu0 %v2316
    %3974 = vmatpush.bf16.msra.mxu0 %v2300
    %3975 = vmatpush.bf16.msra.mxu0 %v2284
    %3976 = vmatmul.bf16.gmra.mxu0 %v184
    %v3977 = vpop.f32.mrf.mxu0
    %v3978 = vadd.f32 %v716, %v3977
    %v3979 = vpop.f32.mrf.mxu0
    %v3980 = vadd.f32 %v716, %v3979
    %3981 = vdwg.mxu0
    %3982 = vmatpush.bf16.msra.mxu0 %v2524
    %3983 = vmatpush.bf16.msra.mxu0 %v2508
    %3984 = vmatpush.bf16.msra.mxu0 %v2492
    %3985 = vmatpush.bf16.msra.mxu0 %v2476
    %3986 = vmatpush.bf16.msra.mxu0 %v2460
    %3987 = vmatpush.bf16.msra.mxu0 %v2444
    %3988 = vmatpush.bf16.msra.mxu0 %v2428
    %3989 = vmatpush.bf16.msra.mxu0 %v2412
    %3990 = vmatmul.bf16.gmra.mxu0 %v185
    %v3991 = vpop.f32.mrf.mxu0
    %v3992 = vadd.f32 %v3978, %v3991
    %v3993 = vpop.f32.mrf.mxu0
    %v3994 = vadd.f32 %v3980, %v3993
    %3995 = vdwg.mxu0
    %3996 = vmatpush.bf16.msra.mxu0 %v2652
    %3997 = vmatpush.bf16.msra.mxu0 %v2636
    %3998 = vmatpush.bf16.msra.mxu0 %v2620
    %3999 = vmatpush.bf16.msra.mxu0 %v2604
    %4000 = vmatpush.bf16.msra.mxu0 %v2588
    %4001 = vmatpush.bf16.msra.mxu0 %v2572
    %4002 = vmatpush.bf16.msra.mxu0 %v2556
    %4003 = vmatpush.bf16.msra.mxu0 %v2540
    %4004 = vmatmul.bf16.gmra.mxu0 %v186
    %v4005 = vpop.f32.mrf.mxu0
    %v4006 = vadd.f32 %v3992, %v4005
    %v4007 = vpop.f32.mrf.mxu0
    %v4008 = vadd.f32 %v3994, %v4007
    %4009 = vdwg.mxu0
    %4010 = vmatpush.bf16.msra.mxu0 %v2780
    %4011 = vmatpush.bf16.msra.mxu0 %v2764
    %4012 = vmatpush.bf16.msra.mxu0 %v2748
    %4013 = vmatpush.bf16.msra.mxu0 %v2732
    %4014 = vmatpush.bf16.msra.mxu0 %v2716
    %4015 = vmatpush.bf16.msra.mxu0 %v2700
    %4016 = vmatpush.bf16.msra.mxu0 %v2684
    %4017 = vmatpush.bf16.msra.mxu0 %v2668
    %4018 = vmatmul.bf16.gmra.mxu0 %v187
    %v4019 = vpop.f32.mrf.mxu0
    %v4020 = vadd.f32 %v4006, %v4019
    %v4021 = vpop.f32.mrf.mxu0
    %v4022 = vadd.f32 %v4008, %v4021
    %4023 = vdwg.mxu0
    %4024 = vmatpush.bf16.msra.mxu0 %v2397
    %4025 = vmatpush.bf16.msra.mxu0 %v2381
    %4026 = vmatpush.bf16.msra.mxu0 %v2365
    %4027 = vmatpush.bf16.msra.mxu0 %v2349
    %4028 = vmatpush.bf16.msra.mxu0 %v2333
    %4029 = vmatpush.bf16.msra.mxu0 %v2317
    %4030 = vmatpush.bf16.msra.mxu0 %v2301
    %4031 = vmatpush.bf16.msra.mxu0 %v2285
    %4032 = vmatmul.bf16.gmra.mxu0 %v184
    %v4033 = vpop.f32.mrf.mxu0
    %v4034 = vadd.f32 %v717, %v4033
    %v4035 = vpop.f32.mrf.mxu0
    %v4036 = vadd.f32 %v717, %v4035
    %4037 = vdwg.mxu0
    %4038 = vmatpush.bf16.msra.mxu0 %v2525
    %4039 = vmatpush.bf16.msra.mxu0 %v2509
    %4040 = vmatpush.bf16.msra.mxu0 %v2493
    %4041 = vmatpush.bf16.msra.mxu0 %v2477
    %4042 = vmatpush.bf16.msra.mxu0 %v2461
    %4043 = vmatpush.bf16.msra.mxu0 %v2445
    %4044 = vmatpush.bf16.msra.mxu0 %v2429
    %4045 = vmatpush.bf16.msra.mxu0 %v2413
    %4046 = vmatmul.bf16.gmra.mxu0 %v185
    %v4047 = vpop.f32.mrf.mxu0
    %v4048 = vadd.f32 %v4034, %v4047
    %v4049 = vpop.f32.mrf.mxu0
    %v4050 = vadd.f32 %v4036, %v4049
    %4051 = vdwg.mxu0
    %4052 = vmatpush.bf16.msra.mxu0 %v2653
    %4053 = vmatpush.bf16.msra.mxu0 %v2637
    %4054 = vmatpush.bf16.msra.mxu0 %v2621
    %4055 = vmatpush.bf16.msra.mxu0 %v2605
    %4056 = vmatpush.bf16.msra.mxu0 %v2589
    %4057 = vmatpush.bf16.msra.mxu0 %v2573
    %4058 = vmatpush.bf16.msra.mxu0 %v2557
    %4059 = vmatpush.bf16.msra.mxu0 %v2541
    %4060 = vmatmul.bf16.gmra.mxu0 %v186
    %v4061 = vpop.f32.mrf.mxu0
    %v4062 = vadd.f32 %v4048, %v4061
    %v4063 = vpop.f32.mrf.mxu0
    %v4064 = vadd.f32 %v4050, %v4063
    %4065 = vdwg.mxu0
    %4066 = vmatpush.bf16.msra.mxu0 %v2781
    %4067 = vmatpush.bf16.msra.mxu0 %v2765
    %4068 = vmatpush.bf16.msra.mxu0 %v2749
    %4069 = vmatpush.bf16.msra.mxu0 %v2733
    %4070 = vmatpush.bf16.msra.mxu0 %v2717
    %4071 = vmatpush.bf16.msra.mxu0 %v2701
    %4072 = vmatpush.bf16.msra.mxu0 %v2685
    %4073 = vmatpush.bf16.msra.mxu0 %v2669
    %4074 = vmatmul.bf16.gmra.mxu0 %v187
    %v4075 = vpop.f32.mrf.mxu0
    %v4076 = vadd.f32 %v4062, %v4075
    %v4077 = vpop.f32.mrf.mxu0
    %v4078 = vadd.f32 %v4064, %v4077
    %4079 = vdwg.mxu0
    %4080 = vmatpush.bf16.msra.mxu0 %v2398
    %4081 = vmatpush.bf16.msra.mxu0 %v2382
    %4082 = vmatpush.bf16.msra.mxu0 %v2366
    %4083 = vmatpush.bf16.msra.mxu0 %v2350
    %4084 = vmatpush.bf16.msra.mxu0 %v2334
    %4085 = vmatpush.bf16.msra.mxu0 %v2318
    %4086 = vmatpush.bf16.msra.mxu0 %v2302
    %4087 = vmatpush.bf16.msra.mxu0 %v2286
    %4088 = vmatmul.bf16.gmra.mxu0 %v184
    %v4089 = vpop.f32.mrf.mxu0
    %v4090 = vadd.f32 %v718, %v4089
    %v4091 = vpop.f32.mrf.mxu0
    %v4092 = vadd.f32 %v718, %v4091
    %4093 = vdwg.mxu0
    %4094 = vmatpush.bf16.msra.mxu0 %v2526
    %4095 = vmatpush.bf16.msra.mxu0 %v2510
    %4096 = vmatpush.bf16.msra.mxu0 %v2494
    %4097 = vmatpush.bf16.msra.mxu0 %v2478
    %4098 = vmatpush.bf16.msra.mxu0 %v2462
    %4099 = vmatpush.bf16.msra.mxu0 %v2446
    %4100 = vmatpush.bf16.msra.mxu0 %v2430
    %4101 = vmatpush.bf16.msra.mxu0 %v2414
    %4102 = vmatmul.bf16.gmra.mxu0 %v185
    %v4103 = vpop.f32.mrf.mxu0
    %v4104 = vadd.f32 %v4090, %v4103
    %v4105 = vpop.f32.mrf.mxu0
    %v4106 = vadd.f32 %v4092, %v4105
    %4107 = vdwg.mxu0
    %4108 = vmatpush.bf16.msra.mxu0 %v2654
    %4109 = vmatpush.bf16.msra.mxu0 %v2638
    %4110 = vmatpush.bf16.msra.mxu0 %v2622
    %4111 = vmatpush.bf16.msra.mxu0 %v2606
    %4112 = vmatpush.bf16.msra.mxu0 %v2590
    %4113 = vmatpush.bf16.msra.mxu0 %v2574
    %4114 = vmatpush.bf16.msra.mxu0 %v2558
    %4115 = vmatpush.bf16.msra.mxu0 %v2542
    %4116 = vmatmul.bf16.gmra.mxu0 %v186
    %v4117 = vpop.f32.mrf.mxu0
    %v4118 = vadd.f32 %v4104, %v4117
    %v4119 = vpop.f32.mrf.mxu0
    %v4120 = vadd.f32 %v4106, %v4119
    %4121 = vdwg.mxu0
    %4122 = vmatpush.bf16.msra.mxu0 %v2782
    %4123 = vmatpush.bf16.msra.mxu0 %v2766
    %4124 = vmatpush.bf16.msra.mxu0 %v2750
    %4125 = vmatpush.bf16.msra.mxu0 %v2734
    %4126 = vmatpush.bf16.msra.mxu0 %v2718
    %4127 = vmatpush.bf16.msra.mxu0 %v2702
    %4128 = vmatpush.bf16.msra.mxu0 %v2686
    %4129 = vmatpush.bf16.msra.mxu0 %v2670
    %4130 = vmatmul.bf16.gmra.mxu0 %v187
    %v4131 = vpop.f32.mrf.mxu0
    %v4132 = vadd.f32 %v4118, %v4131
    %v4133 = vpop.f32.mrf.mxu0
    %v4134 = vadd.f32 %v4120, %v4133
    %4135 = vdwg.mxu0
    %4136 = vmatpush.bf16.msra.mxu0 %v2399
    %4137 = vmatpush.bf16.msra.mxu0 %v2383
    %4138 = vmatpush.bf16.msra.mxu0 %v2367
    %4139 = vmatpush.bf16.msra.mxu0 %v2351
    %4140 = vmatpush.bf16.msra.mxu0 %v2335
    %4141 = vmatpush.bf16.msra.mxu0 %v2319
    %4142 = vmatpush.bf16.msra.mxu0 %v2303
    %4143 = vmatpush.bf16.msra.mxu0 %v2287
    %4144 = vmatmul.bf16.gmra.mxu0 %v184
    %v4145 = vpop.f32.mrf.mxu0
    %v4146 = vadd.f32 %v719, %v4145
    %v4147 = vpop.f32.mrf.mxu0
    %v4148 = vadd.f32 %v719, %v4147
    %4149 = vdwg.mxu0
    %4150 = vmatpush.bf16.msra.mxu0 %v2527
    %4151 = vmatpush.bf16.msra.mxu0 %v2511
    %4152 = vmatpush.bf16.msra.mxu0 %v2495
    %4153 = vmatpush.bf16.msra.mxu0 %v2479
    %4154 = vmatpush.bf16.msra.mxu0 %v2463
    %4155 = vmatpush.bf16.msra.mxu0 %v2447
    %4156 = vmatpush.bf16.msra.mxu0 %v2431
    %4157 = vmatpush.bf16.msra.mxu0 %v2415
    %4158 = vmatmul.bf16.gmra.mxu0 %v185
    %v4159 = vpop.f32.mrf.mxu0
    %v4160 = vadd.f32 %v4146, %v4159
    %v4161 = vpop.f32.mrf.mxu0
    %v4162 = vadd.f32 %v4148, %v4161
    %4163 = vdwg.mxu0
    %4164 = vmatpush.bf16.msra.mxu0 %v2655
    %4165 = vmatpush.bf16.msra.mxu0 %v2639
    %4166 = vmatpush.bf16.msra.mxu0 %v2623
    %4167 = vmatpush.bf16.msra.mxu0 %v2607
    %4168 = vmatpush.bf16.msra.mxu0 %v2591
    %4169 = vmatpush.bf16.msra.mxu0 %v2575
    %4170 = vmatpush.bf16.msra.mxu0 %v2559
    %4171 = vmatpush.bf16.msra.mxu0 %v2543
    %4172 = vmatmul.bf16.gmra.mxu0 %v186
    %v4173 = vpop.f32.mrf.mxu0
    %v4174 = vadd.f32 %v4160, %v4173
    %v4175 = vpop.f32.mrf.mxu0
    %v4176 = vadd.f32 %v4162, %v4175
    %4177 = vdwg.mxu0
    %4178 = vmatpush.bf16.msra.mxu0 %v2783
    %4179 = vmatpush.bf16.msra.mxu0 %v2767
    %4180 = vmatpush.bf16.msra.mxu0 %v2751
    %4181 = vmatpush.bf16.msra.mxu0 %v2735
    %4182 = vmatpush.bf16.msra.mxu0 %v2719
    %4183 = vmatpush.bf16.msra.mxu0 %v2703
    %4184 = vmatpush.bf16.msra.mxu0 %v2687
    %4185 = vmatpush.bf16.msra.mxu0 %v2671
    %4186 = vmatmul.bf16.gmra.mxu0 %v187
    %v4187 = vpop.f32.mrf.mxu0
    %v4188 = vadd.f32 %v4174, %v4187
    %v4189 = vpop.f32.mrf.mxu0
    %v4190 = vadd.f32 %v4176, %v4189
    %4191 = vdwg.mxu0
    %vm4192 = vcmp.gt.f32.partialorder %v3348, 0.0
    %vm4193 = vcmp.gt.f32.partialorder %v3404, 0.0
    %vm4194 = vcmp.gt.f32.partialorder %v3460, 0.0
    %vm4195 = vcmp.gt.f32.partialorder %v3516, 0.0
    %vm4196 = vcmp.gt.f32.partialorder %v3572, 0.0
    %vm4197 = vcmp.gt.f32.partialorder %v3628, 0.0
    %vm4198 = vcmp.gt.f32.partialorder %v3684, 0.0
    %vm4199 = vcmp.gt.f32.partialorder %v3740, 0.0
    %vm4200 = vcmp.gt.f32.partialorder %v3796, 0.0
    %vm4201 = vcmp.gt.f32.partialorder %v3852, 0.0
    %vm4202 = vcmp.gt.f32.partialorder %v3908, 0.0
    %vm4203 = vcmp.gt.f32.partialorder %v3964, 0.0
    %vm4204 = vcmp.gt.f32.partialorder %v4020, 0.0
    %vm4205 = vcmp.gt.f32.partialorder %v4076, 0.0
    %vm4206 = vcmp.gt.f32.partialorder %v4132, 0.0
    %vm4207 = vcmp.gt.f32.partialorder %v4188, 0.0
    %vm4208 = vcmp.gt.f32.partialorder %v3350, 0.0
    %vm4209 = vcmp.gt.f32.partialorder %v3406, 0.0
    %vm4210 = vcmp.gt.f32.partialorder %v3462, 0.0
    %vm4211 = vcmp.gt.f32.partialorder %v3518, 0.0
    %vm4212 = vcmp.gt.f32.partialorder %v3574, 0.0
    %vm4213 = vcmp.gt.f32.partialorder %v3630, 0.0
    %vm4214 = vcmp.gt.f32.partialorder %v3686, 0.0
    %vm4215 = vcmp.gt.f32.partialorder %v3742, 0.0
    %vm4216 = vcmp.gt.f32.partialorder %v3798, 0.0
    %vm4217 = vcmp.gt.f32.partialorder %v3854, 0.0
    %vm4218 = vcmp.gt.f32.partialorder %v3910, 0.0
    %vm4219 = vcmp.gt.f32.partialorder %v3966, 0.0
    %vm4220 = vcmp.gt.f32.partialorder %v4022, 0.0
    %vm4221 = vcmp.gt.f32.partialorder %v4078, 0.0
    %vm4222 = vcmp.gt.f32.partialorder %v4134, 0.0
    %vm4223 = vcmp.gt.f32.partialorder %v4190, 0.0
    %v4224 = vstv %s37
    %v4225 = vmul.f32 %v4224, %v3348
    %v4226 = vmul.f32 %v4224, %v3404
    %v4227 = vmul.f32 %v4224, %v3460
    %v4228 = vmul.f32 %v4224, %v3516
    %v4229 = vmul.f32 %v4224, %v3572
    %v4230 = vmul.f32 %v4224, %v3628
    %v4231 = vmul.f32 %v4224, %v3684
    %v4232 = vmul.f32 %v4224, %v3740
    %v4233 = vmul.f32 %v4224, %v3796
    %v4234 = vmul.f32 %v4224, %v3852
    %v4235 = vmul.f32 %v4224, %v3908
    %v4236 = vmul.f32 %v4224, %v3964
    %v4237 = vmul.f32 %v4224, %v4020
    %v4238 = vmul.f32 %v4224, %v4076
    %v4239 = vmul.f32 %v4224, %v4132
    %v4240 = vmul.f32 %v4224, %v4188
    %v4241 = vmul.f32 %v4224, %v3350
    %v4242 = vmul.f32 %v4224, %v3406
    %v4243 = vmul.f32 %v4224, %v3462
    %v4244 = vmul.f32 %v4224, %v3518
    %v4245 = vmul.f32 %v4224, %v3574
    %v4246 = vmul.f32 %v4224, %v3630
    %v4247 = vmul.f32 %v4224, %v3686
    %v4248 = vmul.f32 %v4224, %v3742
    %v4249 = vmul.f32 %v4224, %v3798
    %v4250 = vmul.f32 %v4224, %v3854
    %v4251 = vmul.f32 %v4224, %v3910
    %v4252 = vmul.f32 %v4224, %v3966
    %v4253 = vmul.f32 %v4224, %v4022
    %v4254 = vmul.f32 %v4224, %v4078
    %v4255 = vmul.f32 %v4224, %v4134
    %v4256 = vmul.f32 %v4224, %v4190
    %v4257 = vsel %vm4192, %v3348, %v4225
    %v4258 = vsel %vm4193, %v3404, %v4226
    %v4259 = vsel %vm4194, %v3460, %v4227
    %v4260 = vsel %vm4195, %v3516, %v4228
    %v4261 = vsel %vm4196, %v3572, %v4229
    %v4262 = vsel %vm4197, %v3628, %v4230
    %v4263 = vsel %vm4198, %v3684, %v4231
    %v4264 = vsel %vm4199, %v3740, %v4232
    %v4265 = vsel %vm4200, %v3796, %v4233
    %v4266 = vsel %vm4201, %v3852, %v4234
    %v4267 = vsel %vm4202, %v3908, %v4235
    %v4268 = vsel %vm4203, %v3964, %v4236
    %v4269 = vsel %vm4204, %v4020, %v4237
    %v4270 = vsel %vm4205, %v4076, %v4238
    %v4271 = vsel %vm4206, %v4132, %v4239
    %v4272 = vsel %vm4207, %v4188, %v4240
    %v4273 = vsel %vm4208, %v3350, %v4241
    %v4274 = vsel %vm4209, %v3406, %v4242
    %v4275 = vsel %vm4210, %v3462, %v4243
    %v4276 = vsel %vm4211, %v3518, %v4244
    %v4277 = vsel %vm4212, %v3574, %v4245
    %v4278 = vsel %vm4213, %v3630, %v4246
    %v4279 = vsel %vm4214, %v3686, %v4247
    %v4280 = vsel %vm4215, %v3742, %v4248
    %v4281 = vsel %vm4216, %v3798, %v4249
    %v4282 = vsel %vm4217, %v3854, %v4250
    %v4283 = vsel %vm4218, %v3910, %v4251
    %v4284 = vsel %vm4219, %v3966, %v4252
    %v4285 = vsel %vm4220, %v4022, %v4253
    %v4286 = vsel %vm4221, %v4078, %v4254
    %v4287 = vsel %vm4222, %v4134, %v4255
    %v4288 = vsel %vm4223, %v4190, %v4256
    %v4289 = vpack.c.bf16 %v4273, %v4257
    %v4290 = vpack.c.bf16 %v4274, %v4258
    %v4291 = vpack.c.bf16 %v4275, %v4259
    %v4292 = vpack.c.bf16 %v4276, %v4260
    %v4293 = vpack.c.bf16 %v4277, %v4261
    %v4294 = vpack.c.bf16 %v4278, %v4262
    %v4295 = vpack.c.bf16 %v4279, %v4263
    %v4296 = vpack.c.bf16 %v4280, %v4264
    %v4297 = vpack.c.bf16 %v4281, %v4265
    %v4298 = vpack.c.bf16 %v4282, %v4266
    %v4299 = vpack.c.bf16 %v4283, %v4267
    %v4300 = vpack.c.bf16 %v4284, %v4268
    %v4301 = vpack.c.bf16 %v4285, %v4269
    %v4302 = vpack.c.bf16 %v4286, %v4270
    %v4303 = vpack.c.bf16 %v4287, %v4271
    %v4304 = vpack.c.bf16 %v4288, %v4272
    %v4305 = vld [vmem:[%s6] sm:$0xff]
    %v4306 = vld [vmem:[%s6 + $0x8] sm:$0xff]
    %v4307 = vld [vmem:[%s6 + $0x10] sm:$0xff]
    %v4308 = vld [vmem:[%s6 + $0x18] sm:$0xf]
    %v4309 = vld [vmem:[%s6 + $0x1c] sm:$0xff]
    %v4310 = vld [vmem:[%s6 + $0x24] sm:$0xff]
    %v4311 = vld [vmem:[%s6 + $0x2c] sm:$0xff]
    %v4312 = vld [vmem:[%s6 + $0x34] sm:$0xf]
    %v4313 = vld [vmem:[%s6 + $0x38] sm:$0xff]
    %v4314 = vld [vmem:[%s6 + $0x40] sm:$0xff]
    %v4315 = vld [vmem:[%s6 + $0x48] sm:$0xff]
    %v4316 = vld [vmem:[%s6 + $0x50] sm:$0xf]
    %v4317 = vld [vmem:[%s6 + $0x54] sm:$0xff]
    %v4318 = vld [vmem:[%s6 + $0x5c] sm:$0xff]
    %v4319 = vld [vmem:[%s6 + $0x64] sm:$0xff]
    %v4320 = vld [vmem:[%s6 + $0x6c] sm:$0xf]
    %v4321 = vld [vmem:[%s6 + $0x70] sm:$0xff]
    %v4322 = vld [vmem:[%s6 + $0x78] sm:$0xff]
    %v4323 = vld [vmem:[%s6 + $0x80] sm:$0xff]
    %v4324 = vld [vmem:[%s6 + $0x88] sm:$0xf]
    %v4325 = vld [vmem:[%s6 + $0x8c] sm:$0xff]
    %v4326 = vld [vmem:[%s6 + $0x94] sm:$0xff]
    %v4327 = vld [vmem:[%s6 + $0x9c] sm:$0xff]
    %v4328 = vld [vmem:[%s6 + $0xa4] sm:$0xf]
    %v4329 = vld [vmem:[%s6 + $0xa8] sm:$0xff]
    %v4330 = vld [vmem:[%s6 + $0xb0] sm:$0xff]
    %v4331 = vld [vmem:[%s6 + $0xb8] sm:$0xff]
    %v4332 = vld [vmem:[%s6 + $0xc0] sm:$0xf]
    %v4333 = vld [vmem:[%s6 + $0xc4] sm:$0xff]
    %v4334 = vld [vmem:[%s6 + $0xcc] sm:$0xff]
    %v4335 = vld [vmem:[%s6 + $0xd4] sm:$0xff]
    %v4336 = vld [vmem:[%s6 + $0xdc] sm:$0xf]
    %v4337 = vld [vmem:[%s6 + $0xe0] sm:$0xff]
    %v4338 = vld [vmem:[%s6 + $0xe8] sm:$0xff]
    %v4339 = vld [vmem:[%s6 + $0xf0] sm:$0xff]
    %v4340 = vld [vmem:[%s6 + $0xf8] sm:$0xf]
    %v4341 = vld [vmem:[%s6 + $0xfc] sm:$0xff]
    %v4342 = vld [vmem:[%s6 + $0x104] sm:$0xff]
    %v4343 = vld [vmem:[%s6 + $0x10c] sm:$0xff]
    %v4344 = vld [vmem:[%s6 + $0x114] sm:$0xf]
    %v4345 = vld [vmem:[%s6 + $0x118] sm:$0xff]
    %v4346 = vld [vmem:[%s6 + $0x120] sm:$0xff]
    %v4347 = vld [vmem:[%s6 + $0x128] sm:$0xff]
    %v4348 = vld [vmem:[%s6 + $0x130] sm:$0xf]
    %v4349 = vld [vmem:[%s6 + $0x134] sm:$0xff]
    %v4350 = vld [vmem:[%s6 + $0x13c] sm:$0xff]
    %v4351 = vld [vmem:[%s6 + $0x144] sm:$0xff]
    %v4352 = vld [vmem:[%s6 + $0x14c] sm:$0xf]
    %v4353 = vld [vmem:[%s6 + $0x150] sm:$0xff]
    %v4354 = vld [vmem:[%s6 + $0x158] sm:$0xff]
    %v4355 = vld [vmem:[%s6 + $0x160] sm:$0xff]
    %v4356 = vld [vmem:[%s6 + $0x168] sm:$0xf]
    %v4357 = vld [vmem:[%s6 + $0x16c] sm:$0xff]
    %v4358 = vld [vmem:[%s6 + $0x174] sm:$0xff]
    %v4359 = vld [vmem:[%s6 + $0x17c] sm:$0xff]
    %v4360 = vld [vmem:[%s6 + $0x184] sm:$0xf]
    %v4361 = vld [vmem:[%s6 + $0x188] sm:$0xff]
    %v4362 = vld [vmem:[%s6 + $0x190] sm:$0xff]
    %v4363 = vld [vmem:[%s6 + $0x198] sm:$0xff]
    %v4364 = vld [vmem:[%s6 + $0x1a0] sm:$0xf]
    %v4365 = vld [vmem:[%s6 + $0x1a4] sm:$0xff]
    %v4366 = vld [vmem:[%s6 + $0x1ac] sm:$0xff]
    %v4367 = vld [vmem:[%s6 + $0x1b4] sm:$0xff]
    %v4368 = vld [vmem:[%s6 + $0x1bc] sm:$0xf]
    %v4369 = vld [vmem:[%s6 + $0x1c0] sm:$0xff]
    %v4370 = vld [vmem:[%s6 + $0x1c8] sm:$0xff]
    %v4371 = vld [vmem:[%s6 + $0x1d0] sm:$0xff]
    %v4372 = vld [vmem:[%s6 + $0x1d8] sm:$0xf]
    %v4373 = vld [vmem:[%s6 + $0x1dc] sm:$0xff]
    %v4374 = vld [vmem:[%s6 + $0x1e4] sm:$0xff]
    %v4375 = vld [vmem:[%s6 + $0x1ec] sm:$0xff]
    %v4376 = vld [vmem:[%s6 + $0x1f4] sm:$0xf]
    %v4377 = vld [vmem:[%s6 + $0x1f8] sm:$0xff]
    %v4378 = vld [vmem:[%s6 + $0x200] sm:$0xff]
    %v4379 = vld [vmem:[%s6 + $0x208] sm:$0xff]
    %v4380 = vld [vmem:[%s6 + $0x210] sm:$0xf]
    %v4381 = vld [vmem:[%s6 + $0x214] sm:$0xff]
    %v4382 = vld [vmem:[%s6 + $0x21c] sm:$0xff]
    %v4383 = vld [vmem:[%s6 + $0x224] sm:$0xff]
    %v4384 = vld [vmem:[%s6 + $0x22c] sm:$0xf]
    %v4385 = vld [vmem:[%s6 + $0x230] sm:$0xff]
    %v4386 = vld [vmem:[%s6 + $0x238] sm:$0xff]
    %v4387 = vld [vmem:[%s6 + $0x240] sm:$0xff]
    %v4388 = vld [vmem:[%s6 + $0x248] sm:$0xf]
    %v4389 = vld [vmem:[%s6 + $0x24c] sm:$0xff]
    %v4390 = vld [vmem:[%s6 + $0x254] sm:$0xff]
    %v4391 = vld [vmem:[%s6 + $0x25c] sm:$0xff]
    %v4392 = vld [vmem:[%s6 + $0x264] sm:$0xf]
    %v4393 = vld [vmem:[%s6 + $0x268] sm:$0xff]
    %v4394 = vld [vmem:[%s6 + $0x270] sm:$0xff]
    %v4395 = vld [vmem:[%s6 + $0x278] sm:$0xff]
    %v4396 = vld [vmem:[%s6 + $0x280] sm:$0xf]
    %v4397 = vld [vmem:[%s6 + $0x284] sm:$0xff]
    %v4398 = vld [vmem:[%s6 + $0x28c] sm:$0xff]
    %v4399 = vld [vmem:[%s6 + $0x294] sm:$0xff]
    %v4400 = vld [vmem:[%s6 + $0x29c] sm:$0xf]
    %v4401 = vld [vmem:[%s6 + $0x2a0] sm:$0xff]
    %v4402 = vld [vmem:[%s6 + $0x2a8] sm:$0xff]
    %v4403 = vld [vmem:[%s6 + $0x2b0] sm:$0xff]
    %v4404 = vld [vmem:[%s6 + $0x2b8] sm:$0xf]
    %v4405 = vld [vmem:[%s6 + $0x2bc] sm:$0xff]
    %v4406 = vld [vmem:[%s6 + $0x2c4] sm:$0xff]
    %v4407 = vld [vmem:[%s6 + $0x2cc] sm:$0xff]
    %v4408 = vld [vmem:[%s6 + $0x2d4] sm:$0xf]
    %v4409 = vld [vmem:[%s6 + $0x2d8] sm:$0xff]
    %v4410 = vld [vmem:[%s6 + $0x2e0] sm:$0xff]
    %v4411 = vld [vmem:[%s6 + $0x2e8] sm:$0xff]
    %v4412 = vld [vmem:[%s6 + $0x2f0] sm:$0xf]
    %v4413 = vld [vmem:[%s6 + $0x2f4] sm:$0xff]
    %v4414 = vld [vmem:[%s6 + $0x2fc] sm:$0xff]
    %v4415 = vld [vmem:[%s6 + $0x304] sm:$0xff]
    %v4416 = vld [vmem:[%s6 + $0x30c] sm:$0xf]
    %v4417 = vld [vmem:[%s6 + $0x310] sm:$0xff]
    %v4418 = vld [vmem:[%s6 + $0x318] sm:$0xff]
    %v4419 = vld [vmem:[%s6 + $0x320] sm:$0xff]
    %v4420 = vld [vmem:[%s6 + $0x328] sm:$0xf]
    %v4421 = vld [vmem:[%s6 + $0x32c] sm:$0xff]
    %v4422 = vld [vmem:[%s6 + $0x334] sm:$0xff]
    %v4423 = vld [vmem:[%s6 + $0x33c] sm:$0xff]
    %v4424 = vld [vmem:[%s6 + $0x344] sm:$0xf]
    %v4425 = vld [vmem:[%s6 + $0x348] sm:$0xff]
    %v4426 = vld [vmem:[%s6 + $0x350] sm:$0xff]
    %v4427 = vld [vmem:[%s6 + $0x358] sm:$0xff]
    %v4428 = vld [vmem:[%s6 + $0x360] sm:$0xf]
    %v4429 = vld [vmem:[%s6 + $0x364] sm:$0xff]
    %v4430 = vld [vmem:[%s6 + $0x36c] sm:$0xff]
    %v4431 = vld [vmem:[%s6 + $0x374] sm:$0xff]
    %v4432 = vld [vmem:[%s6 + $0x37c] sm:$0xf]
    %v4433 = vld [vmem:[%s6 + $0x380] sm:$0xff]
    %v4434 = vld [vmem:[%s6 + $0x388] sm:$0xff]
    %v4435 = vld [vmem:[%s6 + $0x390] sm:$0xff]
    %v4436 = vld [vmem:[%s6 + $0x398] sm:$0xf]
    %v4437 = vld [vmem:[%s6 + $0x39c] sm:$0xff]
    %v4438 = vld [vmem:[%s6 + $0x3a4] sm:$0xff]
    %v4439 = vld [vmem:[%s6 + $0x3ac] sm:$0xff]
    %v4440 = vld [vmem:[%s6 + $0x3b4] sm:$0xf]
    %v4441 = vld [vmem:[%s6 + $0x3b8] sm:$0xff]
    %v4442 = vld [vmem:[%s6 + $0x3c0] sm:$0xff]
    %v4443 = vld [vmem:[%s6 + $0x3c8] sm:$0xff]
    %v4444 = vld [vmem:[%s6 + $0x3d0] sm:$0xf]
    %v4445 = vld [vmem:[%s6 + $0x3d4] sm:$0xff]
    %v4446 = vld [vmem:[%s6 + $0x3dc] sm:$0xff]
    %v4447 = vld [vmem:[%s6 + $0x3e4] sm:$0xff]
    %v4448 = vld [vmem:[%s6 + $0x3ec] sm:$0xf]
    %v4449 = vld [vmem:[%s6 + $0x3f0] sm:$0xff]
    %v4450 = vld [vmem:[%s6 + $0x3f8] sm:$0xff]
    %v4451 = vld [vmem:[%s6 + $0x400] sm:$0xff]
    %v4452 = vld [vmem:[%s6 + $0x408] sm:$0xf]
    %v4453 = vld [vmem:[%s6 + $0x40c] sm:$0xff]
    %v4454 = vld [vmem:[%s6 + $0x414] sm:$0xff]
    %v4455 = vld [vmem:[%s6 + $0x41c] sm:$0xff]
    %v4456 = vld [vmem:[%s6 + $0x424] sm:$0xf]
    %v4457 = vld [vmem:[%s6 + $0x428] sm:$0xff]
    %v4458 = vld [vmem:[%s6 + $0x430] sm:$0xff]
    %v4459 = vld [vmem:[%s6 + $0x438] sm:$0xff]
    %v4460 = vld [vmem:[%s6 + $0x440] sm:$0xf]
    %v4461 = vld [vmem:[%s6 + $0x444] sm:$0xff]
    %v4462 = vld [vmem:[%s6 + $0x44c] sm:$0xff]
    %v4463 = vld [vmem:[%s6 + $0x454] sm:$0xff]
    %v4464 = vld [vmem:[%s6 + $0x45c] sm:$0xf]
    %v4465 = vld [vmem:[%s6 + $0x460] sm:$0xff]
    %v4466 = vld [vmem:[%s6 + $0x468] sm:$0xff]
    %v4467 = vld [vmem:[%s6 + $0x470] sm:$0xff]
    %v4468 = vld [vmem:[%s6 + $0x478] sm:$0xf]
    %v4469 = vld [vmem:[%s6 + $0x47c] sm:$0xff]
    %v4470 = vld [vmem:[%s6 + $0x484] sm:$0xff]
    %v4471 = vld [vmem:[%s6 + $0x48c] sm:$0xff]
    %v4472 = vld [vmem:[%s6 + $0x494] sm:$0xf]
    %v4473 = vld [vmem:[%s6 + $0x498] sm:$0xff]
    %v4474 = vld [vmem:[%s6 + $0x4a0] sm:$0xff]
    %v4475 = vld [vmem:[%s6 + $0x4a8] sm:$0xff]
    %v4476 = vld [vmem:[%s6 + $0x4b0] sm:$0xf]
    %v4477 = vld [vmem:[%s6 + $0x4b4] sm:$0xff]
    %v4478 = vld [vmem:[%s6 + $0x4bc] sm:$0xff]
    %v4479 = vld [vmem:[%s6 + $0x4c4] sm:$0xff]
    %v4480 = vld [vmem:[%s6 + $0x4cc] sm:$0xf]
    %v4481 = vld [vmem:[%s6 + $0x4d0] sm:$0xff]
    %v4482 = vld [vmem:[%s6 + $0x4d8] sm:$0xff]
    %v4483 = vld [vmem:[%s6 + $0x4e0] sm:$0xff]
    %v4484 = vld [vmem:[%s6 + $0x4e8] sm:$0xf]
    %v4485 = vld [vmem:[%s6 + $0x4ec] sm:$0xff]
    %v4486 = vld [vmem:[%s6 + $0x4f4] sm:$0xff]
    %v4487 = vld [vmem:[%s6 + $0x4fc] sm:$0xff]
    %v4488 = vld [vmem:[%s6 + $0x504] sm:$0xf]
    %v4489 = vld [vmem:[%s6 + $0x508] sm:$0xff]
    %v4490 = vld [vmem:[%s6 + $0x510] sm:$0xff]
    %v4491 = vld [vmem:[%s6 + $0x518] sm:$0xff]
    %v4492 = vld [vmem:[%s6 + $0x520] sm:$0xf]
    %v4493 = vld [vmem:[%s6 + $0x524] sm:$0xff]
    %v4494 = vld [vmem:[%s6 + $0x52c] sm:$0xff]
    %v4495 = vld [vmem:[%s6 + $0x534] sm:$0xff]
    %v4496 = vld [vmem:[%s6 + $0x53c] sm:$0xf]
    %v4497 = vld [vmem:[%s6 + $0x540] sm:$0xff]
    %v4498 = vld [vmem:[%s6 + $0x548] sm:$0xff]
    %v4499 = vld [vmem:[%s6 + $0x550] sm:$0xff]
    %v4500 = vld [vmem:[%s6 + $0x558] sm:$0xf]
    %v4501 = vld [vmem:[%s6 + $0x55c] sm:$0xff]
    %v4502 = vld [vmem:[%s6 + $0x564] sm:$0xff]
    %v4503 = vld [vmem:[%s6 + $0x56c] sm:$0xff]
    %v4504 = vld [vmem:[%s6 + $0x574] sm:$0xf]
    %v4505 = vld [vmem:[%s6 + $0x578] sm:$0xff]
    %v4506 = vld [vmem:[%s6 + $0x580] sm:$0xff]
    %v4507 = vld [vmem:[%s6 + $0x588] sm:$0xff]
    %v4508 = vld [vmem:[%s6 + $0x590] sm:$0xf]
    %v4509 = vld [vmem:[%s6 + $0x594] sm:$0xff]
    %v4510 = vld [vmem:[%s6 + $0x59c] sm:$0xff]
    %v4511 = vld [vmem:[%s6 + $0x5a4] sm:$0xff]
    %v4512 = vld [vmem:[%s6 + $0x5ac] sm:$0xf]
    %v4513 = vld [vmem:[%s6 + $0x5b0] sm:$0xff]
    %v4514 = vld [vmem:[%s6 + $0x5b8] sm:$0xff]
    %v4515 = vld [vmem:[%s6 + $0x5c0] sm:$0xff]
    %v4516 = vld [vmem:[%s6 + $0x5c8] sm:$0xf]
    %v4517 = vld [vmem:[%s6 + $0x5cc] sm:$0xff]
    %v4518 = vld [vmem:[%s6 + $0x5d4] sm:$0xff]
    %v4519 = vld [vmem:[%s6 + $0x5dc] sm:$0xff]
    %v4520 = vld [vmem:[%s6 + $0x5e4] sm:$0xf]
    %v4521 = vld [vmem:[%s6 + $0x5e8] sm:$0xff]
    %v4522 = vld [vmem:[%s6 + $0x5f0] sm:$0xff]
    %v4523 = vld [vmem:[%s6 + $0x5f8] sm:$0xff]
    %v4524 = vld [vmem:[%s6 + $0x600] sm:$0xf]
    %v4525 = vld [vmem:[%s6 + $0x604] sm:$0xff]
    %v4526 = vld [vmem:[%s6 + $0x60c] sm:$0xff]
    %v4527 = vld [vmem:[%s6 + $0x614] sm:$0xff]
    %v4528 = vld [vmem:[%s6 + $0x61c] sm:$0xf]
    %v4529 = vld [vmem:[%s6 + $0x620] sm:$0xff]
    %v4530 = vld [vmem:[%s6 + $0x628] sm:$0xff]
    %v4531 = vld [vmem:[%s6 + $0x630] sm:$0xff]
    %v4532 = vld [vmem:[%s6 + $0x638] sm:$0xf]
    %v4533 = vld [vmem:[%s6 + $0x63c] sm:$0xff]
    %v4534 = vld [vmem:[%s6 + $0x644] sm:$0xff]
    %v4535 = vld [vmem:[%s6 + $0x64c] sm:$0xff]
    %v4536 = vld [vmem:[%s6 + $0x654] sm:$0xf]
    %v4537 = vld [vmem:[%s6 + $0x658] sm:$0xff]
    %v4538 = vld [vmem:[%s6 + $0x660] sm:$0xff]
    %v4539 = vld [vmem:[%s6 + $0x668] sm:$0xff]
    %v4540 = vld [vmem:[%s6 + $0x670] sm:$0xf]
    %v4541 = vld [vmem:[%s6 + $0x674] sm:$0xff]
    %v4542 = vld [vmem:[%s6 + $0x67c] sm:$0xff]
    %v4543 = vld [vmem:[%s6 + $0x684] sm:$0xff]
    %v4544 = vld [vmem:[%s6 + $0x68c] sm:$0xf]
    %v4545 = vld [vmem:[%s6 + $0x690] sm:$0xff]
    %v4546 = vld [vmem:[%s6 + $0x698] sm:$0xff]
    %v4547 = vld [vmem:[%s6 + $0x6a0] sm:$0xff]
    %v4548 = vld [vmem:[%s6 + $0x6a8] sm:$0xf]
    %v4549 = vld [vmem:[%s6 + $0x6ac] sm:$0xff]
    %v4550 = vld [vmem:[%s6 + $0x6b4] sm:$0xff]
    %v4551 = vld [vmem:[%s6 + $0x6bc] sm:$0xff]
    %v4552 = vld [vmem:[%s6 + $0x6c4] sm:$0xf]
    %v4553 = vld [vmem:[%s6 + $0x6c8] sm:$0xff]
    %v4554 = vld [vmem:[%s6 + $0x6d0] sm:$0xff]
    %v4555 = vld [vmem:[%s6 + $0x6d8] sm:$0xff]
    %v4556 = vld [vmem:[%s6 + $0x6e0] sm:$0xf]
    %v4557 = vld [vmem:[%s6 + $0x6e4] sm:$0xff]
    %v4558 = vld [vmem:[%s6 + $0x6ec] sm:$0xff]
    %v4559 = vld [vmem:[%s6 + $0x6f4] sm:$0xff]
    %v4560 = vld [vmem:[%s6 + $0x6fc] sm:$0xf]
    %v4561 = vld [vmem:[%s6 + $0x700] sm:$0xff]
    %v4562 = vld [vmem:[%s6 + $0x708] sm:$0xff]
    %v4563 = vld [vmem:[%s6 + $0x710] sm:$0xff]
    %v4564 = vld [vmem:[%s6 + $0x718] sm:$0xf]
    %v4565 = vld [vmem:[%s6 + $0x71c] sm:$0xff]
    %v4566 = vld [vmem:[%s6 + $0x724] sm:$0xff]
    %v4567 = vld [vmem:[%s6 + $0x72c] sm:$0xff]
    %v4568 = vld [vmem:[%s6 + $0x734] sm:$0xf]
    %v4569 = vld [vmem:[%s6 + $0x738] sm:$0xff]
    %v4570 = vld [vmem:[%s6 + $0x740] sm:$0xff]
    %v4571 = vld [vmem:[%s6 + $0x748] sm:$0xff]
    %v4572 = vld [vmem:[%s6 + $0x750] sm:$0xf]
    %v4573 = vld [vmem:[%s6 + $0x754] sm:$0xff]
    %v4574 = vld [vmem:[%s6 + $0x75c] sm:$0xff]
    %v4575 = vld [vmem:[%s6 + $0x764] sm:$0xff]
    %v4576 = vld [vmem:[%s6 + $0x76c] sm:$0xf]
    %v4577 = vld [vmem:[%s6 + $0x770] sm:$0xff]
    %v4578 = vld [vmem:[%s6 + $0x778] sm:$0xff]
    %v4579 = vld [vmem:[%s6 + $0x780] sm:$0xff]
    %v4580 = vld [vmem:[%s6 + $0x788] sm:$0xf]
    %v4581 = vld [vmem:[%s6 + $0x78c] sm:$0xff]
    %v4582 = vld [vmem:[%s6 + $0x794] sm:$0xff]
    %v4583 = vld [vmem:[%s6 + $0x79c] sm:$0xff]
    %v4584 = vld [vmem:[%s6 + $0x7a4] sm:$0xf]
    %v4585 = vld [vmem:[%s6 + $0x7a8] sm:$0xff]
    %v4586 = vld [vmem:[%s6 + $0x7b0] sm:$0xff]
    %v4587 = vld [vmem:[%s6 + $0x7b8] sm:$0xff]
    %v4588 = vld [vmem:[%s6 + $0x7c0] sm:$0xf]
    %v4589 = vld [vmem:[%s6 + $0x7c4] sm:$0xff]
    %v4590 = vld [vmem:[%s6 + $0x7cc] sm:$0xff]
    %v4591 = vld [vmem:[%s6 + $0x7d4] sm:$0xff]
    %v4592 = vld [vmem:[%s6 + $0x7dc] sm:$0xf]
    %v4593 = vld [vmem:[%s6 + $0x7e0] sm:$0xff]
    %v4594 = vld [vmem:[%s6 + $0x7e8] sm:$0xff]
    %v4595 = vld [vmem:[%s6 + $0x7f0] sm:$0xff]
    %v4596 = vld [vmem:[%s6 + $0x7f8] sm:$0xf]
    %v4597 = vld [vmem:[%s6 + $0x7fc] sm:$0xff]
    %v4598 = vld [vmem:[%s6 + $0x804] sm:$0xff]
    %v4599 = vld [vmem:[%s6 + $0x80c] sm:$0xff]
    %v4600 = vld [vmem:[%s6 + $0x814] sm:$0xf]
    %v4601 = vld [vmem:[%s6 + $0x818] sm:$0xff]
    %v4602 = vld [vmem:[%s6 + $0x820] sm:$0xff]
    %v4603 = vld [vmem:[%s6 + $0x828] sm:$0xff]
    %v4604 = vld [vmem:[%s6 + $0x830] sm:$0xf]
    %v4605 = vld [vmem:[%s6 + $0x834] sm:$0xff]
    %v4606 = vld [vmem:[%s6 + $0x83c] sm:$0xff]
    %v4607 = vld [vmem:[%s6 + $0x844] sm:$0xff]
    %v4608 = vld [vmem:[%s6 + $0x84c] sm:$0xf]
    %v4609 = vld [vmem:[%s6 + $0x850] sm:$0xff]
    %v4610 = vld [vmem:[%s6 + $0x858] sm:$0xff]
    %v4611 = vld [vmem:[%s6 + $0x860] sm:$0xff]
    %v4612 = vld [vmem:[%s6 + $0x868] sm:$0xf]
    %v4613 = vld [vmem:[%s6 + $0x86c] sm:$0xff]
    %v4614 = vld [vmem:[%s6 + $0x874] sm:$0xff]
    %v4615 = vld [vmem:[%s6 + $0x87c] sm:$0xff]
    %v4616 = vld [vmem:[%s6 + $0x884] sm:$0xf]
    %v4617 = vld [vmem:[%s6 + $0x888] sm:$0xff]
    %v4618 = vld [vmem:[%s6 + $0x890] sm:$0xff]
    %v4619 = vld [vmem:[%s6 + $0x898] sm:$0xff]
    %v4620 = vld [vmem:[%s6 + $0x8a0] sm:$0xf]
    %v4621 = vld [vmem:[%s6 + $0x8a4] sm:$0xff]
    %v4622 = vld [vmem:[%s6 + $0x8ac] sm:$0xff]
    %v4623 = vld [vmem:[%s6 + $0x8b4] sm:$0xff]
    %v4624 = vld [vmem:[%s6 + $0x8bc] sm:$0xf]
    %v4625 = vld [vmem:[%s6 + $0x8c0] sm:$0xff]
    %v4626 = vld [vmem:[%s6 + $0x8c8] sm:$0xff]
    %v4627 = vld [vmem:[%s6 + $0x8d0] sm:$0xff]
    %v4628 = vld [vmem:[%s6 + $0x8d8] sm:$0xf]
    %v4629 = vld [vmem:[%s6 + $0x8dc] sm:$0xff]
    %v4630 = vld [vmem:[%s6 + $0x8e4] sm:$0xff]
    %v4631 = vld [vmem:[%s6 + $0x8ec] sm:$0xff]
    %v4632 = vld [vmem:[%s6 + $0x8f4] sm:$0xf]
    %v4633 = vld [vmem:[%s6 + $0x8f8] sm:$0xff]
    %v4634 = vld [vmem:[%s6 + $0x900] sm:$0xff]
    %v4635 = vld [vmem:[%s6 + $0x908] sm:$0xff]
    %v4636 = vld [vmem:[%s6 + $0x910] sm:$0xf]
    %v4637 = vld [vmem:[%s6 + $0x914] sm:$0xff]
    %v4638 = vld [vmem:[%s6 + $0x91c] sm:$0xff]
    %v4639 = vld [vmem:[%s6 + $0x924] sm:$0xff]
    %v4640 = vld [vmem:[%s6 + $0x92c] sm:$0xf]
    %v4641 = vld [vmem:[%s6 + $0x930] sm:$0xff]
    %v4642 = vld [vmem:[%s6 + $0x938] sm:$0xff]
    %v4643 = vld [vmem:[%s6 + $0x940] sm:$0xff]
    %v4644 = vld [vmem:[%s6 + $0x948] sm:$0xf]
    %v4645 = vld [vmem:[%s6 + $0x94c] sm:$0xff]
    %v4646 = vld [vmem:[%s6 + $0x954] sm:$0xff]
    %v4647 = vld [vmem:[%s6 + $0x95c] sm:$0xff]
    %v4648 = vld [vmem:[%s6 + $0x964] sm:$0xf]
    %v4649 = vld [vmem:[%s6 + $0x968] sm:$0xff]
    %v4650 = vld [vmem:[%s6 + $0x970] sm:$0xff]
    %v4651 = vld [vmem:[%s6 + $0x978] sm:$0xff]
    %v4652 = vld [vmem:[%s6 + $0x980] sm:$0xf]
    %v4653 = vld [vmem:[%s6 + $0x984] sm:$0xff]
    %v4654 = vld [vmem:[%s6 + $0x98c] sm:$0xff]
    %v4655 = vld [vmem:[%s6 + $0x994] sm:$0xff]
    %v4656 = vld [vmem:[%s6 + $0x99c] sm:$0xf]
    %v4657 = vld [vmem:[%s6 + $0x9a0] sm:$0xff]
    %v4658 = vld [vmem:[%s6 + $0x9a8] sm:$0xff]
    %v4659 = vld [vmem:[%s6 + $0x9b0] sm:$0xff]
    %v4660 = vld [vmem:[%s6 + $0x9b8] sm:$0xf]
    %v4661 = vld [vmem:[%s6 + $0x9bc] sm:$0xff]
    %v4662 = vld [vmem:[%s6 + $0x9c4] sm:$0xff]
    %v4663 = vld [vmem:[%s6 + $0x9cc] sm:$0xff]
    %v4664 = vld [vmem:[%s6 + $0x9d4] sm:$0xf]
    %v4665 = vld [vmem:[%s6 + $0x9d8] sm:$0xff]
    %v4666 = vld [vmem:[%s6 + $0x9e0] sm:$0xff]
    %v4667 = vld [vmem:[%s6 + $0x9e8] sm:$0xff]
    %v4668 = vld [vmem:[%s6 + $0x9f0] sm:$0xf]
    %v4669 = vld [vmem:[%s6 + $0x9f4] sm:$0xff]
    %v4670 = vld [vmem:[%s6 + $0x9fc] sm:$0xff]
    %v4671 = vld [vmem:[%s6 + $0xa04] sm:$0xff]
    %v4672 = vld [vmem:[%s6 + $0xa0c] sm:$0xf]
    %v4673 = vld [vmem:[%s6 + $0xa10] sm:$0xff]
    %v4674 = vld [vmem:[%s6 + $0xa18] sm:$0xff]
    %v4675 = vld [vmem:[%s6 + $0xa20] sm:$0xff]
    %v4676 = vld [vmem:[%s6 + $0xa28] sm:$0xf]
    %v4677 = vld [vmem:[%s6 + $0xa2c] sm:$0xff]
    %v4678 = vld [vmem:[%s6 + $0xa34] sm:$0xff]
    %v4679 = vld [vmem:[%s6 + $0xa3c] sm:$0xff]
    %v4680 = vld [vmem:[%s6 + $0xa44] sm:$0xf]
    %v4681 = vld [vmem:[%s6 + $0xa48] sm:$0xff]
    %v4682 = vld [vmem:[%s6 + $0xa50] sm:$0xff]
    %v4683 = vld [vmem:[%s6 + $0xa58] sm:$0xff]
    %v4684 = vld [vmem:[%s6 + $0xa60] sm:$0xf]
    %v4685 = vld [vmem:[%s6 + $0xa64] sm:$0xff]
    %v4686 = vld [vmem:[%s6 + $0xa6c] sm:$0xff]
    %v4687 = vld [vmem:[%s6 + $0xa74] sm:$0xff]
    %v4688 = vld [vmem:[%s6 + $0xa7c] sm:$0xf]
    %v4689 = vld [vmem:[%s6 + $0xa80] sm:$0xff]
    %v4690 = vld [vmem:[%s6 + $0xa88] sm:$0xff]
    %v4691 = vld [vmem:[%s6 + $0xa90] sm:$0xff]
    %v4692 = vld [vmem:[%s6 + $0xa98] sm:$0xf]
    %v4693 = vld [vmem:[%s6 + $0xa9c] sm:$0xff]
    %v4694 = vld [vmem:[%s6 + $0xaa4] sm:$0xff]
    %v4695 = vld [vmem:[%s6 + $0xaac] sm:$0xff]
    %v4696 = vld [vmem:[%s6 + $0xab4] sm:$0xf]
    %v4697 = vld [vmem:[%s6 + $0xab8] sm:$0xff]
    %v4698 = vld [vmem:[%s6 + $0xac0] sm:$0xff]
    %v4699 = vld [vmem:[%s6 + $0xac8] sm:$0xff]
    %v4700 = vld [vmem:[%s6 + $0xad0] sm:$0xf]
    %v4701 = vld [vmem:[%s6 + $0xad4] sm:$0xff]
    %v4702 = vld [vmem:[%s6 + $0xadc] sm:$0xff]
    %v4703 = vld [vmem:[%s6 + $0xae4] sm:$0xff]
    %v4704 = vld [vmem:[%s6 + $0xaec] sm:$0xf]
    %v4705 = vld [vmem:[%s6 + $0xaf0] sm:$0xff]
    %v4706 = vld [vmem:[%s6 + $0xaf8] sm:$0xff]
    %v4707 = vld [vmem:[%s6 + $0xb00] sm:$0xff]
    %v4708 = vld [vmem:[%s6 + $0xb08] sm:$0xf]
    %v4709 = vld [vmem:[%s6 + $0xb0c] sm:$0xff]
    %v4710 = vld [vmem:[%s6 + $0xb14] sm:$0xff]
    %v4711 = vld [vmem:[%s6 + $0xb1c] sm:$0xff]
    %v4712 = vld [vmem:[%s6 + $0xb24] sm:$0xf]
    %v4713 = vld [vmem:[%s6 + $0xb28] sm:$0xff]
    %v4714 = vld [vmem:[%s6 + $0xb30] sm:$0xff]
    %v4715 = vld [vmem:[%s6 + $0xb38] sm:$0xff]
    %v4716 = vld [vmem:[%s6 + $0xb40] sm:$0xf]
    %v4717 = vld [vmem:[%s6 + $0xb44] sm:$0xff]
    %v4718 = vld [vmem:[%s6 + $0xb4c] sm:$0xff]
    %v4719 = vld [vmem:[%s6 + $0xb54] sm:$0xff]
    %v4720 = vld [vmem:[%s6 + $0xb5c] sm:$0xf]
    %v4721 = vld [vmem:[%s6 + $0xb60] sm:$0xff]
    %v4722 = vld [vmem:[%s6 + $0xb68] sm:$0xff]
    %v4723 = vld [vmem:[%s6 + $0xb70] sm:$0xff]
    %v4724 = vld [vmem:[%s6 + $0xb78] sm:$0xf]
    %v4725 = vld [vmem:[%s6 + $0xb7c] sm:$0xff]
    %v4726 = vld [vmem:[%s6 + $0xb84] sm:$0xff]
    %v4727 = vld [vmem:[%s6 + $0xb8c] sm:$0xff]
    %v4728 = vld [vmem:[%s6 + $0xb94] sm:$0xf]
    %v4729 = vld [vmem:[%s6 + $0xb98] sm:$0xff]
    %v4730 = vld [vmem:[%s6 + $0xba0] sm:$0xff]
    %v4731 = vld [vmem:[%s6 + $0xba8] sm:$0xff]
    %v4732 = vld [vmem:[%s6 + $0xbb0] sm:$0xf]
    %v4733 = vld [vmem:[%s6 + $0xbb4] sm:$0xff]
    %v4734 = vld [vmem:[%s6 + $0xbbc] sm:$0xff]
    %v4735 = vld [vmem:[%s6 + $0xbc4] sm:$0xff]
    %v4736 = vld [vmem:[%s6 + $0xbcc] sm:$0xf]
    %v4737 = vld [vmem:[%s6 + $0xbd0] sm:$0xff]
    %v4738 = vld [vmem:[%s6 + $0xbd8] sm:$0xff]
    %v4739 = vld [vmem:[%s6 + $0xbe0] sm:$0xff]
    %v4740 = vld [vmem:[%s6 + $0xbe8] sm:$0xf]
    %v4741 = vld [vmem:[%s6 + $0xbec] sm:$0xff]
    %v4742 = vld [vmem:[%s6 + $0xbf4] sm:$0xff]
    %v4743 = vld [vmem:[%s6 + $0xbfc] sm:$0xff]
    %v4744 = vld [vmem:[%s6 + $0xc04] sm:$0xf]
    %v4745 = vld [vmem:[%s6 + $0xc08] sm:$0xff]
    %v4746 = vld [vmem:[%s6 + $0xc10] sm:$0xff]
    %v4747 = vld [vmem:[%s6 + $0xc18] sm:$0xff]
    %v4748 = vld [vmem:[%s6 + $0xc20] sm:$0xf]
    %v4749 = vld [vmem:[%s6 + $0xc24] sm:$0xff]
    %v4750 = vld [vmem:[%s6 + $0xc2c] sm:$0xff]
    %v4751 = vld [vmem:[%s6 + $0xc34] sm:$0xff]
    %v4752 = vld [vmem:[%s6 + $0xc3c] sm:$0xf]
    %v4753 = vld [vmem:[%s6 + $0xc40] sm:$0xff]
    %v4754 = vld [vmem:[%s6 + $0xc48] sm:$0xff]
    %v4755 = vld [vmem:[%s6 + $0xc50] sm:$0xff]
    %v4756 = vld [vmem:[%s6 + $0xc58] sm:$0xf]
    %v4757 = vld [vmem:[%s6 + $0xc5c] sm:$0xff]
    %v4758 = vld [vmem:[%s6 + $0xc64] sm:$0xff]
    %v4759 = vld [vmem:[%s6 + $0xc6c] sm:$0xff]
    %v4760 = vld [vmem:[%s6 + $0xc74] sm:$0xf]
    %v4761 = vld [vmem:[%s6 + $0xc78] sm:$0xff]
    %v4762 = vld [vmem:[%s6 + $0xc80] sm:$0xff]
    %v4763 = vld [vmem:[%s6 + $0xc88] sm:$0xff]
    %v4764 = vld [vmem:[%s6 + $0xc90] sm:$0xf]
    %v4765 = vld [vmem:[%s6 + $0xc94] sm:$0xff]
    %v4766 = vld [vmem:[%s6 + $0xc9c] sm:$0xff]
    %v4767 = vld [vmem:[%s6 + $0xca4] sm:$0xff]
    %v4768 = vld [vmem:[%s6 + $0xcac] sm:$0xf]
    %v4769 = vld [vmem:[%s6 + $0xcb0] sm:$0xff]
    %v4770 = vld [vmem:[%s6 + $0xcb8] sm:$0xff]
    %v4771 = vld [vmem:[%s6 + $0xcc0] sm:$0xff]
    %v4772 = vld [vmem:[%s6 + $0xcc8] sm:$0xf]
    %v4773 = vld [vmem:[%s6 + $0xccc] sm:$0xff]
    %v4774 = vld [vmem:[%s6 + $0xcd4] sm:$0xff]
    %v4775 = vld [vmem:[%s6 + $0xcdc] sm:$0xff]
    %v4776 = vld [vmem:[%s6 + $0xce4] sm:$0xf]
    %v4777 = vld [vmem:[%s6 + $0xce8] sm:$0xff]
    %v4778 = vld [vmem:[%s6 + $0xcf0] sm:$0xff]
    %v4779 = vld [vmem:[%s6 + $0xcf8] sm:$0xff]
    %v4780 = vld [vmem:[%s6 + $0xd00] sm:$0xf]
    %v4781 = vld [vmem:[%s6 + $0xd04] sm:$0xff]
    %v4782 = vld [vmem:[%s6 + $0xd0c] sm:$0xff]
    %v4783 = vld [vmem:[%s6 + $0xd14] sm:$0xff]
    %v4784 = vld [vmem:[%s6 + $0xd1c] sm:$0xf]
    %v4785 = vld [vmem:[%s6 + $0xd20] sm:$0xff]
    %v4786 = vld [vmem:[%s6 + $0xd28] sm:$0xff]
    %v4787 = vld [vmem:[%s6 + $0xd30] sm:$0xff]
    %v4788 = vld [vmem:[%s6 + $0xd38] sm:$0xf]
    %v4789 = vld [vmem:[%s6 + $0xd3c] sm:$0xff]
    %v4790 = vld [vmem:[%s6 + $0xd44] sm:$0xff]
    %v4791 = vld [vmem:[%s6 + $0xd4c] sm:$0xff]
    %v4792 = vld [vmem:[%s6 + $0xd54] sm:$0xf]
    %v4793 = vld [vmem:[%s6 + $0xd58] sm:$0xff]
    %v4794 = vld [vmem:[%s6 + $0xd60] sm:$0xff]
    %v4795 = vld [vmem:[%s6 + $0xd68] sm:$0xff]
    %v4796 = vld [vmem:[%s6 + $0xd70] sm:$0xf]
    %v4797 = vld [vmem:[%s6 + $0xd74] sm:$0xff]
    %v4798 = vld [vmem:[%s6 + $0xd7c] sm:$0xff]
    %v4799 = vld [vmem:[%s6 + $0xd84] sm:$0xff]
    %v4800 = vld [vmem:[%s6 + $0xd8c] sm:$0xf]
    %v4801 = vld [vmem:[%s6 + $0xd90] sm:$0xff]
    %v4802 = vld [vmem:[%s6 + $0xd98] sm:$0xff]
    %v4803 = vld [vmem:[%s6 + $0xda0] sm:$0xff]
    %v4804 = vld [vmem:[%s6 + $0xda8] sm:$0xf]
    %v4805 = vld [vmem:[%s6 + $0xdac] sm:$0xff]
    %v4806 = vld [vmem:[%s6 + $0xdb4] sm:$0xff]
    %v4807 = vld [vmem:[%s6 + $0xdbc] sm:$0xff]
    %v4808 = vld [vmem:[%s6 + $0xdc4] sm:$0xf]
    %v4809 = vld [vmem:[%s6 + $0xdc8] sm:$0xff]
    %v4810 = vld [vmem:[%s6 + $0xdd0] sm:$0xff]
    %v4811 = vld [vmem:[%s6 + $0xdd8] sm:$0xff]
    %v4812 = vld [vmem:[%s6 + $0xde0] sm:$0xf]
    %v4813 = vld [vmem:[%s6 + $0xde4] sm:$0xff]
    %v4814 = vld [vmem:[%s6 + $0xdec] sm:$0xff]
    %v4815 = vld [vmem:[%s6 + $0xdf4] sm:$0xff]
    %v4816 = vld [vmem:[%s6 + $0xdfc] sm:$0xf]
    %v4817 = vld [vmem:[%s6 + $0xe00] sm:$0xff]
    %v4818 = vld [vmem:[%s6 + $0xe08] sm:$0xff]
    %v4819 = vld [vmem:[%s6 + $0xe10] sm:$0xff]
    %v4820 = vld [vmem:[%s6 + $0xe18] sm:$0xf]
    %v4821 = vld [vmem:[%s6 + $0xe1c] sm:$0xff]
    %v4822 = vld [vmem:[%s6 + $0xe24] sm:$0xff]
    %v4823 = vld [vmem:[%s6 + $0xe2c] sm:$0xff]
    %v4824 = vld [vmem:[%s6 + $0xe34] sm:$0xf]
    %v4825 = vld [vmem:[%s6 + $0xe38] sm:$0xff]
    %v4826 = vld [vmem:[%s6 + $0xe40] sm:$0xff]
    %v4827 = vld [vmem:[%s6 + $0xe48] sm:$0xff]
    %v4828 = vld [vmem:[%s6 + $0xe50] sm:$0xf]
    %v4829 = vld [vmem:[%s6 + $0xe54] sm:$0xff]
    %v4830 = vld [vmem:[%s6 + $0xe5c] sm:$0xff]
    %v4831 = vld [vmem:[%s6 + $0xe64] sm:$0xff]
    %v4832 = vld [vmem:[%s6 + $0xe6c] sm:$0xf]
    %v4833 = vld [vmem:[%s6 + $0xe70] sm:$0xff]
    %v4834 = vld [vmem:[%s6 + $0xe78] sm:$0xff]
    %v4835 = vld [vmem:[%s6 + $0xe80] sm:$0xff]
    %v4836 = vld [vmem:[%s6 + $0xe88] sm:$0xf]
    %v4837 = vld [vmem:[%s6 + $0xe8c] sm:$0xff]
    %v4838 = vld [vmem:[%s6 + $0xe94] sm:$0xff]
    %v4839 = vld [vmem:[%s6 + $0xe9c] sm:$0xff]
    %v4840 = vld [vmem:[%s6 + $0xea4] sm:$0xf]
    %v4841 = vld [vmem:[%s6 + $0xea8] sm:$0xff]
    %v4842 = vld [vmem:[%s6 + $0xeb0] sm:$0xff]
    %v4843 = vld [vmem:[%s6 + $0xeb8] sm:$0xff]
    %v4844 = vld [vmem:[%s6 + $0xec0] sm:$0xf]
    %v4845 = vld [vmem:[%s6 + $0xec4] sm:$0xff]
    %v4846 = vld [vmem:[%s6 + $0xecc] sm:$0xff]
    %v4847 = vld [vmem:[%s6 + $0xed4] sm:$0xff]
    %v4848 = vld [vmem:[%s6 + $0xedc] sm:$0xf]
    %v4849 = vld [vmem:[%s6 + $0xee0] sm:$0xff]
    %v4850 = vld [vmem:[%s6 + $0xee8] sm:$0xff]
    %v4851 = vld [vmem:[%s6 + $0xef0] sm:$0xff]
    %v4852 = vld [vmem:[%s6 + $0xef8] sm:$0xf]
    %v4853 = vld [vmem:[%s6 + $0xefc] sm:$0xff]
    %v4854 = vld [vmem:[%s6 + $0xf04] sm:$0xff]
    %v4855 = vld [vmem:[%s6 + $0xf0c] sm:$0xff]
    %v4856 = vld [vmem:[%s6 + $0xf14] sm:$0xf]
    %v4857 = vld [vmem:[%s6 + $0xf18] sm:$0xff]
    %v4858 = vld [vmem:[%s6 + $0xf20] sm:$0xff]
    %v4859 = vld [vmem:[%s6 + $0xf28] sm:$0xff]
    %v4860 = vld [vmem:[%s6 + $0xf30] sm:$0xf]
    %v4861 = vld [vmem:[%s6 + $0xf34] sm:$0xff]
    %v4862 = vld [vmem:[%s6 + $0xf3c] sm:$0xff]
    %v4863 = vld [vmem:[%s6 + $0xf44] sm:$0xff]
    %v4864 = vld [vmem:[%s6 + $0xf4c] sm:$0xf]
    %v4865 = vld [vmem:[%s6 + $0xf50] sm:$0xff]
    %v4866 = vld [vmem:[%s6 + $0xf58] sm:$0xff]
    %v4867 = vld [vmem:[%s6 + $0xf60] sm:$0xff]
    %v4868 = vld [vmem:[%s6 + $0xf68] sm:$0xf]
    %v4869 = vld [vmem:[%s6 + $0xf6c] sm:$0xff]
    %v4870 = vld [vmem:[%s6 + $0xf74] sm:$0xff]
    %v4871 = vld [vmem:[%s6 + $0xf7c] sm:$0xff]
    %v4872 = vld [vmem:[%s6 + $0xf84] sm:$0xf]
    %v4873 = vld [vmem:[%s6 + $0xf88] sm:$0xff]
    %v4874 = vld [vmem:[%s6 + $0xf90] sm:$0xff]
    %v4875 = vld [vmem:[%s6 + $0xf98] sm:$0xff]
    %v4876 = vld [vmem:[%s6 + $0xfa0] sm:$0xf]
    %v4877 = vld [vmem:[%s6 + $0xfa4] sm:$0xff]
    %v4878 = vld [vmem:[%s6 + $0xfac] sm:$0xff]
    %v4879 = vld [vmem:[%s6 + $0xfb4] sm:$0xff]
    %v4880 = vld [vmem:[%s6 + $0xfbc] sm:$0xf]
    %v4881 = vld [vmem:[%s6 + $0xfc0] sm:$0xff]
    %v4882 = vld [vmem:[%s6 + $0xfc8] sm:$0xff]
    %v4883 = vld [vmem:[%s6 + $0xfd0] sm:$0xff]
    %v4884 = vld [vmem:[%s6 + $0xfd8] sm:$0xf]
    %v4885 = vld [vmem:[%s6 + $0xfdc] sm:$0xff]
    %v4886 = vld [vmem:[%s6 + $0xfe4] sm:$0xff]
    %v4887 = vld [vmem:[%s6 + $0xfec] sm:$0xff]
    %v4888 = vld [vmem:[%s6 + $0xff4] sm:$0xf]
    %v4889 = vld [vmem:[%s6 + $0xff8] sm:$0xff]
    %v4890 = vld [vmem:[%s6 + $0x1000] sm:$0xff]
    %v4891 = vld [vmem:[%s6 + $0x1008] sm:$0xff]
    %v4892 = vld [vmem:[%s6 + $0x1010] sm:$0xf]
    %v4893 = vld [vmem:[%s6 + $0x1014] sm:$0xff]
    %v4894 = vld [vmem:[%s6 + $0x101c] sm:$0xff]
    %v4895 = vld [vmem:[%s6 + $0x1024] sm:$0xff]
    %v4896 = vld [vmem:[%s6 + $0x102c] sm:$0xf]
    %v4897 = vld [vmem:[%s6 + $0x1030] sm:$0xff]
    %v4898 = vld [vmem:[%s6 + $0x1038] sm:$0xff]
    %v4899 = vld [vmem:[%s6 + $0x1040] sm:$0xff]
    %v4900 = vld [vmem:[%s6 + $0x1048] sm:$0xf]
    %v4901 = vld [vmem:[%s6 + $0x104c] sm:$0xff]
    %v4902 = vld [vmem:[%s6 + $0x1054] sm:$0xff]
    %v4903 = vld [vmem:[%s6 + $0x105c] sm:$0xff]
    %v4904 = vld [vmem:[%s6 + $0x1064] sm:$0xf]
    %v4905 = vld [vmem:[%s6 + $0x1068] sm:$0xff]
    %v4906 = vld [vmem:[%s6 + $0x1070] sm:$0xff]
    %v4907 = vld [vmem:[%s6 + $0x1078] sm:$0xff]
    %v4908 = vld [vmem:[%s6 + $0x1080] sm:$0xf]
    %v4909 = vld [vmem:[%s6 + $0x1084] sm:$0xff]
    %v4910 = vld [vmem:[%s6 + $0x108c] sm:$0xff]
    %v4911 = vld [vmem:[%s6 + $0x1094] sm:$0xff]
    %v4912 = vld [vmem:[%s6 + $0x109c] sm:$0xf]
    %v4913 = vld [vmem:[%s6 + $0x10a0] sm:$0xff]
    %v4914 = vld [vmem:[%s6 + $0x10a8] sm:$0xff]
    %v4915 = vld [vmem:[%s6 + $0x10b0] sm:$0xff]
    %v4916 = vld [vmem:[%s6 + $0x10b8] sm:$0xf]
    %v4917 = vld [vmem:[%s6 + $0x10bc] sm:$0xff]
    %v4918 = vld [vmem:[%s6 + $0x10c4] sm:$0xff]
    %v4919 = vld [vmem:[%s6 + $0x10cc] sm:$0xff]
    %v4920 = vld [vmem:[%s6 + $0x10d4] sm:$0xf]
    %v4921 = vld [vmem:[%s6 + $0x10d8] sm:$0xff]
    %v4922 = vld [vmem:[%s6 + $0x10e0] sm:$0xff]
    %v4923 = vld [vmem:[%s6 + $0x10e8] sm:$0xff]
    %v4924 = vld [vmem:[%s6 + $0x10f0] sm:$0xf]
    %v4925 = vld [vmem:[%s6 + $0x10f4] sm:$0xff]
    %v4926 = vld [vmem:[%s6 + $0x10fc] sm:$0xff]
    %v4927 = vld [vmem:[%s6 + $0x1104] sm:$0xff]
    %v4928 = vld [vmem:[%s6 + $0x110c] sm:$0xf]
    %v4929 = vld [vmem:[%s6 + $0x1110] sm:$0xff]
    %v4930 = vld [vmem:[%s6 + $0x1118] sm:$0xff]
    %v4931 = vld [vmem:[%s6 + $0x1120] sm:$0xff]
    %v4932 = vld [vmem:[%s6 + $0x1128] sm:$0xf]
    %v4933 = vld [vmem:[%s6 + $0x112c] sm:$0xff]
    %v4934 = vld [vmem:[%s6 + $0x1134] sm:$0xff]
    %v4935 = vld [vmem:[%s6 + $0x113c] sm:$0xff]
    %v4936 = vld [vmem:[%s6 + $0x1144] sm:$0xf]
    %v4937 = vld [vmem:[%s6 + $0x1148] sm:$0xff]
    %v4938 = vld [vmem:[%s6 + $0x1150] sm:$0xff]
    %v4939 = vld [vmem:[%s6 + $0x1158] sm:$0xff]
    %v4940 = vld [vmem:[%s6 + $0x1160] sm:$0xf]
    %v4941 = vld [vmem:[%s6 + $0x1164] sm:$0xff]
    %v4942 = vld [vmem:[%s6 + $0x116c] sm:$0xff]
    %v4943 = vld [vmem:[%s6 + $0x1174] sm:$0xff]
    %v4944 = vld [vmem:[%s6 + $0x117c] sm:$0xf]
    %v4945 = vld [vmem:[%s6 + $0x1180] sm:$0xff]
    %v4946 = vld [vmem:[%s6 + $0x1188] sm:$0xff]
    %v4947 = vld [vmem:[%s6 + $0x1190] sm:$0xff]
    %v4948 = vld [vmem:[%s6 + $0x1198] sm:$0xf]
    %v4949 = vld [vmem:[%s6 + $0x119c] sm:$0xff]
    %v4950 = vld [vmem:[%s6 + $0x11a4] sm:$0xff]
    %v4951 = vld [vmem:[%s6 + $0x11ac] sm:$0xff]
    %v4952 = vld [vmem:[%s6 + $0x11b4] sm:$0xf]
    %v4953 = vld [vmem:[%s6 + $0x11b8] sm:$0xff]
    %v4954 = vld [vmem:[%s6 + $0x11c0] sm:$0xff]
    %v4955 = vld [vmem:[%s6 + $0x11c8] sm:$0xff]
    %v4956 = vld [vmem:[%s6 + $0x11d0] sm:$0xf]
    %v4957 = vld [vmem:[%s6 + $0x11d4] sm:$0xff]
    %v4958 = vld [vmem:[%s6 + $0x11dc] sm:$0xff]
    %v4959 = vld [vmem:[%s6 + $0x11e4] sm:$0xff]
    %v4960 = vld [vmem:[%s6 + $0x11ec] sm:$0xf]
    %v4961 = vld [vmem:[%s6 + $0x11f0] sm:$0xff]
    %v4962 = vld [vmem:[%s6 + $0x11f8] sm:$0xff]
    %v4963 = vld [vmem:[%s6 + $0x1200] sm:$0xff]
    %v4964 = vld [vmem:[%s6 + $0x1208] sm:$0xf]
    %v4965 = vld [vmem:[%s6 + $0x120c] sm:$0xff]
    %v4966 = vld [vmem:[%s6 + $0x1214] sm:$0xff]
    %v4967 = vld [vmem:[%s6 + $0x121c] sm:$0xff]
    %v4968 = vld [vmem:[%s6 + $0x1224] sm:$0xf]
    %v4969 = vld [vmem:[%s6 + $0x1228] sm:$0xff]
    %v4970 = vld [vmem:[%s6 + $0x1230] sm:$0xff]
    %v4971 = vld [vmem:[%s6 + $0x1238] sm:$0xff]
    %v4972 = vld [vmem:[%s6 + $0x1240] sm:$0xf]
    %v4973 = vld [vmem:[%s6 + $0x1244] sm:$0xff]
    %v4974 = vld [vmem:[%s6 + $0x124c] sm:$0xff]
    %v4975 = vld [vmem:[%s6 + $0x1254] sm:$0xff]
    %v4976 = vld [vmem:[%s6 + $0x125c] sm:$0xf]
    %v4977 = vld [vmem:[%s6 + $0x1260] sm:$0xff]
    %v4978 = vld [vmem:[%s6 + $0x1268] sm:$0xff]
    %v4979 = vld [vmem:[%s6 + $0x1270] sm:$0xff]
    %v4980 = vld [vmem:[%s6 + $0x1278] sm:$0xf]
    %v4981 = vld [vmem:[%s6 + $0x127c] sm:$0xff]
    %v4982 = vld [vmem:[%s6 + $0x1284] sm:$0xff]
    %v4983 = vld [vmem:[%s6 + $0x128c] sm:$0xff]
    %v4984 = vld [vmem:[%s6 + $0x1294] sm:$0xf]
    %v4985 = vld [vmem:[%s6 + $0x1298] sm:$0xff]
    %v4986 = vld [vmem:[%s6 + $0x12a0] sm:$0xff]
    %v4987 = vld [vmem:[%s6 + $0x12a8] sm:$0xff]
    %v4988 = vld [vmem:[%s6 + $0x12b0] sm:$0xf]
    %v4989 = vld [vmem:[%s6 + $0x12b4] sm:$0xff]
    %v4990 = vld [vmem:[%s6 + $0x12bc] sm:$0xff]
    %v4991 = vld [vmem:[%s6 + $0x12c4] sm:$0xff]
    %v4992 = vld [vmem:[%s6 + $0x12cc] sm:$0xf]
    %v4993 = vld [vmem:[%s6 + $0x12d0] sm:$0xff]
    %v4994 = vld [vmem:[%s6 + $0x12d8] sm:$0xff]
    %v4995 = vld [vmem:[%s6 + $0x12e0] sm:$0xff]
    %v4996 = vld [vmem:[%s6 + $0x12e8] sm:$0xf]
    %v4997 = vld [vmem:[%s6 + $0x12ec] sm:$0xff]
    %v4998 = vld [vmem:[%s6 + $0x12f4] sm:$0xff]
    %v4999 = vld [vmem:[%s6 + $0x12fc] sm:$0xff]
    %v5000 = vld [vmem:[%s6 + $0x1304] sm:$0xf]
    %v5001 = vld [vmem:[%s6 + $0x1308] sm:$0xff]
    %v5002 = vld [vmem:[%s6 + $0x1310] sm:$0xff]
    %v5003 = vld [vmem:[%s6 + $0x1318] sm:$0xff]
    %v5004 = vld [vmem:[%s6 + $0x1320] sm:$0xf]
    %v5005 = vld [vmem:[%s6 + $0x1324] sm:$0xff]
    %v5006 = vld [vmem:[%s6 + $0x132c] sm:$0xff]
    %v5007 = vld [vmem:[%s6 + $0x1334] sm:$0xff]
    %v5008 = vld [vmem:[%s6 + $0x133c] sm:$0xf]
    %v5009 = vld [vmem:[%s6 + $0x1340] sm:$0xff]
    %v5010 = vld [vmem:[%s6 + $0x1348] sm:$0xff]
    %v5011 = vld [vmem:[%s6 + $0x1350] sm:$0xff]
    %v5012 = vld [vmem:[%s6 + $0x1358] sm:$0xf]
    %v5013 = vld [vmem:[%s6 + $0x135c] sm:$0xff]
    %v5014 = vld [vmem:[%s6 + $0x1364] sm:$0xff]
    %v5015 = vld [vmem:[%s6 + $0x136c] sm:$0xff]
    %v5016 = vld [vmem:[%s6 + $0x1374] sm:$0xf]
    %v5017 = vld [vmem:[%s6 + $0x1378] sm:$0xff]
    %v5018 = vld [vmem:[%s6 + $0x1380] sm:$0xff]
    %v5019 = vld [vmem:[%s6 + $0x1388] sm:$0xff]
    %v5020 = vld [vmem:[%s6 + $0x1390] sm:$0xf]
    %v5021 = vld [vmem:[%s6 + $0x1394] sm:$0xff]
    %v5022 = vld [vmem:[%s6 + $0x139c] sm:$0xff]
    %v5023 = vld [vmem:[%s6 + $0x13a4] sm:$0xff]
    %v5024 = vld [vmem:[%s6 + $0x13ac] sm:$0xf]
    %v5025 = vld [vmem:[%s6 + $0x13b0] sm:$0xff]
    %v5026 = vld [vmem:[%s6 + $0x13b8] sm:$0xff]
    %v5027 = vld [vmem:[%s6 + $0x13c0] sm:$0xff]
    %v5028 = vld [vmem:[%s6 + $0x13c8] sm:$0xf]
    %v5029 = vld [vmem:[%s6 + $0x13cc] sm:$0xff]
    %v5030 = vld [vmem:[%s6 + $0x13d4] sm:$0xff]
    %v5031 = vld [vmem:[%s6 + $0x13dc] sm:$0xff]
    %v5032 = vld [vmem:[%s6 + $0x13e4] sm:$0xf]
    %v5033 = vld [vmem:[%s6 + $0x13e8] sm:$0xff]
    %v5034 = vld [vmem:[%s6 + $0x13f0] sm:$0xff]
    %v5035 = vld [vmem:[%s6 + $0x13f8] sm:$0xff]
    %v5036 = vld [vmem:[%s6 + $0x1400] sm:$0xf]
    %v5037 = vld [vmem:[%s6 + $0x1404] sm:$0xff]
    %v5038 = vld [vmem:[%s6 + $0x140c] sm:$0xff]
    %v5039 = vld [vmem:[%s6 + $0x1414] sm:$0xff]
    %v5040 = vld [vmem:[%s6 + $0x141c] sm:$0xf]
    %v5041 = vld [vmem:[%s6 + $0x1420] sm:$0xff]
    %v5042 = vld [vmem:[%s6 + $0x1428] sm:$0xff]
    %v5043 = vld [vmem:[%s6 + $0x1430] sm:$0xff]
    %v5044 = vld [vmem:[%s6 + $0x1438] sm:$0xf]
    %v5045 = vld [vmem:[%s6 + $0x143c] sm:$0xff]
    %v5046 = vld [vmem:[%s6 + $0x1444] sm:$0xff]
    %v5047 = vld [vmem:[%s6 + $0x144c] sm:$0xff]
    %v5048 = vld [vmem:[%s6 + $0x1454] sm:$0xf]
    %v5049 = vld [vmem:[%s6 + $0x1458] sm:$0xff]
    %v5050 = vld [vmem:[%s6 + $0x1460] sm:$0xff]
    %v5051 = vld [vmem:[%s6 + $0x1468] sm:$0xff]
    %v5052 = vld [vmem:[%s6 + $0x1470] sm:$0xf]
    %v5053 = vld [vmem:[%s6 + $0x1474] sm:$0xff]
    %v5054 = vld [vmem:[%s6 + $0x147c] sm:$0xff]
    %v5055 = vld [vmem:[%s6 + $0x1484] sm:$0xff]
    %v5056 = vld [vmem:[%s6 + $0x148c] sm:$0xf]
    %v5057 = vld [vmem:[%s6 + $0x1490] sm:$0xff]
    %v5058 = vld [vmem:[%s6 + $0x1498] sm:$0xff]
    %v5059 = vld [vmem:[%s6 + $0x14a0] sm:$0xff]
    %v5060 = vld [vmem:[%s6 + $0x14a8] sm:$0xf]
    %v5061 = vld [vmem:[%s6 + $0x14ac] sm:$0xff]
    %v5062 = vld [vmem:[%s6 + $0x14b4] sm:$0xff]
    %v5063 = vld [vmem:[%s6 + $0x14bc] sm:$0xff]
    %v5064 = vld [vmem:[%s6 + $0x14c4] sm:$0xf]
    %v5065 = vld [vmem:[%s6 + $0x14c8] sm:$0xff]
    %v5066 = vld [vmem:[%s6 + $0x14d0] sm:$0xff]
    %v5067 = vld [vmem:[%s6 + $0x14d8] sm:$0xff]
    %v5068 = vld [vmem:[%s6 + $0x14e0] sm:$0xf]
    %v5069 = vld [vmem:[%s6 + $0x14e4] sm:$0xff]
    %v5070 = vld [vmem:[%s6 + $0x14ec] sm:$0xff]
    %v5071 = vld [vmem:[%s6 + $0x14f4] sm:$0xff]
    %v5072 = vld [vmem:[%s6 + $0x14fc] sm:$0xf]
    %v5073 = vld [vmem:[%s6 + $0x1500] sm:$0xff]
    %v5074 = vld [vmem:[%s6 + $0x1508] sm:$0xff]
    %v5075 = vld [vmem:[%s6 + $0x1510] sm:$0xff]
    %v5076 = vld [vmem:[%s6 + $0x1518] sm:$0xf]
    %v5077 = vld [vmem:[%s6 + $0x151c] sm:$0xff]
    %v5078 = vld [vmem:[%s6 + $0x1524] sm:$0xff]
    %v5079 = vld [vmem:[%s6 + $0x152c] sm:$0xff]
    %v5080 = vld [vmem:[%s6 + $0x1534] sm:$0xf]
    %v5081 = vld [vmem:[%s6 + $0x1538] sm:$0xff]
    %v5082 = vld [vmem:[%s6 + $0x1540] sm:$0xff]
    %v5083 = vld [vmem:[%s6 + $0x1548] sm:$0xff]
    %v5084 = vld [vmem:[%s6 + $0x1550] sm:$0xf]
    %v5085 = vld [vmem:[%s6 + $0x1554] sm:$0xff]
    %v5086 = vld [vmem:[%s6 + $0x155c] sm:$0xff]
    %v5087 = vld [vmem:[%s6 + $0x1564] sm:$0xff]
    %v5088 = vld [vmem:[%s6 + $0x156c] sm:$0xf]
    %v5089 = vld [vmem:[%s6 + $0x1570] sm:$0xff]
    %v5090 = vld [vmem:[%s6 + $0x1578] sm:$0xff]
    %v5091 = vld [vmem:[%s6 + $0x1580] sm:$0xff]
    %v5092 = vld [vmem:[%s6 + $0x1588] sm:$0xf]
    %v5093 = vld [vmem:[%s6 + $0x158c] sm:$0xff]
    %v5094 = vld [vmem:[%s6 + $0x1594] sm:$0xff]
    %v5095 = vld [vmem:[%s6 + $0x159c] sm:$0xff]
    %v5096 = vld [vmem:[%s6 + $0x15a4] sm:$0xf]
    %v5097 = vld [vmem:[%s6 + $0x15a8] sm:$0xff]
    %v5098 = vld [vmem:[%s6 + $0x15b0] sm:$0xff]
    %v5099 = vld [vmem:[%s6 + $0x15b8] sm:$0xff]
    %v5100 = vld [vmem:[%s6 + $0x15c0] sm:$0xf]
    %v5101 = vld [vmem:[%s6 + $0x15c4] sm:$0xff]
    %v5102 = vld [vmem:[%s6 + $0x15cc] sm:$0xff]
    %v5103 = vld [vmem:[%s6 + $0x15d4] sm:$0xff]
    %v5104 = vld [vmem:[%s6 + $0x15dc] sm:$0xf]
    %v5105 = vld [vmem:[%s6 + $0x15e0] sm:$0xff]
    %v5106 = vld [vmem:[%s6 + $0x15e8] sm:$0xff]
    %v5107 = vld [vmem:[%s6 + $0x15f0] sm:$0xff]
    %v5108 = vld [vmem:[%s6 + $0x15f8] sm:$0xf]
    %v5109 = vld [vmem:[%s6 + $0x15fc] sm:$0xff]
    %v5110 = vld [vmem:[%s6 + $0x1604] sm:$0xff]
    %v5111 = vld [vmem:[%s6 + $0x160c] sm:$0xff]
    %v5112 = vld [vmem:[%s6 + $0x1614] sm:$0xf]
    %v5113 = vld [vmem:[%s6 + $0x1618] sm:$0xff]
    %v5114 = vld [vmem:[%s6 + $0x1620] sm:$0xff]
    %v5115 = vld [vmem:[%s6 + $0x1628] sm:$0xff]
    %v5116 = vld [vmem:[%s6 + $0x1630] sm:$0xf]
    %v5117 = vld [vmem:[%s6 + $0x1634] sm:$0xff]
    %v5118 = vld [vmem:[%s6 + $0x163c] sm:$0xff]
    %v5119 = vld [vmem:[%s6 + $0x1644] sm:$0xff]
    %v5120 = vld [vmem:[%s6 + $0x164c] sm:$0xf]
    %v5121 = vld [vmem:[%s6 + $0x1650] sm:$0xff]
    %v5122 = vld [vmem:[%s6 + $0x1658] sm:$0xff]
    %v5123 = vld [vmem:[%s6 + $0x1660] sm:$0xff]
    %v5124 = vld [vmem:[%s6 + $0x1668] sm:$0xf]
    %v5125 = vld [vmem:[%s6 + $0x166c] sm:$0xff]
    %v5126 = vld [vmem:[%s6 + $0x1674] sm:$0xff]
    %v5127 = vld [vmem:[%s6 + $0x167c] sm:$0xff]
    %v5128 = vld [vmem:[%s6 + $0x1684] sm:$0xf]
    %v5129 = vld [vmem:[%s6 + $0x1688] sm:$0xff]
    %v5130 = vld [vmem:[%s6 + $0x1690] sm:$0xff]
    %v5131 = vld [vmem:[%s6 + $0x1698] sm:$0xff]
    %v5132 = vld [vmem:[%s6 + $0x16a0] sm:$0xf]
    %v5133 = vld [vmem:[%s6 + $0x16a4] sm:$0xff]
    %v5134 = vld [vmem:[%s6 + $0x16ac] sm:$0xff]
    %v5135 = vld [vmem:[%s6 + $0x16b4] sm:$0xff]
    %v5136 = vld [vmem:[%s6 + $0x16bc] sm:$0xf]
    %v5137 = vld [vmem:[%s6 + $0x16c0] sm:$0xff]
    %v5138 = vld [vmem:[%s6 + $0x16c8] sm:$0xff]
    %v5139 = vld [vmem:[%s6 + $0x16d0] sm:$0xff]
    %v5140 = vld [vmem:[%s6 + $0x16d8] sm:$0xf]
    %v5141 = vld [vmem:[%s6 + $0x16dc] sm:$0xff]
    %v5142 = vld [vmem:[%s6 + $0x16e4] sm:$0xff]
    %v5143 = vld [vmem:[%s6 + $0x16ec] sm:$0xff]
    %v5144 = vld [vmem:[%s6 + $0x16f4] sm:$0xf]
    %v5145 = vld [vmem:[%s6 + $0x16f8] sm:$0xff]
    %v5146 = vld [vmem:[%s6 + $0x1700] sm:$0xff]
    %v5147 = vld [vmem:[%s6 + $0x1708] sm:$0xff]
    %v5148 = vld [vmem:[%s6 + $0x1710] sm:$0xf]
    %v5149 = vld [vmem:[%s6 + $0x1714] sm:$0xff]
    %v5150 = vld [vmem:[%s6 + $0x171c] sm:$0xff]
    %v5151 = vld [vmem:[%s6 + $0x1724] sm:$0xff]
    %v5152 = vld [vmem:[%s6 + $0x172c] sm:$0xf]
    %v5153 = vld [vmem:[%s6 + $0x1730] sm:$0xff]
    %v5154 = vld [vmem:[%s6 + $0x1738] sm:$0xff]
    %v5155 = vld [vmem:[%s6 + $0x1740] sm:$0xff]
    %v5156 = vld [vmem:[%s6 + $0x1748] sm:$0xf]
    %v5157 = vld [vmem:[%s6 + $0x174c] sm:$0xff]
    %v5158 = vld [vmem:[%s6 + $0x1754] sm:$0xff]
    %v5159 = vld [vmem:[%s6 + $0x175c] sm:$0xff]
    %v5160 = vld [vmem:[%s6 + $0x1764] sm:$0xf]
    %v5161 = vld [vmem:[%s6 + $0x1768] sm:$0xff]
    %v5162 = vld [vmem:[%s6 + $0x1770] sm:$0xff]
    %v5163 = vld [vmem:[%s6 + $0x1778] sm:$0xff]
    %v5164 = vld [vmem:[%s6 + $0x1780] sm:$0xf]
    %v5165 = vld [vmem:[%s6 + $0x1784] sm:$0xff]
    %v5166 = vld [vmem:[%s6 + $0x178c] sm:$0xff]
    %v5167 = vld [vmem:[%s6 + $0x1794] sm:$0xff]
    %v5168 = vld [vmem:[%s6 + $0x179c] sm:$0xf]
    %v5169 = vld [vmem:[%s6 + $0x17a0] sm:$0xff]
    %v5170 = vld [vmem:[%s6 + $0x17a8] sm:$0xff]
    %v5171 = vld [vmem:[%s6 + $0x17b0] sm:$0xff]
    %v5172 = vld [vmem:[%s6 + $0x17b8] sm:$0xf]
    %v5173 = vld [vmem:[%s6 + $0x17bc] sm:$0xff]
    %v5174 = vld [vmem:[%s6 + $0x17c4] sm:$0xff]
    %v5175 = vld [vmem:[%s6 + $0x17cc] sm:$0xff]
    %v5176 = vld [vmem:[%s6 + $0x17d4] sm:$0xf]
    %v5177 = vld [vmem:[%s6 + $0x17d8] sm:$0xff]
    %v5178 = vld [vmem:[%s6 + $0x17e0] sm:$0xff]
    %v5179 = vld [vmem:[%s6 + $0x17e8] sm:$0xff]
    %v5180 = vld [vmem:[%s6 + $0x17f0] sm:$0xf]
    %v5181 = vld [vmem:[%s6 + $0x17f4] sm:$0xff]
    %v5182 = vld [vmem:[%s6 + $0x17fc] sm:$0xff]
    %v5183 = vld [vmem:[%s6 + $0x1804] sm:$0xff]
    %v5184 = vld [vmem:[%s6 + $0x180c] sm:$0xf]
    %v5185 = vld [vmem:[%s6 + $0x1810] sm:$0xff]
    %v5186 = vld [vmem:[%s6 + $0x1818] sm:$0xff]
    %v5187 = vld [vmem:[%s6 + $0x1820] sm:$0xff]
    %v5188 = vld [vmem:[%s6 + $0x1828] sm:$0xf]
    %v5189 = vld [vmem:[%s6 + $0x182c] sm:$0xff]
    %v5190 = vld [vmem:[%s6 + $0x1834] sm:$0xff]
    %v5191 = vld [vmem:[%s6 + $0x183c] sm:$0xff]
    %v5192 = vld [vmem:[%s6 + $0x1844] sm:$0xf]
    %v5193 = vld [vmem:[%s6 + $0x1848] sm:$0xff]
    %v5194 = vld [vmem:[%s6 + $0x1850] sm:$0xff]
    %v5195 = vld [vmem:[%s6 + $0x1858] sm:$0xff]
    %v5196 = vld [vmem:[%s6 + $0x1860] sm:$0xf]
    %v5197 = vld [vmem:[%s6 + $0x1864] sm:$0xff]
    %v5198 = vld [vmem:[%s6 + $0x186c] sm:$0xff]
    %v5199 = vld [vmem:[%s6 + $0x1874] sm:$0xff]
    %v5200 = vld [vmem:[%s6 + $0x187c] sm:$0xf]
    %v5201 = vld [vmem:[%s6 + $0x1880] sm:$0xff]
    %v5202 = vld [vmem:[%s6 + $0x1888] sm:$0xff]
    %v5203 = vld [vmem:[%s6 + $0x1890] sm:$0xff]
    %v5204 = vld [vmem:[%s6 + $0x1898] sm:$0xf]
    %v5205 = vld [vmem:[%s6 + $0x189c] sm:$0xff]
    %v5206 = vld [vmem:[%s6 + $0x18a4] sm:$0xff]
    %v5207 = vld [vmem:[%s6 + $0x18ac] sm:$0xff]
    %v5208 = vld [vmem:[%s6 + $0x18b4] sm:$0xf]
    %v5209 = vld [vmem:[%s6 + $0x18b8] sm:$0xff]
    %v5210 = vld [vmem:[%s6 + $0x18c0] sm:$0xff]
    %v5211 = vld [vmem:[%s6 + $0x18c8] sm:$0xff]
    %v5212 = vld [vmem:[%s6 + $0x18d0] sm:$0xf]
    %v5213 = vld [vmem:[%s6 + $0x18d4] sm:$0xff]
    %v5214 = vld [vmem:[%s6 + $0x18dc] sm:$0xff]
    %v5215 = vld [vmem:[%s6 + $0x18e4] sm:$0xff]
    %v5216 = vld [vmem:[%s6 + $0x18ec] sm:$0xf]
    %v5217 = vld [vmem:[%s6 + $0x18f0] sm:$0xff]
    %v5218 = vld [vmem:[%s6 + $0x18f8] sm:$0xff]
    %v5219 = vld [vmem:[%s6 + $0x1900] sm:$0xff]
    %v5220 = vld [vmem:[%s6 + $0x1908] sm:$0xf]
    %v5221 = vld [vmem:[%s6 + $0x190c] sm:$0xff]
    %v5222 = vld [vmem:[%s6 + $0x1914] sm:$0xff]
    %v5223 = vld [vmem:[%s6 + $0x191c] sm:$0xff]
    %v5224 = vld [vmem:[%s6 + $0x1924] sm:$0xf]
    %v5225 = vld [vmem:[%s6 + $0x1928] sm:$0xff]
    %v5226 = vld [vmem:[%s6 + $0x1930] sm:$0xff]
    %v5227 = vld [vmem:[%s6 + $0x1938] sm:$0xff]
    %v5228 = vld [vmem:[%s6 + $0x1940] sm:$0xf]
    %v5229 = vld [vmem:[%s6 + $0x1944] sm:$0xff]
    %v5230 = vld [vmem:[%s6 + $0x194c] sm:$0xff]
    %v5231 = vld [vmem:[%s6 + $0x1954] sm:$0xff]
    %v5232 = vld [vmem:[%s6 + $0x195c] sm:$0xf]
    %v5233 = vld [vmem:[%s6 + $0x1960] sm:$0xff]
    %v5234 = vld [vmem:[%s6 + $0x1968] sm:$0xff]
    %v5235 = vld [vmem:[%s6 + $0x1970] sm:$0xff]
    %v5236 = vld [vmem:[%s6 + $0x1978] sm:$0xf]
    %v5237 = vld [vmem:[%s6 + $0x197c] sm:$0xff]
    %v5238 = vld [vmem:[%s6 + $0x1984] sm:$0xff]
    %v5239 = vld [vmem:[%s6 + $0x198c] sm:$0xff]
    %v5240 = vld [vmem:[%s6 + $0x1994] sm:$0xf]
    %v5241 = vld [vmem:[%s6 + $0x1998] sm:$0xff]
    %v5242 = vld [vmem:[%s6 + $0x19a0] sm:$0xff]
    %v5243 = vld [vmem:[%s6 + $0x19a8] sm:$0xff]
    %v5244 = vld [vmem:[%s6 + $0x19b0] sm:$0xf]
    %v5245 = vld [vmem:[%s6 + $0x19b4] sm:$0xff]
    %v5246 = vld [vmem:[%s6 + $0x19bc] sm:$0xff]
    %v5247 = vld [vmem:[%s6 + $0x19c4] sm:$0xff]
    %v5248 = vld [vmem:[%s6 + $0x19cc] sm:$0xf]
    %v5249 = vld [vmem:[%s6 + $0x19d0] sm:$0xff]
    %v5250 = vld [vmem:[%s6 + $0x19d8] sm:$0xff]
    %v5251 = vld [vmem:[%s6 + $0x19e0] sm:$0xff]
    %v5252 = vld [vmem:[%s6 + $0x19e8] sm:$0xf]
    %v5253 = vld [vmem:[%s6 + $0x19ec] sm:$0xff]
    %v5254 = vld [vmem:[%s6 + $0x19f4] sm:$0xff]
    %v5255 = vld [vmem:[%s6 + $0x19fc] sm:$0xff]
    %v5256 = vld [vmem:[%s6 + $0x1a04] sm:$0xf]
    %v5257 = vld [vmem:[%s6 + $0x1a08] sm:$0xff]
    %v5258 = vld [vmem:[%s6 + $0x1a10] sm:$0xff]
    %v5259 = vld [vmem:[%s6 + $0x1a18] sm:$0xff]
    %v5260 = vld [vmem:[%s6 + $0x1a20] sm:$0xf]
    %v5261 = vld [vmem:[%s6 + $0x1a24] sm:$0xff]
    %v5262 = vld [vmem:[%s6 + $0x1a2c] sm:$0xff]
    %v5263 = vld [vmem:[%s6 + $0x1a34] sm:$0xff]
    %v5264 = vld [vmem:[%s6 + $0x1a3c] sm:$0xf]
    %v5265 = vld [vmem:[%s6 + $0x1a40] sm:$0xff]
    %v5266 = vld [vmem:[%s6 + $0x1a48] sm:$0xff]
    %v5267 = vld [vmem:[%s6 + $0x1a50] sm:$0xff]
    %v5268 = vld [vmem:[%s6 + $0x1a58] sm:$0xf]
    %v5269 = vld [vmem:[%s6 + $0x1a5c] sm:$0xff]
    %v5270 = vld [vmem:[%s6 + $0x1a64] sm:$0xff]
    %v5271 = vld [vmem:[%s6 + $0x1a6c] sm:$0xff]
    %v5272 = vld [vmem:[%s6 + $0x1a74] sm:$0xf]
    %v5273 = vld [vmem:[%s6 + $0x1a78] sm:$0xff]
    %v5274 = vld [vmem:[%s6 + $0x1a80] sm:$0xff]
    %v5275 = vld [vmem:[%s6 + $0x1a88] sm:$0xff]
    %v5276 = vld [vmem:[%s6 + $0x1a90] sm:$0xf]
    %v5277 = vld [vmem:[%s6 + $0x1a94] sm:$0xff]
    %v5278 = vld [vmem:[%s6 + $0x1a9c] sm:$0xff]
    %v5279 = vld [vmem:[%s6 + $0x1aa4] sm:$0xff]
    %v5280 = vld [vmem:[%s6 + $0x1aac] sm:$0xf]
    %v5281 = vld [vmem:[%s6 + $0x1ab0] sm:$0xff]
    %v5282 = vld [vmem:[%s6 + $0x1ab8] sm:$0xff]
    %v5283 = vld [vmem:[%s6 + $0x1ac0] sm:$0xff]
    %v5284 = vld [vmem:[%s6 + $0x1ac8] sm:$0xf]
    %v5285 = vld [vmem:[%s6 + $0x1acc] sm:$0xff]
    %v5286 = vld [vmem:[%s6 + $0x1ad4] sm:$0xff]
    %v5287 = vld [vmem:[%s6 + $0x1adc] sm:$0xff]
    %v5288 = vld [vmem:[%s6 + $0x1ae4] sm:$0xf]
    %v5289 = vld [vmem:[%s6 + $0x1ae8] sm:$0xff]
    %v5290 = vld [vmem:[%s6 + $0x1af0] sm:$0xff]
    %v5291 = vld [vmem:[%s6 + $0x1af8] sm:$0xff]
    %v5292 = vld [vmem:[%s6 + $0x1b00] sm:$0xf]
    %v5293 = vld [vmem:[%s6 + $0x1b04] sm:$0xff]
    %v5294 = vld [vmem:[%s6 + $0x1b0c] sm:$0xff]
    %v5295 = vld [vmem:[%s6 + $0x1b14] sm:$0xff]
    %v5296 = vld [vmem:[%s6 + $0x1b1c] sm:$0xf]
    %v5297 = vld [vmem:[%s6 + $0x1b20] sm:$0xff]
    %v5298 = vld [vmem:[%s6 + $0x1b28] sm:$0xff]
    %v5299 = vld [vmem:[%s6 + $0x1b30] sm:$0xff]
    %v5300 = vld [vmem:[%s6 + $0x1b38] sm:$0xf]
    %v5301 = vld [vmem:[%s6 + $0x1b3c] sm:$0xff]
    %v5302 = vld [vmem:[%s6 + $0x1b44] sm:$0xff]
    %v5303 = vld [vmem:[%s6 + $0x1b4c] sm:$0xff]
    %v5304 = vld [vmem:[%s6 + $0x1b54] sm:$0xf]
    %v5305 = vld [vmem:[%s6 + $0x1b58] sm:$0xff]
    %v5306 = vld [vmem:[%s6 + $0x1b60] sm:$0xff]
    %v5307 = vld [vmem:[%s6 + $0x1b68] sm:$0xff]
    %v5308 = vld [vmem:[%s6 + $0x1b70] sm:$0xf]
    %v5309 = vld [vmem:[%s6 + $0x1b74] sm:$0xff]
    %v5310 = vld [vmem:[%s6 + $0x1b7c] sm:$0xff]
    %v5311 = vld [vmem:[%s6 + $0x1b84] sm:$0xff]
    %v5312 = vld [vmem:[%s6 + $0x1b8c] sm:$0xf]
    %v5313 = vld [vmem:[%s6 + $0x1b90] sm:$0xff]
    %v5314 = vld [vmem:[%s6 + $0x1b98] sm:$0xff]
    %v5315 = vld [vmem:[%s6 + $0x1ba0] sm:$0xff]
    %v5316 = vld [vmem:[%s6 + $0x1ba8] sm:$0xf]
    %v5317 = vld [vmem:[%s6 + $0x1bac] sm:$0xff]
    %v5318 = vld [vmem:[%s6 + $0x1bb4] sm:$0xff]
    %v5319 = vld [vmem:[%s6 + $0x1bbc] sm:$0xff]
    %v5320 = vld [vmem:[%s6 + $0x1bc4] sm:$0xf]
    %v5321 = vld [vmem:[%s6 + $0x1bc8] sm:$0xff]
    %v5322 = vld [vmem:[%s6 + $0x1bd0] sm:$0xff]
    %v5323 = vld [vmem:[%s6 + $0x1bd8] sm:$0xff]
    %v5324 = vld [vmem:[%s6 + $0x1be0] sm:$0xf]
    %v5325 = vld [vmem:[%s6 + $0x1be4] sm:$0xff]
    %v5326 = vld [vmem:[%s6 + $0x1bec] sm:$0xff]
    %v5327 = vld [vmem:[%s6 + $0x1bf4] sm:$0xff]
    %v5328 = vld [vmem:[%s6 + $0x1bfc] sm:$0xf]
    %v5329 = vld [vmem:[%s7] sm:$0x7f]
    %v5331 = vperm.slane %v5329, 0
    %v5332 = vperm.slane %v5329, 1
    %v5333 = vperm.slane %v5329, 2
    %v5334 = vperm.slane %v5329, 3
    %v5335 = vperm.slane %v5329, 4
    %v5336 = vperm.slane %v5329, 5
    %v5337 = vperm.slane %v5329, 6
    %v6369 = vunpack.c.l.b16 %v4305
    %v6370 = vunpack.c.h.b16 %v4305
    %v6371 = vunpack.c.l.b16 %v4306
    %v6372 = vunpack.c.h.b16 %v4306
    %v6373 = vunpack.c.l.b16 %v4307
    %v6374 = vunpack.c.h.b16 %v4307
    %v6375 = vunpack.c.l.b16 %v4308
    %v6376 = vunpack.c.l.b16 %v4309
    %v6377 = vunpack.c.h.b16 %v4309
    %v6378 = vunpack.c.l.b16 %v4310
    %v6379 = vunpack.c.h.b16 %v4310
    %v6380 = vunpack.c.l.b16 %v4311
    %v6381 = vunpack.c.h.b16 %v4311
    %v6382 = vunpack.c.l.b16 %v4312
    %v6383 = vunpack.c.l.b16 %v4313
    %v6384 = vunpack.c.h.b16 %v4313
    %v6385 = vunpack.c.l.b16 %v4314
    %v6386 = vunpack.c.h.b16 %v4314
    %v6387 = vunpack.c.l.b16 %v4315
    %v6388 = vunpack.c.h.b16 %v4315
    %v6389 = vunpack.c.l.b16 %v4316
    %v6390 = vunpack.c.l.b16 %v4317
    %v6391 = vunpack.c.h.b16 %v4317
    %v6392 = vunpack.c.l.b16 %v4318
    %v6393 = vunpack.c.h.b16 %v4318
    %v6394 = vunpack.c.l.b16 %v4319
    %v6395 = vunpack.c.h.b16 %v4319
    %v6396 = vunpack.c.l.b16 %v4320
    %v6397 = vunpack.c.l.b16 %v4321
    %v6398 = vunpack.c.h.b16 %v4321
    %v6399 = vunpack.c.l.b16 %v4322
    %v6400 = vunpack.c.h.b16 %v4322
    %v6401 = vunpack.c.l.b16 %v4323
    %v6402 = vunpack.c.h.b16 %v4323
    %v6403 = vunpack.c.l.b16 %v4324
    %v6404 = vunpack.c.l.b16 %v4325
    %v6405 = vunpack.c.h.b16 %v4325
    %v6406 = vunpack.c.l.b16 %v4326
    %v6407 = vunpack.c.h.b16 %v4326
    %v6408 = vunpack.c.l.b16 %v4327
    %v6409 = vunpack.c.h.b16 %v4327
    %v6410 = vunpack.c.l.b16 %v4328
    %v6411 = vunpack.c.l.b16 %v4329
    %v6412 = vunpack.c.h.b16 %v4329
    %v6413 = vunpack.c.l.b16 %v4330
    %v6414 = vunpack.c.h.b16 %v4330
    %v6415 = vunpack.c.l.b16 %v4331
    %v6416 = vunpack.c.h.b16 %v4331
    %v6417 = vunpack.c.l.b16 %v4332
    %v6418 = vunpack.c.l.b16 %v4333
    %v6419 = vunpack.c.h.b16 %v4333
    %v6420 = vunpack.c.l.b16 %v4334
    %v6421 = vunpack.c.h.b16 %v4334
    %v6422 = vunpack.c.l.b16 %v4335
    %v6423 = vunpack.c.h.b16 %v4335
    %v6424 = vunpack.c.l.b16 %v4336
    %v6425 = vunpack.c.l.b16 %v4337
    %v6426 = vunpack.c.h.b16 %v4337
    %v6427 = vunpack.c.l.b16 %v4338
    %v6428 = vunpack.c.h.b16 %v4338
    %v6429 = vunpack.c.l.b16 %v4339
    %v6430 = vunpack.c.h.b16 %v4339
    %v6431 = vunpack.c.l.b16 %v4340
    %v6432 = vunpack.c.l.b16 %v4341
    %v6433 = vunpack.c.h.b16 %v4341
    %v6434 = vunpack.c.l.b16 %v4342
    %v6435 = vunpack.c.h.b16 %v4342
    %v6436 = vunpack.c.l.b16 %v4343
    %v6437 = vunpack.c.h.b16 %v4343
    %v6438 = vunpack.c.l.b16 %v4344
    %v6439 = vunpack.c.l.b16 %v4345
    %v6440 = vunpack.c.h.b16 %v4345
    %v6441 = vunpack.c.l.b16 %v4346
    %v6442 = vunpack.c.h.b16 %v4346
    %v6443 = vunpack.c.l.b16 %v4347
    %v6444 = vunpack.c.h.b16 %v4347
    %v6445 = vunpack.c.l.b16 %v4348
    %v6446 = vunpack.c.l.b16 %v4349
    %v6447 = vunpack.c.h.b16 %v4349
    %v6448 = vunpack.c.l.b16 %v4350
    %v6449 = vunpack.c.h.b16 %v4350
    %v6450 = vunpack.c.l.b16 %v4351
    %v6451 = vunpack.c.h.b16 %v4351
    %v6452 = vunpack.c.l.b16 %v4352
    %v6453 = vunpack.c.l.b16 %v4353
    %v6454 = vunpack.c.h.b16 %v4353
    %v6455 = vunpack.c.l.b16 %v4354
    %v6456 = vunpack.c.h.b16 %v4354
    %v6457 = vunpack.c.l.b16 %v4355
    %v6458 = vunpack.c.h.b16 %v4355
    %v6459 = vunpack.c.l.b16 %v4356
    %v6460 = vunpack.c.l.b16 %v4357
    %v6461 = vunpack.c.h.b16 %v4357
    %v6462 = vunpack.c.l.b16 %v4358
    %v6463 = vunpack.c.h.b16 %v4358
    %v6464 = vunpack.c.l.b16 %v4359
    %v6465 = vunpack.c.h.b16 %v4359
    %v6466 = vunpack.c.l.b16 %v4360
    %v6467 = vunpack.c.l.b16 %v4361
    %v6468 = vunpack.c.h.b16 %v4361
    %v6469 = vunpack.c.l.b16 %v4362
    %v6470 = vunpack.c.h.b16 %v4362
    %v6471 = vunpack.c.l.b16 %v4363
    %v6472 = vunpack.c.h.b16 %v4363
    %v6473 = vunpack.c.l.b16 %v4364
    %v6474 = vunpack.c.l.b16 %v4365
    %v6475 = vunpack.c.h.b16 %v4365
    %v6476 = vunpack.c.l.b16 %v4366
    %v6477 = vunpack.c.h.b16 %v4366
    %v6478 = vunpack.c.l.b16 %v4367
    %v6479 = vunpack.c.h.b16 %v4367
    %v6480 = vunpack.c.l.b16 %v4368
    %v6481 = vunpack.c.l.b16 %v4369
    %v6482 = vunpack.c.h.b16 %v4369
    %v6483 = vunpack.c.l.b16 %v4370
    %v6484 = vunpack.c.h.b16 %v4370
    %v6485 = vunpack.c.l.b16 %v4371
    %v6486 = vunpack.c.h.b16 %v4371
    %v6487 = vunpack.c.l.b16 %v4372
    %v6488 = vunpack.c.l.b16 %v4373
    %v6489 = vunpack.c.h.b16 %v4373
    %v6490 = vunpack.c.l.b16 %v4374
    %v6491 = vunpack.c.h.b16 %v4374
    %v6492 = vunpack.c.l.b16 %v4375
    %v6493 = vunpack.c.h.b16 %v4375
    %v6494 = vunpack.c.l.b16 %v4376
    %v6495 = vunpack.c.l.b16 %v4377
    %v6496 = vunpack.c.h.b16 %v4377
    %v6497 = vunpack.c.l.b16 %v4378
    %v6498 = vunpack.c.h.b16 %v4378
    %v6499 = vunpack.c.l.b16 %v4379
    %v6500 = vunpack.c.h.b16 %v4379
    %v6501 = vunpack.c.l.b16 %v4380
    %v6502 = vunpack.c.l.b16 %v4381
    %v6503 = vunpack.c.h.b16 %v4381
    %v6504 = vunpack.c.l.b16 %v4382
    %v6505 = vunpack.c.h.b16 %v4382
    %v6506 = vunpack.c.l.b16 %v4383
    %v6507 = vunpack.c.h.b16 %v4383
    %v6508 = vunpack.c.l.b16 %v4384
    %v6509 = vunpack.c.l.b16 %v4385
    %v6510 = vunpack.c.h.b16 %v4385
    %v6511 = vunpack.c.l.b16 %v4386
    %v6512 = vunpack.c.h.b16 %v4386
    %v6513 = vunpack.c.l.b16 %v4387
    %v6514 = vunpack.c.h.b16 %v4387
    %v6515 = vunpack.c.l.b16 %v4388
    %v6516 = vunpack.c.l.b16 %v4389
    %v6517 = vunpack.c.h.b16 %v4389
    %v6518 = vunpack.c.l.b16 %v4390
    %v6519 = vunpack.c.h.b16 %v4390
    %v6520 = vunpack.c.l.b16 %v4391
    %v6521 = vunpack.c.h.b16 %v4391
    %v6522 = vunpack.c.l.b16 %v4392
    %v6523 = vunpack.c.l.b16 %v4393
    %v6524 = vunpack.c.h.b16 %v4393
    %v6525 = vunpack.c.l.b16 %v4394
    %v6526 = vunpack.c.h.b16 %v4394
    %v6527 = vunpack.c.l.b16 %v4395
    %v6528 = vunpack.c.h.b16 %v4395
    %v6529 = vunpack.c.l.b16 %v4396
    %v6530 = vunpack.c.l.b16 %v4397
    %v6531 = vunpack.c.h.b16 %v4397
    %v6532 = vunpack.c.l.b16 %v4398
    %v6533 = vunpack.c.h.b16 %v4398
    %v6534 = vunpack.c.l.b16 %v4399
    %v6535 = vunpack.c.h.b16 %v4399
    %v6536 = vunpack.c.l.b16 %v4400
    %v6537 = vunpack.c.l.b16 %v4401
    %v6538 = vunpack.c.h.b16 %v4401
    %v6539 = vunpack.c.l.b16 %v4402
    %v6540 = vunpack.c.h.b16 %v4402
    %v6541 = vunpack.c.l.b16 %v4403
    %v6542 = vunpack.c.h.b16 %v4403
    %v6543 = vunpack.c.l.b16 %v4404
    %v6544 = vunpack.c.l.b16 %v4405
    %v6545 = vunpack.c.h.b16 %v4405
    %v6546 = vunpack.c.l.b16 %v4406
    %v6547 = vunpack.c.h.b16 %v4406
    %v6548 = vunpack.c.l.b16 %v4407
    %v6549 = vunpack.c.h.b16 %v4407
    %v6550 = vunpack.c.l.b16 %v4408
    %v6551 = vunpack.c.l.b16 %v4409
    %v6552 = vunpack.c.h.b16 %v4409
    %v6553 = vunpack.c.l.b16 %v4410
    %v6554 = vunpack.c.h.b16 %v4410
    %v6555 = vunpack.c.l.b16 %v4411
    %v6556 = vunpack.c.h.b16 %v4411
    %v6557 = vunpack.c.l.b16 %v4412
    %v6558 = vunpack.c.l.b16 %v4413
    %v6559 = vunpack.c.h.b16 %v4413
    %v6560 = vunpack.c.l.b16 %v4414
    %v6561 = vunpack.c.h.b16 %v4414
    %v6562 = vunpack.c.l.b16 %v4415
    %v6563 = vunpack.c.h.b16 %v4415
    %v6564 = vunpack.c.l.b16 %v4416
    %v6565 = vunpack.c.l.b16 %v4417
    %v6566 = vunpack.c.h.b16 %v4417
    %v6567 = vunpack.c.l.b16 %v4418
    %v6568 = vunpack.c.h.b16 %v4418
    %v6569 = vunpack.c.l.b16 %v4419
    %v6570 = vunpack.c.h.b16 %v4419
    %v6571 = vunpack.c.l.b16 %v4420
    %v6572 = vunpack.c.l.b16 %v4421
    %v6573 = vunpack.c.h.b16 %v4421
    %v6574 = vunpack.c.l.b16 %v4422
    %v6575 = vunpack.c.h.b16 %v4422
    %v6576 = vunpack.c.l.b16 %v4423
    %v6577 = vunpack.c.h.b16 %v4423
    %v6578 = vunpack.c.l.b16 %v4424
    %v6579 = vunpack.c.l.b16 %v4425
    %v6580 = vunpack.c.h.b16 %v4425
    %v6581 = vunpack.c.l.b16 %v4426
    %v6582 = vunpack.c.h.b16 %v4426
    %v6583 = vunpack.c.l.b16 %v4427
    %v6584 = vunpack.c.h.b16 %v4427
    %v6585 = vunpack.c.l.b16 %v4428
    %v6586 = vunpack.c.l.b16 %v4429
    %v6587 = vunpack.c.h.b16 %v4429
    %v6588 = vunpack.c.l.b16 %v4430
    %v6589 = vunpack.c.h.b16 %v4430
    %v6590 = vunpack.c.l.b16 %v4431
    %v6591 = vunpack.c.h.b16 %v4431
    %v6592 = vunpack.c.l.b16 %v4432
    %v6593 = vunpack.c.l.b16 %v4433
    %v6594 = vunpack.c.h.b16 %v4433
    %v6595 = vunpack.c.l.b16 %v4434
    %v6596 = vunpack.c.h.b16 %v4434
    %v6597 = vunpack.c.l.b16 %v4435
    %v6598 = vunpack.c.h.b16 %v4435
    %v6599 = vunpack.c.l.b16 %v4436
    %v6600 = vunpack.c.l.b16 %v4437
    %v6601 = vunpack.c.h.b16 %v4437
    %v6602 = vunpack.c.l.b16 %v4438
    %v6603 = vunpack.c.h.b16 %v4438
    %v6604 = vunpack.c.l.b16 %v4439
    %v6605 = vunpack.c.h.b16 %v4439
    %v6606 = vunpack.c.l.b16 %v4440
    %v6607 = vunpack.c.l.b16 %v4441
    %v6608 = vunpack.c.h.b16 %v4441
    %v6609 = vunpack.c.l.b16 %v4442
    %v6610 = vunpack.c.h.b16 %v4442
    %v6611 = vunpack.c.l.b16 %v4443
    %v6612 = vunpack.c.h.b16 %v4443
    %v6613 = vunpack.c.l.b16 %v4444
    %v6614 = vunpack.c.l.b16 %v4445
    %v6615 = vunpack.c.h.b16 %v4445
    %v6616 = vunpack.c.l.b16 %v4446
    %v6617 = vunpack.c.h.b16 %v4446
    %v6618 = vunpack.c.l.b16 %v4447
    %v6619 = vunpack.c.h.b16 %v4447
    %v6620 = vunpack.c.l.b16 %v4448
    %v6621 = vunpack.c.l.b16 %v4449
    %v6622 = vunpack.c.h.b16 %v4449
    %v6623 = vunpack.c.l.b16 %v4450
    %v6624 = vunpack.c.h.b16 %v4450
    %v6625 = vunpack.c.l.b16 %v4451
    %v6626 = vunpack.c.h.b16 %v4451
    %v6627 = vunpack.c.l.b16 %v4452
    %v6628 = vunpack.c.l.b16 %v4453
    %v6629 = vunpack.c.h.b16 %v4453
    %v6630 = vunpack.c.l.b16 %v4454
    %v6631 = vunpack.c.h.b16 %v4454
    %v6632 = vunpack.c.l.b16 %v4455
    %v6633 = vunpack.c.h.b16 %v4455
    %v6634 = vunpack.c.l.b16 %v4456
    %v6635 = vunpack.c.l.b16 %v4457
    %v6636 = vunpack.c.h.b16 %v4457
    %v6637 = vunpack.c.l.b16 %v4458
    %v6638 = vunpack.c.h.b16 %v4458
    %v6639 = vunpack.c.l.b16 %v4459
    %v6640 = vunpack.c.h.b16 %v4459
    %v6641 = vunpack.c.l.b16 %v4460
    %v6642 = vunpack.c.l.b16 %v4461
    %v6643 = vunpack.c.h.b16 %v4461
    %v6644 = vunpack.c.l.b16 %v4462
    %v6645 = vunpack.c.h.b16 %v4462
    %v6646 = vunpack.c.l.b16 %v4463
    %v6647 = vunpack.c.h.b16 %v4463
    %v6648 = vunpack.c.l.b16 %v4464
    %v6649 = vunpack.c.l.b16 %v4465
    %v6650 = vunpack.c.h.b16 %v4465
    %v6651 = vunpack.c.l.b16 %v4466
    %v6652 = vunpack.c.h.b16 %v4466
    %v6653 = vunpack.c.l.b16 %v4467
    %v6654 = vunpack.c.h.b16 %v4467
    %v6655 = vunpack.c.l.b16 %v4468
    %v6656 = vunpack.c.l.b16 %v4469
    %v6657 = vunpack.c.h.b16 %v4469
    %v6658 = vunpack.c.l.b16 %v4470
    %v6659 = vunpack.c.h.b16 %v4470
    %v6660 = vunpack.c.l.b16 %v4471
    %v6661 = vunpack.c.h.b16 %v4471
    %v6662 = vunpack.c.l.b16 %v4472
    %v6663 = vunpack.c.l.b16 %v4473
    %v6664 = vunpack.c.h.b16 %v4473
    %v6665 = vunpack.c.l.b16 %v4474
    %v6666 = vunpack.c.h.b16 %v4474
    %v6667 = vunpack.c.l.b16 %v4475
    %v6668 = vunpack.c.h.b16 %v4475
    %v6669 = vunpack.c.l.b16 %v4476
    %v6670 = vunpack.c.l.b16 %v4477
    %v6671 = vunpack.c.h.b16 %v4477
    %v6672 = vunpack.c.l.b16 %v4478
    %v6673 = vunpack.c.h.b16 %v4478
    %v6674 = vunpack.c.l.b16 %v4479
    %v6675 = vunpack.c.h.b16 %v4479
    %v6676 = vunpack.c.l.b16 %v4480
    %v6677 = vunpack.c.l.b16 %v4481
    %v6678 = vunpack.c.h.b16 %v4481
    %v6679 = vunpack.c.l.b16 %v4482
    %v6680 = vunpack.c.h.b16 %v4482
    %v6681 = vunpack.c.l.b16 %v4483
    %v6682 = vunpack.c.h.b16 %v4483
    %v6683 = vunpack.c.l.b16 %v4484
    %v6684 = vunpack.c.l.b16 %v4485
    %v6685 = vunpack.c.h.b16 %v4485
    %v6686 = vunpack.c.l.b16 %v4486
    %v6687 = vunpack.c.h.b16 %v4486
    %v6688 = vunpack.c.l.b16 %v4487
    %v6689 = vunpack.c.h.b16 %v4487
    %v6690 = vunpack.c.l.b16 %v4488
    %v6691 = vunpack.c.l.b16 %v4489
    %v6692 = vunpack.c.h.b16 %v4489
    %v6693 = vunpack.c.l.b16 %v4490
    %v6694 = vunpack.c.h.b16 %v4490
    %v6695 = vunpack.c.l.b16 %v4491
    %v6696 = vunpack.c.h.b16 %v4491
    %v6697 = vunpack.c.l.b16 %v4492
    %v6698 = vunpack.c.l.b16 %v4493
    %v6699 = vunpack.c.h.b16 %v4493
    %v6700 = vunpack.c.l.b16 %v4494
    %v6701 = vunpack.c.h.b16 %v4494
    %v6702 = vunpack.c.l.b16 %v4495
    %v6703 = vunpack.c.h.b16 %v4495
    %v6704 = vunpack.c.l.b16 %v4496
    %v6705 = vunpack.c.l.b16 %v4497
    %v6706 = vunpack.c.h.b16 %v4497
    %v6707 = vunpack.c.l.b16 %v4498
    %v6708 = vunpack.c.h.b16 %v4498
    %v6709 = vunpack.c.l.b16 %v4499
    %v6710 = vunpack.c.h.b16 %v4499
    %v6711 = vunpack.c.l.b16 %v4500
    %v6712 = vunpack.c.l.b16 %v4501
    %v6713 = vunpack.c.h.b16 %v4501
    %v6714 = vunpack.c.l.b16 %v4502
    %v6715 = vunpack.c.h.b16 %v4502
    %v6716 = vunpack.c.l.b16 %v4503
    %v6717 = vunpack.c.h.b16 %v4503
    %v6718 = vunpack.c.l.b16 %v4504
    %v6719 = vunpack.c.l.b16 %v4505
    %v6720 = vunpack.c.h.b16 %v4505
    %v6721 = vunpack.c.l.b16 %v4506
    %v6722 = vunpack.c.h.b16 %v4506
    %v6723 = vunpack.c.l.b16 %v4507
    %v6724 = vunpack.c.h.b16 %v4507
    %v6725 = vunpack.c.l.b16 %v4508
    %v6726 = vunpack.c.l.b16 %v4509
    %v6727 = vunpack.c.h.b16 %v4509
    %v6728 = vunpack.c.l.b16 %v4510
    %v6729 = vunpack.c.h.b16 %v4510
    %v6730 = vunpack.c.l.b16 %v4511
    %v6731 = vunpack.c.h.b16 %v4511
    %v6732 = vunpack.c.l.b16 %v4512
    %v6733 = vunpack.c.l.b16 %v4513
    %v6734 = vunpack.c.h.b16 %v4513
    %v6735 = vunpack.c.l.b16 %v4514
    %v6736 = vunpack.c.h.b16 %v4514
    %v6737 = vunpack.c.l.b16 %v4515
    %v6738 = vunpack.c.h.b16 %v4515
    %v6739 = vunpack.c.l.b16 %v4516
    %v6740 = vunpack.c.l.b16 %v4517
    %v6741 = vunpack.c.h.b16 %v4517
    %v6742 = vunpack.c.l.b16 %v4518
    %v6743 = vunpack.c.h.b16 %v4518
    %v6744 = vunpack.c.l.b16 %v4519
    %v6745 = vunpack.c.h.b16 %v4519
    %v6746 = vunpack.c.l.b16 %v4520
    %v6747 = vunpack.c.l.b16 %v4521
    %v6748 = vunpack.c.h.b16 %v4521
    %v6749 = vunpack.c.l.b16 %v4522
    %v6750 = vunpack.c.h.b16 %v4522
    %v6751 = vunpack.c.l.b16 %v4523
    %v6752 = vunpack.c.h.b16 %v4523
    %v6753 = vunpack.c.l.b16 %v4524
    %v6754 = vunpack.c.l.b16 %v4525
    %v6755 = vunpack.c.h.b16 %v4525
    %v6756 = vunpack.c.l.b16 %v4526
    %v6757 = vunpack.c.h.b16 %v4526
    %v6758 = vunpack.c.l.b16 %v4527
    %v6759 = vunpack.c.h.b16 %v4527
    %v6760 = vunpack.c.l.b16 %v4528
    %v6761 = vunpack.c.l.b16 %v4529
    %v6762 = vunpack.c.h.b16 %v4529
    %v6763 = vunpack.c.l.b16 %v4530
    %v6764 = vunpack.c.h.b16 %v4530
    %v6765 = vunpack.c.l.b16 %v4531
    %v6766 = vunpack.c.h.b16 %v4531
    %v6767 = vunpack.c.l.b16 %v4532
    %v6768 = vunpack.c.l.b16 %v4533
    %v6769 = vunpack.c.h.b16 %v4533
    %v6770 = vunpack.c.l.b16 %v4534
    %v6771 = vunpack.c.h.b16 %v4534
    %v6772 = vunpack.c.l.b16 %v4535
    %v6773 = vunpack.c.h.b16 %v4535
    %v6774 = vunpack.c.l.b16 %v4536
    %v6775 = vunpack.c.l.b16 %v4537
    %v6776 = vunpack.c.h.b16 %v4537
    %v6777 = vunpack.c.l.b16 %v4538
    %v6778 = vunpack.c.h.b16 %v4538
    %v6779 = vunpack.c.l.b16 %v4539
    %v6780 = vunpack.c.h.b16 %v4539
    %v6781 = vunpack.c.l.b16 %v4540
    %v6782 = vunpack.c.l.b16 %v4541
    %v6783 = vunpack.c.h.b16 %v4541
    %v6784 = vunpack.c.l.b16 %v4542
    %v6785 = vunpack.c.h.b16 %v4542
    %v6786 = vunpack.c.l.b16 %v4543
    %v6787 = vunpack.c.h.b16 %v4543
    %v6788 = vunpack.c.l.b16 %v4544
    %v6789 = vunpack.c.l.b16 %v4545
    %v6790 = vunpack.c.h.b16 %v4545
    %v6791 = vunpack.c.l.b16 %v4546
    %v6792 = vunpack.c.h.b16 %v4546
    %v6793 = vunpack.c.l.b16 %v4547
    %v6794 = vunpack.c.h.b16 %v4547
    %v6795 = vunpack.c.l.b16 %v4548
    %v6796 = vunpack.c.l.b16 %v4549
    %v6797 = vunpack.c.h.b16 %v4549
    %v6798 = vunpack.c.l.b16 %v4550
    %v6799 = vunpack.c.h.b16 %v4550
    %v6800 = vunpack.c.l.b16 %v4551
    %v6801 = vunpack.c.h.b16 %v4551
    %v6802 = vunpack.c.l.b16 %v4552
    %v6803 = vunpack.c.l.b16 %v4553
    %v6804 = vunpack.c.h.b16 %v4553
    %v6805 = vunpack.c.l.b16 %v4554
    %v6806 = vunpack.c.h.b16 %v4554
    %v6807 = vunpack.c.l.b16 %v4555
    %v6808 = vunpack.c.h.b16 %v4555
    %v6809 = vunpack.c.l.b16 %v4556
    %v6810 = vunpack.c.l.b16 %v4557
    %v6811 = vunpack.c.h.b16 %v4557
    %v6812 = vunpack.c.l.b16 %v4558
    %v6813 = vunpack.c.h.b16 %v4558
    %v6814 = vunpack.c.l.b16 %v4559
    %v6815 = vunpack.c.h.b16 %v4559
    %v6816 = vunpack.c.l.b16 %v4560
    %v6817 = vunpack.c.l.b16 %v4561
    %v6818 = vunpack.c.h.b16 %v4561
    %v6819 = vunpack.c.l.b16 %v4562
    %v6820 = vunpack.c.h.b16 %v4562
    %v6821 = vunpack.c.l.b16 %v4563
    %v6822 = vunpack.c.h.b16 %v4563
    %v6823 = vunpack.c.l.b16 %v4564
    %v6824 = vunpack.c.l.b16 %v4565
    %v6825 = vunpack.c.h.b16 %v4565
    %v6826 = vunpack.c.l.b16 %v4566
    %v6827 = vunpack.c.h.b16 %v4566
    %v6828 = vunpack.c.l.b16 %v4567
    %v6829 = vunpack.c.h.b16 %v4567
    %v6830 = vunpack.c.l.b16 %v4568
    %v6831 = vunpack.c.l.b16 %v4569
    %v6832 = vunpack.c.h.b16 %v4569
    %v6833 = vunpack.c.l.b16 %v4570
    %v6834 = vunpack.c.h.b16 %v4570
    %v6835 = vunpack.c.l.b16 %v4571
    %v6836 = vunpack.c.h.b16 %v4571
    %v6837 = vunpack.c.l.b16 %v4572
    %v6838 = vunpack.c.l.b16 %v4573
    %v6839 = vunpack.c.h.b16 %v4573
    %v6840 = vunpack.c.l.b16 %v4574
    %v6841 = vunpack.c.h.b16 %v4574
    %v6842 = vunpack.c.l.b16 %v4575
    %v6843 = vunpack.c.h.b16 %v4575
    %v6844 = vunpack.c.l.b16 %v4576
    %v6845 = vunpack.c.l.b16 %v4577
    %v6846 = vunpack.c.h.b16 %v4577
    %v6847 = vunpack.c.l.b16 %v4578
    %v6848 = vunpack.c.h.b16 %v4578
    %v6849 = vunpack.c.l.b16 %v4579
    %v6850 = vunpack.c.h.b16 %v4579
    %v6851 = vunpack.c.l.b16 %v4580
    %v6852 = vunpack.c.l.b16 %v4581
    %v6853 = vunpack.c.h.b16 %v4581
    %v6854 = vunpack.c.l.b16 %v4582
    %v6855 = vunpack.c.h.b16 %v4582
    %v6856 = vunpack.c.l.b16 %v4583
    %v6857 = vunpack.c.h.b16 %v4583
    %v6858 = vunpack.c.l.b16 %v4584
    %v6859 = vunpack.c.l.b16 %v4585
    %v6860 = vunpack.c.h.b16 %v4585
    %v6861 = vunpack.c.l.b16 %v4586
    %v6862 = vunpack.c.h.b16 %v4586
    %v6863 = vunpack.c.l.b16 %v4587
    %v6864 = vunpack.c.h.b16 %v4587
    %v6865 = vunpack.c.l.b16 %v4588
    %v6866 = vunpack.c.l.b16 %v4589
    %v6867 = vunpack.c.h.b16 %v4589
    %v6868 = vunpack.c.l.b16 %v4590
    %v6869 = vunpack.c.h.b16 %v4590
    %v6870 = vunpack.c.l.b16 %v4591
    %v6871 = vunpack.c.h.b16 %v4591
    %v6872 = vunpack.c.l.b16 %v4592
    %v6873 = vunpack.c.l.b16 %v4593
    %v6874 = vunpack.c.h.b16 %v4593
    %v6875 = vunpack.c.l.b16 %v4594
    %v6876 = vunpack.c.h.b16 %v4594
    %v6877 = vunpack.c.l.b16 %v4595
    %v6878 = vunpack.c.h.b16 %v4595
    %v6879 = vunpack.c.l.b16 %v4596
    %v6880 = vunpack.c.l.b16 %v4597
    %v6881 = vunpack.c.h.b16 %v4597
    %v6882 = vunpack.c.l.b16 %v4598
    %v6883 = vunpack.c.h.b16 %v4598
    %v6884 = vunpack.c.l.b16 %v4599
    %v6885 = vunpack.c.h.b16 %v4599
    %v6886 = vunpack.c.l.b16 %v4600
    %v6887 = vunpack.c.l.b16 %v4601
    %v6888 = vunpack.c.h.b16 %v4601
    %v6889 = vunpack.c.l.b16 %v4602
    %v6890 = vunpack.c.h.b16 %v4602
    %v6891 = vunpack.c.l.b16 %v4603
    %v6892 = vunpack.c.h.b16 %v4603
    %v6893 = vunpack.c.l.b16 %v4604
    %v6894 = vunpack.c.l.b16 %v4605
    %v6895 = vunpack.c.h.b16 %v4605
    %v6896 = vunpack.c.l.b16 %v4606
    %v6897 = vunpack.c.h.b16 %v4606
    %v6898 = vunpack.c.l.b16 %v4607
    %v6899 = vunpack.c.h.b16 %v4607
    %v6900 = vunpack.c.l.b16 %v4608
    %v6901 = vunpack.c.l.b16 %v4609
    %v6902 = vunpack.c.h.b16 %v4609
    %v6903 = vunpack.c.l.b16 %v4610
    %v6904 = vunpack.c.h.b16 %v4610
    %v6905 = vunpack.c.l.b16 %v4611
    %v6906 = vunpack.c.h.b16 %v4611
    %v6907 = vunpack.c.l.b16 %v4612
    %v6908 = vunpack.c.l.b16 %v4613
    %v6909 = vunpack.c.h.b16 %v4613
    %v6910 = vunpack.c.l.b16 %v4614
    %v6911 = vunpack.c.h.b16 %v4614
    %v6912 = vunpack.c.l.b16 %v4615
    %v6913 = vunpack.c.h.b16 %v4615
    %v6914 = vunpack.c.l.b16 %v4616
    %v6915 = vunpack.c.l.b16 %v4617
    %v6916 = vunpack.c.h.b16 %v4617
    %v6917 = vunpack.c.l.b16 %v4618
    %v6918 = vunpack.c.h.b16 %v4618
    %v6919 = vunpack.c.l.b16 %v4619
    %v6920 = vunpack.c.h.b16 %v4619
    %v6921 = vunpack.c.l.b16 %v4620
    %v6922 = vunpack.c.l.b16 %v4621
    %v6923 = vunpack.c.h.b16 %v4621
    %v6924 = vunpack.c.l.b16 %v4622
    %v6925 = vunpack.c.h.b16 %v4622
    %v6926 = vunpack.c.l.b16 %v4623
    %v6927 = vunpack.c.h.b16 %v4623
    %v6928 = vunpack.c.l.b16 %v4624
    %v6929 = vunpack.c.l.b16 %v4625
    %v6930 = vunpack.c.h.b16 %v4625
    %v6931 = vunpack.c.l.b16 %v4626
    %v6932 = vunpack.c.h.b16 %v4626
    %v6933 = vunpack.c.l.b16 %v4627
    %v6934 = vunpack.c.h.b16 %v4627
    %v6935 = vunpack.c.l.b16 %v4628
    %v6936 = vunpack.c.l.b16 %v4629
    %v6937 = vunpack.c.h.b16 %v4629
    %v6938 = vunpack.c.l.b16 %v4630
    %v6939 = vunpack.c.h.b16 %v4630
    %v6940 = vunpack.c.l.b16 %v4631
    %v6941 = vunpack.c.h.b16 %v4631
    %v6942 = vunpack.c.l.b16 %v4632
    %v6943 = vunpack.c.l.b16 %v4633
    %v6944 = vunpack.c.h.b16 %v4633
    %v6945 = vunpack.c.l.b16 %v4634
    %v6946 = vunpack.c.h.b16 %v4634
    %v6947 = vunpack.c.l.b16 %v4635
    %v6948 = vunpack.c.h.b16 %v4635
    %v6949 = vunpack.c.l.b16 %v4636
    %v6950 = vunpack.c.l.b16 %v4637
    %v6951 = vunpack.c.h.b16 %v4637
    %v6952 = vunpack.c.l.b16 %v4638
    %v6953 = vunpack.c.h.b16 %v4638
    %v6954 = vunpack.c.l.b16 %v4639
    %v6955 = vunpack.c.h.b16 %v4639
    %v6956 = vunpack.c.l.b16 %v4640
    %v6957 = vunpack.c.l.b16 %v4641
    %v6958 = vunpack.c.h.b16 %v4641
    %v6959 = vunpack.c.l.b16 %v4642
    %v6960 = vunpack.c.h.b16 %v4642
    %v6961 = vunpack.c.l.b16 %v4643
    %v6962 = vunpack.c.h.b16 %v4643
    %v6963 = vunpack.c.l.b16 %v4644
    %v6964 = vunpack.c.l.b16 %v4645
    %v6965 = vunpack.c.h.b16 %v4645
    %v6966 = vunpack.c.l.b16 %v4646
    %v6967 = vunpack.c.h.b16 %v4646
    %v6968 = vunpack.c.l.b16 %v4647
    %v6969 = vunpack.c.h.b16 %v4647
    %v6970 = vunpack.c.l.b16 %v4648
    %v6971 = vunpack.c.l.b16 %v4649
    %v6972 = vunpack.c.h.b16 %v4649
    %v6973 = vunpack.c.l.b16 %v4650
    %v6974 = vunpack.c.h.b16 %v4650
    %v6975 = vunpack.c.l.b16 %v4651
    %v6976 = vunpack.c.h.b16 %v4651
    %v6977 = vunpack.c.l.b16 %v4652
    %v6978 = vunpack.c.l.b16 %v4653
    %v6979 = vunpack.c.h.b16 %v4653
    %v6980 = vunpack.c.l.b16 %v4654
    %v6981 = vunpack.c.h.b16 %v4654
    %v6982 = vunpack.c.l.b16 %v4655
    %v6983 = vunpack.c.h.b16 %v4655
    %v6984 = vunpack.c.l.b16 %v4656
    %v6985 = vunpack.c.l.b16 %v4657
    %v6986 = vunpack.c.h.b16 %v4657
    %v6987 = vunpack.c.l.b16 %v4658
    %v6988 = vunpack.c.h.b16 %v4658
    %v6989 = vunpack.c.l.b16 %v4659
    %v6990 = vunpack.c.h.b16 %v4659
    %v6991 = vunpack.c.l.b16 %v4660
    %v6992 = vunpack.c.l.b16 %v4661
    %v6993 = vunpack.c.h.b16 %v4661
    %v6994 = vunpack.c.l.b16 %v4662
    %v6995 = vunpack.c.h.b16 %v4662
    %v6996 = vunpack.c.l.b16 %v4663
    %v6997 = vunpack.c.h.b16 %v4663
    %v6998 = vunpack.c.l.b16 %v4664
    %v6999 = vunpack.c.l.b16 %v4665
    %v7000 = vunpack.c.h.b16 %v4665
    %v7001 = vunpack.c.l.b16 %v4666
    %v7002 = vunpack.c.h.b16 %v4666
    %v7003 = vunpack.c.l.b16 %v4667
    %v7004 = vunpack.c.h.b16 %v4667
    %v7005 = vunpack.c.l.b16 %v4668
    %v7006 = vunpack.c.l.b16 %v4669
    %v7007 = vunpack.c.h.b16 %v4669
    %v7008 = vunpack.c.l.b16 %v4670
    %v7009 = vunpack.c.h.b16 %v4670
    %v7010 = vunpack.c.l.b16 %v4671
    %v7011 = vunpack.c.h.b16 %v4671
    %v7012 = vunpack.c.l.b16 %v4672
    %v7013 = vunpack.c.l.b16 %v4673
    %v7014 = vunpack.c.h.b16 %v4673
    %v7015 = vunpack.c.l.b16 %v4674
    %v7016 = vunpack.c.h.b16 %v4674
    %v7017 = vunpack.c.l.b16 %v4675
    %v7018 = vunpack.c.h.b16 %v4675
    %v7019 = vunpack.c.l.b16 %v4676
    %v7020 = vunpack.c.l.b16 %v4677
    %v7021 = vunpack.c.h.b16 %v4677
    %v7022 = vunpack.c.l.b16 %v4678
    %v7023 = vunpack.c.h.b16 %v4678
    %v7024 = vunpack.c.l.b16 %v4679
    %v7025 = vunpack.c.h.b16 %v4679
    %v7026 = vunpack.c.l.b16 %v4680
    %v7027 = vunpack.c.l.b16 %v4681
    %v7028 = vunpack.c.h.b16 %v4681
    %v7029 = vunpack.c.l.b16 %v4682
    %v7030 = vunpack.c.h.b16 %v4682
    %v7031 = vunpack.c.l.b16 %v4683
    %v7032 = vunpack.c.h.b16 %v4683
    %v7033 = vunpack.c.l.b16 %v4684
    %v7034 = vunpack.c.l.b16 %v4685
    %v7035 = vunpack.c.h.b16 %v4685
    %v7036 = vunpack.c.l.b16 %v4686
    %v7037 = vunpack.c.h.b16 %v4686
    %v7038 = vunpack.c.l.b16 %v4687
    %v7039 = vunpack.c.h.b16 %v4687
    %v7040 = vunpack.c.l.b16 %v4688
    %v7041 = vunpack.c.l.b16 %v4689
    %v7042 = vunpack.c.h.b16 %v4689
    %v7043 = vunpack.c.l.b16 %v4690
    %v7044 = vunpack.c.h.b16 %v4690
    %v7045 = vunpack.c.l.b16 %v4691
    %v7046 = vunpack.c.h.b16 %v4691
    %v7047 = vunpack.c.l.b16 %v4692
    %v7048 = vunpack.c.l.b16 %v4693
    %v7049 = vunpack.c.h.b16 %v4693
    %v7050 = vunpack.c.l.b16 %v4694
    %v7051 = vunpack.c.h.b16 %v4694
    %v7052 = vunpack.c.l.b16 %v4695
    %v7053 = vunpack.c.h.b16 %v4695
    %v7054 = vunpack.c.l.b16 %v4696
    %v7055 = vunpack.c.l.b16 %v4697
    %v7056 = vunpack.c.h.b16 %v4697
    %v7057 = vunpack.c.l.b16 %v4698
    %v7058 = vunpack.c.h.b16 %v4698
    %v7059 = vunpack.c.l.b16 %v4699
    %v7060 = vunpack.c.h.b16 %v4699
    %v7061 = vunpack.c.l.b16 %v4700
    %v7062 = vunpack.c.l.b16 %v4701
    %v7063 = vunpack.c.h.b16 %v4701
    %v7064 = vunpack.c.l.b16 %v4702
    %v7065 = vunpack.c.h.b16 %v4702
    %v7066 = vunpack.c.l.b16 %v4703
    %v7067 = vunpack.c.h.b16 %v4703
    %v7068 = vunpack.c.l.b16 %v4704
    %v7069 = vunpack.c.l.b16 %v4705
    %v7070 = vunpack.c.h.b16 %v4705
    %v7071 = vunpack.c.l.b16 %v4706
    %v7072 = vunpack.c.h.b16 %v4706
    %v7073 = vunpack.c.l.b16 %v4707
    %v7074 = vunpack.c.h.b16 %v4707
    %v7075 = vunpack.c.l.b16 %v4708
    %v7076 = vunpack.c.l.b16 %v4709
    %v7077 = vunpack.c.h.b16 %v4709
    %v7078 = vunpack.c.l.b16 %v4710
    %v7079 = vunpack.c.h.b16 %v4710
    %v7080 = vunpack.c.l.b16 %v4711
    %v7081 = vunpack.c.h.b16 %v4711
    %v7082 = vunpack.c.l.b16 %v4712
    %v7083 = vunpack.c.l.b16 %v4713
    %v7084 = vunpack.c.h.b16 %v4713
    %v7085 = vunpack.c.l.b16 %v4714
    %v7086 = vunpack.c.h.b16 %v4714
    %v7087 = vunpack.c.l.b16 %v4715
    %v7088 = vunpack.c.h.b16 %v4715
    %v7089 = vunpack.c.l.b16 %v4716
    %v7090 = vunpack.c.l.b16 %v4717
    %v7091 = vunpack.c.h.b16 %v4717
    %v7092 = vunpack.c.l.b16 %v4718
    %v7093 = vunpack.c.h.b16 %v4718
    %v7094 = vunpack.c.l.b16 %v4719
    %v7095 = vunpack.c.h.b16 %v4719
    %v7096 = vunpack.c.l.b16 %v4720
    %v7097 = vunpack.c.l.b16 %v4721
    %v7098 = vunpack.c.h.b16 %v4721
    %v7099 = vunpack.c.l.b16 %v4722
    %v7100 = vunpack.c.h.b16 %v4722
    %v7101 = vunpack.c.l.b16 %v4723
    %v7102 = vunpack.c.h.b16 %v4723
    %v7103 = vunpack.c.l.b16 %v4724
    %v7104 = vunpack.c.l.b16 %v4725
    %v7105 = vunpack.c.h.b16 %v4725
    %v7106 = vunpack.c.l.b16 %v4726
    %v7107 = vunpack.c.h.b16 %v4726
    %v7108 = vunpack.c.l.b16 %v4727
    %v7109 = vunpack.c.h.b16 %v4727
    %v7110 = vunpack.c.l.b16 %v4728
    %v7111 = vunpack.c.l.b16 %v4729
    %v7112 = vunpack.c.h.b16 %v4729
    %v7113 = vunpack.c.l.b16 %v4730
    %v7114 = vunpack.c.h.b16 %v4730
    %v7115 = vunpack.c.l.b16 %v4731
    %v7116 = vunpack.c.h.b16 %v4731
    %v7117 = vunpack.c.l.b16 %v4732
    %v7118 = vunpack.c.l.b16 %v4733
    %v7119 = vunpack.c.h.b16 %v4733
    %v7120 = vunpack.c.l.b16 %v4734
    %v7121 = vunpack.c.h.b16 %v4734
    %v7122 = vunpack.c.l.b16 %v4735
    %v7123 = vunpack.c.h.b16 %v4735
    %v7124 = vunpack.c.l.b16 %v4736
    %v7125 = vunpack.c.l.b16 %v4737
    %v7126 = vunpack.c.h.b16 %v4737
    %v7127 = vunpack.c.l.b16 %v4738
    %v7128 = vunpack.c.h.b16 %v4738
    %v7129 = vunpack.c.l.b16 %v4739
    %v7130 = vunpack.c.h.b16 %v4739
    %v7131 = vunpack.c.l.b16 %v4740
    %v7132 = vunpack.c.l.b16 %v4741
    %v7133 = vunpack.c.h.b16 %v4741
    %v7134 = vunpack.c.l.b16 %v4742
    %v7135 = vunpack.c.h.b16 %v4742
    %v7136 = vunpack.c.l.b16 %v4743
    %v7137 = vunpack.c.h.b16 %v4743
    %v7138 = vunpack.c.l.b16 %v4744
    %v7139 = vunpack.c.l.b16 %v4745
    %v7140 = vunpack.c.h.b16 %v4745
    %v7141 = vunpack.c.l.b16 %v4746
    %v7142 = vunpack.c.h.b16 %v4746
    %v7143 = vunpack.c.l.b16 %v4747
    %v7144 = vunpack.c.h.b16 %v4747
    %v7145 = vunpack.c.l.b16 %v4748
    %v7146 = vunpack.c.l.b16 %v4749
    %v7147 = vunpack.c.h.b16 %v4749
    %v7148 = vunpack.c.l.b16 %v4750
    %v7149 = vunpack.c.h.b16 %v4750
    %v7150 = vunpack.c.l.b16 %v4751
    %v7151 = vunpack.c.h.b16 %v4751
    %v7152 = vunpack.c.l.b16 %v4752
    %v7153 = vunpack.c.l.b16 %v4753
    %v7154 = vunpack.c.h.b16 %v4753
    %v7155 = vunpack.c.l.b16 %v4754
    %v7156 = vunpack.c.h.b16 %v4754
    %v7157 = vunpack.c.l.b16 %v4755
    %v7158 = vunpack.c.h.b16 %v4755
    %v7159 = vunpack.c.l.b16 %v4756
    %v7160 = vunpack.c.l.b16 %v4757
    %v7161 = vunpack.c.h.b16 %v4757
    %v7162 = vunpack.c.l.b16 %v4758
    %v7163 = vunpack.c.h.b16 %v4758
    %v7164 = vunpack.c.l.b16 %v4759
    %v7165 = vunpack.c.h.b16 %v4759
    %v7166 = vunpack.c.l.b16 %v4760
    %v7167 = vunpack.c.l.b16 %v4761
    %v7168 = vunpack.c.h.b16 %v4761
    %v7169 = vunpack.c.l.b16 %v4762
    %v7170 = vunpack.c.h.b16 %v4762
    %v7171 = vunpack.c.l.b16 %v4763
    %v7172 = vunpack.c.h.b16 %v4763
    %v7173 = vunpack.c.l.b16 %v4764
    %v7174 = vunpack.c.l.b16 %v4765
    %v7175 = vunpack.c.h.b16 %v4765
    %v7176 = vunpack.c.l.b16 %v4766
    %v7177 = vunpack.c.h.b16 %v4766
    %v7178 = vunpack.c.l.b16 %v4767
    %v7179 = vunpack.c.h.b16 %v4767
    %v7180 = vunpack.c.l.b16 %v4768
    %v7181 = vunpack.c.l.b16 %v4769
    %v7182 = vunpack.c.h.b16 %v4769
    %v7183 = vunpack.c.l.b16 %v4770
    %v7184 = vunpack.c.h.b16 %v4770
    %v7185 = vunpack.c.l.b16 %v4771
    %v7186 = vunpack.c.h.b16 %v4771
    %v7187 = vunpack.c.l.b16 %v4772
    %v7188 = vunpack.c.l.b16 %v4773
    %v7189 = vunpack.c.h.b16 %v4773
    %v7190 = vunpack.c.l.b16 %v4774
    %v7191 = vunpack.c.h.b16 %v4774
    %v7192 = vunpack.c.l.b16 %v4775
    %v7193 = vunpack.c.h.b16 %v4775
    %v7194 = vunpack.c.l.b16 %v4776
    %v7195 = vunpack.c.l.b16 %v4777
    %v7196 = vunpack.c.h.b16 %v4777
    %v7197 = vunpack.c.l.b16 %v4778
    %v7198 = vunpack.c.h.b16 %v4778
    %v7199 = vunpack.c.l.b16 %v4779
    %v7200 = vunpack.c.h.b16 %v4779
    %v7201 = vunpack.c.l.b16 %v4780
    %v7202 = vunpack.c.l.b16 %v4781
    %v7203 = vunpack.c.h.b16 %v4781
    %v7204 = vunpack.c.l.b16 %v4782
    %v7205 = vunpack.c.h.b16 %v4782
    %v7206 = vunpack.c.l.b16 %v4783
    %v7207 = vunpack.c.h.b16 %v4783
    %v7208 = vunpack.c.l.b16 %v4784
    %v7209 = vunpack.c.l.b16 %v4785
    %v7210 = vunpack.c.h.b16 %v4785
    %v7211 = vunpack.c.l.b16 %v4786
    %v7212 = vunpack.c.h.b16 %v4786
    %v7213 = vunpack.c.l.b16 %v4787
    %v7214 = vunpack.c.h.b16 %v4787
    %v7215 = vunpack.c.l.b16 %v4788
    %v7216 = vunpack.c.l.b16 %v4789
    %v7217 = vunpack.c.h.b16 %v4789
    %v7218 = vunpack.c.l.b16 %v4790
    %v7219 = vunpack.c.h.b16 %v4790
    %v7220 = vunpack.c.l.b16 %v4791
    %v7221 = vunpack.c.h.b16 %v4791
    %v7222 = vunpack.c.l.b16 %v4792
    %v7223 = vunpack.c.l.b16 %v4793
    %v7224 = vunpack.c.h.b16 %v4793
    %v7225 = vunpack.c.l.b16 %v4794
    %v7226 = vunpack.c.h.b16 %v4794
    %v7227 = vunpack.c.l.b16 %v4795
    %v7228 = vunpack.c.h.b16 %v4795
    %v7229 = vunpack.c.l.b16 %v4796
    %v7230 = vunpack.c.l.b16 %v4797
    %v7231 = vunpack.c.h.b16 %v4797
    %v7232 = vunpack.c.l.b16 %v4798
    %v7233 = vunpack.c.h.b16 %v4798
    %v7234 = vunpack.c.l.b16 %v4799
    %v7235 = vunpack.c.h.b16 %v4799
    %v7236 = vunpack.c.l.b16 %v4800
    %v7237 = vunpack.c.l.b16 %v4801
    %v7238 = vunpack.c.h.b16 %v4801
    %v7239 = vunpack.c.l.b16 %v4802
    %v7240 = vunpack.c.h.b16 %v4802
    %v7241 = vunpack.c.l.b16 %v4803
    %v7242 = vunpack.c.h.b16 %v4803
    %v7243 = vunpack.c.l.b16 %v4804
    %v7244 = vunpack.c.l.b16 %v4805
    %v7245 = vunpack.c.h.b16 %v4805
    %v7246 = vunpack.c.l.b16 %v4806
    %v7247 = vunpack.c.h.b16 %v4806
    %v7248 = vunpack.c.l.b16 %v4807
    %v7249 = vunpack.c.h.b16 %v4807
    %v7250 = vunpack.c.l.b16 %v4808
    %v7251 = vunpack.c.l.b16 %v4809
    %v7252 = vunpack.c.h.b16 %v4809
    %v7253 = vunpack.c.l.b16 %v4810
    %v7254 = vunpack.c.h.b16 %v4810
    %v7255 = vunpack.c.l.b16 %v4811
    %v7256 = vunpack.c.h.b16 %v4811
    %v7257 = vunpack.c.l.b16 %v4812
    %v7258 = vunpack.c.l.b16 %v4813
    %v7259 = vunpack.c.h.b16 %v4813
    %v7260 = vunpack.c.l.b16 %v4814
    %v7261 = vunpack.c.h.b16 %v4814
    %v7262 = vunpack.c.l.b16 %v4815
    %v7263 = vunpack.c.h.b16 %v4815
    %v7264 = vunpack.c.l.b16 %v4816
    %v7265 = vunpack.c.l.b16 %v4817
    %v7266 = vunpack.c.h.b16 %v4817
    %v7267 = vunpack.c.l.b16 %v4818
    %v7268 = vunpack.c.h.b16 %v4818
    %v7269 = vunpack.c.l.b16 %v4819
    %v7270 = vunpack.c.h.b16 %v4819
    %v7271 = vunpack.c.l.b16 %v4820
    %v7272 = vunpack.c.l.b16 %v4821
    %v7273 = vunpack.c.h.b16 %v4821
    %v7274 = vunpack.c.l.b16 %v4822
    %v7275 = vunpack.c.h.b16 %v4822
    %v7276 = vunpack.c.l.b16 %v4823
    %v7277 = vunpack.c.h.b16 %v4823
    %v7278 = vunpack.c.l.b16 %v4824
    %v7279 = vunpack.c.l.b16 %v4825
    %v7280 = vunpack.c.h.b16 %v4825
    %v7281 = vunpack.c.l.b16 %v4826
    %v7282 = vunpack.c.h.b16 %v4826
    %v7283 = vunpack.c.l.b16 %v4827
    %v7284 = vunpack.c.h.b16 %v4827
    %v7285 = vunpack.c.l.b16 %v4828
    %v7286 = vunpack.c.l.b16 %v4829
    %v7287 = vunpack.c.h.b16 %v4829
    %v7288 = vunpack.c.l.b16 %v4830
    %v7289 = vunpack.c.h.b16 %v4830
    %v7290 = vunpack.c.l.b16 %v4831
    %v7291 = vunpack.c.h.b16 %v4831
    %v7292 = vunpack.c.l.b16 %v4832
    %v7293 = vunpack.c.l.b16 %v4833
    %v7294 = vunpack.c.h.b16 %v4833
    %v7295 = vunpack.c.l.b16 %v4834
    %v7296 = vunpack.c.h.b16 %v4834
    %v7297 = vunpack.c.l.b16 %v4835
    %v7298 = vunpack.c.h.b16 %v4835
    %v7299 = vunpack.c.l.b16 %v4836
    %v7300 = vunpack.c.l.b16 %v4837
    %v7301 = vunpack.c.h.b16 %v4837
    %v7302 = vunpack.c.l.b16 %v4838
    %v7303 = vunpack.c.h.b16 %v4838
    %v7304 = vunpack.c.l.b16 %v4839
    %v7305 = vunpack.c.h.b16 %v4839
    %v7306 = vunpack.c.l.b16 %v4840
    %v7307 = vunpack.c.l.b16 %v4841
    %v7308 = vunpack.c.h.b16 %v4841
    %v7309 = vunpack.c.l.b16 %v4842
    %v7310 = vunpack.c.h.b16 %v4842
    %v7311 = vunpack.c.l.b16 %v4843
    %v7312 = vunpack.c.h.b16 %v4843
    %v7313 = vunpack.c.l.b16 %v4844
    %v7314 = vunpack.c.l.b16 %v4845
    %v7315 = vunpack.c.h.b16 %v4845
    %v7316 = vunpack.c.l.b16 %v4846
    %v7317 = vunpack.c.h.b16 %v4846
    %v7318 = vunpack.c.l.b16 %v4847
    %v7319 = vunpack.c.h.b16 %v4847
    %v7320 = vunpack.c.l.b16 %v4848
    %v7321 = vunpack.c.l.b16 %v4849
    %v7322 = vunpack.c.h.b16 %v4849
    %v7323 = vunpack.c.l.b16 %v4850
    %v7324 = vunpack.c.h.b16 %v4850
    %v7325 = vunpack.c.l.b16 %v4851
    %v7326 = vunpack.c.h.b16 %v4851
    %v7327 = vunpack.c.l.b16 %v4852
    %v7328 = vunpack.c.l.b16 %v4853
    %v7329 = vunpack.c.h.b16 %v4853
    %v7330 = vunpack.c.l.b16 %v4854
    %v7331 = vunpack.c.h.b16 %v4854
    %v7332 = vunpack.c.l.b16 %v4855
    %v7333 = vunpack.c.h.b16 %v4855
    %v7334 = vunpack.c.l.b16 %v4856
    %v7335 = vunpack.c.l.b16 %v4857
    %v7336 = vunpack.c.h.b16 %v4857
    %v7337 = vunpack.c.l.b16 %v4858
    %v7338 = vunpack.c.h.b16 %v4858
    %v7339 = vunpack.c.l.b16 %v4859
    %v7340 = vunpack.c.h.b16 %v4859
    %v7341 = vunpack.c.l.b16 %v4860
    %v7342 = vunpack.c.l.b16 %v4861
    %v7343 = vunpack.c.h.b16 %v4861
    %v7344 = vunpack.c.l.b16 %v4862
    %v7345 = vunpack.c.h.b16 %v4862
    %v7346 = vunpack.c.l.b16 %v4863
    %v7347 = vunpack.c.h.b16 %v4863
    %v7348 = vunpack.c.l.b16 %v4864
    %v7349 = vunpack.c.l.b16 %v4865
    %v7350 = vunpack.c.h.b16 %v4865
    %v7351 = vunpack.c.l.b16 %v4866
    %v7352 = vunpack.c.h.b16 %v4866
    %v7353 = vunpack.c.l.b16 %v4867
    %v7354 = vunpack.c.h.b16 %v4867
    %v7355 = vunpack.c.l.b16 %v4868
    %v7356 = vunpack.c.l.b16 %v4869
    %v7357 = vunpack.c.h.b16 %v4869
    %v7358 = vunpack.c.l.b16 %v4870
    %v7359 = vunpack.c.h.b16 %v4870
    %v7360 = vunpack.c.l.b16 %v4871
    %v7361 = vunpack.c.h.b16 %v4871
    %v7362 = vunpack.c.l.b16 %v4872
    %v7363 = vunpack.c.l.b16 %v4873
    %v7364 = vunpack.c.h.b16 %v4873
    %v7365 = vunpack.c.l.b16 %v4874
    %v7366 = vunpack.c.h.b16 %v4874
    %v7367 = vunpack.c.l.b16 %v4875
    %v7368 = vunpack.c.h.b16 %v4875
    %v7369 = vunpack.c.l.b16 %v4876
    %v7370 = vunpack.c.l.b16 %v4877
    %v7371 = vunpack.c.h.b16 %v4877
    %v7372 = vunpack.c.l.b16 %v4878
    %v7373 = vunpack.c.h.b16 %v4878
    %v7374 = vunpack.c.l.b16 %v4879
    %v7375 = vunpack.c.h.b16 %v4879
    %v7376 = vunpack.c.l.b16 %v4880
    %v7377 = vunpack.c.l.b16 %v4881
    %v7378 = vunpack.c.h.b16 %v4881
    %v7379 = vunpack.c.l.b16 %v4882
    %v7380 = vunpack.c.h.b16 %v4882
    %v7381 = vunpack.c.l.b16 %v4883
    %v7382 = vunpack.c.h.b16 %v4883
    %v7383 = vunpack.c.l.b16 %v4884
    %v7384 = vunpack.c.l.b16 %v4885
    %v7385 = vunpack.c.h.b16 %v4885
    %v7386 = vunpack.c.l.b16 %v4886
    %v7387 = vunpack.c.h.b16 %v4886
    %v7388 = vunpack.c.l.b16 %v4887
    %v7389 = vunpack.c.h.b16 %v4887
    %v7390 = vunpack.c.l.b16 %v4888
    %v7391 = vunpack.c.l.b16 %v4889
    %v7392 = vunpack.c.h.b16 %v4889
    %v7393 = vunpack.c.l.b16 %v4890
    %v7394 = vunpack.c.h.b16 %v4890
    %v7395 = vunpack.c.l.b16 %v4891
    %v7396 = vunpack.c.h.b16 %v4891
    %v7397 = vunpack.c.l.b16 %v4892
    %v7398 = vunpack.c.l.b16 %v4893
    %v7399 = vunpack.c.h.b16 %v4893
    %v7400 = vunpack.c.l.b16 %v4894
    %v7401 = vunpack.c.h.b16 %v4894
    %v7402 = vunpack.c.l.b16 %v4895
    %v7403 = vunpack.c.h.b16 %v4895
    %v7404 = vunpack.c.l.b16 %v4896
    %v7405 = vunpack.c.l.b16 %v4897
    %v7406 = vunpack.c.h.b16 %v4897
    %v7407 = vunpack.c.l.b16 %v4898
    %v7408 = vunpack.c.h.b16 %v4898
    %v7409 = vunpack.c.l.b16 %v4899
    %v7410 = vunpack.c.h.b16 %v4899
    %v7411 = vunpack.c.l.b16 %v4900
    %v7412 = vunpack.c.l.b16 %v4901
    %v7413 = vunpack.c.h.b16 %v4901
    %v7414 = vunpack.c.l.b16 %v4902
    %v7415 = vunpack.c.h.b16 %v4902
    %v7416 = vunpack.c.l.b16 %v4903
    %v7417 = vunpack.c.h.b16 %v4903
    %v7418 = vunpack.c.l.b16 %v4904
    %v7419 = vunpack.c.l.b16 %v4905
    %v7420 = vunpack.c.h.b16 %v4905
    %v7421 = vunpack.c.l.b16 %v4906
    %v7422 = vunpack.c.h.b16 %v4906
    %v7423 = vunpack.c.l.b16 %v4907
    %v7424 = vunpack.c.h.b16 %v4907
    %v7425 = vunpack.c.l.b16 %v4908
    %v7426 = vunpack.c.l.b16 %v4909
    %v7427 = vunpack.c.h.b16 %v4909
    %v7428 = vunpack.c.l.b16 %v4910
    %v7429 = vunpack.c.h.b16 %v4910
    %v7430 = vunpack.c.l.b16 %v4911
    %v7431 = vunpack.c.h.b16 %v4911
    %v7432 = vunpack.c.l.b16 %v4912
    %v7433 = vunpack.c.l.b16 %v4913
    %v7434 = vunpack.c.h.b16 %v4913
    %v7435 = vunpack.c.l.b16 %v4914
    %v7436 = vunpack.c.h.b16 %v4914
    %v7437 = vunpack.c.l.b16 %v4915
    %v7438 = vunpack.c.h.b16 %v4915
    %v7439 = vunpack.c.l.b16 %v4916
    %v7440 = vunpack.c.l.b16 %v4917
    %v7441 = vunpack.c.h.b16 %v4917
    %v7442 = vunpack.c.l.b16 %v4918
    %v7443 = vunpack.c.h.b16 %v4918
    %v7444 = vunpack.c.l.b16 %v4919
    %v7445 = vunpack.c.h.b16 %v4919
    %v7446 = vunpack.c.l.b16 %v4920
    %v7447 = vunpack.c.l.b16 %v4921
    %v7448 = vunpack.c.h.b16 %v4921
    %v7449 = vunpack.c.l.b16 %v4922
    %v7450 = vunpack.c.h.b16 %v4922
    %v7451 = vunpack.c.l.b16 %v4923
    %v7452 = vunpack.c.h.b16 %v4923
    %v7453 = vunpack.c.l.b16 %v4924
    %v7454 = vunpack.c.l.b16 %v4925
    %v7455 = vunpack.c.h.b16 %v4925
    %v7456 = vunpack.c.l.b16 %v4926
    %v7457 = vunpack.c.h.b16 %v4926
    %v7458 = vunpack.c.l.b16 %v4927
    %v7459 = vunpack.c.h.b16 %v4927
    %v7460 = vunpack.c.l.b16 %v4928
    %v7461 = vunpack.c.l.b16 %v4929
    %v7462 = vunpack.c.h.b16 %v4929
    %v7463 = vunpack.c.l.b16 %v4930
    %v7464 = vunpack.c.h.b16 %v4930
    %v7465 = vunpack.c.l.b16 %v4931
    %v7466 = vunpack.c.h.b16 %v4931
    %v7467 = vunpack.c.l.b16 %v4932
    %v7468 = vunpack.c.l.b16 %v4933
    %v7469 = vunpack.c.h.b16 %v4933
    %v7470 = vunpack.c.l.b16 %v4934
    %v7471 = vunpack.c.h.b16 %v4934
    %v7472 = vunpack.c.l.b16 %v4935
    %v7473 = vunpack.c.h.b16 %v4935
    %v7474 = vunpack.c.l.b16 %v4936
    %v7475 = vunpack.c.l.b16 %v4937
    %v7476 = vunpack.c.h.b16 %v4937
    %v7477 = vunpack.c.l.b16 %v4938
    %v7478 = vunpack.c.h.b16 %v4938
    %v7479 = vunpack.c.l.b16 %v4939
    %v7480 = vunpack.c.h.b16 %v4939
    %v7481 = vunpack.c.l.b16 %v4940
    %v7482 = vunpack.c.l.b16 %v4941
    %v7483 = vunpack.c.h.b16 %v4941
    %v7484 = vunpack.c.l.b16 %v4942
    %v7485 = vunpack.c.h.b16 %v4942
    %v7486 = vunpack.c.l.b16 %v4943
    %v7487 = vunpack.c.h.b16 %v4943
    %v7488 = vunpack.c.l.b16 %v4944
    %v7489 = vunpack.c.l.b16 %v4945
    %v7490 = vunpack.c.h.b16 %v4945
    %v7491 = vunpack.c.l.b16 %v4946
    %v7492 = vunpack.c.h.b16 %v4946
    %v7493 = vunpack.c.l.b16 %v4947
    %v7494 = vunpack.c.h.b16 %v4947
    %v7495 = vunpack.c.l.b16 %v4948
    %v7496 = vunpack.c.l.b16 %v4949
    %v7497 = vunpack.c.h.b16 %v4949
    %v7498 = vunpack.c.l.b16 %v4950
    %v7499 = vunpack.c.h.b16 %v4950
    %v7500 = vunpack.c.l.b16 %v4951
    %v7501 = vunpack.c.h.b16 %v4951
    %v7502 = vunpack.c.l.b16 %v4952
    %v7503 = vunpack.c.l.b16 %v4953
    %v7504 = vunpack.c.h.b16 %v4953
    %v7505 = vunpack.c.l.b16 %v4954
    %v7506 = vunpack.c.h.b16 %v4954
    %v7507 = vunpack.c.l.b16 %v4955
    %v7508 = vunpack.c.h.b16 %v4955
    %v7509 = vunpack.c.l.b16 %v4956
    %v7510 = vunpack.c.l.b16 %v4957
    %v7511 = vunpack.c.h.b16 %v4957
    %v7512 = vunpack.c.l.b16 %v4958
    %v7513 = vunpack.c.h.b16 %v4958
    %v7514 = vunpack.c.l.b16 %v4959
    %v7515 = vunpack.c.h.b16 %v4959
    %v7516 = vunpack.c.l.b16 %v4960
    %v7517 = vunpack.c.l.b16 %v4961
    %v7518 = vunpack.c.h.b16 %v4961
    %v7519 = vunpack.c.l.b16 %v4962
    %v7520 = vunpack.c.h.b16 %v4962
    %v7521 = vunpack.c.l.b16 %v4963
    %v7522 = vunpack.c.h.b16 %v4963
    %v7523 = vunpack.c.l.b16 %v4964
    %v7524 = vunpack.c.l.b16 %v4965
    %v7525 = vunpack.c.h.b16 %v4965
    %v7526 = vunpack.c.l.b16 %v4966
    %v7527 = vunpack.c.h.b16 %v4966
    %v7528 = vunpack.c.l.b16 %v4967
    %v7529 = vunpack.c.h.b16 %v4967
    %v7530 = vunpack.c.l.b16 %v4968
    %v7531 = vunpack.c.l.b16 %v4969
    %v7532 = vunpack.c.h.b16 %v4969
    %v7533 = vunpack.c.l.b16 %v4970
    %v7534 = vunpack.c.h.b16 %v4970
    %v7535 = vunpack.c.l.b16 %v4971
    %v7536 = vunpack.c.h.b16 %v4971
    %v7537 = vunpack.c.l.b16 %v4972
    %v7538 = vunpack.c.l.b16 %v4973
    %v7539 = vunpack.c.h.b16 %v4973
    %v7540 = vunpack.c.l.b16 %v4974
    %v7541 = vunpack.c.h.b16 %v4974
    %v7542 = vunpack.c.l.b16 %v4975
    %v7543 = vunpack.c.h.b16 %v4975
    %v7544 = vunpack.c.l.b16 %v4976
    %v7545 = vunpack.c.l.b16 %v4977
    %v7546 = vunpack.c.h.b16 %v4977
    %v7547 = vunpack.c.l.b16 %v4978
    %v7548 = vunpack.c.h.b16 %v4978
    %v7549 = vunpack.c.l.b16 %v4979
    %v7550 = vunpack.c.h.b16 %v4979
    %v7551 = vunpack.c.l.b16 %v4980
    %v7552 = vunpack.c.l.b16 %v4981
    %v7553 = vunpack.c.h.b16 %v4981
    %v7554 = vunpack.c.l.b16 %v4982
    %v7555 = vunpack.c.h.b16 %v4982
    %v7556 = vunpack.c.l.b16 %v4983
    %v7557 = vunpack.c.h.b16 %v4983
    %v7558 = vunpack.c.l.b16 %v4984
    %v7559 = vunpack.c.l.b16 %v4985
    %v7560 = vunpack.c.h.b16 %v4985
    %v7561 = vunpack.c.l.b16 %v4986
    %v7562 = vunpack.c.h.b16 %v4986
    %v7563 = vunpack.c.l.b16 %v4987
    %v7564 = vunpack.c.h.b16 %v4987
    %v7565 = vunpack.c.l.b16 %v4988
    %v7566 = vunpack.c.l.b16 %v4989
    %v7567 = vunpack.c.h.b16 %v4989
    %v7568 = vunpack.c.l.b16 %v4990
    %v7569 = vunpack.c.h.b16 %v4990
    %v7570 = vunpack.c.l.b16 %v4991
    %v7571 = vunpack.c.h.b16 %v4991
    %v7572 = vunpack.c.l.b16 %v4992
    %v7573 = vunpack.c.l.b16 %v4993
    %v7574 = vunpack.c.h.b16 %v4993
    %v7575 = vunpack.c.l.b16 %v4994
    %v7576 = vunpack.c.h.b16 %v4994
    %v7577 = vunpack.c.l.b16 %v4995
    %v7578 = vunpack.c.h.b16 %v4995
    %v7579 = vunpack.c.l.b16 %v4996
    %v7580 = vunpack.c.l.b16 %v4997
    %v7581 = vunpack.c.h.b16 %v4997
    %v7582 = vunpack.c.l.b16 %v4998
    %v7583 = vunpack.c.h.b16 %v4998
    %v7584 = vunpack.c.l.b16 %v4999
    %v7585 = vunpack.c.h.b16 %v4999
    %v7586 = vunpack.c.l.b16 %v5000
    %v7587 = vunpack.c.l.b16 %v5001
    %v7588 = vunpack.c.h.b16 %v5001
    %v7589 = vunpack.c.l.b16 %v5002
    %v7590 = vunpack.c.h.b16 %v5002
    %v7591 = vunpack.c.l.b16 %v5003
    %v7592 = vunpack.c.h.b16 %v5003
    %v7593 = vunpack.c.l.b16 %v5004
    %v7594 = vunpack.c.l.b16 %v5005
    %v7595 = vunpack.c.h.b16 %v5005
    %v7596 = vunpack.c.l.b16 %v5006
    %v7597 = vunpack.c.h.b16 %v5006
    %v7598 = vunpack.c.l.b16 %v5007
    %v7599 = vunpack.c.h.b16 %v5007
    %v7600 = vunpack.c.l.b16 %v5008
    %v7601 = vunpack.c.l.b16 %v5009
    %v7602 = vunpack.c.h.b16 %v5009
    %v7603 = vunpack.c.l.b16 %v5010
    %v7604 = vunpack.c.h.b16 %v5010
    %v7605 = vunpack.c.l.b16 %v5011
    %v7606 = vunpack.c.h.b16 %v5011
    %v7607 = vunpack.c.l.b16 %v5012
    %v7608 = vunpack.c.l.b16 %v5013
    %v7609 = vunpack.c.h.b16 %v5013
    %v7610 = vunpack.c.l.b16 %v5014
    %v7611 = vunpack.c.h.b16 %v5014
    %v7612 = vunpack.c.l.b16 %v5015
    %v7613 = vunpack.c.h.b16 %v5015
    %v7614 = vunpack.c.l.b16 %v5016
    %v7615 = vunpack.c.l.b16 %v5017
    %v7616 = vunpack.c.h.b16 %v5017
    %v7617 = vunpack.c.l.b16 %v5018
    %v7618 = vunpack.c.h.b16 %v5018
    %v7619 = vunpack.c.l.b16 %v5019
    %v7620 = vunpack.c.h.b16 %v5019
    %v7621 = vunpack.c.l.b16 %v5020
    %v7622 = vunpack.c.l.b16 %v5021
    %v7623 = vunpack.c.h.b16 %v5021
    %v7624 = vunpack.c.l.b16 %v5022
    %v7625 = vunpack.c.h.b16 %v5022
    %v7626 = vunpack.c.l.b16 %v5023
    %v7627 = vunpack.c.h.b16 %v5023
    %v7628 = vunpack.c.l.b16 %v5024
    %v7629 = vunpack.c.l.b16 %v5025
    %v7630 = vunpack.c.h.b16 %v5025
    %v7631 = vunpack.c.l.b16 %v5026
    %v7632 = vunpack.c.h.b16 %v5026
    %v7633 = vunpack.c.l.b16 %v5027
    %v7634 = vunpack.c.h.b16 %v5027
    %v7635 = vunpack.c.l.b16 %v5028
    %v7636 = vunpack.c.l.b16 %v5029
    %v7637 = vunpack.c.h.b16 %v5029
    %v7638 = vunpack.c.l.b16 %v5030
    %v7639 = vunpack.c.h.b16 %v5030
    %v7640 = vunpack.c.l.b16 %v5031
    %v7641 = vunpack.c.h.b16 %v5031
    %v7642 = vunpack.c.l.b16 %v5032
    %v7643 = vunpack.c.l.b16 %v5033
    %v7644 = vunpack.c.h.b16 %v5033
    %v7645 = vunpack.c.l.b16 %v5034
    %v7646 = vunpack.c.h.b16 %v5034
    %v7647 = vunpack.c.l.b16 %v5035
    %v7648 = vunpack.c.h.b16 %v5035
    %v7649 = vunpack.c.l.b16 %v5036
    %v7650 = vunpack.c.l.b16 %v5037
    %v7651 = vunpack.c.h.b16 %v5037
    %v7652 = vunpack.c.l.b16 %v5038
    %v7653 = vunpack.c.h.b16 %v5038
    %v7654 = vunpack.c.l.b16 %v5039
    %v7655 = vunpack.c.h.b16 %v5039
    %v7656 = vunpack.c.l.b16 %v5040
    %v7657 = vunpack.c.l.b16 %v5041
    %v7658 = vunpack.c.h.b16 %v5041
    %v7659 = vunpack.c.l.b16 %v5042
    %v7660 = vunpack.c.h.b16 %v5042
    %v7661 = vunpack.c.l.b16 %v5043
    %v7662 = vunpack.c.h.b16 %v5043
    %v7663 = vunpack.c.l.b16 %v5044
    %v7664 = vunpack.c.l.b16 %v5045
    %v7665 = vunpack.c.h.b16 %v5045
    %v7666 = vunpack.c.l.b16 %v5046
    %v7667 = vunpack.c.h.b16 %v5046
    %v7668 = vunpack.c.l.b16 %v5047
    %v7669 = vunpack.c.h.b16 %v5047
    %v7670 = vunpack.c.l.b16 %v5048
    %v7671 = vunpack.c.l.b16 %v5049
    %v7672 = vunpack.c.h.b16 %v5049
    %v7673 = vunpack.c.l.b16 %v5050
    %v7674 = vunpack.c.h.b16 %v5050
    %v7675 = vunpack.c.l.b16 %v5051
    %v7676 = vunpack.c.h.b16 %v5051
    %v7677 = vunpack.c.l.b16 %v5052
    %v7678 = vunpack.c.l.b16 %v5053
    %v7679 = vunpack.c.h.b16 %v5053
    %v7680 = vunpack.c.l.b16 %v5054
    %v7681 = vunpack.c.h.b16 %v5054
    %v7682 = vunpack.c.l.b16 %v5055
    %v7683 = vunpack.c.h.b16 %v5055
    %v7684 = vunpack.c.l.b16 %v5056
    %v7685 = vunpack.c.l.b16 %v5057
    %v7686 = vunpack.c.h.b16 %v5057
    %v7687 = vunpack.c.l.b16 %v5058
    %v7688 = vunpack.c.h.b16 %v5058
    %v7689 = vunpack.c.l.b16 %v5059
    %v7690 = vunpack.c.h.b16 %v5059
    %v7691 = vunpack.c.l.b16 %v5060
    %v7692 = vunpack.c.l.b16 %v5061
    %v7693 = vunpack.c.h.b16 %v5061
    %v7694 = vunpack.c.l.b16 %v5062
    %v7695 = vunpack.c.h.b16 %v5062
    %v7696 = vunpack.c.l.b16 %v5063
    %v7697 = vunpack.c.h.b16 %v5063
    %v7698 = vunpack.c.l.b16 %v5064
    %v7699 = vunpack.c.l.b16 %v5065
    %v7700 = vunpack.c.h.b16 %v5065
    %v7701 = vunpack.c.l.b16 %v5066
    %v7702 = vunpack.c.h.b16 %v5066
    %v7703 = vunpack.c.l.b16 %v5067
    %v7704 = vunpack.c.h.b16 %v5067
    %v7705 = vunpack.c.l.b16 %v5068
    %v7706 = vunpack.c.l.b16 %v5069
    %v7707 = vunpack.c.h.b16 %v5069
    %v7708 = vunpack.c.l.b16 %v5070
    %v7709 = vunpack.c.h.b16 %v5070
    %v7710 = vunpack.c.l.b16 %v5071
    %v7711 = vunpack.c.h.b16 %v5071
    %v7712 = vunpack.c.l.b16 %v5072
    %v7713 = vunpack.c.l.b16 %v5073
    %v7714 = vunpack.c.h.b16 %v5073
    %v7715 = vunpack.c.l.b16 %v5074
    %v7716 = vunpack.c.h.b16 %v5074
    %v7717 = vunpack.c.l.b16 %v5075
    %v7718 = vunpack.c.h.b16 %v5075
    %v7719 = vunpack.c.l.b16 %v5076
    %v7720 = vunpack.c.l.b16 %v5077
    %v7721 = vunpack.c.h.b16 %v5077
    %v7722 = vunpack.c.l.b16 %v5078
    %v7723 = vunpack.c.h.b16 %v5078
    %v7724 = vunpack.c.l.b16 %v5079
    %v7725 = vunpack.c.h.b16 %v5079
    %v7726 = vunpack.c.l.b16 %v5080
    %v7727 = vunpack.c.l.b16 %v5081
    %v7728 = vunpack.c.h.b16 %v5081
    %v7729 = vunpack.c.l.b16 %v5082
    %v7730 = vunpack.c.h.b16 %v5082
    %v7731 = vunpack.c.l.b16 %v5083
    %v7732 = vunpack.c.h.b16 %v5083
    %v7733 = vunpack.c.l.b16 %v5084
    %v7734 = vunpack.c.l.b16 %v5085
    %v7735 = vunpack.c.h.b16 %v5085
    %v7736 = vunpack.c.l.b16 %v5086
    %v7737 = vunpack.c.h.b16 %v5086
    %v7738 = vunpack.c.l.b16 %v5087
    %v7739 = vunpack.c.h.b16 %v5087
    %v7740 = vunpack.c.l.b16 %v5088
    %v7741 = vunpack.c.l.b16 %v5089
    %v7742 = vunpack.c.h.b16 %v5089
    %v7743 = vunpack.c.l.b16 %v5090
    %v7744 = vunpack.c.h.b16 %v5090
    %v7745 = vunpack.c.l.b16 %v5091
    %v7746 = vunpack.c.h.b16 %v5091
    %v7747 = vunpack.c.l.b16 %v5092
    %v7748 = vunpack.c.l.b16 %v5093
    %v7749 = vunpack.c.h.b16 %v5093
    %v7750 = vunpack.c.l.b16 %v5094
    %v7751 = vunpack.c.h.b16 %v5094
    %v7752 = vunpack.c.l.b16 %v5095
    %v7753 = vunpack.c.h.b16 %v5095
    %v7754 = vunpack.c.l.b16 %v5096
    %v7755 = vunpack.c.l.b16 %v5097
    %v7756 = vunpack.c.h.b16 %v5097
    %v7757 = vunpack.c.l.b16 %v5098
    %v7758 = vunpack.c.h.b16 %v5098
    %v7759 = vunpack.c.l.b16 %v5099
    %v7760 = vunpack.c.h.b16 %v5099
    %v7761 = vunpack.c.l.b16 %v5100
    %v7762 = vunpack.c.l.b16 %v5101
    %v7763 = vunpack.c.h.b16 %v5101
    %v7764 = vunpack.c.l.b16 %v5102
    %v7765 = vunpack.c.h.b16 %v5102
    %v7766 = vunpack.c.l.b16 %v5103
    %v7767 = vunpack.c.h.b16 %v5103
    %v7768 = vunpack.c.l.b16 %v5104
    %v7769 = vunpack.c.l.b16 %v5105
    %v7770 = vunpack.c.h.b16 %v5105
    %v7771 = vunpack.c.l.b16 %v5106
    %v7772 = vunpack.c.h.b16 %v5106
    %v7773 = vunpack.c.l.b16 %v5107
    %v7774 = vunpack.c.h.b16 %v5107
    %v7775 = vunpack.c.l.b16 %v5108
    %v7776 = vunpack.c.l.b16 %v5109
    %v7777 = vunpack.c.h.b16 %v5109
    %v7778 = vunpack.c.l.b16 %v5110
    %v7779 = vunpack.c.h.b16 %v5110
    %v7780 = vunpack.c.l.b16 %v5111
    %v7781 = vunpack.c.h.b16 %v5111
    %v7782 = vunpack.c.l.b16 %v5112
    %v7783 = vunpack.c.l.b16 %v5113
    %v7784 = vunpack.c.h.b16 %v5113
    %v7785 = vunpack.c.l.b16 %v5114
    %v7786 = vunpack.c.h.b16 %v5114
    %v7787 = vunpack.c.l.b16 %v5115
    %v7788 = vunpack.c.h.b16 %v5115
    %v7789 = vunpack.c.l.b16 %v5116
    %v7790 = vunpack.c.l.b16 %v5117
    %v7791 = vunpack.c.h.b16 %v5117
    %v7792 = vunpack.c.l.b16 %v5118
    %v7793 = vunpack.c.h.b16 %v5118
    %v7794 = vunpack.c.l.b16 %v5119
    %v7795 = vunpack.c.h.b16 %v5119
    %v7796 = vunpack.c.l.b16 %v5120
    %v7797 = vunpack.c.l.b16 %v5121
    %v7798 = vunpack.c.h.b16 %v5121
    %v7799 = vunpack.c.l.b16 %v5122
    %v7800 = vunpack.c.h.b16 %v5122
    %v7801 = vunpack.c.l.b16 %v5123
    %v7802 = vunpack.c.h.b16 %v5123
    %v7803 = vunpack.c.l.b16 %v5124
    %v7804 = vunpack.c.l.b16 %v5125
    %v7805 = vunpack.c.h.b16 %v5125
    %v7806 = vunpack.c.l.b16 %v5126
    %v7807 = vunpack.c.h.b16 %v5126
    %v7808 = vunpack.c.l.b16 %v5127
    %v7809 = vunpack.c.h.b16 %v5127
    %v7810 = vunpack.c.l.b16 %v5128
    %v7811 = vunpack.c.l.b16 %v5129
    %v7812 = vunpack.c.h.b16 %v5129
    %v7813 = vunpack.c.l.b16 %v5130
    %v7814 = vunpack.c.h.b16 %v5130
    %v7815 = vunpack.c.l.b16 %v5131
    %v7816 = vunpack.c.h.b16 %v5131
    %v7817 = vunpack.c.l.b16 %v5132
    %v7818 = vunpack.c.l.b16 %v5133
    %v7819 = vunpack.c.h.b16 %v5133
    %v7820 = vunpack.c.l.b16 %v5134
    %v7821 = vunpack.c.h.b16 %v5134
    %v7822 = vunpack.c.l.b16 %v5135
    %v7823 = vunpack.c.h.b16 %v5135
    %v7824 = vunpack.c.l.b16 %v5136
    %v7825 = vunpack.c.l.b16 %v5137
    %v7826 = vunpack.c.h.b16 %v5137
    %v7827 = vunpack.c.l.b16 %v5138
    %v7828 = vunpack.c.h.b16 %v5138
    %v7829 = vunpack.c.l.b16 %v5139
    %v7830 = vunpack.c.h.b16 %v5139
    %v7831 = vunpack.c.l.b16 %v5140
    %v7832 = vunpack.c.l.b16 %v5141
    %v7833 = vunpack.c.h.b16 %v5141
    %v7834 = vunpack.c.l.b16 %v5142
    %v7835 = vunpack.c.h.b16 %v5142
    %v7836 = vunpack.c.l.b16 %v5143
    %v7837 = vunpack.c.h.b16 %v5143
    %v7838 = vunpack.c.l.b16 %v5144
    %v7839 = vunpack.c.l.b16 %v5145
    %v7840 = vunpack.c.h.b16 %v5145
    %v7841 = vunpack.c.l.b16 %v5146
    %v7842 = vunpack.c.h.b16 %v5146
    %v7843 = vunpack.c.l.b16 %v5147
    %v7844 = vunpack.c.h.b16 %v5147
    %v7845 = vunpack.c.l.b16 %v5148
    %v7846 = vunpack.c.l.b16 %v5149
    %v7847 = vunpack.c.h.b16 %v5149
    %v7848 = vunpack.c.l.b16 %v5150
    %v7849 = vunpack.c.h.b16 %v5150
    %v7850 = vunpack.c.l.b16 %v5151
    %v7851 = vunpack.c.h.b16 %v5151
    %v7852 = vunpack.c.l.b16 %v5152
    %v7853 = vunpack.c.l.b16 %v5153
    %v7854 = vunpack.c.h.b16 %v5153
    %v7855 = vunpack.c.l.b16 %v5154
    %v7856 = vunpack.c.h.b16 %v5154
    %v7857 = vunpack.c.l.b16 %v5155
    %v7858 = vunpack.c.h.b16 %v5155
    %v7859 = vunpack.c.l.b16 %v5156
    %v7860 = vunpack.c.l.b16 %v5157
    %v7861 = vunpack.c.h.b16 %v5157
    %v7862 = vunpack.c.l.b16 %v5158
    %v7863 = vunpack.c.h.b16 %v5158
    %v7864 = vunpack.c.l.b16 %v5159
    %v7865 = vunpack.c.h.b16 %v5159
    %v7866 = vunpack.c.l.b16 %v5160
    %v7867 = vunpack.c.l.b16 %v5161
    %v7868 = vunpack.c.h.b16 %v5161
    %v7869 = vunpack.c.l.b16 %v5162
    %v7870 = vunpack.c.h.b16 %v5162
    %v7871 = vunpack.c.l.b16 %v5163
    %v7872 = vunpack.c.h.b16 %v5163
    %v7873 = vunpack.c.l.b16 %v5164
    %v7874 = vunpack.c.l.b16 %v5165
    %v7875 = vunpack.c.h.b16 %v5165
    %v7876 = vunpack.c.l.b16 %v5166
    %v7877 = vunpack.c.h.b16 %v5166
    %v7878 = vunpack.c.l.b16 %v5167
    %v7879 = vunpack.c.h.b16 %v5167
    %v7880 = vunpack.c.l.b16 %v5168
    %v7881 = vunpack.c.l.b16 %v5169
    %v7882 = vunpack.c.h.b16 %v5169
    %v7883 = vunpack.c.l.b16 %v5170
    %v7884 = vunpack.c.h.b16 %v5170
    %v7885 = vunpack.c.l.b16 %v5171
    %v7886 = vunpack.c.h.b16 %v5171
    %v7887 = vunpack.c.l.b16 %v5172
    %v7888 = vunpack.c.l.b16 %v5173
    %v7889 = vunpack.c.h.b16 %v5173
    %v7890 = vunpack.c.l.b16 %v5174
    %v7891 = vunpack.c.h.b16 %v5174
    %v7892 = vunpack.c.l.b16 %v5175
    %v7893 = vunpack.c.h.b16 %v5175
    %v7894 = vunpack.c.l.b16 %v5176
    %v7895 = vunpack.c.l.b16 %v5177
    %v7896 = vunpack.c.h.b16 %v5177
    %v7897 = vunpack.c.l.b16 %v5178
    %v7898 = vunpack.c.h.b16 %v5178
    %v7899 = vunpack.c.l.b16 %v5179
    %v7900 = vunpack.c.h.b16 %v5179
    %v7901 = vunpack.c.l.b16 %v5180
    %v7902 = vunpack.c.l.b16 %v5181
    %v7903 = vunpack.c.h.b16 %v5181
    %v7904 = vunpack.c.l.b16 %v5182
    %v7905 = vunpack.c.h.b16 %v5182
    %v7906 = vunpack.c.l.b16 %v5183
    %v7907 = vunpack.c.h.b16 %v5183
    %v7908 = vunpack.c.l.b16 %v5184
    %v7909 = vunpack.c.l.b16 %v5185
    %v7910 = vunpack.c.h.b16 %v5185
    %v7911 = vunpack.c.l.b16 %v5186
    %v7912 = vunpack.c.h.b16 %v5186
    %v7913 = vunpack.c.l.b16 %v5187
    %v7914 = vunpack.c.h.b16 %v5187
    %v7915 = vunpack.c.l.b16 %v5188
    %v7916 = vunpack.c.l.b16 %v5189
    %v7917 = vunpack.c.h.b16 %v5189
    %v7918 = vunpack.c.l.b16 %v5190
    %v7919 = vunpack.c.h.b16 %v5190
    %v7920 = vunpack.c.l.b16 %v5191
    %v7921 = vunpack.c.h.b16 %v5191
    %v7922 = vunpack.c.l.b16 %v5192
    %v7923 = vunpack.c.l.b16 %v5193
    %v7924 = vunpack.c.h.b16 %v5193
    %v7925 = vunpack.c.l.b16 %v5194
    %v7926 = vunpack.c.h.b16 %v5194
    %v7927 = vunpack.c.l.b16 %v5195
    %v7928 = vunpack.c.h.b16 %v5195
    %v7929 = vunpack.c.l.b16 %v5196
    %v7930 = vunpack.c.l.b16 %v5197
    %v7931 = vunpack.c.h.b16 %v5197
    %v7932 = vunpack.c.l.b16 %v5198
    %v7933 = vunpack.c.h.b16 %v5198
    %v7934 = vunpack.c.l.b16 %v5199
    %v7935 = vunpack.c.h.b16 %v5199
    %v7936 = vunpack.c.l.b16 %v5200
    %v7937 = vunpack.c.l.b16 %v5201
    %v7938 = vunpack.c.h.b16 %v5201
    %v7939 = vunpack.c.l.b16 %v5202
    %v7940 = vunpack.c.h.b16 %v5202
    %v7941 = vunpack.c.l.b16 %v5203
    %v7942 = vunpack.c.h.b16 %v5203
    %v7943 = vunpack.c.l.b16 %v5204
    %v7944 = vunpack.c.l.b16 %v5205
    %v7945 = vunpack.c.h.b16 %v5205
    %v7946 = vunpack.c.l.b16 %v5206
    %v7947 = vunpack.c.h.b16 %v5206
    %v7948 = vunpack.c.l.b16 %v5207
    %v7949 = vunpack.c.h.b16 %v5207
    %v7950 = vunpack.c.l.b16 %v5208
    %v7951 = vunpack.c.l.b16 %v5209
    %v7952 = vunpack.c.h.b16 %v5209
    %v7953 = vunpack.c.l.b16 %v5210
    %v7954 = vunpack.c.h.b16 %v5210
    %v7955 = vunpack.c.l.b16 %v5211
    %v7956 = vunpack.c.h.b16 %v5211
    %v7957 = vunpack.c.l.b16 %v5212
    %v7958 = vunpack.c.l.b16 %v5213
    %v7959 = vunpack.c.h.b16 %v5213
    %v7960 = vunpack.c.l.b16 %v5214
    %v7961 = vunpack.c.h.b16 %v5214
    %v7962 = vunpack.c.l.b16 %v5215
    %v7963 = vunpack.c.h.b16 %v5215
    %v7964 = vunpack.c.l.b16 %v5216
    %v7965 = vunpack.c.l.b16 %v5217
    %v7966 = vunpack.c.h.b16 %v5217
    %v7967 = vunpack.c.l.b16 %v5218
    %v7968 = vunpack.c.h.b16 %v5218
    %v7969 = vunpack.c.l.b16 %v5219
    %v7970 = vunpack.c.h.b16 %v5219
    %v7971 = vunpack.c.l.b16 %v5220
    %v7972 = vunpack.c.l.b16 %v5221
    %v7973 = vunpack.c.h.b16 %v5221
    %v7974 = vunpack.c.l.b16 %v5222
    %v7975 = vunpack.c.h.b16 %v5222
    %v7976 = vunpack.c.l.b16 %v5223
    %v7977 = vunpack.c.h.b16 %v5223
    %v7978 = vunpack.c.l.b16 %v5224
    %v7979 = vunpack.c.l.b16 %v5225
    %v7980 = vunpack.c.h.b16 %v5225
    %v7981 = vunpack.c.l.b16 %v5226
    %v7982 = vunpack.c.h.b16 %v5226
    %v7983 = vunpack.c.l.b16 %v5227
    %v7984 = vunpack.c.h.b16 %v5227
    %v7985 = vunpack.c.l.b16 %v5228
    %v7986 = vunpack.c.l.b16 %v5229
    %v7987 = vunpack.c.h.b16 %v5229
    %v7988 = vunpack.c.l.b16 %v5230
    %v7989 = vunpack.c.h.b16 %v5230
    %v7990 = vunpack.c.l.b16 %v5231
    %v7991 = vunpack.c.h.b16 %v5231
    %v7992 = vunpack.c.l.b16 %v5232
    %v7993 = vunpack.c.l.b16 %v5233
    %v7994 = vunpack.c.h.b16 %v5233
    %v7995 = vunpack.c.l.b16 %v5234
    %v7996 = vunpack.c.h.b16 %v5234
    %v7997 = vunpack.c.l.b16 %v5235
    %v7998 = vunpack.c.h.b16 %v5235
    %v7999 = vunpack.c.l.b16 %v5236
    %v8000 = vunpack.c.l.b16 %v5237
    %v8001 = vunpack.c.h.b16 %v5237
    %v8002 = vunpack.c.l.b16 %v5238
    %v8003 = vunpack.c.h.b16 %v5238
    %v8004 = vunpack.c.l.b16 %v5239
    %v8005 = vunpack.c.h.b16 %v5239
    %v8006 = vunpack.c.l.b16 %v5240
    %v8007 = vunpack.c.l.b16 %v5241
    %v8008 = vunpack.c.h.b16 %v5241
    %v8009 = vunpack.c.l.b16 %v5242
    %v8010 = vunpack.c.h.b16 %v5242
    %v8011 = vunpack.c.l.b16 %v5243
    %v8012 = vunpack.c.h.b16 %v5243
    %v8013 = vunpack.c.l.b16 %v5244
    %v8014 = vunpack.c.l.b16 %v5245
    %v8015 = vunpack.c.h.b16 %v5245
    %v8016 = vunpack.c.l.b16 %v5246
    %v8017 = vunpack.c.h.b16 %v5246
    %v8018 = vunpack.c.l.b16 %v5247
    %v8019 = vunpack.c.h.b16 %v5247
    %v8020 = vunpack.c.l.b16 %v5248
    %v8021 = vunpack.c.l.b16 %v5249
    %v8022 = vunpack.c.h.b16 %v5249
    %v8023 = vunpack.c.l.b16 %v5250
    %v8024 = vunpack.c.h.b16 %v5250
    %v8025 = vunpack.c.l.b16 %v5251
    %v8026 = vunpack.c.h.b16 %v5251
    %v8027 = vunpack.c.l.b16 %v5252
    %v8028 = vunpack.c.l.b16 %v5253
    %v8029 = vunpack.c.h.b16 %v5253
    %v8030 = vunpack.c.l.b16 %v5254
    %v8031 = vunpack.c.h.b16 %v5254
    %v8032 = vunpack.c.l.b16 %v5255
    %v8033 = vunpack.c.h.b16 %v5255
    %v8034 = vunpack.c.l.b16 %v5256
    %v8035 = vunpack.c.l.b16 %v5257
    %v8036 = vunpack.c.h.b16 %v5257
    %v8037 = vunpack.c.l.b16 %v5258
    %v8038 = vunpack.c.h.b16 %v5258
    %v8039 = vunpack.c.l.b16 %v5259
    %v8040 = vunpack.c.h.b16 %v5259
    %v8041 = vunpack.c.l.b16 %v5260
    %v8042 = vunpack.c.l.b16 %v5261
    %v8043 = vunpack.c.h.b16 %v5261
    %v8044 = vunpack.c.l.b16 %v5262
    %v8045 = vunpack.c.h.b16 %v5262
    %v8046 = vunpack.c.l.b16 %v5263
    %v8047 = vunpack.c.h.b16 %v5263
    %v8048 = vunpack.c.l.b16 %v5264
    %v8049 = vunpack.c.l.b16 %v5265
    %v8050 = vunpack.c.h.b16 %v5265
    %v8051 = vunpack.c.l.b16 %v5266
    %v8052 = vunpack.c.h.b16 %v5266
    %v8053 = vunpack.c.l.b16 %v5267
    %v8054 = vunpack.c.h.b16 %v5267
    %v8055 = vunpack.c.l.b16 %v5268
    %v8056 = vunpack.c.l.b16 %v5269
    %v8057 = vunpack.c.h.b16 %v5269
    %v8058 = vunpack.c.l.b16 %v5270
    %v8059 = vunpack.c.h.b16 %v5270
    %v8060 = vunpack.c.l.b16 %v5271
    %v8061 = vunpack.c.h.b16 %v5271
    %v8062 = vunpack.c.l.b16 %v5272
    %v8063 = vunpack.c.l.b16 %v5273
    %v8064 = vunpack.c.h.b16 %v5273
    %v8065 = vunpack.c.l.b16 %v5274
    %v8066 = vunpack.c.h.b16 %v5274
    %v8067 = vunpack.c.l.b16 %v5275
    %v8068 = vunpack.c.h.b16 %v5275
    %v8069 = vunpack.c.l.b16 %v5276
    %v8070 = vunpack.c.l.b16 %v5277
    %v8071 = vunpack.c.h.b16 %v5277
    %v8072 = vunpack.c.l.b16 %v5278
    %v8073 = vunpack.c.h.b16 %v5278
    %v8074 = vunpack.c.l.b16 %v5279
    %v8075 = vunpack.c.h.b16 %v5279
    %v8076 = vunpack.c.l.b16 %v5280
    %v8077 = vunpack.c.l.b16 %v5281
    %v8078 = vunpack.c.h.b16 %v5281
    %v8079 = vunpack.c.l.b16 %v5282
    %v8080 = vunpack.c.h.b16 %v5282
    %v8081 = vunpack.c.l.b16 %v5283
    %v8082 = vunpack.c.h.b16 %v5283
    %v8083 = vunpack.c.l.b16 %v5284
    %v8084 = vunpack.c.l.b16 %v5285
    %v8085 = vunpack.c.h.b16 %v5285
    %v8086 = vunpack.c.l.b16 %v5286
    %v8087 = vunpack.c.h.b16 %v5286
    %v8088 = vunpack.c.l.b16 %v5287
    %v8089 = vunpack.c.h.b16 %v5287
    %v8090 = vunpack.c.l.b16 %v5288
    %v8091 = vunpack.c.l.b16 %v5289
    %v8092 = vunpack.c.h.b16 %v5289
    %v8093 = vunpack.c.l.b16 %v5290
    %v8094 = vunpack.c.h.b16 %v5290
    %v8095 = vunpack.c.l.b16 %v5291
    %v8096 = vunpack.c.h.b16 %v5291
    %v8097 = vunpack.c.l.b16 %v5292
    %v8098 = vunpack.c.l.b16 %v5293
    %v8099 = vunpack.c.h.b16 %v5293
    %v8100 = vunpack.c.l.b16 %v5294
    %v8101 = vunpack.c.h.b16 %v5294
    %v8102 = vunpack.c.l.b16 %v5295
    %v8103 = vunpack.c.h.b16 %v5295
    %v8104 = vunpack.c.l.b16 %v5296
    %v8105 = vunpack.c.l.b16 %v5297
    %v8106 = vunpack.c.h.b16 %v5297
    %v8107 = vunpack.c.l.b16 %v5298
    %v8108 = vunpack.c.h.b16 %v5298
    %v8109 = vunpack.c.l.b16 %v5299
    %v8110 = vunpack.c.h.b16 %v5299
    %v8111 = vunpack.c.l.b16 %v5300
    %v8112 = vunpack.c.l.b16 %v5301
    %v8113 = vunpack.c.h.b16 %v5301
    %v8114 = vunpack.c.l.b16 %v5302
    %v8115 = vunpack.c.h.b16 %v5302
    %v8116 = vunpack.c.l.b16 %v5303
    %v8117 = vunpack.c.h.b16 %v5303
    %v8118 = vunpack.c.l.b16 %v5304
    %v8119 = vunpack.c.l.b16 %v5305
    %v8120 = vunpack.c.h.b16 %v5305
    %v8121 = vunpack.c.l.b16 %v5306
    %v8122 = vunpack.c.h.b16 %v5306
    %v8123 = vunpack.c.l.b16 %v5307
    %v8124 = vunpack.c.h.b16 %v5307
    %v8125 = vunpack.c.l.b16 %v5308
    %v8126 = vunpack.c.l.b16 %v5309
    %v8127 = vunpack.c.h.b16 %v5309
    %v8128 = vunpack.c.l.b16 %v5310
    %v8129 = vunpack.c.h.b16 %v5310
    %v8130 = vunpack.c.l.b16 %v5311
    %v8131 = vunpack.c.h.b16 %v5311
    %v8132 = vunpack.c.l.b16 %v5312
    %v8133 = vunpack.c.l.b16 %v5313
    %v8134 = vunpack.c.h.b16 %v5313
    %v8135 = vunpack.c.l.b16 %v5314
    %v8136 = vunpack.c.h.b16 %v5314
    %v8137 = vunpack.c.l.b16 %v5315
    %v8138 = vunpack.c.h.b16 %v5315
    %v8139 = vunpack.c.l.b16 %v5316
    %v8140 = vunpack.c.l.b16 %v5317
    %v8141 = vunpack.c.h.b16 %v5317
    %v8142 = vunpack.c.l.b16 %v5318
    %v8143 = vunpack.c.h.b16 %v5318
    %v8144 = vunpack.c.l.b16 %v5319
    %v8145 = vunpack.c.h.b16 %v5319
    %v8146 = vunpack.c.l.b16 %v5320
    %v8147 = vunpack.c.l.b16 %v5321
    %v8148 = vunpack.c.h.b16 %v5321
    %v8149 = vunpack.c.l.b16 %v5322
    %v8150 = vunpack.c.h.b16 %v5322
    %v8151 = vunpack.c.l.b16 %v5323
    %v8152 = vunpack.c.h.b16 %v5323
    %v8153 = vunpack.c.l.b16 %v5324
    %v8154 = vunpack.c.l.b16 %v5325
    %v8155 = vunpack.c.h.b16 %v5325
    %v8156 = vunpack.c.l.b16 %v5326
    %v8157 = vunpack.c.h.b16 %v5326
    %v8158 = vunpack.c.l.b16 %v5327
    %v8159 = vunpack.c.h.b16 %v5327
    %v8160 = vunpack.c.l.b16 %v5328
    %v8161 = vpack.c.b16 %v6376, %v6369
    %v8162 = vpack.c.b16 %v6377, %v6370
    %v8163 = vpack.c.b16 %v6378, %v6371
    %v8164 = vpack.c.b16 %v6379, %v6372
    %v8165 = vpack.c.b16 %v6380, %v6373
    %v8166 = vpack.c.b16 %v6381, %v6374
    %v8167 = vpack.c.b16 %v6382, %v6375
    %v8168 = vpack.c.b16 %v6390, %v6383
    %v8169 = vpack.c.b16 %v6391, %v6384
    %v8170 = vpack.c.b16 %v6392, %v6385
    %v8171 = vpack.c.b16 %v6393, %v6386
    %v8172 = vpack.c.b16 %v6394, %v6387
    %v8173 = vpack.c.b16 %v6395, %v6388
    %v8174 = vpack.c.b16 %v6396, %v6389
    %v8175 = vpack.c.b16 %v6404, %v6397
    %v8176 = vpack.c.b16 %v6405, %v6398
    %v8177 = vpack.c.b16 %v6406, %v6399
    %v8178 = vpack.c.b16 %v6407, %v6400
    %v8179 = vpack.c.b16 %v6408, %v6401
    %v8180 = vpack.c.b16 %v6409, %v6402
    %v8181 = vpack.c.b16 %v6410, %v6403
    %v8182 = vpack.c.b16 %v6418, %v6411
    %v8183 = vpack.c.b16 %v6419, %v6412
    %v8184 = vpack.c.b16 %v6420, %v6413
    %v8185 = vpack.c.b16 %v6421, %v6414
    %v8186 = vpack.c.b16 %v6422, %v6415
    %v8187 = vpack.c.b16 %v6423, %v6416
    %v8188 = vpack.c.b16 %v6424, %v6417
    %v8189 = vpack.c.b16 %v6432, %v6425
    %v8190 = vpack.c.b16 %v6433, %v6426
    %v8191 = vpack.c.b16 %v6434, %v6427
    %v8192 = vpack.c.b16 %v6435, %v6428
    %v8193 = vpack.c.b16 %v6436, %v6429
    %v8194 = vpack.c.b16 %v6437, %v6430
    %v8195 = vpack.c.b16 %v6438, %v6431
    %v8196 = vpack.c.b16 %v6446, %v6439
    %v8197 = vpack.c.b16 %v6447, %v6440
    %v8198 = vpack.c.b16 %v6448, %v6441
    %v8199 = vpack.c.b16 %v6449, %v6442
    %v8200 = vpack.c.b16 %v6450, %v6443
    %v8201 = vpack.c.b16 %v6451, %v6444
    %v8202 = vpack.c.b16 %v6452, %v6445
    %v8203 = vpack.c.b16 %v6460, %v6453
    %v8204 = vpack.c.b16 %v6461, %v6454
    %v8205 = vpack.c.b16 %v6462, %v6455
    %v8206 = vpack.c.b16 %v6463, %v6456
    %v8207 = vpack.c.b16 %v6464, %v6457
    %v8208 = vpack.c.b16 %v6465, %v6458
    %v8209 = vpack.c.b16 %v6466, %v6459
    %v8210 = vpack.c.b16 %v6474, %v6467
    %v8211 = vpack.c.b16 %v6475, %v6468
    %v8212 = vpack.c.b16 %v6476, %v6469
    %v8213 = vpack.c.b16 %v6477, %v6470
    %v8214 = vpack.c.b16 %v6478, %v6471
    %v8215 = vpack.c.b16 %v6479, %v6472
    %v8216 = vpack.c.b16 %v6480, %v6473
    %v8217 = vpack.c.b16 %v6488, %v6481
    %v8218 = vpack.c.b16 %v6489, %v6482
    %v8219 = vpack.c.b16 %v6490, %v6483
    %v8220 = vpack.c.b16 %v6491, %v6484
    %v8221 = vpack.c.b16 %v6492, %v6485
    %v8222 = vpack.c.b16 %v6493, %v6486
    %v8223 = vpack.c.b16 %v6494, %v6487
    %v8224 = vpack.c.b16 %v6502, %v6495
    %v8225 = vpack.c.b16 %v6503, %v6496
    %v8226 = vpack.c.b16 %v6504, %v6497
    %v8227 = vpack.c.b16 %v6505, %v6498
    %v8228 = vpack.c.b16 %v6506, %v6499
    %v8229 = vpack.c.b16 %v6507, %v6500
    %v8230 = vpack.c.b16 %v6508, %v6501
    %v8231 = vpack.c.b16 %v6516, %v6509
    %v8232 = vpack.c.b16 %v6517, %v6510
    %v8233 = vpack.c.b16 %v6518, %v6511
    %v8234 = vpack.c.b16 %v6519, %v6512
    %v8235 = vpack.c.b16 %v6520, %v6513
    %v8236 = vpack.c.b16 %v6521, %v6514
    %v8237 = vpack.c.b16 %v6522, %v6515
    %v8238 = vpack.c.b16 %v6530, %v6523
    %v8239 = vpack.c.b16 %v6531, %v6524
    %v8240 = vpack.c.b16 %v6532, %v6525
    %v8241 = vpack.c.b16 %v6533, %v6526
    %v8242 = vpack.c.b16 %v6534, %v6527
    %v8243 = vpack.c.b16 %v6535, %v6528
    %v8244 = vpack.c.b16 %v6536, %v6529
    %v8245 = vpack.c.b16 %v6544, %v6537
    %v8246 = vpack.c.b16 %v6545, %v6538
    %v8247 = vpack.c.b16 %v6546, %v6539
    %v8248 = vpack.c.b16 %v6547, %v6540
    %v8249 = vpack.c.b16 %v6548, %v6541
    %v8250 = vpack.c.b16 %v6549, %v6542
    %v8251 = vpack.c.b16 %v6550, %v6543
    %v8252 = vpack.c.b16 %v6558, %v6551
    %v8253 = vpack.c.b16 %v6559, %v6552
    %v8254 = vpack.c.b16 %v6560, %v6553
    %v8255 = vpack.c.b16 %v6561, %v6554
    %v8256 = vpack.c.b16 %v6562, %v6555
    %v8257 = vpack.c.b16 %v6563, %v6556
    %v8258 = vpack.c.b16 %v6564, %v6557
    %v8259 = vpack.c.b16 %v6572, %v6565
    %v8260 = vpack.c.b16 %v6573, %v6566
    %v8261 = vpack.c.b16 %v6574, %v6567
    %v8262 = vpack.c.b16 %v6575, %v6568
    %v8263 = vpack.c.b16 %v6576, %v6569
    %v8264 = vpack.c.b16 %v6577, %v6570
    %v8265 = vpack.c.b16 %v6578, %v6571
    %v8266 = vpack.c.b16 %v6586, %v6579
    %v8267 = vpack.c.b16 %v6587, %v6580
    %v8268 = vpack.c.b16 %v6588, %v6581
    %v8269 = vpack.c.b16 %v6589, %v6582
    %v8270 = vpack.c.b16 %v6590, %v6583
    %v8271 = vpack.c.b16 %v6591, %v6584
    %v8272 = vpack.c.b16 %v6592, %v6585
    %v8273 = vpack.c.b16 %v6600, %v6593
    %v8274 = vpack.c.b16 %v6601, %v6594
    %v8275 = vpack.c.b16 %v6602, %v6595
    %v8276 = vpack.c.b16 %v6603, %v6596
    %v8277 = vpack.c.b16 %v6604, %v6597
    %v8278 = vpack.c.b16 %v6605, %v6598
    %v8279 = vpack.c.b16 %v6606, %v6599
    %v8280 = vpack.c.b16 %v6614, %v6607
    %v8281 = vpack.c.b16 %v6615, %v6608
    %v8282 = vpack.c.b16 %v6616, %v6609
    %v8283 = vpack.c.b16 %v6617, %v6610
    %v8284 = vpack.c.b16 %v6618, %v6611
    %v8285 = vpack.c.b16 %v6619, %v6612
    %v8286 = vpack.c.b16 %v6620, %v6613
    %v8287 = vpack.c.b16 %v6628, %v6621
    %v8288 = vpack.c.b16 %v6629, %v6622
    %v8289 = vpack.c.b16 %v6630, %v6623
    %v8290 = vpack.c.b16 %v6631, %v6624
    %v8291 = vpack.c.b16 %v6632, %v6625
    %v8292 = vpack.c.b16 %v6633, %v6626
    %v8293 = vpack.c.b16 %v6634, %v6627
    %v8294 = vpack.c.b16 %v6642, %v6635
    %v8295 = vpack.c.b16 %v6643, %v6636
    %v8296 = vpack.c.b16 %v6644, %v6637
    %v8297 = vpack.c.b16 %v6645, %v6638
    %v8298 = vpack.c.b16 %v6646, %v6639
    %v8299 = vpack.c.b16 %v6647, %v6640
    %v8300 = vpack.c.b16 %v6648, %v6641
    %v8301 = vpack.c.b16 %v6656, %v6649
    %v8302 = vpack.c.b16 %v6657, %v6650
    %v8303 = vpack.c.b16 %v6658, %v6651
    %v8304 = vpack.c.b16 %v6659, %v6652
    %v8305 = vpack.c.b16 %v6660, %v6653
    %v8306 = vpack.c.b16 %v6661, %v6654
    %v8307 = vpack.c.b16 %v6662, %v6655
    %v8308 = vpack.c.b16 %v6670, %v6663
    %v8309 = vpack.c.b16 %v6671, %v6664
    %v8310 = vpack.c.b16 %v6672, %v6665
    %v8311 = vpack.c.b16 %v6673, %v6666
    %v8312 = vpack.c.b16 %v6674, %v6667
    %v8313 = vpack.c.b16 %v6675, %v6668
    %v8314 = vpack.c.b16 %v6676, %v6669
    %v8315 = vpack.c.b16 %v6684, %v6677
    %v8316 = vpack.c.b16 %v6685, %v6678
    %v8317 = vpack.c.b16 %v6686, %v6679
    %v8318 = vpack.c.b16 %v6687, %v6680
    %v8319 = vpack.c.b16 %v6688, %v6681
    %v8320 = vpack.c.b16 %v6689, %v6682
    %v8321 = vpack.c.b16 %v6690, %v6683
    %v8322 = vpack.c.b16 %v6698, %v6691
    %v8323 = vpack.c.b16 %v6699, %v6692
    %v8324 = vpack.c.b16 %v6700, %v6693
    %v8325 = vpack.c.b16 %v6701, %v6694
    %v8326 = vpack.c.b16 %v6702, %v6695
    %v8327 = vpack.c.b16 %v6703, %v6696
    %v8328 = vpack.c.b16 %v6704, %v6697
    %v8329 = vpack.c.b16 %v6712, %v6705
    %v8330 = vpack.c.b16 %v6713, %v6706
    %v8331 = vpack.c.b16 %v6714, %v6707
    %v8332 = vpack.c.b16 %v6715, %v6708
    %v8333 = vpack.c.b16 %v6716, %v6709
    %v8334 = vpack.c.b16 %v6717, %v6710
    %v8335 = vpack.c.b16 %v6718, %v6711
    %v8336 = vpack.c.b16 %v6726, %v6719
    %v8337 = vpack.c.b16 %v6727, %v6720
    %v8338 = vpack.c.b16 %v6728, %v6721
    %v8339 = vpack.c.b16 %v6729, %v6722
    %v8340 = vpack.c.b16 %v6730, %v6723
    %v8341 = vpack.c.b16 %v6731, %v6724
    %v8342 = vpack.c.b16 %v6732, %v6725
    %v8343 = vpack.c.b16 %v6740, %v6733
    %v8344 = vpack.c.b16 %v6741, %v6734
    %v8345 = vpack.c.b16 %v6742, %v6735
    %v8346 = vpack.c.b16 %v6743, %v6736
    %v8347 = vpack.c.b16 %v6744, %v6737
    %v8348 = vpack.c.b16 %v6745, %v6738
    %v8349 = vpack.c.b16 %v6746, %v6739
    %v8350 = vpack.c.b16 %v6754, %v6747
    %v8351 = vpack.c.b16 %v6755, %v6748
    %v8352 = vpack.c.b16 %v6756, %v6749
    %v8353 = vpack.c.b16 %v6757, %v6750
    %v8354 = vpack.c.b16 %v6758, %v6751
    %v8355 = vpack.c.b16 %v6759, %v6752
    %v8356 = vpack.c.b16 %v6760, %v6753
    %v8357 = vpack.c.b16 %v6768, %v6761
    %v8358 = vpack.c.b16 %v6769, %v6762
    %v8359 = vpack.c.b16 %v6770, %v6763
    %v8360 = vpack.c.b16 %v6771, %v6764
    %v8361 = vpack.c.b16 %v6772, %v6765
    %v8362 = vpack.c.b16 %v6773, %v6766
    %v8363 = vpack.c.b16 %v6774, %v6767
    %v8364 = vpack.c.b16 %v6782, %v6775
    %v8365 = vpack.c.b16 %v6783, %v6776
    %v8366 = vpack.c.b16 %v6784, %v6777
    %v8367 = vpack.c.b16 %v6785, %v6778
    %v8368 = vpack.c.b16 %v6786, %v6779
    %v8369 = vpack.c.b16 %v6787, %v6780
    %v8370 = vpack.c.b16 %v6788, %v6781
    %v8371 = vpack.c.b16 %v6796, %v6789
    %v8372 = vpack.c.b16 %v6797, %v6790
    %v8373 = vpack.c.b16 %v6798, %v6791
    %v8374 = vpack.c.b16 %v6799, %v6792
    %v8375 = vpack.c.b16 %v6800, %v6793
    %v8376 = vpack.c.b16 %v6801, %v6794
    %v8377 = vpack.c.b16 %v6802, %v6795
    %v8378 = vpack.c.b16 %v6810, %v6803
    %v8379 = vpack.c.b16 %v6811, %v6804
    %v8380 = vpack.c.b16 %v6812, %v6805
    %v8381 = vpack.c.b16 %v6813, %v6806
    %v8382 = vpack.c.b16 %v6814, %v6807
    %v8383 = vpack.c.b16 %v6815, %v6808
    %v8384 = vpack.c.b16 %v6816, %v6809
    %v8385 = vpack.c.b16 %v6824, %v6817
    %v8386 = vpack.c.b16 %v6825, %v6818
    %v8387 = vpack.c.b16 %v6826, %v6819
    %v8388 = vpack.c.b16 %v6827, %v6820
    %v8389 = vpack.c.b16 %v6828, %v6821
    %v8390 = vpack.c.b16 %v6829, %v6822
    %v8391 = vpack.c.b16 %v6830, %v6823
    %v8392 = vpack.c.b16 %v6838, %v6831
    %v8393 = vpack.c.b16 %v6839, %v6832
    %v8394 = vpack.c.b16 %v6840, %v6833
    %v8395 = vpack.c.b16 %v6841, %v6834
    %v8396 = vpack.c.b16 %v6842, %v6835
    %v8397 = vpack.c.b16 %v6843, %v6836
    %v8398 = vpack.c.b16 %v6844, %v6837
    %v8399 = vpack.c.b16 %v6852, %v6845
    %v8400 = vpack.c.b16 %v6853, %v6846
    %v8401 = vpack.c.b16 %v6854, %v6847
    %v8402 = vpack.c.b16 %v6855, %v6848
    %v8403 = vpack.c.b16 %v6856, %v6849
    %v8404 = vpack.c.b16 %v6857, %v6850
    %v8405 = vpack.c.b16 %v6858, %v6851
    %v8406 = vpack.c.b16 %v6866, %v6859
    %v8407 = vpack.c.b16 %v6867, %v6860
    %v8408 = vpack.c.b16 %v6868, %v6861
    %v8409 = vpack.c.b16 %v6869, %v6862
    %v8410 = vpack.c.b16 %v6870, %v6863
    %v8411 = vpack.c.b16 %v6871, %v6864
    %v8412 = vpack.c.b16 %v6872, %v6865
    %v8413 = vpack.c.b16 %v6880, %v6873
    %v8414 = vpack.c.b16 %v6881, %v6874
    %v8415 = vpack.c.b16 %v6882, %v6875
    %v8416 = vpack.c.b16 %v6883, %v6876
    %v8417 = vpack.c.b16 %v6884, %v6877
    %v8418 = vpack.c.b16 %v6885, %v6878
    %v8419 = vpack.c.b16 %v6886, %v6879
    %v8420 = vpack.c.b16 %v6894, %v6887
    %v8421 = vpack.c.b16 %v6895, %v6888
    %v8422 = vpack.c.b16 %v6896, %v6889
    %v8423 = vpack.c.b16 %v6897, %v6890
    %v8424 = vpack.c.b16 %v6898, %v6891
    %v8425 = vpack.c.b16 %v6899, %v6892
    %v8426 = vpack.c.b16 %v6900, %v6893
    %v8427 = vpack.c.b16 %v6908, %v6901
    %v8428 = vpack.c.b16 %v6909, %v6902
    %v8429 = vpack.c.b16 %v6910, %v6903
    %v8430 = vpack.c.b16 %v6911, %v6904
    %v8431 = vpack.c.b16 %v6912, %v6905
    %v8432 = vpack.c.b16 %v6913, %v6906
    %v8433 = vpack.c.b16 %v6914, %v6907
    %v8434 = vpack.c.b16 %v6922, %v6915
    %v8435 = vpack.c.b16 %v6923, %v6916
    %v8436 = vpack.c.b16 %v6924, %v6917
    %v8437 = vpack.c.b16 %v6925, %v6918
    %v8438 = vpack.c.b16 %v6926, %v6919
    %v8439 = vpack.c.b16 %v6927, %v6920
    %v8440 = vpack.c.b16 %v6928, %v6921
    %v8441 = vpack.c.b16 %v6936, %v6929
    %v8442 = vpack.c.b16 %v6937, %v6930
    %v8443 = vpack.c.b16 %v6938, %v6931
    %v8444 = vpack.c.b16 %v6939, %v6932
    %v8445 = vpack.c.b16 %v6940, %v6933
    %v8446 = vpack.c.b16 %v6941, %v6934
    %v8447 = vpack.c.b16 %v6942, %v6935
    %v8448 = vpack.c.b16 %v6950, %v6943
    %v8449 = vpack.c.b16 %v6951, %v6944
    %v8450 = vpack.c.b16 %v6952, %v6945
    %v8451 = vpack.c.b16 %v6953, %v6946
    %v8452 = vpack.c.b16 %v6954, %v6947
    %v8453 = vpack.c.b16 %v6955, %v6948
    %v8454 = vpack.c.b16 %v6956, %v6949
    %v8455 = vpack.c.b16 %v6964, %v6957
    %v8456 = vpack.c.b16 %v6965, %v6958
    %v8457 = vpack.c.b16 %v6966, %v6959
    %v8458 = vpack.c.b16 %v6967, %v6960
    %v8459 = vpack.c.b16 %v6968, %v6961
    %v8460 = vpack.c.b16 %v6969, %v6962
    %v8461 = vpack.c.b16 %v6970, %v6963
    %v8462 = vpack.c.b16 %v6978, %v6971
    %v8463 = vpack.c.b16 %v6979, %v6972
    %v8464 = vpack.c.b16 %v6980, %v6973
    %v8465 = vpack.c.b16 %v6981, %v6974
    %v8466 = vpack.c.b16 %v6982, %v6975
    %v8467 = vpack.c.b16 %v6983, %v6976
    %v8468 = vpack.c.b16 %v6984, %v6977
    %v8469 = vpack.c.b16 %v6992, %v6985
    %v8470 = vpack.c.b16 %v6993, %v6986
    %v8471 = vpack.c.b16 %v6994, %v6987
    %v8472 = vpack.c.b16 %v6995, %v6988
    %v8473 = vpack.c.b16 %v6996, %v6989
    %v8474 = vpack.c.b16 %v6997, %v6990
    %v8475 = vpack.c.b16 %v6998, %v6991
    %v8476 = vpack.c.b16 %v7006, %v6999
    %v8477 = vpack.c.b16 %v7007, %v7000
    %v8478 = vpack.c.b16 %v7008, %v7001
    %v8479 = vpack.c.b16 %v7009, %v7002
    %v8480 = vpack.c.b16 %v7010, %v7003
    %v8481 = vpack.c.b16 %v7011, %v7004
    %v8482 = vpack.c.b16 %v7012, %v7005
    %v8483 = vpack.c.b16 %v7020, %v7013
    %v8484 = vpack.c.b16 %v7021, %v7014
    %v8485 = vpack.c.b16 %v7022, %v7015
    %v8486 = vpack.c.b16 %v7023, %v7016
    %v8487 = vpack.c.b16 %v7024, %v7017
    %v8488 = vpack.c.b16 %v7025, %v7018
    %v8489 = vpack.c.b16 %v7026, %v7019
    %v8490 = vpack.c.b16 %v7034, %v7027
    %v8491 = vpack.c.b16 %v7035, %v7028
    %v8492 = vpack.c.b16 %v7036, %v7029
    %v8493 = vpack.c.b16 %v7037, %v7030
    %v8494 = vpack.c.b16 %v7038, %v7031
    %v8495 = vpack.c.b16 %v7039, %v7032
    %v8496 = vpack.c.b16 %v7040, %v7033
    %v8497 = vpack.c.b16 %v7048, %v7041
    %v8498 = vpack.c.b16 %v7049, %v7042
    %v8499 = vpack.c.b16 %v7050, %v7043
    %v8500 = vpack.c.b16 %v7051, %v7044
    %v8501 = vpack.c.b16 %v7052, %v7045
    %v8502 = vpack.c.b16 %v7053, %v7046
    %v8503 = vpack.c.b16 %v7054, %v7047
    %v8504 = vpack.c.b16 %v7062, %v7055
    %v8505 = vpack.c.b16 %v7063, %v7056
    %v8506 = vpack.c.b16 %v7064, %v7057
    %v8507 = vpack.c.b16 %v7065, %v7058
    %v8508 = vpack.c.b16 %v7066, %v7059
    %v8509 = vpack.c.b16 %v7067, %v7060
    %v8510 = vpack.c.b16 %v7068, %v7061
    %v8511 = vpack.c.b16 %v7076, %v7069
    %v8512 = vpack.c.b16 %v7077, %v7070
    %v8513 = vpack.c.b16 %v7078, %v7071
    %v8514 = vpack.c.b16 %v7079, %v7072
    %v8515 = vpack.c.b16 %v7080, %v7073
    %v8516 = vpack.c.b16 %v7081, %v7074
    %v8517 = vpack.c.b16 %v7082, %v7075
    %v8518 = vpack.c.b16 %v7090, %v7083
    %v8519 = vpack.c.b16 %v7091, %v7084
    %v8520 = vpack.c.b16 %v7092, %v7085
    %v8521 = vpack.c.b16 %v7093, %v7086
    %v8522 = vpack.c.b16 %v7094, %v7087
    %v8523 = vpack.c.b16 %v7095, %v7088
    %v8524 = vpack.c.b16 %v7096, %v7089
    %v8525 = vpack.c.b16 %v7104, %v7097
    %v8526 = vpack.c.b16 %v7105, %v7098
    %v8527 = vpack.c.b16 %v7106, %v7099
    %v8528 = vpack.c.b16 %v7107, %v7100
    %v8529 = vpack.c.b16 %v7108, %v7101
    %v8530 = vpack.c.b16 %v7109, %v7102
    %v8531 = vpack.c.b16 %v7110, %v7103
    %v8532 = vpack.c.b16 %v7118, %v7111
    %v8533 = vpack.c.b16 %v7119, %v7112
    %v8534 = vpack.c.b16 %v7120, %v7113
    %v8535 = vpack.c.b16 %v7121, %v7114
    %v8536 = vpack.c.b16 %v7122, %v7115
    %v8537 = vpack.c.b16 %v7123, %v7116
    %v8538 = vpack.c.b16 %v7124, %v7117
    %v8539 = vpack.c.b16 %v7132, %v7125
    %v8540 = vpack.c.b16 %v7133, %v7126
    %v8541 = vpack.c.b16 %v7134, %v7127
    %v8542 = vpack.c.b16 %v7135, %v7128
    %v8543 = vpack.c.b16 %v7136, %v7129
    %v8544 = vpack.c.b16 %v7137, %v7130
    %v8545 = vpack.c.b16 %v7138, %v7131
    %v8546 = vpack.c.b16 %v7146, %v7139
    %v8547 = vpack.c.b16 %v7147, %v7140
    %v8548 = vpack.c.b16 %v7148, %v7141
    %v8549 = vpack.c.b16 %v7149, %v7142
    %v8550 = vpack.c.b16 %v7150, %v7143
    %v8551 = vpack.c.b16 %v7151, %v7144
    %v8552 = vpack.c.b16 %v7152, %v7145
    %v8553 = vpack.c.b16 %v7160, %v7153
    %v8554 = vpack.c.b16 %v7161, %v7154
    %v8555 = vpack.c.b16 %v7162, %v7155
    %v8556 = vpack.c.b16 %v7163, %v7156
    %v8557 = vpack.c.b16 %v7164, %v7157
    %v8558 = vpack.c.b16 %v7165, %v7158
    %v8559 = vpack.c.b16 %v7166, %v7159
    %v8560 = vpack.c.b16 %v7174, %v7167
    %v8561 = vpack.c.b16 %v7175, %v7168
    %v8562 = vpack.c.b16 %v7176, %v7169
    %v8563 = vpack.c.b16 %v7177, %v7170
    %v8564 = vpack.c.b16 %v7178, %v7171
    %v8565 = vpack.c.b16 %v7179, %v7172
    %v8566 = vpack.c.b16 %v7180, %v7173
    %v8567 = vpack.c.b16 %v7188, %v7181
    %v8568 = vpack.c.b16 %v7189, %v7182
    %v8569 = vpack.c.b16 %v7190, %v7183
    %v8570 = vpack.c.b16 %v7191, %v7184
    %v8571 = vpack.c.b16 %v7192, %v7185
    %v8572 = vpack.c.b16 %v7193, %v7186
    %v8573 = vpack.c.b16 %v7194, %v7187
    %v8574 = vpack.c.b16 %v7202, %v7195
    %v8575 = vpack.c.b16 %v7203, %v7196
    %v8576 = vpack.c.b16 %v7204, %v7197
    %v8577 = vpack.c.b16 %v7205, %v7198
    %v8578 = vpack.c.b16 %v7206, %v7199
    %v8579 = vpack.c.b16 %v7207, %v7200
    %v8580 = vpack.c.b16 %v7208, %v7201
    %v8581 = vpack.c.b16 %v7216, %v7209
    %v8582 = vpack.c.b16 %v7217, %v7210
    %v8583 = vpack.c.b16 %v7218, %v7211
    %v8584 = vpack.c.b16 %v7219, %v7212
    %v8585 = vpack.c.b16 %v7220, %v7213
    %v8586 = vpack.c.b16 %v7221, %v7214
    %v8587 = vpack.c.b16 %v7222, %v7215
    %v8588 = vpack.c.b16 %v7230, %v7223
    %v8589 = vpack.c.b16 %v7231, %v7224
    %v8590 = vpack.c.b16 %v7232, %v7225
    %v8591 = vpack.c.b16 %v7233, %v7226
    %v8592 = vpack.c.b16 %v7234, %v7227
    %v8593 = vpack.c.b16 %v7235, %v7228
    %v8594 = vpack.c.b16 %v7236, %v7229
    %v8595 = vpack.c.b16 %v7244, %v7237
    %v8596 = vpack.c.b16 %v7245, %v7238
    %v8597 = vpack.c.b16 %v7246, %v7239
    %v8598 = vpack.c.b16 %v7247, %v7240
    %v8599 = vpack.c.b16 %v7248, %v7241
    %v8600 = vpack.c.b16 %v7249, %v7242
    %v8601 = vpack.c.b16 %v7250, %v7243
    %v8602 = vpack.c.b16 %v7258, %v7251
    %v8603 = vpack.c.b16 %v7259, %v7252
    %v8604 = vpack.c.b16 %v7260, %v7253
    %v8605 = vpack.c.b16 %v7261, %v7254
    %v8606 = vpack.c.b16 %v7262, %v7255
    %v8607 = vpack.c.b16 %v7263, %v7256
    %v8608 = vpack.c.b16 %v7264, %v7257
    %v8609 = vpack.c.b16 %v7272, %v7265
    %v8610 = vpack.c.b16 %v7273, %v7266
    %v8611 = vpack.c.b16 %v7274, %v7267
    %v8612 = vpack.c.b16 %v7275, %v7268
    %v8613 = vpack.c.b16 %v7276, %v7269
    %v8614 = vpack.c.b16 %v7277, %v7270
    %v8615 = vpack.c.b16 %v7278, %v7271
    %v8616 = vpack.c.b16 %v7286, %v7279
    %v8617 = vpack.c.b16 %v7287, %v7280
    %v8618 = vpack.c.b16 %v7288, %v7281
    %v8619 = vpack.c.b16 %v7289, %v7282
    %v8620 = vpack.c.b16 %v7290, %v7283
    %v8621 = vpack.c.b16 %v7291, %v7284
    %v8622 = vpack.c.b16 %v7292, %v7285
    %v8623 = vpack.c.b16 %v7300, %v7293
    %v8624 = vpack.c.b16 %v7301, %v7294
    %v8625 = vpack.c.b16 %v7302, %v7295
    %v8626 = vpack.c.b16 %v7303, %v7296
    %v8627 = vpack.c.b16 %v7304, %v7297
    %v8628 = vpack.c.b16 %v7305, %v7298
    %v8629 = vpack.c.b16 %v7306, %v7299
    %v8630 = vpack.c.b16 %v7314, %v7307
    %v8631 = vpack.c.b16 %v7315, %v7308
    %v8632 = vpack.c.b16 %v7316, %v7309
    %v8633 = vpack.c.b16 %v7317, %v7310
    %v8634 = vpack.c.b16 %v7318, %v7311
    %v8635 = vpack.c.b16 %v7319, %v7312
    %v8636 = vpack.c.b16 %v7320, %v7313
    %v8637 = vpack.c.b16 %v7328, %v7321
    %v8638 = vpack.c.b16 %v7329, %v7322
    %v8639 = vpack.c.b16 %v7330, %v7323
    %v8640 = vpack.c.b16 %v7331, %v7324
    %v8641 = vpack.c.b16 %v7332, %v7325
    %v8642 = vpack.c.b16 %v7333, %v7326
    %v8643 = vpack.c.b16 %v7334, %v7327
    %v8644 = vpack.c.b16 %v7342, %v7335
    %v8645 = vpack.c.b16 %v7343, %v7336
    %v8646 = vpack.c.b16 %v7344, %v7337
    %v8647 = vpack.c.b16 %v7345, %v7338
    %v8648 = vpack.c.b16 %v7346, %v7339
    %v8649 = vpack.c.b16 %v7347, %v7340
    %v8650 = vpack.c.b16 %v7348, %v7341
    %v8651 = vpack.c.b16 %v7356, %v7349
    %v8652 = vpack.c.b16 %v7357, %v7350
    %v8653 = vpack.c.b16 %v7358, %v7351
    %v8654 = vpack.c.b16 %v7359, %v7352
    %v8655 = vpack.c.b16 %v7360, %v7353
    %v8656 = vpack.c.b16 %v7361, %v7354
    %v8657 = vpack.c.b16 %v7362, %v7355
    %v8658 = vpack.c.b16 %v7370, %v7363
    %v8659 = vpack.c.b16 %v7371, %v7364
    %v8660 = vpack.c.b16 %v7372, %v7365
    %v8661 = vpack.c.b16 %v7373, %v7366
    %v8662 = vpack.c.b16 %v7374, %v7367
    %v8663 = vpack.c.b16 %v7375, %v7368
    %v8664 = vpack.c.b16 %v7376, %v7369
    %v8665 = vpack.c.b16 %v7384, %v7377
    %v8666 = vpack.c.b16 %v7385, %v7378
    %v8667 = vpack.c.b16 %v7386, %v7379
    %v8668 = vpack.c.b16 %v7387, %v7380
    %v8669 = vpack.c.b16 %v7388, %v7381
    %v8670 = vpack.c.b16 %v7389, %v7382
    %v8671 = vpack.c.b16 %v7390, %v7383
    %v8672 = vpack.c.b16 %v7398, %v7391
    %v8673 = vpack.c.b16 %v7399, %v7392
    %v8674 = vpack.c.b16 %v7400, %v7393
    %v8675 = vpack.c.b16 %v7401, %v7394
    %v8676 = vpack.c.b16 %v7402, %v7395
    %v8677 = vpack.c.b16 %v7403, %v7396
    %v8678 = vpack.c.b16 %v7404, %v7397
    %v8679 = vpack.c.b16 %v7412, %v7405
    %v8680 = vpack.c.b16 %v7413, %v7406
    %v8681 = vpack.c.b16 %v7414, %v7407
    %v8682 = vpack.c.b16 %v7415, %v7408
    %v8683 = vpack.c.b16 %v7416, %v7409
    %v8684 = vpack.c.b16 %v7417, %v7410
    %v8685 = vpack.c.b16 %v7418, %v7411
    %v8686 = vpack.c.b16 %v7426, %v7419
    %v8687 = vpack.c.b16 %v7427, %v7420
    %v8688 = vpack.c.b16 %v7428, %v7421
    %v8689 = vpack.c.b16 %v7429, %v7422
    %v8690 = vpack.c.b16 %v7430, %v7423
    %v8691 = vpack.c.b16 %v7431, %v7424
    %v8692 = vpack.c.b16 %v7432, %v7425
    %v8693 = vpack.c.b16 %v7440, %v7433
    %v8694 = vpack.c.b16 %v7441, %v7434
    %v8695 = vpack.c.b16 %v7442, %v7435
    %v8696 = vpack.c.b16 %v7443, %v7436
    %v8697 = vpack.c.b16 %v7444, %v7437
    %v8698 = vpack.c.b16 %v7445, %v7438
    %v8699 = vpack.c.b16 %v7446, %v7439
    %v8700 = vpack.c.b16 %v7454, %v7447
    %v8701 = vpack.c.b16 %v7455, %v7448
    %v8702 = vpack.c.b16 %v7456, %v7449
    %v8703 = vpack.c.b16 %v7457, %v7450
    %v8704 = vpack.c.b16 %v7458, %v7451
    %v8705 = vpack.c.b16 %v7459, %v7452
    %v8706 = vpack.c.b16 %v7460, %v7453
    %v8707 = vpack.c.b16 %v7468, %v7461
    %v8708 = vpack.c.b16 %v7469, %v7462
    %v8709 = vpack.c.b16 %v7470, %v7463
    %v8710 = vpack.c.b16 %v7471, %v7464
    %v8711 = vpack.c.b16 %v7472, %v7465
    %v8712 = vpack.c.b16 %v7473, %v7466
    %v8713 = vpack.c.b16 %v7474, %v7467
    %v8714 = vpack.c.b16 %v7482, %v7475
    %v8715 = vpack.c.b16 %v7483, %v7476
    %v8716 = vpack.c.b16 %v7484, %v7477
    %v8717 = vpack.c.b16 %v7485, %v7478
    %v8718 = vpack.c.b16 %v7486, %v7479
    %v8719 = vpack.c.b16 %v7487, %v7480
    %v8720 = vpack.c.b16 %v7488, %v7481
    %v8721 = vpack.c.b16 %v7496, %v7489
    %v8722 = vpack.c.b16 %v7497, %v7490
    %v8723 = vpack.c.b16 %v7498, %v7491
    %v8724 = vpack.c.b16 %v7499, %v7492
    %v8725 = vpack.c.b16 %v7500, %v7493
    %v8726 = vpack.c.b16 %v7501, %v7494
    %v8727 = vpack.c.b16 %v7502, %v7495
    %v8728 = vpack.c.b16 %v7510, %v7503
    %v8729 = vpack.c.b16 %v7511, %v7504
    %v8730 = vpack.c.b16 %v7512, %v7505
    %v8731 = vpack.c.b16 %v7513, %v7506
    %v8732 = vpack.c.b16 %v7514, %v7507
    %v8733 = vpack.c.b16 %v7515, %v7508
    %v8734 = vpack.c.b16 %v7516, %v7509
    %v8735 = vpack.c.b16 %v7524, %v7517
    %v8736 = vpack.c.b16 %v7525, %v7518
    %v8737 = vpack.c.b16 %v7526, %v7519
    %v8738 = vpack.c.b16 %v7527, %v7520
    %v8739 = vpack.c.b16 %v7528, %v7521
    %v8740 = vpack.c.b16 %v7529, %v7522
    %v8741 = vpack.c.b16 %v7530, %v7523
    %v8742 = vpack.c.b16 %v7538, %v7531
    %v8743 = vpack.c.b16 %v7539, %v7532
    %v8744 = vpack.c.b16 %v7540, %v7533
    %v8745 = vpack.c.b16 %v7541, %v7534
    %v8746 = vpack.c.b16 %v7542, %v7535
    %v8747 = vpack.c.b16 %v7543, %v7536
    %v8748 = vpack.c.b16 %v7544, %v7537
    %v8749 = vpack.c.b16 %v7552, %v7545
    %v8750 = vpack.c.b16 %v7553, %v7546
    %v8751 = vpack.c.b16 %v7554, %v7547
    %v8752 = vpack.c.b16 %v7555, %v7548
    %v8753 = vpack.c.b16 %v7556, %v7549
    %v8754 = vpack.c.b16 %v7557, %v7550
    %v8755 = vpack.c.b16 %v7558, %v7551
    %v8756 = vpack.c.b16 %v7566, %v7559
    %v8757 = vpack.c.b16 %v7567, %v7560
    %v8758 = vpack.c.b16 %v7568, %v7561
    %v8759 = vpack.c.b16 %v7569, %v7562
    %v8760 = vpack.c.b16 %v7570, %v7563
    %v8761 = vpack.c.b16 %v7571, %v7564
    %v8762 = vpack.c.b16 %v7572, %v7565
    %v8763 = vpack.c.b16 %v7580, %v7573
    %v8764 = vpack.c.b16 %v7581, %v7574
    %v8765 = vpack.c.b16 %v7582, %v7575
    %v8766 = vpack.c.b16 %v7583, %v7576
    %v8767 = vpack.c.b16 %v7584, %v7577
    %v8768 = vpack.c.b16 %v7585, %v7578
    %v8769 = vpack.c.b16 %v7586, %v7579
    %v8770 = vpack.c.b16 %v7594, %v7587
    %v8771 = vpack.c.b16 %v7595, %v7588
    %v8772 = vpack.c.b16 %v7596, %v7589
    %v8773 = vpack.c.b16 %v7597, %v7590
    %v8774 = vpack.c.b16 %v7598, %v7591
    %v8775 = vpack.c.b16 %v7599, %v7592
    %v8776 = vpack.c.b16 %v7600, %v7593
    %v8777 = vpack.c.b16 %v7608, %v7601
    %v8778 = vpack.c.b16 %v7609, %v7602
    %v8779 = vpack.c.b16 %v7610, %v7603
    %v8780 = vpack.c.b16 %v7611, %v7604
    %v8781 = vpack.c.b16 %v7612, %v7605
    %v8782 = vpack.c.b16 %v7613, %v7606
    %v8783 = vpack.c.b16 %v7614, %v7607
    %v8784 = vpack.c.b16 %v7622, %v7615
    %v8785 = vpack.c.b16 %v7623, %v7616
    %v8786 = vpack.c.b16 %v7624, %v7617
    %v8787 = vpack.c.b16 %v7625, %v7618
    %v8788 = vpack.c.b16 %v7626, %v7619
    %v8789 = vpack.c.b16 %v7627, %v7620
    %v8790 = vpack.c.b16 %v7628, %v7621
    %v8791 = vpack.c.b16 %v7636, %v7629
    %v8792 = vpack.c.b16 %v7637, %v7630
    %v8793 = vpack.c.b16 %v7638, %v7631
    %v8794 = vpack.c.b16 %v7639, %v7632
    %v8795 = vpack.c.b16 %v7640, %v7633
    %v8796 = vpack.c.b16 %v7641, %v7634
    %v8797 = vpack.c.b16 %v7642, %v7635
    %v8798 = vpack.c.b16 %v7650, %v7643
    %v8799 = vpack.c.b16 %v7651, %v7644
    %v8800 = vpack.c.b16 %v7652, %v7645
    %v8801 = vpack.c.b16 %v7653, %v7646
    %v8802 = vpack.c.b16 %v7654, %v7647
    %v8803 = vpack.c.b16 %v7655, %v7648
    %v8804 = vpack.c.b16 %v7656, %v7649
    %v8805 = vpack.c.b16 %v7664, %v7657
    %v8806 = vpack.c.b16 %v7665, %v7658
    %v8807 = vpack.c.b16 %v7666, %v7659
    %v8808 = vpack.c.b16 %v7667, %v7660
    %v8809 = vpack.c.b16 %v7668, %v7661
    %v8810 = vpack.c.b16 %v7669, %v7662
    %v8811 = vpack.c.b16 %v7670, %v7663
    %v8812 = vpack.c.b16 %v7678, %v7671
    %v8813 = vpack.c.b16 %v7679, %v7672
    %v8814 = vpack.c.b16 %v7680, %v7673
    %v8815 = vpack.c.b16 %v7681, %v7674
    %v8816 = vpack.c.b16 %v7682, %v7675
    %v8817 = vpack.c.b16 %v7683, %v7676
    %v8818 = vpack.c.b16 %v7684, %v7677
    %v8819 = vpack.c.b16 %v7692, %v7685
    %v8820 = vpack.c.b16 %v7693, %v7686
    %v8821 = vpack.c.b16 %v7694, %v7687
    %v8822 = vpack.c.b16 %v7695, %v7688
    %v8823 = vpack.c.b16 %v7696, %v7689
    %v8824 = vpack.c.b16 %v7697, %v7690
    %v8825 = vpack.c.b16 %v7698, %v7691
    %v8826 = vpack.c.b16 %v7706, %v7699
    %v8827 = vpack.c.b16 %v7707, %v7700
    %v8828 = vpack.c.b16 %v7708, %v7701
    %v8829 = vpack.c.b16 %v7709, %v7702
    %v8830 = vpack.c.b16 %v7710, %v7703
    %v8831 = vpack.c.b16 %v7711, %v7704
    %v8832 = vpack.c.b16 %v7712, %v7705
    %v8833 = vpack.c.b16 %v7720, %v7713
    %v8834 = vpack.c.b16 %v7721, %v7714
    %v8835 = vpack.c.b16 %v7722, %v7715
    %v8836 = vpack.c.b16 %v7723, %v7716
    %v8837 = vpack.c.b16 %v7724, %v7717
    %v8838 = vpack.c.b16 %v7725, %v7718
    %v8839 = vpack.c.b16 %v7726, %v7719
    %v8840 = vpack.c.b16 %v7734, %v7727
    %v8841 = vpack.c.b16 %v7735, %v7728
    %v8842 = vpack.c.b16 %v7736, %v7729
    %v8843 = vpack.c.b16 %v7737, %v7730
    %v8844 = vpack.c.b16 %v7738, %v7731
    %v8845 = vpack.c.b16 %v7739, %v7732
    %v8846 = vpack.c.b16 %v7740, %v7733
    %v8847 = vpack.c.b16 %v7748, %v7741
    %v8848 = vpack.c.b16 %v7749, %v7742
    %v8849 = vpack.c.b16 %v7750, %v7743
    %v8850 = vpack.c.b16 %v7751, %v7744
    %v8851 = vpack.c.b16 %v7752, %v7745
    %v8852 = vpack.c.b16 %v7753, %v7746
    %v8853 = vpack.c.b16 %v7754, %v7747
    %v8854 = vpack.c.b16 %v7762, %v7755
    %v8855 = vpack.c.b16 %v7763, %v7756
    %v8856 = vpack.c.b16 %v7764, %v7757
    %v8857 = vpack.c.b16 %v7765, %v7758
    %v8858 = vpack.c.b16 %v7766, %v7759
    %v8859 = vpack.c.b16 %v7767, %v7760
    %v8860 = vpack.c.b16 %v7768, %v7761
    %v8861 = vpack.c.b16 %v7776, %v7769
    %v8862 = vpack.c.b16 %v7777, %v7770
    %v8863 = vpack.c.b16 %v7778, %v7771
    %v8864 = vpack.c.b16 %v7779, %v7772
    %v8865 = vpack.c.b16 %v7780, %v7773
    %v8866 = vpack.c.b16 %v7781, %v7774
    %v8867 = vpack.c.b16 %v7782, %v7775
    %v8868 = vpack.c.b16 %v7790, %v7783
    %v8869 = vpack.c.b16 %v7791, %v7784
    %v8870 = vpack.c.b16 %v7792, %v7785
    %v8871 = vpack.c.b16 %v7793, %v7786
    %v8872 = vpack.c.b16 %v7794, %v7787
    %v8873 = vpack.c.b16 %v7795, %v7788
    %v8874 = vpack.c.b16 %v7796, %v7789
    %v8875 = vpack.c.b16 %v7804, %v7797
    %v8876 = vpack.c.b16 %v7805, %v7798
    %v8877 = vpack.c.b16 %v7806, %v7799
    %v8878 = vpack.c.b16 %v7807, %v7800
    %v8879 = vpack.c.b16 %v7808, %v7801
    %v8880 = vpack.c.b16 %v7809, %v7802
    %v8881 = vpack.c.b16 %v7810, %v7803
    %v8882 = vpack.c.b16 %v7818, %v7811
    %v8883 = vpack.c.b16 %v7819, %v7812
    %v8884 = vpack.c.b16 %v7820, %v7813
    %v8885 = vpack.c.b16 %v7821, %v7814
    %v8886 = vpack.c.b16 %v7822, %v7815
    %v8887 = vpack.c.b16 %v7823, %v7816
    %v8888 = vpack.c.b16 %v7824, %v7817
    %v8889 = vpack.c.b16 %v7832, %v7825
    %v8890 = vpack.c.b16 %v7833, %v7826
    %v8891 = vpack.c.b16 %v7834, %v7827
    %v8892 = vpack.c.b16 %v7835, %v7828
    %v8893 = vpack.c.b16 %v7836, %v7829
    %v8894 = vpack.c.b16 %v7837, %v7830
    %v8895 = vpack.c.b16 %v7838, %v7831
    %v8896 = vpack.c.b16 %v7846, %v7839
    %v8897 = vpack.c.b16 %v7847, %v7840
    %v8898 = vpack.c.b16 %v7848, %v7841
    %v8899 = vpack.c.b16 %v7849, %v7842
    %v8900 = vpack.c.b16 %v7850, %v7843
    %v8901 = vpack.c.b16 %v7851, %v7844
    %v8902 = vpack.c.b16 %v7852, %v7845
    %v8903 = vpack.c.b16 %v7860, %v7853
    %v8904 = vpack.c.b16 %v7861, %v7854
    %v8905 = vpack.c.b16 %v7862, %v7855
    %v8906 = vpack.c.b16 %v7863, %v7856
    %v8907 = vpack.c.b16 %v7864, %v7857
    %v8908 = vpack.c.b16 %v7865, %v7858
    %v8909 = vpack.c.b16 %v7866, %v7859
    %v8910 = vpack.c.b16 %v7874, %v7867
    %v8911 = vpack.c.b16 %v7875, %v7868
    %v8912 = vpack.c.b16 %v7876, %v7869
    %v8913 = vpack.c.b16 %v7877, %v7870
    %v8914 = vpack.c.b16 %v7878, %v7871
    %v8915 = vpack.c.b16 %v7879, %v7872
    %v8916 = vpack.c.b16 %v7880, %v7873
    %v8917 = vpack.c.b16 %v7888, %v7881
    %v8918 = vpack.c.b16 %v7889, %v7882
    %v8919 = vpack.c.b16 %v7890, %v7883
    %v8920 = vpack.c.b16 %v7891, %v7884
    %v8921 = vpack.c.b16 %v7892, %v7885
    %v8922 = vpack.c.b16 %v7893, %v7886
    %v8923 = vpack.c.b16 %v7894, %v7887
    %v8924 = vpack.c.b16 %v7902, %v7895
    %v8925 = vpack.c.b16 %v7903, %v7896
    %v8926 = vpack.c.b16 %v7904, %v7897
    %v8927 = vpack.c.b16 %v7905, %v7898
    %v8928 = vpack.c.b16 %v7906, %v7899
    %v8929 = vpack.c.b16 %v7907, %v7900
    %v8930 = vpack.c.b16 %v7908, %v7901
    %v8931 = vpack.c.b16 %v7916, %v7909
    %v8932 = vpack.c.b16 %v7917, %v7910
    %v8933 = vpack.c.b16 %v7918, %v7911
    %v8934 = vpack.c.b16 %v7919, %v7912
    %v8935 = vpack.c.b16 %v7920, %v7913
    %v8936 = vpack.c.b16 %v7921, %v7914
    %v8937 = vpack.c.b16 %v7922, %v7915
    %v8938 = vpack.c.b16 %v7930, %v7923
    %v8939 = vpack.c.b16 %v7931, %v7924
    %v8940 = vpack.c.b16 %v7932, %v7925
    %v8941 = vpack.c.b16 %v7933, %v7926
    %v8942 = vpack.c.b16 %v7934, %v7927
    %v8943 = vpack.c.b16 %v7935, %v7928
    %v8944 = vpack.c.b16 %v7936, %v7929
    %v8945 = vpack.c.b16 %v7944, %v7937
    %v8946 = vpack.c.b16 %v7945, %v7938
    %v8947 = vpack.c.b16 %v7946, %v7939
    %v8948 = vpack.c.b16 %v7947, %v7940
    %v8949 = vpack.c.b16 %v7948, %v7941
    %v8950 = vpack.c.b16 %v7949, %v7942
    %v8951 = vpack.c.b16 %v7950, %v7943
    %v8952 = vpack.c.b16 %v7958, %v7951
    %v8953 = vpack.c.b16 %v7959, %v7952
    %v8954 = vpack.c.b16 %v7960, %v7953
    %v8955 = vpack.c.b16 %v7961, %v7954
    %v8956 = vpack.c.b16 %v7962, %v7955
    %v8957 = vpack.c.b16 %v7963, %v7956
    %v8958 = vpack.c.b16 %v7964, %v7957
    %v8959 = vpack.c.b16 %v7972, %v7965
    %v8960 = vpack.c.b16 %v7973, %v7966
    %v8961 = vpack.c.b16 %v7974, %v7967
    %v8962 = vpack.c.b16 %v7975, %v7968
    %v8963 = vpack.c.b16 %v7976, %v7969
    %v8964 = vpack.c.b16 %v7977, %v7970
    %v8965 = vpack.c.b16 %v7978, %v7971
    %v8966 = vpack.c.b16 %v7986, %v7979
    %v8967 = vpack.c.b16 %v7987, %v7980
    %v8968 = vpack.c.b16 %v7988, %v7981
    %v8969 = vpack.c.b16 %v7989, %v7982
    %v8970 = vpack.c.b16 %v7990, %v7983
    %v8971 = vpack.c.b16 %v7991, %v7984
    %v8972 = vpack.c.b16 %v7992, %v7985
    %v8973 = vpack.c.b16 %v8000, %v7993
    %v8974 = vpack.c.b16 %v8001, %v7994
    %v8975 = vpack.c.b16 %v8002, %v7995
    %v8976 = vpack.c.b16 %v8003, %v7996
    %v8977 = vpack.c.b16 %v8004, %v7997
    %v8978 = vpack.c.b16 %v8005, %v7998
    %v8979 = vpack.c.b16 %v8006, %v7999
    %v8980 = vpack.c.b16 %v8014, %v8007
    %v8981 = vpack.c.b16 %v8015, %v8008
    %v8982 = vpack.c.b16 %v8016, %v8009
    %v8983 = vpack.c.b16 %v8017, %v8010
    %v8984 = vpack.c.b16 %v8018, %v8011
    %v8985 = vpack.c.b16 %v8019, %v8012
    %v8986 = vpack.c.b16 %v8020, %v8013
    %v8987 = vpack.c.b16 %v8028, %v8021
    %v8988 = vpack.c.b16 %v8029, %v8022
    %v8989 = vpack.c.b16 %v8030, %v8023
    %v8990 = vpack.c.b16 %v8031, %v8024
    %v8991 = vpack.c.b16 %v8032, %v8025
    %v8992 = vpack.c.b16 %v8033, %v8026
    %v8993 = vpack.c.b16 %v8034, %v8027
    %v8994 = vpack.c.b16 %v8042, %v8035
    %v8995 = vpack.c.b16 %v8043, %v8036
    %v8996 = vpack.c.b16 %v8044, %v8037
    %v8997 = vpack.c.b16 %v8045, %v8038
    %v8998 = vpack.c.b16 %v8046, %v8039
    %v8999 = vpack.c.b16 %v8047, %v8040
    %v9000 = vpack.c.b16 %v8048, %v8041
    %v9001 = vpack.c.b16 %v8056, %v8049
    %v9002 = vpack.c.b16 %v8057, %v8050
    %v9003 = vpack.c.b16 %v8058, %v8051
    %v9004 = vpack.c.b16 %v8059, %v8052
    %v9005 = vpack.c.b16 %v8060, %v8053
    %v9006 = vpack.c.b16 %v8061, %v8054
    %v9007 = vpack.c.b16 %v8062, %v8055
    %v9008 = vpack.c.b16 %v8070, %v8063
    %v9009 = vpack.c.b16 %v8071, %v8064
    %v9010 = vpack.c.b16 %v8072, %v8065
    %v9011 = vpack.c.b16 %v8073, %v8066
    %v9012 = vpack.c.b16 %v8074, %v8067
    %v9013 = vpack.c.b16 %v8075, %v8068
    %v9014 = vpack.c.b16 %v8076, %v8069
    %v9015 = vpack.c.b16 %v8084, %v8077
    %v9016 = vpack.c.b16 %v8085, %v8078
    %v9017 = vpack.c.b16 %v8086, %v8079
    %v9018 = vpack.c.b16 %v8087, %v8080
    %v9019 = vpack.c.b16 %v8088, %v8081
    %v9020 = vpack.c.b16 %v8089, %v8082
    %v9021 = vpack.c.b16 %v8090, %v8083
    %v9022 = vpack.c.b16 %v8098, %v8091
    %v9023 = vpack.c.b16 %v8099, %v8092
    %v9024 = vpack.c.b16 %v8100, %v8093
    %v9025 = vpack.c.b16 %v8101, %v8094
    %v9026 = vpack.c.b16 %v8102, %v8095
    %v9027 = vpack.c.b16 %v8103, %v8096
    %v9028 = vpack.c.b16 %v8104, %v8097
    %v9029 = vpack.c.b16 %v8112, %v8105
    %v9030 = vpack.c.b16 %v8113, %v8106
    %v9031 = vpack.c.b16 %v8114, %v8107
    %v9032 = vpack.c.b16 %v8115, %v8108
    %v9033 = vpack.c.b16 %v8116, %v8109
    %v9034 = vpack.c.b16 %v8117, %v8110
    %v9035 = vpack.c.b16 %v8118, %v8111
    %v9036 = vpack.c.b16 %v8126, %v8119
    %v9037 = vpack.c.b16 %v8127, %v8120
    %v9038 = vpack.c.b16 %v8128, %v8121
    %v9039 = vpack.c.b16 %v8129, %v8122
    %v9040 = vpack.c.b16 %v8130, %v8123
    %v9041 = vpack.c.b16 %v8131, %v8124
    %v9042 = vpack.c.b16 %v8132, %v8125
    %v9043 = vpack.c.b16 %v8140, %v8133
    %v9044 = vpack.c.b16 %v8141, %v8134
    %v9045 = vpack.c.b16 %v8142, %v8135
    %v9046 = vpack.c.b16 %v8143, %v8136
    %v9047 = vpack.c.b16 %v8144, %v8137
    %v9048 = vpack.c.b16 %v8145, %v8138
    %v9049 = vpack.c.b16 %v8146, %v8139
    %v9050 = vpack.c.b16 %v8154, %v8147
    %v9051 = vpack.c.b16 %v8155, %v8148
    %v9052 = vpack.c.b16 %v8156, %v8149
    %v9053 = vpack.c.b16 %v8157, %v8150
    %v9054 = vpack.c.b16 %v8158, %v8151
    %v9055 = vpack.c.b16 %v8159, %v8152
    %v9056 = vpack.c.b16 %v8160, %v8153
    %9953 = vmatpush.bf16.msra.mxu0 %v8210
    %9954 = vmatpush.bf16.msra.mxu0 %v8203
    %9955 = vmatpush.bf16.msra.mxu0 %v8196
    %9956 = vmatpush.bf16.msra.mxu0 %v8189
    %9957 = vmatpush.bf16.msra.mxu0 %v8182
    %9958 = vmatpush.bf16.msra.mxu0 %v8175
    %9959 = vmatpush.bf16.msra.mxu0 %v8168
    %9960 = vmatpush.bf16.msra.mxu0 %v8161
    %9961 = vmatmul.bf16.gmra.mxu0 %v4289
    %v9962 = vpop.f32.mrf.mxu0
    %v9963 = vadd.f32 %v5331, %v9962
    %v9964 = vpop.f32.mrf.mxu0
    %v9965 = vadd.f32 %v5331, %v9964
    %9966 = vdwg.mxu0
    %9967 = vmatpush.bf16.msra.mxu0 %v8266
    %9968 = vmatpush.bf16.msra.mxu0 %v8259
    %9969 = vmatpush.bf16.msra.mxu0 %v8252
    %9970 = vmatpush.bf16.msra.mxu0 %v8245
    %9971 = vmatpush.bf16.msra.mxu0 %v8238
    %9972 = vmatpush.bf16.msra.mxu0 %v8231
    %9973 = vmatpush.bf16.msra.mxu0 %v8224
    %9974 = vmatpush.bf16.msra.mxu0 %v8217
    %9975 = vmatmul.bf16.gmra.mxu0 %v4290
    %v9976 = vpop.f32.mrf.mxu0
    %v9977 = vadd.f32 %v9963, %v9976
    %v9978 = vpop.f32.mrf.mxu0
    %v9979 = vadd.f32 %v9965, %v9978
    %9980 = vdwg.mxu0
    %9981 = vmatpush.bf16.msra.mxu0 %v8322
    %9982 = vmatpush.bf16.msra.mxu0 %v8315
    %9983 = vmatpush.bf16.msra.mxu0 %v8308
    %9984 = vmatpush.bf16.msra.mxu0 %v8301
    %9985 = vmatpush.bf16.msra.mxu0 %v8294
    %9986 = vmatpush.bf16.msra.mxu0 %v8287
    %9987 = vmatpush.bf16.msra.mxu0 %v8280
    %9988 = vmatpush.bf16.msra.mxu0 %v8273
    %9989 = vmatmul.bf16.gmra.mxu0 %v4291
    %v9990 = vpop.f32.mrf.mxu0
    %v9991 = vadd.f32 %v9977, %v9990
    %v9992 = vpop.f32.mrf.mxu0
    %v9993 = vadd.f32 %v9979, %v9992
    %9994 = vdwg.mxu0
    %9995 = vmatpush.bf16.msra.mxu0 %v8378
    %9996 = vmatpush.bf16.msra.mxu0 %v8371
    %9997 = vmatpush.bf16.msra.mxu0 %v8364
    %9998 = vmatpush.bf16.msra.mxu0 %v8357
    %9999 = vmatpush.bf16.msra.mxu0 %v8350
    %10000 = vmatpush.bf16.msra.mxu0 %v8343
    %10001 = vmatpush.bf16.msra.mxu0 %v8336
    %10002 = vmatpush.bf16.msra.mxu0 %v8329
    %10003 = vmatmul.bf16.gmra.mxu0 %v4292
    %v10004 = vpop.f32.mrf.mxu0
    %v10005 = vadd.f32 %v9991, %v10004
    %v10006 = vpop.f32.mrf.mxu0
    %v10007 = vadd.f32 %v9993, %v10006
    %10008 = vdwg.mxu0
    %10009 = vmatpush.bf16.msra.mxu0 %v8434
    %10010 = vmatpush.bf16.msra.mxu0 %v8427
    %10011 = vmatpush.bf16.msra.mxu0 %v8420
    %10012 = vmatpush.bf16.msra.mxu0 %v8413
    %10013 = vmatpush.bf16.msra.mxu0 %v8406
    %10014 = vmatpush.bf16.msra.mxu0 %v8399
    %10015 = vmatpush.bf16.msra.mxu0 %v8392
    %10016 = vmatpush.bf16.msra.mxu0 %v8385
    %10017 = vmatmul.bf16.gmra.mxu0 %v4293
    %v10018 = vpop.f32.mrf.mxu0
    %v10019 = vadd.f32 %v10005, %v10018
    %v10020 = vpop.f32.mrf.mxu0
    %v10021 = vadd.f32 %v10007, %v10020
    %10022 = vdwg.mxu0
    %10023 = vmatpush.bf16.msra.mxu0 %v8490
    %10024 = vmatpush.bf16.msra.mxu0 %v8483
    %10025 = vmatpush.bf16.msra.mxu0 %v8476
    %10026 = vmatpush.bf16.msra.mxu0 %v8469
    %10027 = vmatpush.bf16.msra.mxu0 %v8462
    %10028 = vmatpush.bf16.msra.mxu0 %v8455
    %10029 = vmatpush.bf16.msra.mxu0 %v8448
    %10030 = vmatpush.bf16.msra.mxu0 %v8441
    %10031 = vmatmul.bf16.gmra.mxu0 %v4294
    %v10032 = vpop.f32.mrf.mxu0
    %v10033 = vadd.f32 %v10019, %v10032
    %v10034 = vpop.f32.mrf.mxu0
    %v10035 = vadd.f32 %v10021, %v10034
    %10036 = vdwg.mxu0
    %10037 = vmatpush.bf16.msra.mxu0 %v8546
    %10038 = vmatpush.bf16.msra.mxu0 %v8539
    %10039 = vmatpush.bf16.msra.mxu0 %v8532
    %10040 = vmatpush.bf16.msra.mxu0 %v8525
    %10041 = vmatpush.bf16.msra.mxu0 %v8518
    %10042 = vmatpush.bf16.msra.mxu0 %v8511
    %10043 = vmatpush.bf16.msra.mxu0 %v8504
    %10044 = vmatpush.bf16.msra.mxu0 %v8497
    %10045 = vmatmul.bf16.gmra.mxu0 %v4295
    %v10046 = vpop.f32.mrf.mxu0
    %v10047 = vadd.f32 %v10033, %v10046
    %v10048 = vpop.f32.mrf.mxu0
    %v10049 = vadd.f32 %v10035, %v10048
    %10050 = vdwg.mxu0
    %10051 = vmatpush.bf16.msra.mxu0 %v8602
    %10052 = vmatpush.bf16.msra.mxu0 %v8595
    %10053 = vmatpush.bf16.msra.mxu0 %v8588
    %10054 = vmatpush.bf16.msra.mxu0 %v8581
    %10055 = vmatpush.bf16.msra.mxu0 %v8574
    %10056 = vmatpush.bf16.msra.mxu0 %v8567
    %10057 = vmatpush.bf16.msra.mxu0 %v8560
    %10058 = vmatpush.bf16.msra.mxu0 %v8553
    %10059 = vmatmul.bf16.gmra.mxu0 %v4296
    %v10060 = vpop.f32.mrf.mxu0
    %v10061 = vadd.f32 %v10047, %v10060
    %v10062 = vpop.f32.mrf.mxu0
    %v10063 = vadd.f32 %v10049, %v10062
    %10064 = vdwg.mxu0
    %10065 = vmatpush.bf16.msra.mxu0 %v8658
    %10066 = vmatpush.bf16.msra.mxu0 %v8651
    %10067 = vmatpush.bf16.msra.mxu0 %v8644
    %10068 = vmatpush.bf16.msra.mxu0 %v8637
    %10069 = vmatpush.bf16.msra.mxu0 %v8630
    %10070 = vmatpush.bf16.msra.mxu0 %v8623
    %10071 = vmatpush.bf16.msra.mxu0 %v8616
    %10072 = vmatpush.bf16.msra.mxu0 %v8609
    %10073 = vmatmul.bf16.gmra.mxu0 %v4297
    %v10074 = vpop.f32.mrf.mxu0
    %v10075 = vadd.f32 %v10061, %v10074
    %v10076 = vpop.f32.mrf.mxu0
    %v10077 = vadd.f32 %v10063, %v10076
    %10078 = vdwg.mxu0
    %10079 = vmatpush.bf16.msra.mxu0 %v8714
    %10080 = vmatpush.bf16.msra.mxu0 %v8707
    %10081 = vmatpush.bf16.msra.mxu0 %v8700
    %10082 = vmatpush.bf16.msra.mxu0 %v8693
    %10083 = vmatpush.bf16.msra.mxu0 %v8686
    %10084 = vmatpush.bf16.msra.mxu0 %v8679
    %10085 = vmatpush.bf16.msra.mxu0 %v8672
    %10086 = vmatpush.bf16.msra.mxu0 %v8665
    %10087 = vmatmul.bf16.gmra.mxu0 %v4298
    %v10088 = vpop.f32.mrf.mxu0
    %v10089 = vadd.f32 %v10075, %v10088
    %v10090 = vpop.f32.mrf.mxu0
    %v10091 = vadd.f32 %v10077, %v10090
    %10092 = vdwg.mxu0
    %10093 = vmatpush.bf16.msra.mxu0 %v8770
    %10094 = vmatpush.bf16.msra.mxu0 %v8763
    %10095 = vmatpush.bf16.msra.mxu0 %v8756
    %10096 = vmatpush.bf16.msra.mxu0 %v8749
    %10097 = vmatpush.bf16.msra.mxu0 %v8742
    %10098 = vmatpush.bf16.msra.mxu0 %v8735
    %10099 = vmatpush.bf16.msra.mxu0 %v8728
    %10100 = vmatpush.bf16.msra.mxu0 %v8721
    %10101 = vmatmul.bf16.gmra.mxu0 %v4299
    %v10102 = vpop.f32.mrf.mxu0
    %v10103 = vadd.f32 %v10089, %v10102
    %v10104 = vpop.f32.mrf.mxu0
    %v10105 = vadd.f32 %v10091, %v10104
    %10106 = vdwg.mxu0
    %10107 = vmatpush.bf16.msra.mxu0 %v8826
    %10108 = vmatpush.bf16.msra.mxu0 %v8819
    %10109 = vmatpush.bf16.msra.mxu0 %v8812
    %10110 = vmatpush.bf16.msra.mxu0 %v8805
    %10111 = vmatpush.bf16.msra.mxu0 %v8798
    %10112 = vmatpush.bf16.msra.mxu0 %v8791
    %10113 = vmatpush.bf16.msra.mxu0 %v8784
    %10114 = vmatpush.bf16.msra.mxu0 %v8777
    %10115 = vmatmul.bf16.gmra.mxu0 %v4300
    %v10116 = vpop.f32.mrf.mxu0
    %v10117 = vadd.f32 %v10103, %v10116
    %v10118 = vpop.f32.mrf.mxu0
    %v10119 = vadd.f32 %v10105, %v10118
    %10120 = vdwg.mxu0
    %10121 = vmatpush.bf16.msra.mxu0 %v8882
    %10122 = vmatpush.bf16.msra.mxu0 %v8875
    %10123 = vmatpush.bf16.msra.mxu0 %v8868
    %10124 = vmatpush.bf16.msra.mxu0 %v8861
    %10125 = vmatpush.bf16.msra.mxu0 %v8854
    %10126 = vmatpush.bf16.msra.mxu0 %v8847
    %10127 = vmatpush.bf16.msra.mxu0 %v8840
    %10128 = vmatpush.bf16.msra.mxu0 %v8833
    %10129 = vmatmul.bf16.gmra.mxu0 %v4301
    %v10130 = vpop.f32.mrf.mxu0
    %v10131 = vadd.f32 %v10117, %v10130
    %v10132 = vpop.f32.mrf.mxu0
    %v10133 = vadd.f32 %v10119, %v10132
    %10134 = vdwg.mxu0
    %10135 = vmatpush.bf16.msra.mxu0 %v8938
    %10136 = vmatpush.bf16.msra.mxu0 %v8931
    %10137 = vmatpush.bf16.msra.mxu0 %v8924
    %10138 = vmatpush.bf16.msra.mxu0 %v8917
    %10139 = vmatpush.bf16.msra.mxu0 %v8910
    %10140 = vmatpush.bf16.msra.mxu0 %v8903
    %10141 = vmatpush.bf16.msra.mxu0 %v8896
    %10142 = vmatpush.bf16.msra.mxu0 %v8889
    %10143 = vmatmul.bf16.gmra.mxu0 %v4302
    %v10144 = vpop.f32.mrf.mxu0
    %v10145 = vadd.f32 %v10131, %v10144
    %v10146 = vpop.f32.mrf.mxu0
    %v10147 = vadd.f32 %v10133, %v10146
    %10148 = vdwg.mxu0
    %10149 = vmatpush.bf16.msra.mxu0 %v8994
    %10150 = vmatpush.bf16.msra.mxu0 %v8987
    %10151 = vmatpush.bf16.msra.mxu0 %v8980
    %10152 = vmatpush.bf16.msra.mxu0 %v8973
    %10153 = vmatpush.bf16.msra.mxu0 %v8966
    %10154 = vmatpush.bf16.msra.mxu0 %v8959
    %10155 = vmatpush.bf16.msra.mxu0 %v8952
    %10156 = vmatpush.bf16.msra.mxu0 %v8945
    %10157 = vmatmul.bf16.gmra.mxu0 %v4303
    %v10158 = vpop.f32.mrf.mxu0
    %v10159 = vadd.f32 %v10145, %v10158
    %v10160 = vpop.f32.mrf.mxu0
    %v10161 = vadd.f32 %v10147, %v10160
    %10162 = vdwg.mxu0
    %10163 = vmatpush.bf16.msra.mxu0 %v9050
    %10164 = vmatpush.bf16.msra.mxu0 %v9043
    %10165 = vmatpush.bf16.msra.mxu0 %v9036
    %10166 = vmatpush.bf16.msra.mxu0 %v9029
    %10167 = vmatpush.bf16.msra.mxu0 %v9022
    %10168 = vmatpush.bf16.msra.mxu0 %v9015
    %10169 = vmatpush.bf16.msra.mxu0 %v9008
    %10170 = vmatpush.bf16.msra.mxu0 %v9001
    %10171 = vmatmul.bf16.gmra.mxu0 %v4304
    %v10172 = vpop.f32.mrf.mxu0
    %v10173 = vadd.f32 %v10159, %v10172
    %v10174 = vpop.f32.mrf.mxu0
    %v10175 = vadd.f32 %v10161, %v10174
    %10176 = vdwg.mxu0
    %10177 = vmatpush.bf16.msra.mxu0 %v8211
    %10178 = vmatpush.bf16.msra.mxu0 %v8204
    %10179 = vmatpush.bf16.msra.mxu0 %v8197
    %10180 = vmatpush.bf16.msra.mxu0 %v8190
    %10181 = vmatpush.bf16.msra.mxu0 %v8183
    %10182 = vmatpush.bf16.msra.mxu0 %v8176
    %10183 = vmatpush.bf16.msra.mxu0 %v8169
    %10184 = vmatpush.bf16.msra.mxu0 %v8162
    %10185 = vmatmul.bf16.gmra.mxu0 %v4289
    %v10186 = vpop.f32.mrf.mxu0
    %v10187 = vadd.f32 %v5332, %v10186
    %v10188 = vpop.f32.mrf.mxu0
    %v10189 = vadd.f32 %v5332, %v10188
    %10190 = vdwg.mxu0
    %10191 = vmatpush.bf16.msra.mxu0 %v8267
    %10192 = vmatpush.bf16.msra.mxu0 %v8260
    %10193 = vmatpush.bf16.msra.mxu0 %v8253
    %10194 = vmatpush.bf16.msra.mxu0 %v8246
    %10195 = vmatpush.bf16.msra.mxu0 %v8239
    %10196 = vmatpush.bf16.msra.mxu0 %v8232
    %10197 = vmatpush.bf16.msra.mxu0 %v8225
    %10198 = vmatpush.bf16.msra.mxu0 %v8218
    %10199 = vmatmul.bf16.gmra.mxu0 %v4290
    %v10200 = vpop.f32.mrf.mxu0
    %v10201 = vadd.f32 %v10187, %v10200
    %v10202 = vpop.f32.mrf.mxu0
    %v10203 = vadd.f32 %v10189, %v10202
    %10204 = vdwg.mxu0
    %10205 = vmatpush.bf16.msra.mxu0 %v8323
    %10206 = vmatpush.bf16.msra.mxu0 %v8316
    %10207 = vmatpush.bf16.msra.mxu0 %v8309
    %10208 = vmatpush.bf16.msra.mxu0 %v8302
    %10209 = vmatpush.bf16.msra.mxu0 %v8295
    %10210 = vmatpush.bf16.msra.mxu0 %v8288
    %10211 = vmatpush.bf16.msra.mxu0 %v8281
    %10212 = vmatpush.bf16.msra.mxu0 %v8274
    %10213 = vmatmul.bf16.gmra.mxu0 %v4291
    %v10214 = vpop.f32.mrf.mxu0
    %v10215 = vadd.f32 %v10201, %v10214
    %v10216 = vpop.f32.mrf.mxu0
    %v10217 = vadd.f32 %v10203, %v10216
    %10218 = vdwg.mxu0
    %10219 = vmatpush.bf16.msra.mxu0 %v8379
    %10220 = vmatpush.bf16.msra.mxu0 %v8372
    %10221 = vmatpush.bf16.msra.mxu0 %v8365
    %10222 = vmatpush.bf16.msra.mxu0 %v8358
    %10223 = vmatpush.bf16.msra.mxu0 %v8351
    %10224 = vmatpush.bf16.msra.mxu0 %v8344
    %10225 = vmatpush.bf16.msra.mxu0 %v8337
    %10226 = vmatpush.bf16.msra.mxu0 %v8330
    %10227 = vmatmul.bf16.gmra.mxu0 %v4292
    %v10228 = vpop.f32.mrf.mxu0
    %v10229 = vadd.f32 %v10215, %v10228
    %v10230 = vpop.f32.mrf.mxu0
    %v10231 = vadd.f32 %v10217, %v10230
    %10232 = vdwg.mxu0
    %10233 = vmatpush.bf16.msra.mxu0 %v8435
    %10234 = vmatpush.bf16.msra.mxu0 %v8428
    %10235 = vmatpush.bf16.msra.mxu0 %v8421
    %10236 = vmatpush.bf16.msra.mxu0 %v8414
    %10237 = vmatpush.bf16.msra.mxu0 %v8407
    %10238 = vmatpush.bf16.msra.mxu0 %v8400
    %10239 = vmatpush.bf16.msra.mxu0 %v8393
    %10240 = vmatpush.bf16.msra.mxu0 %v8386
    %10241 = vmatmul.bf16.gmra.mxu0 %v4293
    %v10242 = vpop.f32.mrf.mxu0
    %v10243 = vadd.f32 %v10229, %v10242
    %v10244 = vpop.f32.mrf.mxu0
    %v10245 = vadd.f32 %v10231, %v10244
    %10246 = vdwg.mxu0
    %10247 = vmatpush.bf16.msra.mxu0 %v8491
    %10248 = vmatpush.bf16.msra.mxu0 %v8484
    %10249 = vmatpush.bf16.msra.mxu0 %v8477
    %10250 = vmatpush.bf16.msra.mxu0 %v8470
    %10251 = vmatpush.bf16.msra.mxu0 %v8463
    %10252 = vmatpush.bf16.msra.mxu0 %v8456
    %10253 = vmatpush.bf16.msra.mxu0 %v8449
    %10254 = vmatpush.bf16.msra.mxu0 %v8442
    %10255 = vmatmul.bf16.gmra.mxu0 %v4294
    %v10256 = vpop.f32.mrf.mxu0
    %v10257 = vadd.f32 %v10243, %v10256
    %v10258 = vpop.f32.mrf.mxu0
    %v10259 = vadd.f32 %v10245, %v10258
    %10260 = vdwg.mxu0
    %10261 = vmatpush.bf16.msra.mxu0 %v8547
    %10262 = vmatpush.bf16.msra.mxu0 %v8540
    %10263 = vmatpush.bf16.msra.mxu0 %v8533
    %10264 = vmatpush.bf16.msra.mxu0 %v8526
    %10265 = vmatpush.bf16.msra.mxu0 %v8519
    %10266 = vmatpush.bf16.msra.mxu0 %v8512
    %10267 = vmatpush.bf16.msra.mxu0 %v8505
    %10268 = vmatpush.bf16.msra.mxu0 %v8498
    %10269 = vmatmul.bf16.gmra.mxu0 %v4295
    %v10270 = vpop.f32.mrf.mxu0
    %v10271 = vadd.f32 %v10257, %v10270
    %v10272 = vpop.f32.mrf.mxu0
    %v10273 = vadd.f32 %v10259, %v10272
    %10274 = vdwg.mxu0
    %10275 = vmatpush.bf16.msra.mxu0 %v8603
    %10276 = vmatpush.bf16.msra.mxu0 %v8596
    %10277 = vmatpush.bf16.msra.mxu0 %v8589
    %10278 = vmatpush.bf16.msra.mxu0 %v8582
    %10279 = vmatpush.bf16.msra.mxu0 %v8575
    %10280 = vmatpush.bf16.msra.mxu0 %v8568
    %10281 = vmatpush.bf16.msra.mxu0 %v8561
    %10282 = vmatpush.bf16.msra.mxu0 %v8554
    %10283 = vmatmul.bf16.gmra.mxu0 %v4296
    %v10284 = vpop.f32.mrf.mxu0
    %v10285 = vadd.f32 %v10271, %v10284
    %v10286 = vpop.f32.mrf.mxu0
    %v10287 = vadd.f32 %v10273, %v10286
    %10288 = vdwg.mxu0
    %10289 = vmatpush.bf16.msra.mxu0 %v8659
    %10290 = vmatpush.bf16.msra.mxu0 %v8652
    %10291 = vmatpush.bf16.msra.mxu0 %v8645
    %10292 = vmatpush.bf16.msra.mxu0 %v8638
    %10293 = vmatpush.bf16.msra.mxu0 %v8631
    %10294 = vmatpush.bf16.msra.mxu0 %v8624
    %10295 = vmatpush.bf16.msra.mxu0 %v8617
    %10296 = vmatpush.bf16.msra.mxu0 %v8610
    %10297 = vmatmul.bf16.gmra.mxu0 %v4297
    %v10298 = vpop.f32.mrf.mxu0
    %v10299 = vadd.f32 %v10285, %v10298
    %v10300 = vpop.f32.mrf.mxu0
    %v10301 = vadd.f32 %v10287, %v10300
    %10302 = vdwg.mxu0
    %10303 = vmatpush.bf16.msra.mxu0 %v8715
    %10304 = vmatpush.bf16.msra.mxu0 %v8708
    %10305 = vmatpush.bf16.msra.mxu0 %v8701
    %10306 = vmatpush.bf16.msra.mxu0 %v8694
    %10307 = vmatpush.bf16.msra.mxu0 %v8687
    %10308 = vmatpush.bf16.msra.mxu0 %v8680
    %10309 = vmatpush.bf16.msra.mxu0 %v8673
    %10310 = vmatpush.bf16.msra.mxu0 %v8666
    %10311 = vmatmul.bf16.gmra.mxu0 %v4298
    %v10312 = vpop.f32.mrf.mxu0
    %v10313 = vadd.f32 %v10299, %v10312
    %v10314 = vpop.f32.mrf.mxu0
    %v10315 = vadd.f32 %v10301, %v10314
    %10316 = vdwg.mxu0
    %10317 = vmatpush.bf16.msra.mxu0 %v8771
    %10318 = vmatpush.bf16.msra.mxu0 %v8764
    %10319 = vmatpush.bf16.msra.mxu0 %v8757
    %10320 = vmatpush.bf16.msra.mxu0 %v8750
    %10321 = vmatpush.bf16.msra.mxu0 %v8743
    %10322 = vmatpush.bf16.msra.mxu0 %v8736
    %10323 = vmatpush.bf16.msra.mxu0 %v8729
    %10324 = vmatpush.bf16.msra.mxu0 %v8722
    %10325 = vmatmul.bf16.gmra.mxu0 %v4299
    %v10326 = vpop.f32.mrf.mxu0
    %v10327 = vadd.f32 %v10313, %v10326
    %v10328 = vpop.f32.mrf.mxu0
    %v10329 = vadd.f32 %v10315, %v10328
    %10330 = vdwg.mxu0
    %10331 = vmatpush.bf16.msra.mxu0 %v8827
    %10332 = vmatpush.bf16.msra.mxu0 %v8820
    %10333 = vmatpush.bf16.msra.mxu0 %v8813
    %10334 = vmatpush.bf16.msra.mxu0 %v8806
    %10335 = vmatpush.bf16.msra.mxu0 %v8799
    %10336 = vmatpush.bf16.msra.mxu0 %v8792
    %10337 = vmatpush.bf16.msra.mxu0 %v8785
    %10338 = vmatpush.bf16.msra.mxu0 %v8778
    %10339 = vmatmul.bf16.gmra.mxu0 %v4300
    %v10340 = vpop.f32.mrf.mxu0
    %v10341 = vadd.f32 %v10327, %v10340
    %v10342 = vpop.f32.mrf.mxu0
    %v10343 = vadd.f32 %v10329, %v10342
    %10344 = vdwg.mxu0
    %10345 = vmatpush.bf16.msra.mxu0 %v8883
    %10346 = vmatpush.bf16.msra.mxu0 %v8876
    %10347 = vmatpush.bf16.msra.mxu0 %v8869
    %10348 = vmatpush.bf16.msra.mxu0 %v8862
    %10349 = vmatpush.bf16.msra.mxu0 %v8855
    %10350 = vmatpush.bf16.msra.mxu0 %v8848
    %10351 = vmatpush.bf16.msra.mxu0 %v8841
    %10352 = vmatpush.bf16.msra.mxu0 %v8834
    %10353 = vmatmul.bf16.gmra.mxu0 %v4301
    %v10354 = vpop.f32.mrf.mxu0
    %v10355 = vadd.f32 %v10341, %v10354
    %v10356 = vpop.f32.mrf.mxu0
    %v10357 = vadd.f32 %v10343, %v10356
    %10358 = vdwg.mxu0
    %10359 = vmatpush.bf16.msra.mxu0 %v8939
    %10360 = vmatpush.bf16.msra.mxu0 %v8932
    %10361 = vmatpush.bf16.msra.mxu0 %v8925
    %10362 = vmatpush.bf16.msra.mxu0 %v8918
    %10363 = vmatpush.bf16.msra.mxu0 %v8911
    %10364 = vmatpush.bf16.msra.mxu0 %v8904
    %10365 = vmatpush.bf16.msra.mxu0 %v8897
    %10366 = vmatpush.bf16.msra.mxu0 %v8890
    %10367 = vmatmul.bf16.gmra.mxu0 %v4302
    %v10368 = vpop.f32.mrf.mxu0
    %v10369 = vadd.f32 %v10355, %v10368
    %v10370 = vpop.f32.mrf.mxu0
    %v10371 = vadd.f32 %v10357, %v10370
    %10372 = vdwg.mxu0
    %10373 = vmatpush.bf16.msra.mxu0 %v8995
    %10374 = vmatpush.bf16.msra.mxu0 %v8988
    %10375 = vmatpush.bf16.msra.mxu0 %v8981
    %10376 = vmatpush.bf16.msra.mxu0 %v8974
    %10377 = vmatpush.bf16.msra.mxu0 %v8967
    %10378 = vmatpush.bf16.msra.mxu0 %v8960
    %10379 = vmatpush.bf16.msra.mxu0 %v8953
    %10380 = vmatpush.bf16.msra.mxu0 %v8946
    %10381 = vmatmul.bf16.gmra.mxu0 %v4303
    %v10382 = vpop.f32.mrf.mxu0
    %v10383 = vadd.f32 %v10369, %v10382
    %v10384 = vpop.f32.mrf.mxu0
    %v10385 = vadd.f32 %v10371, %v10384
    %10386 = vdwg.mxu0
    %10387 = vmatpush.bf16.msra.mxu0 %v9051
    %10388 = vmatpush.bf16.msra.mxu0 %v9044
    %10389 = vmatpush.bf16.msra.mxu0 %v9037
    %10390 = vmatpush.bf16.msra.mxu0 %v9030
    %10391 = vmatpush.bf16.msra.mxu0 %v9023
    %10392 = vmatpush.bf16.msra.mxu0 %v9016
    %10393 = vmatpush.bf16.msra.mxu0 %v9009
    %10394 = vmatpush.bf16.msra.mxu0 %v9002
    %10395 = vmatmul.bf16.gmra.mxu0 %v4304
    %v10396 = vpop.f32.mrf.mxu0
    %v10397 = vadd.f32 %v10383, %v10396
    %v10398 = vpop.f32.mrf.mxu0
    %v10399 = vadd.f32 %v10385, %v10398
    %10400 = vdwg.mxu0
    %10401 = vmatpush.bf16.msra.mxu0 %v8212
    %10402 = vmatpush.bf16.msra.mxu0 %v8205
    %10403 = vmatpush.bf16.msra.mxu0 %v8198
    %10404 = vmatpush.bf16.msra.mxu0 %v8191
    %10405 = vmatpush.bf16.msra.mxu0 %v8184
    %10406 = vmatpush.bf16.msra.mxu0 %v8177
    %10407 = vmatpush.bf16.msra.mxu0 %v8170
    %10408 = vmatpush.bf16.msra.mxu0 %v8163
    %10409 = vmatmul.bf16.gmra.mxu0 %v4289
    %v10410 = vpop.f32.mrf.mxu0
    %v10411 = vadd.f32 %v5333, %v10410
    %v10412 = vpop.f32.mrf.mxu0
    %v10413 = vadd.f32 %v5333, %v10412
    %10414 = vdwg.mxu0
    %10415 = vmatpush.bf16.msra.mxu0 %v8268
    %10416 = vmatpush.bf16.msra.mxu0 %v8261
    %10417 = vmatpush.bf16.msra.mxu0 %v8254
    %10418 = vmatpush.bf16.msra.mxu0 %v8247
    %10419 = vmatpush.bf16.msra.mxu0 %v8240
    %10420 = vmatpush.bf16.msra.mxu0 %v8233
    %10421 = vmatpush.bf16.msra.mxu0 %v8226
    %10422 = vmatpush.bf16.msra.mxu0 %v8219
    %10423 = vmatmul.bf16.gmra.mxu0 %v4290
    %v10424 = vpop.f32.mrf.mxu0
    %v10425 = vadd.f32 %v10411, %v10424
    %v10426 = vpop.f32.mrf.mxu0
    %v10427 = vadd.f32 %v10413, %v10426
    %10428 = vdwg.mxu0
    %10429 = vmatpush.bf16.msra.mxu0 %v8324
    %10430 = vmatpush.bf16.msra.mxu0 %v8317
    %10431 = vmatpush.bf16.msra.mxu0 %v8310
    %10432 = vmatpush.bf16.msra.mxu0 %v8303
    %10433 = vmatpush.bf16.msra.mxu0 %v8296
    %10434 = vmatpush.bf16.msra.mxu0 %v8289
    %10435 = vmatpush.bf16.msra.mxu0 %v8282
    %10436 = vmatpush.bf16.msra.mxu0 %v8275
    %10437 = vmatmul.bf16.gmra.mxu0 %v4291
    %v10438 = vpop.f32.mrf.mxu0
    %v10439 = vadd.f32 %v10425, %v10438
    %v10440 = vpop.f32.mrf.mxu0
    %v10441 = vadd.f32 %v10427, %v10440
    %10442 = vdwg.mxu0
    %10443 = vmatpush.bf16.msra.mxu0 %v8380
    %10444 = vmatpush.bf16.msra.mxu0 %v8373
    %10445 = vmatpush.bf16.msra.mxu0 %v8366
    %10446 = vmatpush.bf16.msra.mxu0 %v8359
    %10447 = vmatpush.bf16.msra.mxu0 %v8352
    %10448 = vmatpush.bf16.msra.mxu0 %v8345
    %10449 = vmatpush.bf16.msra.mxu0 %v8338
    %10450 = vmatpush.bf16.msra.mxu0 %v8331
    %10451 = vmatmul.bf16.gmra.mxu0 %v4292
    %v10452 = vpop.f32.mrf.mxu0
    %v10453 = vadd.f32 %v10439, %v10452
    %v10454 = vpop.f32.mrf.mxu0
    %v10455 = vadd.f32 %v10441, %v10454
    %10456 = vdwg.mxu0
    %10457 = vmatpush.bf16.msra.mxu0 %v8436
    %10458 = vmatpush.bf16.msra.mxu0 %v8429
    %10459 = vmatpush.bf16.msra.mxu0 %v8422
    %10460 = vmatpush.bf16.msra.mxu0 %v8415
    %10461 = vmatpush.bf16.msra.mxu0 %v8408
    %10462 = vmatpush.bf16.msra.mxu0 %v8401
    %10463 = vmatpush.bf16.msra.mxu0 %v8394
    %10464 = vmatpush.bf16.msra.mxu0 %v8387
    %10465 = vmatmul.bf16.gmra.mxu0 %v4293
    %v10466 = vpop.f32.mrf.mxu0
    %v10467 = vadd.f32 %v10453, %v10466
    %v10468 = vpop.f32.mrf.mxu0
    %v10469 = vadd.f32 %v10455, %v10468
    %10470 = vdwg.mxu0
    %10471 = vmatpush.bf16.msra.mxu0 %v8492
    %10472 = vmatpush.bf16.msra.mxu0 %v8485
    %10473 = vmatpush.bf16.msra.mxu0 %v8478
    %10474 = vmatpush.bf16.msra.mxu0 %v8471
    %10475 = vmatpush.bf16.msra.mxu0 %v8464
    %10476 = vmatpush.bf16.msra.mxu0 %v8457
    %10477 = vmatpush.bf16.msra.mxu0 %v8450
    %10478 = vmatpush.bf16.msra.mxu0 %v8443
    %10479 = vmatmul.bf16.gmra.mxu0 %v4294
    %v10480 = vpop.f32.mrf.mxu0
    %v10481 = vadd.f32 %v10467, %v10480
    %v10482 = vpop.f32.mrf.mxu0
    %v10483 = vadd.f32 %v10469, %v10482
    %10484 = vdwg.mxu0
    %10485 = vmatpush.bf16.msra.mxu0 %v8548
    %10486 = vmatpush.bf16.msra.mxu0 %v8541
    %10487 = vmatpush.bf16.msra.mxu0 %v8534
    %10488 = vmatpush.bf16.msra.mxu0 %v8527
    %10489 = vmatpush.bf16.msra.mxu0 %v8520
    %10490 = vmatpush.bf16.msra.mxu0 %v8513
    %10491 = vmatpush.bf16.msra.mxu0 %v8506
    %10492 = vmatpush.bf16.msra.mxu0 %v8499
    %10493 = vmatmul.bf16.gmra.mxu0 %v4295
    %v10494 = vpop.f32.mrf.mxu0
    %v10495 = vadd.f32 %v10481, %v10494
    %v10496 = vpop.f32.mrf.mxu0
    %v10497 = vadd.f32 %v10483, %v10496
    %10498 = vdwg.mxu0
    %10499 = vmatpush.bf16.msra.mxu0 %v8604
    %10500 = vmatpush.bf16.msra.mxu0 %v8597
    %10501 = vmatpush.bf16.msra.mxu0 %v8590
    %10502 = vmatpush.bf16.msra.mxu0 %v8583
    %10503 = vmatpush.bf16.msra.mxu0 %v8576
    %10504 = vmatpush.bf16.msra.mxu0 %v8569
    %10505 = vmatpush.bf16.msra.mxu0 %v8562
    %10506 = vmatpush.bf16.msra.mxu0 %v8555
    %10507 = vmatmul.bf16.gmra.mxu0 %v4296
    %v10508 = vpop.f32.mrf.mxu0
    %v10509 = vadd.f32 %v10495, %v10508
    %v10510 = vpop.f32.mrf.mxu0
    %v10511 = vadd.f32 %v10497, %v10510
    %10512 = vdwg.mxu0
    %10513 = vmatpush.bf16.msra.mxu0 %v8660
    %10514 = vmatpush.bf16.msra.mxu0 %v8653
    %10515 = vmatpush.bf16.msra.mxu0 %v8646
    %10516 = vmatpush.bf16.msra.mxu0 %v8639
    %10517 = vmatpush.bf16.msra.mxu0 %v8632
    %10518 = vmatpush.bf16.msra.mxu0 %v8625
    %10519 = vmatpush.bf16.msra.mxu0 %v8618
    %10520 = vmatpush.bf16.msra.mxu0 %v8611
    %10521 = vmatmul.bf16.gmra.mxu0 %v4297
    %v10522 = vpop.f32.mrf.mxu0
    %v10523 = vadd.f32 %v10509, %v10522
    %v10524 = vpop.f32.mrf.mxu0
    %v10525 = vadd.f32 %v10511, %v10524
    %10526 = vdwg.mxu0
    %10527 = vmatpush.bf16.msra.mxu0 %v8716
    %10528 = vmatpush.bf16.msra.mxu0 %v8709
    %10529 = vmatpush.bf16.msra.mxu0 %v8702
    %10530 = vmatpush.bf16.msra.mxu0 %v8695
    %10531 = vmatpush.bf16.msra.mxu0 %v8688
    %10532 = vmatpush.bf16.msra.mxu0 %v8681
    %10533 = vmatpush.bf16.msra.mxu0 %v8674
    %10534 = vmatpush.bf16.msra.mxu0 %v8667
    %10535 = vmatmul.bf16.gmra.mxu0 %v4298
    %v10536 = vpop.f32.mrf.mxu0
    %v10537 = vadd.f32 %v10523, %v10536
    %v10538 = vpop.f32.mrf.mxu0
    %v10539 = vadd.f32 %v10525, %v10538
    %10540 = vdwg.mxu0
    %10541 = vmatpush.bf16.msra.mxu0 %v8772
    %10542 = vmatpush.bf16.msra.mxu0 %v8765
    %10543 = vmatpush.bf16.msra.mxu0 %v8758
    %10544 = vmatpush.bf16.msra.mxu0 %v8751
    %10545 = vmatpush.bf16.msra.mxu0 %v8744
    %10546 = vmatpush.bf16.msra.mxu0 %v8737
    %10547 = vmatpush.bf16.msra.mxu0 %v8730
    %10548 = vmatpush.bf16.msra.mxu0 %v8723
    %10549 = vmatmul.bf16.gmra.mxu0 %v4299
    %v10550 = vpop.f32.mrf.mxu0
    %v10551 = vadd.f32 %v10537, %v10550
    %v10552 = vpop.f32.mrf.mxu0
    %v10553 = vadd.f32 %v10539, %v10552
    %10554 = vdwg.mxu0
    %10555 = vmatpush.bf16.msra.mxu0 %v8828
    %10556 = vmatpush.bf16.msra.mxu0 %v8821
    %10557 = vmatpush.bf16.msra.mxu0 %v8814
    %10558 = vmatpush.bf16.msra.mxu0 %v8807
    %10559 = vmatpush.bf16.msra.mxu0 %v8800
    %10560 = vmatpush.bf16.msra.mxu0 %v8793
    %10561 = vmatpush.bf16.msra.mxu0 %v8786
    %10562 = vmatpush.bf16.msra.mxu0 %v8779
    %10563 = vmatmul.bf16.gmra.mxu0 %v4300
    %v10564 = vpop.f32.mrf.mxu0
    %v10565 = vadd.f32 %v10551, %v10564
    %v10566 = vpop.f32.mrf.mxu0
    %v10567 = vadd.f32 %v10553, %v10566
    %10568 = vdwg.mxu0
    %10569 = vmatpush.bf16.msra.mxu0 %v8884
    %10570 = vmatpush.bf16.msra.mxu0 %v8877
    %10571 = vmatpush.bf16.msra.mxu0 %v8870
    %10572 = vmatpush.bf16.msra.mxu0 %v8863
    %10573 = vmatpush.bf16.msra.mxu0 %v8856
    %10574 = vmatpush.bf16.msra.mxu0 %v8849
    %10575 = vmatpush.bf16.msra.mxu0 %v8842
    %10576 = vmatpush.bf16.msra.mxu0 %v8835
    %10577 = vmatmul.bf16.gmra.mxu0 %v4301
    %v10578 = vpop.f32.mrf.mxu0
    %v10579 = vadd.f32 %v10565, %v10578
    %v10580 = vpop.f32.mrf.mxu0
    %v10581 = vadd.f32 %v10567, %v10580
    %10582 = vdwg.mxu0
    %10583 = vmatpush.bf16.msra.mxu0 %v8940
    %10584 = vmatpush.bf16.msra.mxu0 %v8933
    %10585 = vmatpush.bf16.msra.mxu0 %v8926
    %10586 = vmatpush.bf16.msra.mxu0 %v8919
    %10587 = vmatpush.bf16.msra.mxu0 %v8912
    %10588 = vmatpush.bf16.msra.mxu0 %v8905
    %10589 = vmatpush.bf16.msra.mxu0 %v8898
    %10590 = vmatpush.bf16.msra.mxu0 %v8891
    %10591 = vmatmul.bf16.gmra.mxu0 %v4302
    %v10592 = vpop.f32.mrf.mxu0
    %v10593 = vadd.f32 %v10579, %v10592
    %v10594 = vpop.f32.mrf.mxu0
    %v10595 = vadd.f32 %v10581, %v10594
    %10596 = vdwg.mxu0
    %10597 = vmatpush.bf16.msra.mxu0 %v8996
    %10598 = vmatpush.bf16.msra.mxu0 %v8989
    %10599 = vmatpush.bf16.msra.mxu0 %v8982
    %10600 = vmatpush.bf16.msra.mxu0 %v8975
    %10601 = vmatpush.bf16.msra.mxu0 %v8968
    %10602 = vmatpush.bf16.msra.mxu0 %v8961
    %10603 = vmatpush.bf16.msra.mxu0 %v8954
    %10604 = vmatpush.bf16.msra.mxu0 %v8947
    %10605 = vmatmul.bf16.gmra.mxu0 %v4303
    %v10606 = vpop.f32.mrf.mxu0
    %v10607 = vadd.f32 %v10593, %v10606
    %v10608 = vpop.f32.mrf.mxu0
    %v10609 = vadd.f32 %v10595, %v10608
    %10610 = vdwg.mxu0
    %10611 = vmatpush.bf16.msra.mxu0 %v9052
    %10612 = vmatpush.bf16.msra.mxu0 %v9045
    %10613 = vmatpush.bf16.msra.mxu0 %v9038
    %10614 = vmatpush.bf16.msra.mxu0 %v9031
    %10615 = vmatpush.bf16.msra.mxu0 %v9024
    %10616 = vmatpush.bf16.msra.mxu0 %v9017
    %10617 = vmatpush.bf16.msra.mxu0 %v9010
    %10618 = vmatpush.bf16.msra.mxu0 %v9003
    %10619 = vmatmul.bf16.gmra.mxu0 %v4304
    %v10620 = vpop.f32.mrf.mxu0
    %v10621 = vadd.f32 %v10607, %v10620
    %v10622 = vpop.f32.mrf.mxu0
    %v10623 = vadd.f32 %v10609, %v10622
    %10624 = vdwg.mxu0
    %10625 = vmatpush.bf16.msra.mxu0 %v8213
    %10626 = vmatpush.bf16.msra.mxu0 %v8206
    %10627 = vmatpush.bf16.msra.mxu0 %v8199
    %10628 = vmatpush.bf16.msra.mxu0 %v8192
    %10629 = vmatpush.bf16.msra.mxu0 %v8185
    %10630 = vmatpush.bf16.msra.mxu0 %v8178
    %10631 = vmatpush.bf16.msra.mxu0 %v8171
    %10632 = vmatpush.bf16.msra.mxu0 %v8164
    %10633 = vmatmul.bf16.gmra.mxu0 %v4289
    %v10634 = vpop.f32.mrf.mxu0
    %v10635 = vadd.f32 %v5334, %v10634
    %v10636 = vpop.f32.mrf.mxu0
    %v10637 = vadd.f32 %v5334, %v10636
    %10638 = vdwg.mxu0
    %10639 = vmatpush.bf16.msra.mxu0 %v8269
    %10640 = vmatpush.bf16.msra.mxu0 %v8262
    %10641 = vmatpush.bf16.msra.mxu0 %v8255
    %10642 = vmatpush.bf16.msra.mxu0 %v8248
    %10643 = vmatpush.bf16.msra.mxu0 %v8241
    %10644 = vmatpush.bf16.msra.mxu0 %v8234
    %10645 = vmatpush.bf16.msra.mxu0 %v8227
    %10646 = vmatpush.bf16.msra.mxu0 %v8220
    %10647 = vmatmul.bf16.gmra.mxu0 %v4290
    %v10648 = vpop.f32.mrf.mxu0
    %v10649 = vadd.f32 %v10635, %v10648
    %v10650 = vpop.f32.mrf.mxu0
    %v10651 = vadd.f32 %v10637, %v10650
    %10652 = vdwg.mxu0
    %10653 = vmatpush.bf16.msra.mxu0 %v8325
    %10654 = vmatpush.bf16.msra.mxu0 %v8318
    %10655 = vmatpush.bf16.msra.mxu0 %v8311
    %10656 = vmatpush.bf16.msra.mxu0 %v8304
    %10657 = vmatpush.bf16.msra.mxu0 %v8297
    %10658 = vmatpush.bf16.msra.mxu0 %v8290
    %10659 = vmatpush.bf16.msra.mxu0 %v8283
    %10660 = vmatpush.bf16.msra.mxu0 %v8276
    %10661 = vmatmul.bf16.gmra.mxu0 %v4291
    %v10662 = vpop.f32.mrf.mxu0
    %v10663 = vadd.f32 %v10649, %v10662
    %v10664 = vpop.f32.mrf.mxu0
    %v10665 = vadd.f32 %v10651, %v10664
    %10666 = vdwg.mxu0
    %10667 = vmatpush.bf16.msra.mxu0 %v8381
    %10668 = vmatpush.bf16.msra.mxu0 %v8374
    %10669 = vmatpush.bf16.msra.mxu0 %v8367
    %10670 = vmatpush.bf16.msra.mxu0 %v8360
    %10671 = vmatpush.bf16.msra.mxu0 %v8353
    %10672 = vmatpush.bf16.msra.mxu0 %v8346
    %10673 = vmatpush.bf16.msra.mxu0 %v8339
    %10674 = vmatpush.bf16.msra.mxu0 %v8332
    %10675 = vmatmul.bf16.gmra.mxu0 %v4292
    %v10676 = vpop.f32.mrf.mxu0
    %v10677 = vadd.f32 %v10663, %v10676
    %v10678 = vpop.f32.mrf.mxu0
    %v10679 = vadd.f32 %v10665, %v10678
    %10680 = vdwg.mxu0
    %10681 = vmatpush.bf16.msra.mxu0 %v8437
    %10682 = vmatpush.bf16.msra.mxu0 %v8430
    %10683 = vmatpush.bf16.msra.mxu0 %v8423
    %10684 = vmatpush.bf16.msra.mxu0 %v8416
    %10685 = vmatpush.bf16.msra.mxu0 %v8409
    %10686 = vmatpush.bf16.msra.mxu0 %v8402
    %10687 = vmatpush.bf16.msra.mxu0 %v8395
    %10688 = vmatpush.bf16.msra.mxu0 %v8388
    %10689 = vmatmul.bf16.gmra.mxu0 %v4293
    %v10690 = vpop.f32.mrf.mxu0
    %v10691 = vadd.f32 %v10677, %v10690
    %v10692 = vpop.f32.mrf.mxu0
    %v10693 = vadd.f32 %v10679, %v10692
    %10694 = vdwg.mxu0
    %10695 = vmatpush.bf16.msra.mxu0 %v8493
    %10696 = vmatpush.bf16.msra.mxu0 %v8486
    %10697 = vmatpush.bf16.msra.mxu0 %v8479
    %10698 = vmatpush.bf16.msra.mxu0 %v8472
    %10699 = vmatpush.bf16.msra.mxu0 %v8465
    %10700 = vmatpush.bf16.msra.mxu0 %v8458
    %10701 = vmatpush.bf16.msra.mxu0 %v8451
    %10702 = vmatpush.bf16.msra.mxu0 %v8444
    %10703 = vmatmul.bf16.gmra.mxu0 %v4294
    %v10704 = vpop.f32.mrf.mxu0
    %v10705 = vadd.f32 %v10691, %v10704
    %v10706 = vpop.f32.mrf.mxu0
    %v10707 = vadd.f32 %v10693, %v10706
    %10708 = vdwg.mxu0
    %10709 = vmatpush.bf16.msra.mxu0 %v8549
    %10710 = vmatpush.bf16.msra.mxu0 %v8542
    %10711 = vmatpush.bf16.msra.mxu0 %v8535
    %10712 = vmatpush.bf16.msra.mxu0 %v8528
    %10713 = vmatpush.bf16.msra.mxu0 %v8521
    %10714 = vmatpush.bf16.msra.mxu0 %v8514
    %10715 = vmatpush.bf16.msra.mxu0 %v8507
    %10716 = vmatpush.bf16.msra.mxu0 %v8500
    %10717 = vmatmul.bf16.gmra.mxu0 %v4295
    %v10718 = vpop.f32.mrf.mxu0
    %v10719 = vadd.f32 %v10705, %v10718
    %v10720 = vpop.f32.mrf.mxu0
    %v10721 = vadd.f32 %v10707, %v10720
    %10722 = vdwg.mxu0
    %10723 = vmatpush.bf16.msra.mxu0 %v8605
    %10724 = vmatpush.bf16.msra.mxu0 %v8598
    %10725 = vmatpush.bf16.msra.mxu0 %v8591
    %10726 = vmatpush.bf16.msra.mxu0 %v8584
    %10727 = vmatpush.bf16.msra.mxu0 %v8577
    %10728 = vmatpush.bf16.msra.mxu0 %v8570
    %10729 = vmatpush.bf16.msra.mxu0 %v8563
    %10730 = vmatpush.bf16.msra.mxu0 %v8556
    %10731 = vmatmul.bf16.gmra.mxu0 %v4296
    %v10732 = vpop.f32.mrf.mxu0
    %v10733 = vadd.f32 %v10719, %v10732
    %v10734 = vpop.f32.mrf.mxu0
    %v10735 = vadd.f32 %v10721, %v10734
    %10736 = vdwg.mxu0
    %10737 = vmatpush.bf16.msra.mxu0 %v8661
    %10738 = vmatpush.bf16.msra.mxu0 %v8654
    %10739 = vmatpush.bf16.msra.mxu0 %v8647
    %10740 = vmatpush.bf16.msra.mxu0 %v8640
    %10741 = vmatpush.bf16.msra.mxu0 %v8633
    %10742 = vmatpush.bf16.msra.mxu0 %v8626
    %10743 = vmatpush.bf16.msra.mxu0 %v8619
    %10744 = vmatpush.bf16.msra.mxu0 %v8612
    %10745 = vmatmul.bf16.gmra.mxu0 %v4297
    %v10746 = vpop.f32.mrf.mxu0
    %v10747 = vadd.f32 %v10733, %v10746
    %v10748 = vpop.f32.mrf.mxu0
    %v10749 = vadd.f32 %v10735, %v10748
    %10750 = vdwg.mxu0
    %10751 = vmatpush.bf16.msra.mxu0 %v8717
    %10752 = vmatpush.bf16.msra.mxu0 %v8710
    %10753 = vmatpush.bf16.msra.mxu0 %v8703
    %10754 = vmatpush.bf16.msra.mxu0 %v8696
    %10755 = vmatpush.bf16.msra.mxu0 %v8689
    %10756 = vmatpush.bf16.msra.mxu0 %v8682
    %10757 = vmatpush.bf16.msra.mxu0 %v8675
    %10758 = vmatpush.bf16.msra.mxu0 %v8668
    %10759 = vmatmul.bf16.gmra.mxu0 %v4298
    %v10760 = vpop.f32.mrf.mxu0
    %v10761 = vadd.f32 %v10747, %v10760
    %v10762 = vpop.f32.mrf.mxu0
    %v10763 = vadd.f32 %v10749, %v10762
    %10764 = vdwg.mxu0
    %10765 = vmatpush.bf16.msra.mxu0 %v8773
    %10766 = vmatpush.bf16.msra.mxu0 %v8766
    %10767 = vmatpush.bf16.msra.mxu0 %v8759
    %10768 = vmatpush.bf16.msra.mxu0 %v8752
    %10769 = vmatpush.bf16.msra.mxu0 %v8745
    %10770 = vmatpush.bf16.msra.mxu0 %v8738
    %10771 = vmatpush.bf16.msra.mxu0 %v8731
    %10772 = vmatpush.bf16.msra.mxu0 %v8724
    %10773 = vmatmul.bf16.gmra.mxu0 %v4299
    %v10774 = vpop.f32.mrf.mxu0
    %v10775 = vadd.f32 %v10761, %v10774
    %v10776 = vpop.f32.mrf.mxu0
    %v10777 = vadd.f32 %v10763, %v10776
    %10778 = vdwg.mxu0
    %10779 = vmatpush.bf16.msra.mxu0 %v8829
    %10780 = vmatpush.bf16.msra.mxu0 %v8822
    %10781 = vmatpush.bf16.msra.mxu0 %v8815
    %10782 = vmatpush.bf16.msra.mxu0 %v8808
    %10783 = vmatpush.bf16.msra.mxu0 %v8801
    %10784 = vmatpush.bf16.msra.mxu0 %v8794
    %10785 = vmatpush.bf16.msra.mxu0 %v8787
    %10786 = vmatpush.bf16.msra.mxu0 %v8780
    %10787 = vmatmul.bf16.gmra.mxu0 %v4300
    %v10788 = vpop.f32.mrf.mxu0
    %v10789 = vadd.f32 %v10775, %v10788
    %v10790 = vpop.f32.mrf.mxu0
    %v10791 = vadd.f32 %v10777, %v10790
    %10792 = vdwg.mxu0
    %10793 = vmatpush.bf16.msra.mxu0 %v8885
    %10794 = vmatpush.bf16.msra.mxu0 %v8878
    %10795 = vmatpush.bf16.msra.mxu0 %v8871
    %10796 = vmatpush.bf16.msra.mxu0 %v8864
    %10797 = vmatpush.bf16.msra.mxu0 %v8857
    %10798 = vmatpush.bf16.msra.mxu0 %v8850
    %10799 = vmatpush.bf16.msra.mxu0 %v8843
    %10800 = vmatpush.bf16.msra.mxu0 %v8836
    %10801 = vmatmul.bf16.gmra.mxu0 %v4301
    %v10802 = vpop.f32.mrf.mxu0
    %v10803 = vadd.f32 %v10789, %v10802
    %v10804 = vpop.f32.mrf.mxu0
    %v10805 = vadd.f32 %v10791, %v10804
    %10806 = vdwg.mxu0
    %10807 = vmatpush.bf16.msra.mxu0 %v8941
    %10808 = vmatpush.bf16.msra.mxu0 %v8934
    %10809 = vmatpush.bf16.msra.mxu0 %v8927
    %10810 = vmatpush.bf16.msra.mxu0 %v8920
    %10811 = vmatpush.bf16.msra.mxu0 %v8913
    %10812 = vmatpush.bf16.msra.mxu0 %v8906
    %10813 = vmatpush.bf16.msra.mxu0 %v8899
    %10814 = vmatpush.bf16.msra.mxu0 %v8892
    %10815 = vmatmul.bf16.gmra.mxu0 %v4302
    %v10816 = vpop.f32.mrf.mxu0
    %v10817 = vadd.f32 %v10803, %v10816
    %v10818 = vpop.f32.mrf.mxu0
    %v10819 = vadd.f32 %v10805, %v10818
    %10820 = vdwg.mxu0
    %10821 = vmatpush.bf16.msra.mxu0 %v8997
    %10822 = vmatpush.bf16.msra.mxu0 %v8990
    %10823 = vmatpush.bf16.msra.mxu0 %v8983
    %10824 = vmatpush.bf16.msra.mxu0 %v8976
    %10825 = vmatpush.bf16.msra.mxu0 %v8969
    %10826 = vmatpush.bf16.msra.mxu0 %v8962
    %10827 = vmatpush.bf16.msra.mxu0 %v8955
    %10828 = vmatpush.bf16.msra.mxu0 %v8948
    %10829 = vmatmul.bf16.gmra.mxu0 %v4303
    %v10830 = vpop.f32.mrf.mxu0
    %v10831 = vadd.f32 %v10817, %v10830
    %v10832 = vpop.f32.mrf.mxu0
    %v10833 = vadd.f32 %v10819, %v10832
    %10834 = vdwg.mxu0
    %10835 = vmatpush.bf16.msra.mxu0 %v9053
    %10836 = vmatpush.bf16.msra.mxu0 %v9046
    %10837 = vmatpush.bf16.msra.mxu0 %v9039
    %10838 = vmatpush.bf16.msra.mxu0 %v9032
    %10839 = vmatpush.bf16.msra.mxu0 %v9025
    %10840 = vmatpush.bf16.msra.mxu0 %v9018
    %10841 = vmatpush.bf16.msra.mxu0 %v9011
    %10842 = vmatpush.bf16.msra.mxu0 %v9004
    %10843 = vmatmul.bf16.gmra.mxu0 %v4304
    %v10844 = vpop.f32.mrf.mxu0
    %v10845 = vadd.f32 %v10831, %v10844
    %v10846 = vpop.f32.mrf.mxu0
    %v10847 = vadd.f32 %v10833, %v10846
    %10848 = vdwg.mxu0
    %10849 = vmatpush.bf16.msra.mxu0 %v8214
    %10850 = vmatpush.bf16.msra.mxu0 %v8207
    %10851 = vmatpush.bf16.msra.mxu0 %v8200
    %10852 = vmatpush.bf16.msra.mxu0 %v8193
    %10853 = vmatpush.bf16.msra.mxu0 %v8186
    %10854 = vmatpush.bf16.msra.mxu0 %v8179
    %10855 = vmatpush.bf16.msra.mxu0 %v8172
    %10856 = vmatpush.bf16.msra.mxu0 %v8165
    %10857 = vmatmul.bf16.gmra.mxu0 %v4289
    %v10858 = vpop.f32.mrf.mxu0
    %v10859 = vadd.f32 %v5335, %v10858
    %v10860 = vpop.f32.mrf.mxu0
    %v10861 = vadd.f32 %v5335, %v10860
    %10862 = vdwg.mxu0
    %10863 = vmatpush.bf16.msra.mxu0 %v8270
    %10864 = vmatpush.bf16.msra.mxu0 %v8263
    %10865 = vmatpush.bf16.msra.mxu0 %v8256
    %10866 = vmatpush.bf16.msra.mxu0 %v8249
    %10867 = vmatpush.bf16.msra.mxu0 %v8242
    %10868 = vmatpush.bf16.msra.mxu0 %v8235
    %10869 = vmatpush.bf16.msra.mxu0 %v8228
    %10870 = vmatpush.bf16.msra.mxu0 %v8221
    %10871 = vmatmul.bf16.gmra.mxu0 %v4290
    %v10872 = vpop.f32.mrf.mxu0
    %v10873 = vadd.f32 %v10859, %v10872
    %v10874 = vpop.f32.mrf.mxu0
    %v10875 = vadd.f32 %v10861, %v10874
    %10876 = vdwg.mxu0
    %10877 = vmatpush.bf16.msra.mxu0 %v8326
    %10878 = vmatpush.bf16.msra.mxu0 %v8319
    %10879 = vmatpush.bf16.msra.mxu0 %v8312
    %10880 = vmatpush.bf16.msra.mxu0 %v8305
    %10881 = vmatpush.bf16.msra.mxu0 %v8298
    %10882 = vmatpush.bf16.msra.mxu0 %v8291
    %10883 = vmatpush.bf16.msra.mxu0 %v8284
    %10884 = vmatpush.bf16.msra.mxu0 %v8277
    %10885 = vmatmul.bf16.gmra.mxu0 %v4291
    %v10886 = vpop.f32.mrf.mxu0
    %v10887 = vadd.f32 %v10873, %v10886
    %v10888 = vpop.f32.mrf.mxu0
    %v10889 = vadd.f32 %v10875, %v10888
    %10890 = vdwg.mxu0
    %10891 = vmatpush.bf16.msra.mxu0 %v8382
    %10892 = vmatpush.bf16.msra.mxu0 %v8375
    %10893 = vmatpush.bf16.msra.mxu0 %v8368
    %10894 = vmatpush.bf16.msra.mxu0 %v8361
    %10895 = vmatpush.bf16.msra.mxu0 %v8354
    %10896 = vmatpush.bf16.msra.mxu0 %v8347
    %10897 = vmatpush.bf16.msra.mxu0 %v8340
    %10898 = vmatpush.bf16.msra.mxu0 %v8333
    %10899 = vmatmul.bf16.gmra.mxu0 %v4292
    %v10900 = vpop.f32.mrf.mxu0
    %v10901 = vadd.f32 %v10887, %v10900
    %v10902 = vpop.f32.mrf.mxu0
    %v10903 = vadd.f32 %v10889, %v10902
    %10904 = vdwg.mxu0
    %10905 = vmatpush.bf16.msra.mxu0 %v8438
    %10906 = vmatpush.bf16.msra.mxu0 %v8431
    %10907 = vmatpush.bf16.msra.mxu0 %v8424
    %10908 = vmatpush.bf16.msra.mxu0 %v8417
    %10909 = vmatpush.bf16.msra.mxu0 %v8410
    %10910 = vmatpush.bf16.msra.mxu0 %v8403
    %10911 = vmatpush.bf16.msra.mxu0 %v8396
    %10912 = vmatpush.bf16.msra.mxu0 %v8389
    %10913 = vmatmul.bf16.gmra.mxu0 %v4293
    %v10914 = vpop.f32.mrf.mxu0
    %v10915 = vadd.f32 %v10901, %v10914
    %v10916 = vpop.f32.mrf.mxu0
    %v10917 = vadd.f32 %v10903, %v10916
    %10918 = vdwg.mxu0
    %10919 = vmatpush.bf16.msra.mxu0 %v8494
    %10920 = vmatpush.bf16.msra.mxu0 %v8487
    %10921 = vmatpush.bf16.msra.mxu0 %v8480
    %10922 = vmatpush.bf16.msra.mxu0 %v8473
    %10923 = vmatpush.bf16.msra.mxu0 %v8466
    %10924 = vmatpush.bf16.msra.mxu0 %v8459
    %10925 = vmatpush.bf16.msra.mxu0 %v8452
    %10926 = vmatpush.bf16.msra.mxu0 %v8445
    %10927 = vmatmul.bf16.gmra.mxu0 %v4294
    %v10928 = vpop.f32.mrf.mxu0
    %v10929 = vadd.f32 %v10915, %v10928
    %v10930 = vpop.f32.mrf.mxu0
    %v10931 = vadd.f32 %v10917, %v10930
    %10932 = vdwg.mxu0
    %10933 = vmatpush.bf16.msra.mxu0 %v8550
    %10934 = vmatpush.bf16.msra.mxu0 %v8543
    %10935 = vmatpush.bf16.msra.mxu0 %v8536
    %10936 = vmatpush.bf16.msra.mxu0 %v8529
    %10937 = vmatpush.bf16.msra.mxu0 %v8522
    %10938 = vmatpush.bf16.msra.mxu0 %v8515
    %10939 = vmatpush.bf16.msra.mxu0 %v8508
    %10940 = vmatpush.bf16.msra.mxu0 %v8501
    %10941 = vmatmul.bf16.gmra.mxu0 %v4295
    %v10942 = vpop.f32.mrf.mxu0
    %v10943 = vadd.f32 %v10929, %v10942
    %v10944 = vpop.f32.mrf.mxu0
    %v10945 = vadd.f32 %v10931, %v10944
    %10946 = vdwg.mxu0
    %10947 = vmatpush.bf16.msra.mxu0 %v8606
    %10948 = vmatpush.bf16.msra.mxu0 %v8599
    %10949 = vmatpush.bf16.msra.mxu0 %v8592
    %10950 = vmatpush.bf16.msra.mxu0 %v8585
    %10951 = vmatpush.bf16.msra.mxu0 %v8578
    %10952 = vmatpush.bf16.msra.mxu0 %v8571
    %10953 = vmatpush.bf16.msra.mxu0 %v8564
    %10954 = vmatpush.bf16.msra.mxu0 %v8557
    %10955 = vmatmul.bf16.gmra.mxu0 %v4296
    %v10956 = vpop.f32.mrf.mxu0
    %v10957 = vadd.f32 %v10943, %v10956
    %v10958 = vpop.f32.mrf.mxu0
    %v10959 = vadd.f32 %v10945, %v10958
    %10960 = vdwg.mxu0
    %10961 = vmatpush.bf16.msra.mxu0 %v8662
    %10962 = vmatpush.bf16.msra.mxu0 %v8655
    %10963 = vmatpush.bf16.msra.mxu0 %v8648
    %10964 = vmatpush.bf16.msra.mxu0 %v8641
    %10965 = vmatpush.bf16.msra.mxu0 %v8634
    %10966 = vmatpush.bf16.msra.mxu0 %v8627
    %10967 = vmatpush.bf16.msra.mxu0 %v8620
    %10968 = vmatpush.bf16.msra.mxu0 %v8613
    %10969 = vmatmul.bf16.gmra.mxu0 %v4297
    %v10970 = vpop.f32.mrf.mxu0
    %v10971 = vadd.f32 %v10957, %v10970
    %v10972 = vpop.f32.mrf.mxu0
    %v10973 = vadd.f32 %v10959, %v10972
    %10974 = vdwg.mxu0
    %10975 = vmatpush.bf16.msra.mxu0 %v8718
    %10976 = vmatpush.bf16.msra.mxu0 %v8711
    %10977 = vmatpush.bf16.msra.mxu0 %v8704
    %10978 = vmatpush.bf16.msra.mxu0 %v8697
    %10979 = vmatpush.bf16.msra.mxu0 %v8690
    %10980 = vmatpush.bf16.msra.mxu0 %v8683
    %10981 = vmatpush.bf16.msra.mxu0 %v8676
    %10982 = vmatpush.bf16.msra.mxu0 %v8669
    %10983 = vmatmul.bf16.gmra.mxu0 %v4298
    %v10984 = vpop.f32.mrf.mxu0
    %v10985 = vadd.f32 %v10971, %v10984
    %v10986 = vpop.f32.mrf.mxu0
    %v10987 = vadd.f32 %v10973, %v10986
    %10988 = vdwg.mxu0
    %10989 = vmatpush.bf16.msra.mxu0 %v8774
    %10990 = vmatpush.bf16.msra.mxu0 %v8767
    %10991 = vmatpush.bf16.msra.mxu0 %v8760
    %10992 = vmatpush.bf16.msra.mxu0 %v8753
    %10993 = vmatpush.bf16.msra.mxu0 %v8746
    %10994 = vmatpush.bf16.msra.mxu0 %v8739
    %10995 = vmatpush.bf16.msra.mxu0 %v8732
    %10996 = vmatpush.bf16.msra.mxu0 %v8725
    %10997 = vmatmul.bf16.gmra.mxu0 %v4299
    %v10998 = vpop.f32.mrf.mxu0
    %v10999 = vadd.f32 %v10985, %v10998
    %v11000 = vpop.f32.mrf.mxu0
    %v11001 = vadd.f32 %v10987, %v11000
    %11002 = vdwg.mxu0
    %11003 = vmatpush.bf16.msra.mxu0 %v8830
    %11004 = vmatpush.bf16.msra.mxu0 %v8823
    %11005 = vmatpush.bf16.msra.mxu0 %v8816
    %11006 = vmatpush.bf16.msra.mxu0 %v8809
    %11007 = vmatpush.bf16.msra.mxu0 %v8802
    %11008 = vmatpush.bf16.msra.mxu0 %v8795
    %11009 = vmatpush.bf16.msra.mxu0 %v8788
    %11010 = vmatpush.bf16.msra.mxu0 %v8781
    %11011 = vmatmul.bf16.gmra.mxu0 %v4300
    %v11012 = vpop.f32.mrf.mxu0
    %v11013 = vadd.f32 %v10999, %v11012
    %v11014 = vpop.f32.mrf.mxu0
    %v11015 = vadd.f32 %v11001, %v11014
    %11016 = vdwg.mxu0
    %11017 = vmatpush.bf16.msra.mxu0 %v8886
    %11018 = vmatpush.bf16.msra.mxu0 %v8879
    %11019 = vmatpush.bf16.msra.mxu0 %v8872
    %11020 = vmatpush.bf16.msra.mxu0 %v8865
    %11021 = vmatpush.bf16.msra.mxu0 %v8858
    %11022 = vmatpush.bf16.msra.mxu0 %v8851
    %11023 = vmatpush.bf16.msra.mxu0 %v8844
    %11024 = vmatpush.bf16.msra.mxu0 %v8837
    %11025 = vmatmul.bf16.gmra.mxu0 %v4301
    %v11026 = vpop.f32.mrf.mxu0
    %v11027 = vadd.f32 %v11013, %v11026
    %v11028 = vpop.f32.mrf.mxu0
    %v11029 = vadd.f32 %v11015, %v11028
    %11030 = vdwg.mxu0
    %11031 = vmatpush.bf16.msra.mxu0 %v8942
    %11032 = vmatpush.bf16.msra.mxu0 %v8935
    %11033 = vmatpush.bf16.msra.mxu0 %v8928
    %11034 = vmatpush.bf16.msra.mxu0 %v8921
    %11035 = vmatpush.bf16.msra.mxu0 %v8914
    %11036 = vmatpush.bf16.msra.mxu0 %v8907
    %11037 = vmatpush.bf16.msra.mxu0 %v8900
    %11038 = vmatpush.bf16.msra.mxu0 %v8893
    %11039 = vmatmul.bf16.gmra.mxu0 %v4302
    %v11040 = vpop.f32.mrf.mxu0
    %v11041 = vadd.f32 %v11027, %v11040
    %v11042 = vpop.f32.mrf.mxu0
    %v11043 = vadd.f32 %v11029, %v11042
    %11044 = vdwg.mxu0
    %11045 = vmatpush.bf16.msra.mxu0 %v8998
    %11046 = vmatpush.bf16.msra.mxu0 %v8991
    %11047 = vmatpush.bf16.msra.mxu0 %v8984
    %11048 = vmatpush.bf16.msra.mxu0 %v8977
    %11049 = vmatpush.bf16.msra.mxu0 %v8970
    %11050 = vmatpush.bf16.msra.mxu0 %v8963
    %11051 = vmatpush.bf16.msra.mxu0 %v8956
    %11052 = vmatpush.bf16.msra.mxu0 %v8949
    %11053 = vmatmul.bf16.gmra.mxu0 %v4303
    %v11054 = vpop.f32.mrf.mxu0
    %v11055 = vadd.f32 %v11041, %v11054
    %v11056 = vpop.f32.mrf.mxu0
    %v11057 = vadd.f32 %v11043, %v11056
    %11058 = vdwg.mxu0
    %11059 = vmatpush.bf16.msra.mxu0 %v9054
    %11060 = vmatpush.bf16.msra.mxu0 %v9047
    %11061 = vmatpush.bf16.msra.mxu0 %v9040
    %11062 = vmatpush.bf16.msra.mxu0 %v9033
    %11063 = vmatpush.bf16.msra.mxu0 %v9026
    %11064 = vmatpush.bf16.msra.mxu0 %v9019
    %11065 = vmatpush.bf16.msra.mxu0 %v9012
    %11066 = vmatpush.bf16.msra.mxu0 %v9005
    %11067 = vmatmul.bf16.gmra.mxu0 %v4304
    %v11068 = vpop.f32.mrf.mxu0
    %v11069 = vadd.f32 %v11055, %v11068
    %v11070 = vpop.f32.mrf.mxu0
    %v11071 = vadd.f32 %v11057, %v11070
    %11072 = vdwg.mxu0
    %11073 = vmatpush.bf16.msra.mxu0 %v8215
    %11074 = vmatpush.bf16.msra.mxu0 %v8208
    %11075 = vmatpush.bf16.msra.mxu0 %v8201
    %11076 = vmatpush.bf16.msra.mxu0 %v8194
    %11077 = vmatpush.bf16.msra.mxu0 %v8187
    %11078 = vmatpush.bf16.msra.mxu0 %v8180
    %11079 = vmatpush.bf16.msra.mxu0 %v8173
    %11080 = vmatpush.bf16.msra.mxu0 %v8166
    %11081 = vmatmul.bf16.gmra.mxu0 %v4289
    %v11082 = vpop.f32.mrf.mxu0
    %v11083 = vadd.f32 %v5336, %v11082
    %v11084 = vpop.f32.mrf.mxu0
    %v11085 = vadd.f32 %v5336, %v11084
    %11086 = vdwg.mxu0
    %11087 = vmatpush.bf16.msra.mxu0 %v8271
    %11088 = vmatpush.bf16.msra.mxu0 %v8264
    %11089 = vmatpush.bf16.msra.mxu0 %v8257
    %11090 = vmatpush.bf16.msra.mxu0 %v8250
    %11091 = vmatpush.bf16.msra.mxu0 %v8243
    %11092 = vmatpush.bf16.msra.mxu0 %v8236
    %11093 = vmatpush.bf16.msra.mxu0 %v8229
    %11094 = vmatpush.bf16.msra.mxu0 %v8222
    %11095 = vmatmul.bf16.gmra.mxu0 %v4290
    %v11096 = vpop.f32.mrf.mxu0
    %v11097 = vadd.f32 %v11083, %v11096
    %v11098 = vpop.f32.mrf.mxu0
    %v11099 = vadd.f32 %v11085, %v11098
    %11100 = vdwg.mxu0
    %11101 = vmatpush.bf16.msra.mxu0 %v8327
    %11102 = vmatpush.bf16.msra.mxu0 %v8320
    %11103 = vmatpush.bf16.msra.mxu0 %v8313
    %11104 = vmatpush.bf16.msra.mxu0 %v8306
    %11105 = vmatpush.bf16.msra.mxu0 %v8299
    %11106 = vmatpush.bf16.msra.mxu0 %v8292
    %11107 = vmatpush.bf16.msra.mxu0 %v8285
    %11108 = vmatpush.bf16.msra.mxu0 %v8278
    %11109 = vmatmul.bf16.gmra.mxu0 %v4291
    %v11110 = vpop.f32.mrf.mxu0
    %v11111 = vadd.f32 %v11097, %v11110
    %v11112 = vpop.f32.mrf.mxu0
    %v11113 = vadd.f32 %v11099, %v11112
    %11114 = vdwg.mxu0
    %11115 = vmatpush.bf16.msra.mxu0 %v8383
    %11116 = vmatpush.bf16.msra.mxu0 %v8376
    %11117 = vmatpush.bf16.msra.mxu0 %v8369
    %11118 = vmatpush.bf16.msra.mxu0 %v8362
    %11119 = vmatpush.bf16.msra.mxu0 %v8355
    %11120 = vmatpush.bf16.msra.mxu0 %v8348
    %11121 = vmatpush.bf16.msra.mxu0 %v8341
    %11122 = vmatpush.bf16.msra.mxu0 %v8334
    %11123 = vmatmul.bf16.gmra.mxu0 %v4292
    %v11124 = vpop.f32.mrf.mxu0
    %v11125 = vadd.f32 %v11111, %v11124
    %v11126 = vpop.f32.mrf.mxu0
    %v11127 = vadd.f32 %v11113, %v11126
    %11128 = vdwg.mxu0
    %11129 = vmatpush.bf16.msra.mxu0 %v8439
    %11130 = vmatpush.bf16.msra.mxu0 %v8432
    %11131 = vmatpush.bf16.msra.mxu0 %v8425
    %11132 = vmatpush.bf16.msra.mxu0 %v8418
    %11133 = vmatpush.bf16.msra.mxu0 %v8411
    %11134 = vmatpush.bf16.msra.mxu0 %v8404
    %11135 = vmatpush.bf16.msra.mxu0 %v8397
    %11136 = vmatpush.bf16.msra.mxu0 %v8390
    %11137 = vmatmul.bf16.gmra.mxu0 %v4293
    %v11138 = vpop.f32.mrf.mxu0
    %v11139 = vadd.f32 %v11125, %v11138
    %v11140 = vpop.f32.mrf.mxu0
    %v11141 = vadd.f32 %v11127, %v11140
    %11142 = vdwg.mxu0
    %11143 = vmatpush.bf16.msra.mxu0 %v8495
    %11144 = vmatpush.bf16.msra.mxu0 %v8488
    %11145 = vmatpush.bf16.msra.mxu0 %v8481
    %11146 = vmatpush.bf16.msra.mxu0 %v8474
    %11147 = vmatpush.bf16.msra.mxu0 %v8467
    %11148 = vmatpush.bf16.msra.mxu0 %v8460
    %11149 = vmatpush.bf16.msra.mxu0 %v8453
    %11150 = vmatpush.bf16.msra.mxu0 %v8446
    %11151 = vmatmul.bf16.gmra.mxu0 %v4294
    %v11152 = vpop.f32.mrf.mxu0
    %v11153 = vadd.f32 %v11139, %v11152
    %v11154 = vpop.f32.mrf.mxu0
    %v11155 = vadd.f32 %v11141, %v11154
    %11156 = vdwg.mxu0
    %11157 = vmatpush.bf16.msra.mxu0 %v8551
    %11158 = vmatpush.bf16.msra.mxu0 %v8544
    %11159 = vmatpush.bf16.msra.mxu0 %v8537
    %11160 = vmatpush.bf16.msra.mxu0 %v8530
    %11161 = vmatpush.bf16.msra.mxu0 %v8523
    %11162 = vmatpush.bf16.msra.mxu0 %v8516
    %11163 = vmatpush.bf16.msra.mxu0 %v8509
    %11164 = vmatpush.bf16.msra.mxu0 %v8502
    %11165 = vmatmul.bf16.gmra.mxu0 %v4295
    %v11166 = vpop.f32.mrf.mxu0
    %v11167 = vadd.f32 %v11153, %v11166
    %v11168 = vpop.f32.mrf.mxu0
    %v11169 = vadd.f32 %v11155, %v11168
    %11170 = vdwg.mxu0
    %11171 = vmatpush.bf16.msra.mxu0 %v8607
    %11172 = vmatpush.bf16.msra.mxu0 %v8600
    %11173 = vmatpush.bf16.msra.mxu0 %v8593
    %11174 = vmatpush.bf16.msra.mxu0 %v8586
    %11175 = vmatpush.bf16.msra.mxu0 %v8579
    %11176 = vmatpush.bf16.msra.mxu0 %v8572
    %11177 = vmatpush.bf16.msra.mxu0 %v8565
    %11178 = vmatpush.bf16.msra.mxu0 %v8558
    %11179 = vmatmul.bf16.gmra.mxu0 %v4296
    %v11180 = vpop.f32.mrf.mxu0
    %v11181 = vadd.f32 %v11167, %v11180
    %v11182 = vpop.f32.mrf.mxu0
    %v11183 = vadd.f32 %v11169, %v11182
    %11184 = vdwg.mxu0
    %11185 = vmatpush.bf16.msra.mxu0 %v8663
    %11186 = vmatpush.bf16.msra.mxu0 %v8656
    %11187 = vmatpush.bf16.msra.mxu0 %v8649
    %11188 = vmatpush.bf16.msra.mxu0 %v8642
    %11189 = vmatpush.bf16.msra.mxu0 %v8635
    %11190 = vmatpush.bf16.msra.mxu0 %v8628
    %11191 = vmatpush.bf16.msra.mxu0 %v8621
    %11192 = vmatpush.bf16.msra.mxu0 %v8614
    %11193 = vmatmul.bf16.gmra.mxu0 %v4297
    %v11194 = vpop.f32.mrf.mxu0
    %v11195 = vadd.f32 %v11181, %v11194
    %v11196 = vpop.f32.mrf.mxu0
    %v11197 = vadd.f32 %v11183, %v11196
    %11198 = vdwg.mxu0
    %11199 = vmatpush.bf16.msra.mxu0 %v8719
    %11200 = vmatpush.bf16.msra.mxu0 %v8712
    %11201 = vmatpush.bf16.msra.mxu0 %v8705
    %11202 = vmatpush.bf16.msra.mxu0 %v8698
    %11203 = vmatpush.bf16.msra.mxu0 %v8691
    %11204 = vmatpush.bf16.msra.mxu0 %v8684
    %11205 = vmatpush.bf16.msra.mxu0 %v8677
    %11206 = vmatpush.bf16.msra.mxu0 %v8670
    %11207 = vmatmul.bf16.gmra.mxu0 %v4298
    %v11208 = vpop.f32.mrf.mxu0
    %v11209 = vadd.f32 %v11195, %v11208
    %v11210 = vpop.f32.mrf.mxu0
    %v11211 = vadd.f32 %v11197, %v11210
    %11212 = vdwg.mxu0
    %11213 = vmatpush.bf16.msra.mxu0 %v8775
    %11214 = vmatpush.bf16.msra.mxu0 %v8768
    %11215 = vmatpush.bf16.msra.mxu0 %v8761
    %11216 = vmatpush.bf16.msra.mxu0 %v8754
    %11217 = vmatpush.bf16.msra.mxu0 %v8747
    %11218 = vmatpush.bf16.msra.mxu0 %v8740
    %11219 = vmatpush.bf16.msra.mxu0 %v8733
    %11220 = vmatpush.bf16.msra.mxu0 %v8726
    %11221 = vmatmul.bf16.gmra.mxu0 %v4299
    %v11222 = vpop.f32.mrf.mxu0
    %v11223 = vadd.f32 %v11209, %v11222
    %v11224 = vpop.f32.mrf.mxu0
    %v11225 = vadd.f32 %v11211, %v11224
    %11226 = vdwg.mxu0
    %11227 = vmatpush.bf16.msra.mxu0 %v8831
    %11228 = vmatpush.bf16.msra.mxu0 %v8824
    %11229 = vmatpush.bf16.msra.mxu0 %v8817
    %11230 = vmatpush.bf16.msra.mxu0 %v8810
    %11231 = vmatpush.bf16.msra.mxu0 %v8803
    %11232 = vmatpush.bf16.msra.mxu0 %v8796
    %11233 = vmatpush.bf16.msra.mxu0 %v8789
    %11234 = vmatpush.bf16.msra.mxu0 %v8782
    %11235 = vmatmul.bf16.gmra.mxu0 %v4300
    %v11236 = vpop.f32.mrf.mxu0
    %v11237 = vadd.f32 %v11223, %v11236
    %v11238 = vpop.f32.mrf.mxu0
    %v11239 = vadd.f32 %v11225, %v11238
    %11240 = vdwg.mxu0
    %11241 = vmatpush.bf16.msra.mxu0 %v8887
    %11242 = vmatpush.bf16.msra.mxu0 %v8880
    %11243 = vmatpush.bf16.msra.mxu0 %v8873
    %11244 = vmatpush.bf16.msra.mxu0 %v8866
    %11245 = vmatpush.bf16.msra.mxu0 %v8859
    %11246 = vmatpush.bf16.msra.mxu0 %v8852
    %11247 = vmatpush.bf16.msra.mxu0 %v8845
    %11248 = vmatpush.bf16.msra.mxu0 %v8838
    %11249 = vmatmul.bf16.gmra.mxu0 %v4301
    %v11250 = vpop.f32.mrf.mxu0
    %v11251 = vadd.f32 %v11237, %v11250
    %v11252 = vpop.f32.mrf.mxu0
    %v11253 = vadd.f32 %v11239, %v11252
    %11254 = vdwg.mxu0
    %11255 = vmatpush.bf16.msra.mxu0 %v8943
    %11256 = vmatpush.bf16.msra.mxu0 %v8936
    %11257 = vmatpush.bf16.msra.mxu0 %v8929
    %11258 = vmatpush.bf16.msra.mxu0 %v8922
    %11259 = vmatpush.bf16.msra.mxu0 %v8915
    %11260 = vmatpush.bf16.msra.mxu0 %v8908
    %11261 = vmatpush.bf16.msra.mxu0 %v8901
    %11262 = vmatpush.bf16.msra.mxu0 %v8894
    %11263 = vmatmul.bf16.gmra.mxu0 %v4302
    %v11264 = vpop.f32.mrf.mxu0
    %v11265 = vadd.f32 %v11251, %v11264
    %v11266 = vpop.f32.mrf.mxu0
    %v11267 = vadd.f32 %v11253, %v11266
    %11268 = vdwg.mxu0
    %11269 = vmatpush.bf16.msra.mxu0 %v8999
    %11270 = vmatpush.bf16.msra.mxu0 %v8992
    %11271 = vmatpush.bf16.msra.mxu0 %v8985
    %11272 = vmatpush.bf16.msra.mxu0 %v8978
    %11273 = vmatpush.bf16.msra.mxu0 %v8971
    %11274 = vmatpush.bf16.msra.mxu0 %v8964
    %11275 = vmatpush.bf16.msra.mxu0 %v8957
    %11276 = vmatpush.bf16.msra.mxu0 %v8950
    %11277 = vmatmul.bf16.gmra.mxu0 %v4303
    %v11278 = vpop.f32.mrf.mxu0
    %v11279 = vadd.f32 %v11265, %v11278
    %v11280 = vpop.f32.mrf.mxu0
    %v11281 = vadd.f32 %v11267, %v11280
    %11282 = vdwg.mxu0
    %11283 = vmatpush.bf16.msra.mxu0 %v9055
    %11284 = vmatpush.bf16.msra.mxu0 %v9048
    %11285 = vmatpush.bf16.msra.mxu0 %v9041
    %11286 = vmatpush.bf16.msra.mxu0 %v9034
    %11287 = vmatpush.bf16.msra.mxu0 %v9027
    %11288 = vmatpush.bf16.msra.mxu0 %v9020
    %11289 = vmatpush.bf16.msra.mxu0 %v9013
    %11290 = vmatpush.bf16.msra.mxu0 %v9006
    %11291 = vmatmul.bf16.gmra.mxu0 %v4304
    %v11292 = vpop.f32.mrf.mxu0
    %v11293 = vadd.f32 %v11279, %v11292
    %v11294 = vpop.f32.mrf.mxu0
    %v11295 = vadd.f32 %v11281, %v11294
    %11296 = vdwg.mxu0
    %11297 = vmatpush.bf16.msra.mxu0 %v8216
    %11298 = vmatpush.bf16.msra.mxu0 %v8209
    %11299 = vmatpush.bf16.msra.mxu0 %v8202
    %11300 = vmatpush.bf16.msra.mxu0 %v8195
    %11301 = vmatpush.bf16.msra.mxu0 %v8188
    %11302 = vmatpush.bf16.msra.mxu0 %v8181
    %11303 = vmatpush.bf16.msra.mxu0 %v8174
    %11304 = vmatpush.bf16.msra.mxu0 %v8167
    %11305 = vmatmul.bf16.gmra.mxu0 %v4289
    %v11306 = vpop.f32.mrf.mxu0
    %v11307 = vadd.f32 %v5337, %v11306
    %v11308 = vpop.f32.mrf.mxu0
    %v11309 = vadd.f32 %v5337, %v11308
    %11310 = vdwg.mxu0
    %11311 = vmatpush.bf16.msra.mxu0 %v8272
    %11312 = vmatpush.bf16.msra.mxu0 %v8265
    %11313 = vmatpush.bf16.msra.mxu0 %v8258
    %11314 = vmatpush.bf16.msra.mxu0 %v8251
    %11315 = vmatpush.bf16.msra.mxu0 %v8244
    %11316 = vmatpush.bf16.msra.mxu0 %v8237
    %11317 = vmatpush.bf16.msra.mxu0 %v8230
    %11318 = vmatpush.bf16.msra.mxu0 %v8223
    %11319 = vmatmul.bf16.gmra.mxu0 %v4290
    %v11320 = vpop.f32.mrf.mxu0
    %v11321 = vadd.f32 %v11307, %v11320
    %v11322 = vpop.f32.mrf.mxu0
    %v11323 = vadd.f32 %v11309, %v11322
    %11324 = vdwg.mxu0
    %11325 = vmatpush.bf16.msra.mxu0 %v8328
    %11326 = vmatpush.bf16.msra.mxu0 %v8321
    %11327 = vmatpush.bf16.msra.mxu0 %v8314
    %11328 = vmatpush.bf16.msra.mxu0 %v8307
    %11329 = vmatpush.bf16.msra.mxu0 %v8300
    %11330 = vmatpush.bf16.msra.mxu0 %v8293
    %11331 = vmatpush.bf16.msra.mxu0 %v8286
    %11332 = vmatpush.bf16.msra.mxu0 %v8279
    %11333 = vmatmul.bf16.gmra.mxu0 %v4291
    %v11334 = vpop.f32.mrf.mxu0
    %v11335 = vadd.f32 %v11321, %v11334
    %v11336 = vpop.f32.mrf.mxu0
    %v11337 = vadd.f32 %v11323, %v11336
    %11338 = vdwg.mxu0
    %11339 = vmatpush.bf16.msra.mxu0 %v8384
    %11340 = vmatpush.bf16.msra.mxu0 %v8377
    %11341 = vmatpush.bf16.msra.mxu0 %v8370
    %11342 = vmatpush.bf16.msra.mxu0 %v8363
    %11343 = vmatpush.bf16.msra.mxu0 %v8356
    %11344 = vmatpush.bf16.msra.mxu0 %v8349
    %11345 = vmatpush.bf16.msra.mxu0 %v8342
    %11346 = vmatpush.bf16.msra.mxu0 %v8335
    %11347 = vmatmul.bf16.gmra.mxu0 %v4292
    %v11348 = vpop.f32.mrf.mxu0
    %v11349 = vadd.f32 %v11335, %v11348
    %v11350 = vpop.f32.mrf.mxu0
    %v11351 = vadd.f32 %v11337, %v11350
    %11352 = vdwg.mxu0
    %11353 = vmatpush.bf16.msra.mxu0 %v8440
    %11354 = vmatpush.bf16.msra.mxu0 %v8433
    %11355 = vmatpush.bf16.msra.mxu0 %v8426
    %11356 = vmatpush.bf16.msra.mxu0 %v8419
    %11357 = vmatpush.bf16.msra.mxu0 %v8412
    %11358 = vmatpush.bf16.msra.mxu0 %v8405
    %11359 = vmatpush.bf16.msra.mxu0 %v8398
    %11360 = vmatpush.bf16.msra.mxu0 %v8391
    %11361 = vmatmul.bf16.gmra.mxu0 %v4293
    %v11362 = vpop.f32.mrf.mxu0
    %v11363 = vadd.f32 %v11349, %v11362
    %v11364 = vpop.f32.mrf.mxu0
    %v11365 = vadd.f32 %v11351, %v11364
    %11366 = vdwg.mxu0
    %11367 = vmatpush.bf16.msra.mxu0 %v8496
    %11368 = vmatpush.bf16.msra.mxu0 %v8489
    %11369 = vmatpush.bf16.msra.mxu0 %v8482
    %11370 = vmatpush.bf16.msra.mxu0 %v8475
    %11371 = vmatpush.bf16.msra.mxu0 %v8468
    %11372 = vmatpush.bf16.msra.mxu0 %v8461
    %11373 = vmatpush.bf16.msra.mxu0 %v8454
    %11374 = vmatpush.bf16.msra.mxu0 %v8447
    %11375 = vmatmul.bf16.gmra.mxu0 %v4294
    %v11376 = vpop.f32.mrf.mxu0
    %v11377 = vadd.f32 %v11363, %v11376
    %v11378 = vpop.f32.mrf.mxu0
    %v11379 = vadd.f32 %v11365, %v11378
    %11380 = vdwg.mxu0
    %11381 = vmatpush.bf16.msra.mxu0 %v8552
    %11382 = vmatpush.bf16.msra.mxu0 %v8545
    %11383 = vmatpush.bf16.msra.mxu0 %v8538
    %11384 = vmatpush.bf16.msra.mxu0 %v8531
    %11385 = vmatpush.bf16.msra.mxu0 %v8524
    %11386 = vmatpush.bf16.msra.mxu0 %v8517
    %11387 = vmatpush.bf16.msra.mxu0 %v8510
    %11388 = vmatpush.bf16.msra.mxu0 %v8503
    %11389 = vmatmul.bf16.gmra.mxu0 %v4295
    %v11390 = vpop.f32.mrf.mxu0
    %v11391 = vadd.f32 %v11377, %v11390
    %v11392 = vpop.f32.mrf.mxu0
    %v11393 = vadd.f32 %v11379, %v11392
    %11394 = vdwg.mxu0
    %11395 = vmatpush.bf16.msra.mxu0 %v8608
    %11396 = vmatpush.bf16.msra.mxu0 %v8601
    %11397 = vmatpush.bf16.msra.mxu0 %v8594
    %11398 = vmatpush.bf16.msra.mxu0 %v8587
    %11399 = vmatpush.bf16.msra.mxu0 %v8580
    %11400 = vmatpush.bf16.msra.mxu0 %v8573
    %11401 = vmatpush.bf16.msra.mxu0 %v8566
    %11402 = vmatpush.bf16.msra.mxu0 %v8559
    %11403 = vmatmul.bf16.gmra.mxu0 %v4296
    %v11404 = vpop.f32.mrf.mxu0
    %v11405 = vadd.f32 %v11391, %v11404
    %v11406 = vpop.f32.mrf.mxu0
    %v11407 = vadd.f32 %v11393, %v11406
    %11408 = vdwg.mxu0
    %11409 = vmatpush.bf16.msra.mxu0 %v8664
    %11410 = vmatpush.bf16.msra.mxu0 %v8657
    %11411 = vmatpush.bf16.msra.mxu0 %v8650
    %11412 = vmatpush.bf16.msra.mxu0 %v8643
    %11413 = vmatpush.bf16.msra.mxu0 %v8636
    %11414 = vmatpush.bf16.msra.mxu0 %v8629
    %11415 = vmatpush.bf16.msra.mxu0 %v8622
    %11416 = vmatpush.bf16.msra.mxu0 %v8615
    %11417 = vmatmul.bf16.gmra.mxu0 %v4297
    %v11418 = vpop.f32.mrf.mxu0
    %v11419 = vadd.f32 %v11405, %v11418
    %v11420 = vpop.f32.mrf.mxu0
    %v11421 = vadd.f32 %v11407, %v11420
    %11422 = vdwg.mxu0
    %11423 = vmatpush.bf16.msra.mxu0 %v8720
    %11424 = vmatpush.bf16.msra.mxu0 %v8713
    %11425 = vmatpush.bf16.msra.mxu0 %v8706
    %11426 = vmatpush.bf16.msra.mxu0 %v8699
    %11427 = vmatpush.bf16.msra.mxu0 %v8692
    %11428 = vmatpush.bf16.msra.mxu0 %v8685
    %11429 = vmatpush.bf16.msra.mxu0 %v8678
    %11430 = vmatpush.bf16.msra.mxu0 %v8671
    %11431 = vmatmul.bf16.gmra.mxu0 %v4298
    %v11432 = vpop.f32.mrf.mxu0
    %v11433 = vadd.f32 %v11419, %v11432
    %v11434 = vpop.f32.mrf.mxu0
    %v11435 = vadd.f32 %v11421, %v11434
    %11436 = vdwg.mxu0
    %11437 = vmatpush.bf16.msra.mxu0 %v8776
    %11438 = vmatpush.bf16.msra.mxu0 %v8769
    %11439 = vmatpush.bf16.msra.mxu0 %v8762
    %11440 = vmatpush.bf16.msra.mxu0 %v8755
    %11441 = vmatpush.bf16.msra.mxu0 %v8748
    %11442 = vmatpush.bf16.msra.mxu0 %v8741
    %11443 = vmatpush.bf16.msra.mxu0 %v8734
    %11444 = vmatpush.bf16.msra.mxu0 %v8727
    %11445 = vmatmul.bf16.gmra.mxu0 %v4299
    %v11446 = vpop.f32.mrf.mxu0
    %v11447 = vadd.f32 %v11433, %v11446
    %v11448 = vpop.f32.mrf.mxu0
    %v11449 = vadd.f32 %v11435, %v11448
    %11450 = vdwg.mxu0
    %11451 = vmatpush.bf16.msra.mxu0 %v8832
    %11452 = vmatpush.bf16.msra.mxu0 %v8825
    %11453 = vmatpush.bf16.msra.mxu0 %v8818
    %11454 = vmatpush.bf16.msra.mxu0 %v8811
    %11455 = vmatpush.bf16.msra.mxu0 %v8804
    %11456 = vmatpush.bf16.msra.mxu0 %v8797
    %11457 = vmatpush.bf16.msra.mxu0 %v8790
    %11458 = vmatpush.bf16.msra.mxu0 %v8783
    %11459 = vmatmul.bf16.gmra.mxu0 %v4300
    %v11460 = vpop.f32.mrf.mxu0
    %v11461 = vadd.f32 %v11447, %v11460
    %v11462 = vpop.f32.mrf.mxu0
    %v11463 = vadd.f32 %v11449, %v11462
    %11464 = vdwg.mxu0
    %11465 = vmatpush.bf16.msra.mxu0 %v8888
    %11466 = vmatpush.bf16.msra.mxu0 %v8881
    %11467 = vmatpush.bf16.msra.mxu0 %v8874
    %11468 = vmatpush.bf16.msra.mxu0 %v8867
    %11469 = vmatpush.bf16.msra.mxu0 %v8860
    %11470 = vmatpush.bf16.msra.mxu0 %v8853
    %11471 = vmatpush.bf16.msra.mxu0 %v8846
    %11472 = vmatpush.bf16.msra.mxu0 %v8839
    %11473 = vmatmul.bf16.gmra.mxu0 %v4301
    %v11474 = vpop.f32.mrf.mxu0
    %v11475 = vadd.f32 %v11461, %v11474
    %v11476 = vpop.f32.mrf.mxu0
    %v11477 = vadd.f32 %v11463, %v11476
    %11478 = vdwg.mxu0
    %11479 = vmatpush.bf16.msra.mxu0 %v8944
    %11480 = vmatpush.bf16.msra.mxu0 %v8937
    %11481 = vmatpush.bf16.msra.mxu0 %v8930
    %11482 = vmatpush.bf16.msra.mxu0 %v8923
    %11483 = vmatpush.bf16.msra.mxu0 %v8916
    %11484 = vmatpush.bf16.msra.mxu0 %v8909
    %11485 = vmatpush.bf16.msra.mxu0 %v8902
    %11486 = vmatpush.bf16.msra.mxu0 %v8895
    %11487 = vmatmul.bf16.gmra.mxu0 %v4302
    %v11488 = vpop.f32.mrf.mxu0
    %v11489 = vadd.f32 %v11475, %v11488
    %v11490 = vpop.f32.mrf.mxu0
    %v11491 = vadd.f32 %v11477, %v11490
    %11492 = vdwg.mxu0
    %11493 = vmatpush.bf16.msra.mxu0 %v9000
    %11494 = vmatpush.bf16.msra.mxu0 %v8993
    %11495 = vmatpush.bf16.msra.mxu0 %v8986
    %11496 = vmatpush.bf16.msra.mxu0 %v8979
    %11497 = vmatpush.bf16.msra.mxu0 %v8972
    %11498 = vmatpush.bf16.msra.mxu0 %v8965
    %11499 = vmatpush.bf16.msra.mxu0 %v8958
    %11500 = vmatpush.bf16.msra.mxu0 %v8951
    %11501 = vmatmul.bf16.gmra.mxu0 %v4303
    %v11502 = vpop.f32.mrf.mxu0
    %v11503 = vadd.f32 %v11489, %v11502
    %v11504 = vpop.f32.mrf.mxu0
    %v11505 = vadd.f32 %v11491, %v11504
    %11506 = vdwg.mxu0
    %11507 = vmatpush.bf16.msra.mxu0 %v9056
    %11508 = vmatpush.bf16.msra.mxu0 %v9049
    %11509 = vmatpush.bf16.msra.mxu0 %v9042
    %11510 = vmatpush.bf16.msra.mxu0 %v9035
    %11511 = vmatpush.bf16.msra.mxu0 %v9028
    %11512 = vmatpush.bf16.msra.mxu0 %v9021
    %11513 = vmatpush.bf16.msra.mxu0 %v9014
    %11514 = vmatpush.bf16.msra.mxu0 %v9007
    %11515 = vmatmul.bf16.gmra.mxu0 %v4304
    %v11516 = vpop.f32.mrf.mxu0
    %v11517 = vadd.f32 %v11503, %v11516
    %v11518 = vpop.f32.mrf.mxu0
    %v11519 = vadd.f32 %v11505, %v11518
    %11520 = vdwg.mxu0
    %v11521 = vxor.u32 %v10173, 2147483648
    %v11522 = vxor.u32 %v10397, 2147483648
    %v11523 = vxor.u32 %v10621, 2147483648
    %v11524 = vxor.u32 %v10845, 2147483648
    %v11525 = vxor.u32 %v11069, 2147483648
    %v11526 = vxor.u32 %v11293, 2147483648
    %v11527 = vxor.u32 %v11517, 2147483648
    %v11528 = vxor.u32 %v10175, 2147483648
    %v11529 = vxor.u32 %v10399, 2147483648
    %v11530 = vxor.u32 %v10623, 2147483648
    %v11531 = vxor.u32 %v10847, 2147483648
    %v11532 = vxor.u32 %v11071, 2147483648
    %v11533 = vxor.u32 %v11295, 2147483648
    %v11534 = vxor.u32 %v11519, 2147483648
    %v11535 = vmul.f32 %v11521, 1.442695
    %v11536 = vpow.pop %v11535
    %v11537 = vmul.f32 %v11522, 1.442695
    %v11538 = vpow.pop %v11537
    %v11539 = vmul.f32 %v11523, 1.442695
    %v11540 = vpow.pop %v11539
    %v11541 = vmul.f32 %v11524, 1.442695
    %v11542 = vpow.pop %v11541
    %v11543 = vmul.f32 %v11525, 1.442695
    %v11544 = vpow.pop %v11543
    %v11545 = vmul.f32 %v11526, 1.442695
    %v11546 = vpow.pop %v11545
    %v11547 = vmul.f32 %v11527, 1.442695
    %v11548 = vpow.pop %v11547
    %v11549 = vmul.f32 %v11528, 1.442695
    %v11550 = vpow.pop %v11549
    %v11551 = vmul.f32 %v11529, 1.442695
    %v11552 = vpow.pop %v11551
    %v11553 = vmul.f32 %v11530, 1.442695
    %v11554 = vpow.pop %v11553
    %v11555 = vmul.f32 %v11531, 1.442695
    %v11556 = vpow.pop %v11555
    %v11557 = vmul.f32 %v11532, 1.442695
    %v11558 = vpow.pop %v11557
    %v11559 = vmul.f32 %v11533, 1.442695
    %v11560 = vpow.pop %v11559
    %v11561 = vmul.f32 %v11534, 1.442695
    %v11562 = vpow.pop %v11561
    %v11563 = vadd.f32 %v11536, 1.0
    %v11564 = vadd.f32 %v11538, 1.0
    %v11565 = vadd.f32 %v11540, 1.0
    %v11566 = vadd.f32 %v11542, 1.0
    %v11567 = vadd.f32 %v11544, 1.0
    %v11568 = vadd.f32 %v11546, 1.0
    %v11569 = vadd.f32 %v11548, 1.0
    %v11570 = vadd.f32 %v11550, 1.0
    %v11571 = vadd.f32 %v11552, 1.0
    %v11572 = vadd.f32 %v11554, 1.0
    %v11573 = vadd.f32 %v11556, 1.0
    %v11574 = vadd.f32 %v11558, 1.0
    %v11575 = vadd.f32 %v11560, 1.0
    %v11576 = vadd.f32 %v11562, 1.0
    %v11577 = vrcp.pop %v11563
    %v11578 = vmul.f32 %v11563, %v11577
    %v11579 = vsub.f32 1.0, %v11578
    %v11580 = vmul.f32 %v11577, %v11579
    %v11581 = vadd.f32 %v11577, %v11580
    %vm11582 = vweird.f32 %v11563
    %vm11583 = vweird.f32 %v11577
    %vm11584 = vmor %vm11582, %vm11583
    %v11585 = vsel %vm11584, %v11577, %v11581
    %v11586 = vand.u32 2147483647, %v11563
    %vm11587 = vcmp.eq.f32.partialorder %v11586, 8.507059e+37
    %v11588 = vand.u32 %v11563, 2147483648
    %v11589 = vor.u32 1.1754944e-38, %v11588
    %v11590 = vsel %vm11587, %v11589, %v11585
    %v11591 = vmul.f32 1.0, %v11590
    %v11592 = vrcp.pop %v11564
    %v11593 = vmul.f32 %v11564, %v11592
    %v11594 = vsub.f32 1.0, %v11593
    %v11595 = vmul.f32 %v11592, %v11594
    %v11596 = vadd.f32 %v11592, %v11595
    %vm11597 = vweird.f32 %v11564
    %vm11598 = vweird.f32 %v11592
    %vm11599 = vmor %vm11597, %vm11598
    %v11600 = vsel %vm11599, %v11592, %v11596
    %v11601 = vand.u32 2147483647, %v11564
    %vm11602 = vcmp.eq.f32.partialorder %v11601, 8.507059e+37
    %v11603 = vand.u32 %v11564, 2147483648
    %v11604 = vor.u32 1.1754944e-38, %v11603
    %v11605 = vsel %vm11602, %v11604, %v11600
    %v11606 = vmul.f32 1.0, %v11605
    %v11607 = vrcp.pop %v11565
    %v11608 = vmul.f32 %v11565, %v11607
    %v11609 = vsub.f32 1.0, %v11608
    %v11610 = vmul.f32 %v11607, %v11609
    %v11611 = vadd.f32 %v11607, %v11610
    %vm11612 = vweird.f32 %v11565
    %vm11613 = vweird.f32 %v11607
    %vm11614 = vmor %vm11612, %vm11613
    %v11615 = vsel %vm11614, %v11607, %v11611
    %v11616 = vand.u32 2147483647, %v11565
    %vm11617 = vcmp.eq.f32.partialorder %v11616, 8.507059e+37
    %v11618 = vand.u32 %v11565, 2147483648
    %v11619 = vor.u32 1.1754944e-38, %v11618
    %v11620 = vsel %vm11617, %v11619, %v11615
    %v11621 = vmul.f32 1.0, %v11620
    %v11622 = vrcp.pop %v11566
    %v11623 = vmul.f32 %v11566, %v11622
    %v11624 = vsub.f32 1.0, %v11623
    %v11625 = vmul.f32 %v11622, %v11624
    %v11626 = vadd.f32 %v11622, %v11625
    %vm11627 = vweird.f32 %v11566
    %vm11628 = vweird.f32 %v11622
    %vm11629 = vmor %vm11627, %vm11628
    %v11630 = vsel %vm11629, %v11622, %v11626
    %v11631 = vand.u32 2147483647, %v11566
    %vm11632 = vcmp.eq.f32.partialorder %v11631, 8.507059e+37
    %v11633 = vand.u32 %v11566, 2147483648
    %v11634 = vor.u32 1.1754944e-38, %v11633
    %v11635 = vsel %vm11632, %v11634, %v11630
    %v11636 = vmul.f32 1.0, %v11635
    %v11637 = vrcp.pop %v11567
    %v11638 = vmul.f32 %v11567, %v11637
    %v11639 = vsub.f32 1.0, %v11638
    %v11640 = vmul.f32 %v11637, %v11639
    %v11641 = vadd.f32 %v11637, %v11640
    %vm11642 = vweird.f32 %v11567
    %vm11643 = vweird.f32 %v11637
    %vm11644 = vmor %vm11642, %vm11643
    %v11645 = vsel %vm11644, %v11637, %v11641
    %v11646 = vand.u32 2147483647, %v11567
    %vm11647 = vcmp.eq.f32.partialorder %v11646, 8.507059e+37
    %v11648 = vand.u32 %v11567, 2147483648
    %v11649 = vor.u32 1.1754944e-38, %v11648
    %v11650 = vsel %vm11647, %v11649, %v11645
    %v11651 = vmul.f32 1.0, %v11650
    %v11652 = vrcp.pop %v11568
    %v11653 = vmul.f32 %v11568, %v11652
    %v11654 = vsub.f32 1.0, %v11653
    %v11655 = vmul.f32 %v11652, %v11654
    %v11656 = vadd.f32 %v11652, %v11655
    %vm11657 = vweird.f32 %v11568
    %vm11658 = vweird.f32 %v11652
    %vm11659 = vmor %vm11657, %vm11658
    %v11660 = vsel %vm11659, %v11652, %v11656
    %v11661 = vand.u32 2147483647, %v11568
    %vm11662 = vcmp.eq.f32.partialorder %v11661, 8.507059e+37
    %v11663 = vand.u32 %v11568, 2147483648
    %v11664 = vor.u32 1.1754944e-38, %v11663
    %v11665 = vsel %vm11662, %v11664, %v11660
    %v11666 = vmul.f32 1.0, %v11665
    %v11667 = vrcp.pop %v11569
    %v11668 = vmul.f32 %v11569, %v11667
    %v11669 = vsub.f32 1.0, %v11668
    %v11670 = vmul.f32 %v11667, %v11669
    %v11671 = vadd.f32 %v11667, %v11670
    %vm11672 = vweird.f32 %v11569
    %vm11673 = vweird.f32 %v11667
    %vm11674 = vmor %vm11672, %vm11673
    %v11675 = vsel %vm11674, %v11667, %v11671
    %v11676 = vand.u32 2147483647, %v11569
    %vm11677 = vcmp.eq.f32.partialorder %v11676, 8.507059e+37
    %v11678 = vand.u32 %v11569, 2147483648
    %v11679 = vor.u32 1.1754944e-38, %v11678
    %v11680 = vsel %vm11677, %v11679, %v11675
    %v11681 = vmul.f32 1.0, %v11680
    %v11682 = vrcp.pop %v11570
    %v11683 = vmul.f32 %v11570, %v11682
    %v11684 = vsub.f32 1.0, %v11683
    %v11685 = vmul.f32 %v11682, %v11684
    %v11686 = vadd.f32 %v11682, %v11685
    %vm11687 = vweird.f32 %v11570
    %vm11688 = vweird.f32 %v11682
    %vm11689 = vmor %vm11687, %vm11688
    %v11690 = vsel %vm11689, %v11682, %v11686
    %v11691 = vand.u32 2147483647, %v11570
    %vm11692 = vcmp.eq.f32.partialorder %v11691, 8.507059e+37
    %v11693 = vand.u32 %v11570, 2147483648
    %v11694 = vor.u32 1.1754944e-38, %v11693
    %v11695 = vsel %vm11692, %v11694, %v11690
    %v11696 = vmul.f32 1.0, %v11695
    %v11697 = vrcp.pop %v11571
    %v11698 = vmul.f32 %v11571, %v11697
    %v11699 = vsub.f32 1.0, %v11698
    %v11700 = vmul.f32 %v11697, %v11699
    %v11701 = vadd.f32 %v11697, %v11700
    %vm11702 = vweird.f32 %v11571
    %vm11703 = vweird.f32 %v11697
    %vm11704 = vmor %vm11702, %vm11703
    %v11705 = vsel %vm11704, %v11697, %v11701
    %v11706 = vand.u32 2147483647, %v11571
    %vm11707 = vcmp.eq.f32.partialorder %v11706, 8.507059e+37
    %v11708 = vand.u32 %v11571, 2147483648
    %v11709 = vor.u32 1.1754944e-38, %v11708
    %v11710 = vsel %vm11707, %v11709, %v11705
    %v11711 = vmul.f32 1.0, %v11710
    %v11712 = vrcp.pop %v11572
    %v11713 = vmul.f32 %v11572, %v11712
    %v11714 = vsub.f32 1.0, %v11713
    %v11715 = vmul.f32 %v11712, %v11714
    %v11716 = vadd.f32 %v11712, %v11715
    %vm11717 = vweird.f32 %v11572
    %vm11718 = vweird.f32 %v11712
    %vm11719 = vmor %vm11717, %vm11718
    %v11720 = vsel %vm11719, %v11712, %v11716
    %v11721 = vand.u32 2147483647, %v11572
    %vm11722 = vcmp.eq.f32.partialorder %v11721, 8.507059e+37
    %v11723 = vand.u32 %v11572, 2147483648
    %v11724 = vor.u32 1.1754944e-38, %v11723
    %v11725 = vsel %vm11722, %v11724, %v11720
    %v11726 = vmul.f32 1.0, %v11725
    %v11727 = vrcp.pop %v11573
    %v11728 = vmul.f32 %v11573, %v11727
    %v11729 = vsub.f32 1.0, %v11728
    %v11730 = vmul.f32 %v11727, %v11729
    %v11731 = vadd.f32 %v11727, %v11730
    %vm11732 = vweird.f32 %v11573
    %vm11733 = vweird.f32 %v11727
    %vm11734 = vmor %vm11732, %vm11733
    %v11735 = vsel %vm11734, %v11727, %v11731
    %v11736 = vand.u32 2147483647, %v11573
    %vm11737 = vcmp.eq.f32.partialorder %v11736, 8.507059e+37
    %v11738 = vand.u32 %v11573, 2147483648
    %v11739 = vor.u32 1.1754944e-38, %v11738
    %v11740 = vsel %vm11737, %v11739, %v11735
    %v11741 = vmul.f32 1.0, %v11740
    %v11742 = vrcp.pop %v11574
    %v11743 = vmul.f32 %v11574, %v11742
    %v11744 = vsub.f32 1.0, %v11743
    %v11745 = vmul.f32 %v11742, %v11744
    %v11746 = vadd.f32 %v11742, %v11745
    %vm11747 = vweird.f32 %v11574
    %vm11748 = vweird.f32 %v11742
    %vm11749 = vmor %vm11747, %vm11748
    %v11750 = vsel %vm11749, %v11742, %v11746
    %v11751 = vand.u32 2147483647, %v11574
    %vm11752 = vcmp.eq.f32.partialorder %v11751, 8.507059e+37
    %v11753 = vand.u32 %v11574, 2147483648
    %v11754 = vor.u32 1.1754944e-38, %v11753
    %v11755 = vsel %vm11752, %v11754, %v11750
    %v11756 = vmul.f32 1.0, %v11755
    %v11757 = vrcp.pop %v11575
    %v11758 = vmul.f32 %v11575, %v11757
    %v11759 = vsub.f32 1.0, %v11758
    %v11760 = vmul.f32 %v11757, %v11759
    %v11761 = vadd.f32 %v11757, %v11760
    %vm11762 = vweird.f32 %v11575
    %vm11763 = vweird.f32 %v11757
    %vm11764 = vmor %vm11762, %vm11763
    %v11765 = vsel %vm11764, %v11757, %v11761
    %v11766 = vand.u32 2147483647, %v11575
    %vm11767 = vcmp.eq.f32.partialorder %v11766, 8.507059e+37
    %v11768 = vand.u32 %v11575, 2147483648
    %v11769 = vor.u32 1.1754944e-38, %v11768
    %v11770 = vsel %vm11767, %v11769, %v11765
    %v11771 = vmul.f32 1.0, %v11770
    %v11772 = vrcp.pop %v11576
    %v11773 = vmul.f32 %v11576, %v11772
    %v11774 = vsub.f32 1.0, %v11773
    %v11775 = vmul.f32 %v11772, %v11774
    %v11776 = vadd.f32 %v11772, %v11775
    %vm11777 = vweird.f32 %v11576
    %vm11778 = vweird.f32 %v11772
    %vm11779 = vmor %vm11777, %vm11778
    %v11780 = vsel %vm11779, %v11772, %v11776
    %v11781 = vand.u32 2147483647, %v11576
    %vm11782 = vcmp.eq.f32.partialorder %v11781, 8.507059e+37
    %v11783 = vand.u32 %v11576, 2147483648
    %v11784 = vor.u32 1.1754944e-38, %v11783
    %v11785 = vsel %vm11782, %v11784, %v11780
    %v11786 = vmul.f32 1.0, %v11785
    %v11801 = vrot.slane %v11606, 6
    %v11802 = vrot.slane %v11621, 4
    %v11803 = vrot.slane %v11636, 2
    %v11804 = vrot.slane %v11666, 6
    %v11805 = vrot.slane %v11681, 4
    %v11806 = vrot.slane %v11711, 6
    %v11807 = vrot.slane %v11726, 4
    %v11808 = vrot.slane %v11741, 2
    %v11809 = vrot.slane %v11771, 6
    %v11810 = vrot.slane %v11786, 4
    %vm11811 = vcmask 1041408
    %v11812 = vsel %vm11811, %v11591, %v11801
    %vm11813 = vcmask 1045508
    %v11814 = vsel %vm11813, %v11802, %v11803
    %vm11815 = vcmask 1043456
    %v11816 = vsel %vm11815, %v11812, %v11814
    %v11817 = vsel %vm11811, %v11651, %v11804
    %v11818 = vsel %vm11815, %v11817, %v11805
    %vm11819 = vcmask 1043458
    %v11820 = vsel %vm11819, %v11591, %v11801
    %vm11821 = vcmask 1045504
    %v11822 = vsel %vm11821, %v11803, %v11802
    %vm11823 = vcmask 1045506
    %v11824 = vsel %vm11823, %v11820, %v11822
    %v11825 = vrot.slane %v11824, 2
    %v11826 = vsel %vm11819, %v11651, %v11804
    %v11827 = vsel %vm11823, %v11826, %v11805
    %v11828 = vrot.slane %v11827, 2
    %v11829 = vsel %vm11813, %v11591, %v11801
    %v11830 = vsel %vm11811, %v11802, %v11803
    %v11831 = vsel %vm11815, %v11830, %v11829
    %v11832 = vrot.slane %v11831, 4
    %v11833 = vsel %vm11813, %v11651, %v11804
    %v11834 = vsel %vm11815, %v11805, %v11833
    %v11835 = vrot.slane %v11834, 4
    %v11836 = vsel %vm11821, %v11801, %v11591
    %v11837 = vsel %vm11819, %v11802, %v11803
    %v11838 = vsel %vm11823, %v11837, %v11836
    %v11839 = vrot.slane %v11838, 6
    %v11840 = vsel %vm11821, %v11804, %v11651
    %v11841 = vsel %vm11823, %v11805, %v11840
    %v11842 = vrot.slane %v11841, 6
    %v11843 = vsel %vm11811, %v11696, %v11806
    %v11844 = vsel %vm11813, %v11807, %v11808
    %v11845 = vsel %vm11815, %v11843, %v11844
    %v11846 = vsel %vm11811, %v11756, %v11809
    %v11847 = vsel %vm11815, %v11846, %v11810
    %v11848 = vsel %vm11819, %v11696, %v11806
    %v11849 = vsel %vm11821, %v11808, %v11807
    %v11850 = vsel %vm11823, %v11848, %v11849
    %v11851 = vrot.slane %v11850, 2
    %v11852 = vsel %vm11819, %v11756, %v11809
    %v11853 = vsel %vm11823, %v11852, %v11810
    %v11854 = vrot.slane %v11853, 2
    %v11855 = vsel %vm11813, %v11696, %v11806
    %v11856 = vsel %vm11811, %v11807, %v11808
    %v11857 = vsel %vm11815, %v11856, %v11855
    %v11858 = vrot.slane %v11857, 4
    %v11859 = vsel %vm11813, %v11756, %v11809
    %v11860 = vsel %vm11815, %v11810, %v11859
    %v11861 = vrot.slane %v11860, 4
    %v11862 = vsel %vm11821, %v11806, %v11696
    %v11863 = vsel %vm11819, %v11807, %v11808
    %v11864 = vsel %vm11823, %v11863, %v11862
    %v11865 = vrot.slane %v11864, 6
    %v11866 = vsel %vm11821, %v11809, %v11756
    %v11867 = vsel %vm11823, %v11810, %v11866
    %v11868 = vrot.slane %v11867, 6
    %11885 = vst [vmem:[#allocation4] sm:$0xff] %v11816
    %vm11886 = vmor %vm11819, %vm11811
    %vm11887 = vcmask 128004
    %vm11888 = vmor %vm11887, %vm11886
    %11889 = vst.msk [vmem:[#allocation4 + $0x8] sm:$0x3f] %vm11888, %v11818
    %11890 = vst [vmem:[#allocation4 + $0xe] sm:$0xff] %v11825
    %11891 = vst.msk [vmem:[#allocation4 + $0x16] sm:$0x3f] %vm11888, %v11828
    %11892 = vst [vmem:[#allocation4 + $0x1c] sm:$0xff] %v11832
    %11893 = vst.msk [vmem:[#allocation4 + $0x24] sm:$0x3f] %vm11888, %v11835
    %11894 = vst [vmem:[#allocation4 + $0x2a] sm:$0xff] %v11839
    %11895 = vst.msk [vmem:[#allocation4 + $0x32] sm:$0x3f] %vm11888, %v11842
    %11896 = vst [vmem:[#allocation4 + $0x38] sm:$0xff] %v11845
    %11897 = vst.msk [vmem:[#allocation4 + $0x40] sm:$0x3f] %vm11888, %v11847
    %11898 = vst [vmem:[#allocation4 + $0x46] sm:$0xff] %v11851
    %11899 = vst.msk [vmem:[#allocation4 + $0x4e] sm:$0x3f] %vm11888, %v11854
    %11900 = vst [vmem:[#allocation4 + $0x54] sm:$0xff] %v11858
    %11901 = vst.msk [vmem:[#allocation4 + $0x5c] sm:$0x3f] %vm11888, %v11861
    %11902 = vst [vmem:[#allocation4 + $0x62] sm:$0xff] %v11865
    %11903 = vst.msk [vmem:[#allocation4 + $0x6a] sm:$0x3f] %vm11888, %v11868
    // Predicated region
    $region30: #{img_reconstruct_forward.1} parent=1 // pred_check
      _
    $region31: #{img_reconstruct_forward.1} parent=1 // pred_check_branch
      %11905 = sbr.rel (0) target = $region33
    $region32: #{img_reconstruct_forward.1} parent=1 // pred_region
      // Predicated region
      $region34: #{img_reconstruct_forward.1} parent=32 // pred_check
        _
      $region35: #{img_reconstruct_forward.1} parent=32 // pred_check_branch
        %11907 = sbr.rel (0) target = $region37
      $region36: #{img_reconstruct_forward.1} parent=32 // pred_region
        // Predicated region
        $region38: #{img_reconstruct_forward.1} parent=36 // pred_check
          _
        $region39: #{img_reconstruct_forward.1} parent=36 // pred_check_branch
          %11909 = sbr.rel (0) target = $region41
        $region40: #{img_reconstruct_forward.1} parent=36 // pred_region
          %s11910 = scalar_lea.vmem [#allocation4], 8
          %s11911 = scalar_lea.vmem %s8, 8
          loop: start=0, step=1, limit=1
          $region42: #{img_reconstruct_forward.1} parent=40 // loop_pre_header
            _
          $region43: #{img_reconstruct_forward.1} parent=40 // loop_header
            %s11913 = sphi 0, %s11917
            %p11914 = scmp.ge.s32.totalorder %s11913, 1
            %s11918 = sphi [#allocation4], [#allocation4]
            %s11919 = sphi %s8, %s8
          $region44: #{img_reconstruct_forward.1} parent=40 // loop_header_branch
            %11916 = sbr.rel (%p11914) target = $region48
          $region45: #{img_reconstruct_forward.1} parent=40 // loop_body
            %v11920 = vld [vmem:[%s11918] sm:$0xff]
            %11921 = vst [vmem:[%s11919] sm:$0xff] %v11920
          $region46: #{img_reconstruct_forward.1} parent=40 // loop_footer
            %s11917 = sadd.s32 1, %s11913
          $region47: #{img_reconstruct_forward.1} parent=40 // loop_footer_branch
            %11912 = sbr.rel target = $region43
          $region48: #{img_reconstruct_forward.1} parent=40 // loop_exit
            _
          %s11923 = ssub.s32 64, 1
          loop: start=0, step=1, limit=1
          $region49: #{img_reconstruct_forward.1} parent=40 // loop_pre_header
            _
          $region50: #{img_reconstruct_forward.1} parent=40 // loop_header
            %s11925 = sphi 0, %s11929
            %p11926 = scmp.ge.s32.totalorder %s11925, 1
            %s11930 = sphi %s11910, %s11910
            %s11931 = sphi %s11911, %s11911
          $region51: #{img_reconstruct_forward.1} parent=40 // loop_header_branch
            %11928 = sbr.rel (%p11926) target = $region55
          $region52: #{img_reconstruct_forward.1} parent=40 // loop_body
            %v11932 = vld [vmem:[%s11930] sm:%s11923]
            %11933 = vst [vmem:[%s11931] sm:%s11923] %v11932
          $region53: #{img_reconstruct_forward.1} parent=40 // loop_footer
            %s11929 = sadd.s32 1, %s11925
          $region54: #{img_reconstruct_forward.1} parent=40 // loop_footer_branch
            %11924 = sbr.rel target = $region50
          $region55: #{img_reconstruct_forward.1} parent=40 // loop_exit
            _
        $region41: #{img_reconstruct_forward.1} parent=36 // pred_fallthru
          _
      $region37: #{img_reconstruct_forward.1} parent=32 // pred_fallthru
        _
      %11934 = vnop
    $region33: #{img_reconstruct_forward.1} parent=1 // pred_fallthru
      _
    // Predicated region
    $region56: #{img_reconstruct_forward.1} parent=1 // pred_check
      _
    $region57: #{img_reconstruct_forward.1} parent=1 // pred_check_branch
      %11936 = sbr.rel (0) target = $region59
    $region58: #{img_reconstruct_forward.1} parent=1 // pred_region
      _
    $region59: #{img_reconstruct_forward.1} parent=1 // pred_fallthru
      _

</llo_original>
